<compile_context>
chip_gen: v5e
topology: v5e:2x2
jax: 0.10.0
libtpu: 0.0.40
codegen_flags: <defaults>
</compile_context>

<pallas_src>
import jax
import jax.numpy as jnp
from jax import lax
from jax.experimental import pallas as pl
from jax.experimental.pallas import tpu as pltpu

LANES = 128
SUBLANES = 8
ROW_ALIGN = 32                   # legal sublane multiple for f32 / bf16 / int8 blocks
BASE_BLOCK_ROWS_F32 = 4096       # 2 MiB f32 block; 2 inputs double-buffered ~= 8 MiB
MIN_PALLAS_ELEMS = 32 * 1024     # below this a fused XLA reduction beats kernel overhead
VMEM_LIMIT_BYTES = 32 * 1024 * 1024


def _cdiv(a, b):
    return -(-a // b)


def _round_up(x, m):
    return ((x + m - 1) // m) * m


def _as_rows128(x, pad_value):
    """Free (bitcast) reshape of a contiguous tensor to (rows, 128).

    Only when numel % 128 != 0 do we append < 128 elements of `pad_value`
    (1.0 for real, 0.0 for fake) so the padded tail contributes exactly 0.
    """
    n = int(x.size)
    flat = jnp.ravel(x)
    rem = n % LANES
    if rem:
        flat = jnp.concatenate(
            [flat, jnp.full((LANES - rem,), pad_value, dtype=x.dtype)])
    return flat.reshape(-1, LANES)


def _pair_loss_jnp(dr, dg):
    """Fallback for tiny (or mismatched) pairs: fused XLA reduction."""
    drf = dr.astype(jnp.float32)
    dgf = dg.astype(jnp.float32)
    return jnp.mean((1.0 - drf) ** 2) + jnp.mean(dgf ** 2)


def _pair_sum_sq_pallas(dr, dg):
    """sum((1 - dr)^2) + sum(dg^2) in f32, streaming both tensors once."""
    n = int(dr.size)
    itemsize = dr.dtype.itemsize

    dr2 = _as_rows128(dr, 1.0)   # real padded with 1.0 -> pad contributes 0
    dg2 = _as_rows128(dg, 0.0)   # fake padded with 0.0 -> pad contributes 0
    rows = dr2.shape[0]

    # Equal-byte blocks across dtypes (bf16 gets 2x the rows of f32).
    max_rows = BASE_BLOCK_ROWS_F32 * max(1, 4 // itemsize)
    block_rows = min(max_rows, _round_up(rows, ROW_ALIGN))
    blocks_total = _cdiv(rows, block_rows)

    # 2-way core split (v7x megacore); harmless on single-core v5e/v6e.
    splits = 2 if blocks_total >= 2 else 1
    bpc = _cdiv(blocks_total, splits)          # blocks per core

    def idx_map(c, j):
        # Clamp so the (rare) overhang block re-reads an in-bounds block; its
        # rows are fully masked in the kernel so it contributes 0.
        return (jnp.minimum(c * bpc + j, blocks_total - 1), 0)

    def kernel(dr_ref, dg_ref, acc_ref):
        c = pl.program_id(0)
        j = pl.program_id(1)

        @pl.when(j == 0)
        def _init():
            acc_ref[...] = jnp.zeros_like(acc_ref)

        # Row mask for the ragged tail / overhang block (unclamped offset).
        row_off = (c * bpc + j) * block_rows
        row_idx = lax.broadcasted_iota(jnp.int32, (block_rows, LANES), 0) + row_off
        valid = row_idx < rows

        # bf16 (etc.) stays narrow in HBM/VMEM; cast to f32 in-register.
        drf = dr_ref[...].astype(jnp.float32)
        dgf = dg_ref[...].astype(jnp.float32)
        r = jnp.where(valid, 1.0 - drf, 0.0)
        f = jnp.where(valid, dgf, 0.0)
        contrib = r * r + f * f
        # Pure-VPU fold of (block_rows, 128) onto the resident (8, 128) block.
        acc_ref[...] += contrib.reshape(-1, SUBLANES, LANES).sum(axis=0)

    out = pl.pallas_call(
        kernel,
        out_shape=jax.ShapeDtypeStruct((splits * SUBLANES, LANES), jnp.float32),
        grid=(splits, bpc),
        in_specs=[
            pl.BlockSpec((block_rows, LANES), idx_map),
            pl.BlockSpec((block_rows, LANES), idx_map),
        ],
        out_specs=pl.BlockSpec((SUBLANES, LANES), lambda c, j: (c, 0)),
        compiler_params=pltpu.CompilerParams(
            dimension_semantics=("parallel", "arbitrary"),
            vmem_limit_bytes=VMEM_LIMIT_BYTES,
        ),
        cost_estimate=pl.CostEstimate(
            flops=6 * rows * LANES,
            transcendentals=0,
            bytes_accessed=2 * rows * LANES * itemsize
            + splits * SUBLANES * LANES * 4,
        ),
    )(dr2, dg2)

    # Tiny epilogue: one reduction over (splits*8, 128) partial sums.
    return jnp.sum(out)


def _pair_loss(dr, dg):
    if (dr.shape != dg.shape) or (dr.dtype != dg.dtype) or int(dr.size) < MIN_PALLAS_ELEMS:
        # Mismatched pairs never occur for a real discriminator; tiny pairs are
        # cheaper as one fused XLA reduction than as a pallas_call.
        return _pair_loss_jnp(dr, dg)
    return _pair_sum_sq_pallas(dr, dg) / jnp.float32(dr.size)


def basic_discriminator_loss(real_outputs, fake_outputs):
    """JAX/Pallas equivalent of BasicDiscriminatorLoss.forward (returns scalar loss)."""
    loss = jnp.float32(0.0)
    for dr, dg in zip(real_outputs, fake_outputs):
        loss = loss + _pair_loss(dr, dg)
    return loss


if __name__ == "__main__":
    key = jax.random.PRNGKey(0)
    keys = jax.random.split(key, 8)

    # Multi-scale discriminator logit maps: two tiny pairs (jnp fallback path)
    # plus two larger pairs that exercise the Pallas path (f32 multi-block with
    # the 2-way core split; bf16 with a non-multiple-of-128 element count).
    real_outputs = [
        jax.random.normal(keys[0], (2, 4, 16), dtype=jnp.float32),
        jax.random.normal(keys[1], (2, 1, 8, 8), dtype=jnp.bfloat16),
        jax.random.normal(keys[2], (2, 4, 131072), dtype=jnp.float32),
        jax.random.normal(keys[3], (2, 1, 36000), dtype=jnp.bfloat16),
    ]
    fake_outputs = [
        jax.random.normal(keys[4], (2, 4, 16), dtype=jnp.float32),
        jax.random.normal(keys[5], (2, 1, 8, 8), dtype=jnp.bfloat16),
        jax.random.normal(keys[6], (2, 4, 131072), dtype=jnp.float32),
        jax.random.normal(keys[7], (2, 1, 36000), dtype=jnp.bfloat16),
    ]

    loss = basic_discriminator_loss(real_outputs, fake_outputs)
    loss = jax.block_until_ready(loss)

    # Pure-JAX reference (same math as the PyTorch module).
    ref = jnp.float32(0.0)
    for dr, dg in zip(real_outputs, fake_outputs):
        drf = dr.astype(jnp.float32)
        dgf = dg.astype(jnp.float32)
        ref = ref + jnp.mean((1.0 - drf) ** 2) + jnp.mean(dgf ** 2)

    assert jnp.allclose(loss, ref, rtol=1e-4, atol=1e-4), (loss, ref)
    print("KERNEL_OK")
</pallas_src>

<mosaic_0001>
module attributes {stable_mosaic.version = 11 : i64} {
  func.func @kernel(%arg0: i32, %arg1: i32, %arg2: memref<4096x128xf32, #tpu.memory_space<vmem>>, %arg3: memref<4096x128xf32, #tpu.memory_space<vmem>>, %arg4: memref<8x128xf32, #tpu.memory_space<vmem>>) attributes {dimension_semantics = [#tpu.dimension_semantics<parallel>, #tpu.dimension_semantics<arbitrary>], iteration_bounds = array<i64: 2, 1>, scalar_prefetch = 0 : i64, scratch_operands = 0 : i64, tpu.core_type = #tpu.core_type<tc>, window_params = [{transform_indices = @transform_0, window_bounds = array<i64: 4096, 128>}, {transform_indices = @transform_1, window_bounds = array<i64: 4096, 128>}, {transform_indices = @transform_2, window_bounds = array<i64: 8, 128>}]} {
    %c0_i32 = arith.constant 0 : i32
    %0 = arith.cmpi eq, %arg1, %c0_i32 : i32
    %1 = arith.extui %0 : i1 to i32
    %c0_i32_0 = arith.constant 0 : i32
    %2 = arith.cmpi ne, %1, %c0_i32_0 : i32
    scf.if %2 {
      %cst_11 = arith.constant 0.000000e+00 : f32
      %27 = vector.broadcast %cst_11 : f32 to vector<8x128xf32>
      %c0_12 = arith.constant 0 : index
      %c0_13 = arith.constant 0 : index
      %28 = vector.load %arg4[%c0_12, %c0_13] : memref<8x128xf32, #tpu.memory_space<vmem>>, vector<8x128xf32>
      tpu.vector_store %arg4[%c0_12, %c0_13], %27 {strides = array<i32>} : memref<8x128xf32, #tpu.memory_space<vmem>>, vector<8x128xf32>,
    } else {
    }
    %c1_i32 = arith.constant 1 : i32
    %3 = arith.muli %arg0, %c1_i32 : i32
    %4 = arith.addi %3, %arg1 : i32
    %c4096_i32 = arith.constant 4096 : i32
    %5 = arith.muli %4, %c4096_i32 : i32
    %6 = tpu.iota {dimensions = array<i32: 0>} : vector<4096x128xi32>
    %7 = vector.broadcast %5 : i32 to vector<4096x128xi32>
    %8 = arith.addi %6, %7 : vector<4096x128xi32>
    %c8192_i32 = arith.constant 8192 : i32
    %9 = vector.broadcast %c8192_i32 : i32 to vector<4096x128xi32>
    %10 = arith.cmpi slt, %8, %9 : vector<4096x128xi32>
    %c0 = arith.constant 0 : index
    %c0_1 = arith.constant 0 : index
    %11 = vector.load %arg2[%c0, %c0_1] : memref<4096x128xf32, #tpu.memory_space<vmem>>, vector<4096x128xf32>
    %c0_2 = arith.constant 0 : index
    %c0_3 = arith.constant 0 : index
    %12 = vector.load %arg3[%c0_2, %c0_3] : memref<4096x128xf32, #tpu.memory_space<vmem>>, vector<4096x128xf32>
    %cst = arith.constant 1.000000e+00 : f32
    %13 = vector.broadcast %cst : f32 to vector<4096x128xf32>
    %14 = arith.subf %13, %11 : vector<4096x128xf32>
    %cst_4 = arith.constant 0.000000e+00 : f32
    %15 = vector.broadcast %cst_4 : f32 to vector<4096x128xf32>
    %16 = arith.select %10, %14, %15 : vector<4096x128xi1>, vector<4096x128xf32>
    %cst_5 = arith.constant 0.000000e+00 : f32
    %17 = vector.broadcast %cst_5 : f32 to vector<4096x128xf32>
    %18 = arith.select %10, %12, %17 : vector<4096x128xi1>, vector<4096x128xf32>
    %19 = arith.mulf %16, %16 : vector<4096x128xf32>
    %20 = arith.mulf %18, %18 : vector<4096x128xf32>
    %21 = arith.addf %19, %20 : vector<4096x128xf32>
    %c0_6 = arith.constant 0 : index
    %c0_7 = arith.constant 0 : index
    %22 = vector.load %arg4[%c0_6, %c0_7] : memref<8x128xf32, #tpu.memory_space<vmem>>, vector<8x128xf32>
    %23 = vector.shape_cast %21 : vector<4096x128xf32> to vector<512x8x128xf32>
    %cst_8 = arith.constant dense<0.000000e+00> : vector<8x128xf32>
    %24 = vector.multi_reduction <add>, %23, %cst_8 [0] : vector<512x8x128xf32> to vector<8x128xf32>
    %25 = arith.addf %22, %24 : vector<8x128xf32>
    %c0_9 = arith.constant 0 : index
    %c0_10 = arith.constant 0 : index
    %26 = vector.load %arg4[%c0_9, %c0_10] : memref<8x128xf32, #tpu.memory_space<vmem>>, vector<8x128xf32>
    tpu.vector_store %arg4[%c0_9, %c0_10], %25 {strides = array<i32>} : memref<8x128xf32, #tpu.memory_space<vmem>>, vector<8x128xf32>,
    return
  }
  func.func @transform_0(%arg0: i32, %arg1: i32) -> (i32, i32) {
    %c1_i32 = arith.constant 1 : i32
    %0 = arith.muli %arg0, %c1_i32 : i32
    %1 = arith.addi %0, %arg1 : i32
    %c1_i32_0 = arith.constant 1 : i32
    %2 = arith.minsi %1, %c1_i32_0 : i32
    %c0_i32 = arith.constant 0 : i32
    %c0_i32_1 = arith.constant 0 : i32
    return %2, %c0_i32 : i32, i32
  }
  func.func @transform_1(%arg0: i32, %arg1: i32) -> (i32, i32) {
    %c1_i32 = arith.constant 1 : i32
    %0 = arith.muli %arg0, %c1_i32 : i32
    %1 = arith.addi %0, %arg1 : i32
    %c1_i32_0 = arith.constant 1 : i32
    %2 = arith.minsi %1, %c1_i32_0 : i32
    %c0_i32 = arith.constant 0 : i32
    %c0_i32_1 = arith.constant 0 : i32
    return %2, %c0_i32 : i32, i32
  }
  func.func @transform_2(%arg0: i32, %arg1: i32) -> (i32, i32) {
    %c0_i32 = arith.constant 0 : i32
    %c0_i32_0 = arith.constant 0 : i32
    return %arg0, %c0_i32 : i32, i32
  }
}

</mosaic_0001>

<llo_original>
// kernel: tpu_custom_call.1
$region0: #{tpu_custom_call.1}
  #allocation0 [shape = 'u32[]', space=smem, size = 0x4, offset = 0x4, fixed_abs, tag = 'smem constant byte address 0x4 - core index']
  #allocation1 [shape = 'u32[72,128]{1,0:T(1,128)}', space=vmem, size = 0x9000, scoped, tag = 'internal scratch']
  %s0 = inlined_call_operand.hbm [shape: f32[8192,128], index: 0, kind: input, shape index: {}]
  %s1 = inlined_call_operand.hbm [shape: f32[8192,128], index: 1, kind: input, shape index: {}]
  %s2 = inlined_call_operand.hbm [shape: f32[16,128], index: 2, kind: output, shape index: {}]
  %s3 = sld [smem:[#allocation0]]
  $region53: #{tpu_custom_call.1} parent=0
    _
  %s5 = ssub.s32 1, %s3
  %s6 = scalar_select 0, %s5, %s3
  $region1: #{tpu_custom_call.1} parent=0
    #allocation2 [shape = 'u8[4194304]{0}', space=vmem, size = 0x400000, scoped, tag = 'input window, operand 0']
    #allocation3 [shape = 's32[2]{0}', space=sflag, size = 0x8, scoped, tag = 'scoped memory for tpu_custom_call.1']
    #allocation4 [shape = 's32[2]{0}', space=sflag, size = 0x8, scoped, tag = 'scoped memory for tpu_custom_call.1']
    #allocation5 [shape = 'u8[4194304]{0}', space=vmem, size = 0x400000, scoped, tag = 'input window, operand 1']
    #allocation6 [shape = 's32[2]{0}', space=sflag, size = 0x8, scoped, tag = 'scoped memory for tpu_custom_call.1']
    #allocation7 [shape = 'u8[8192]{0}', space=vmem, size = 0x2000, scoped, tag = 'output window, operand 0']
    %7 = vsyncpa [#allocation3], 0
    %s8 = scalar_lea.sflag [#allocation3], 1
    %9 = vsyncpa %s8, 0
    %10 = vsyncpa [#allocation6], 0
    %s11 = scalar_lea.sflag [#allocation6], 1
    %12 = vsyncpa %s11, 0
    %13 = vsyncpa [#allocation4], 0
    %s14 = scalar_lea.sflag [#allocation4], 1
    %15 = vsyncpa %s14, 0
    loop: start=0, step=1, limit=4
    $region2: #{tpu_custom_call.1} parent=1 // loop_pre_header
      _
    $region3: #{tpu_custom_call.1} parent=1 // loop_header
      %s17 = sphi 0, %s21
      %p18 = scmp.ge.s32.totalorder %s17, 4
      %s24 = sphi 0, %s36
      %s25 = sphi 0, %s32
      %s26 = sphi 0, %s24
      %s27 = sphi 0, %s25
      %s28 = sphi 0, %s26
      %s29 = sphi 0, %s27
      %s45 = sphi 0, %s47
      %s48 = sphi 0, %s45
      %s49 = sphi 0, %s48
      %s65 = sphi 0, %s49
      %s77 = sphi 0, %s79
      %s80 = sphi 0, %s77
      %s81 = sphi 0, %s80
      %s97 = sphi 0, %s81
      %s103 = sphi 0, %s105
      %s106 = sphi 0, %s103
      %s107 = sphi 0, %s106
      %s123 = sphi 0, %s107
    $region4: #{tpu_custom_call.1} parent=1 // loop_header_branch
      %20 = sbr.rel (%p18) target = $region8
    $region5: #{tpu_custom_call.1} parent=1 // loop_body
      %s22 = ssub.s32 %s17, 1
      %s23 = ssub.s32 %s17, 2
      %s30 = sadd.s32 1, %s25
      %p31 = scmp.ge.s32.totalorder %s30, 1
      %s32 = scalar_select %p31, 0, %s30
      %s33 = sadd.s32 1, %s24
      %s34 = scalar_select %p31, %s33, %s24
      %p35 = scmp.ge.s32.totalorder %s34, 2
      %s36 = scalar_select %p35, 0, %s34
      %s37 = sadd.s32 %s24, %s25
      %p38 = scmp.lt.s32.totalorder %s37, 1
      %s39 = scalar_select %p38, %s37, 1
      %s40 = sadd.s32 %s36, %s32
      %p41 = scmp.lt.s32.totalorder %s40, 1
      %s42 = scalar_select %p41, %s40, 1
      %s43 = ssub.s32 %s39, %s42
      %p44 = scmp.eq.s32.totalorder %s43, 0
      %s46 = sadd.s32 %s45, 1
      %s47 = scalar_select %p44, %s45, %s46
      %p50 = pneg %p44
      %p51 = scmp.eq.s32.totalorder %s17, 1
      %p52 = por %p50, %p51
      %p53 = scmp.ne.s32.totalorder %s45, %s48
      %p54 = scmp.eq.s32.totalorder %s17, 0
      %p55 = por %p53, %p54
      %p56 = scmp.ne.s32.totalorder %s45, %s48
      %p57 = scmp.eq.s32.totalorder %s22, 1
      %p58 = por %p56, %p57
      %p59 = scmp.ne.s32.totalorder %s48, %s49
      %p60 = scmp.eq.s32.totalorder %s22, 0
      %p61 = por %p59, %p60
      %p62 = scmp.ne.s32.totalorder %s48, %s49
      %p63 = scmp.eq.s32.totalorder %s23, 1
      %p64 = por %p62, %p63
      %p66 = scmp.ne.s32.totalorder %s49, %s65
      %p67 = scmp.eq.s32.totalorder %s23, 0
      %p68 = por %p66, %p67
      %s69 = sadd.s32 %s24, %s25
      %p70 = scmp.lt.s32.totalorder %s69, 1
      %s71 = scalar_select %p70, %s69, 1
      %s72 = sadd.s32 %s36, %s32
      %p73 = scmp.lt.s32.totalorder %s72, 1
      %s74 = scalar_select %p73, %s72, 1
      %s75 = ssub.s32 %s71, %s74
      %p76 = scmp.eq.s32.totalorder %s75, 0
      %s78 = sadd.s32 %s77, 1
      %s79 = scalar_select %p76, %s77, %s78
      %p82 = pneg %p76
      %p83 = scmp.eq.s32.totalorder %s17, 1
      %p84 = por %p82, %p83
      %p85 = scmp.ne.s32.totalorder %s77, %s80
      %p86 = scmp.eq.s32.totalorder %s17, 0
      %p87 = por %p85, %p86
      %p88 = scmp.ne.s32.totalorder %s77, %s80
      %p89 = scmp.eq.s32.totalorder %s22, 1
      %p90 = por %p88, %p89
      %p91 = scmp.ne.s32.totalorder %s80, %s81
      %p92 = scmp.eq.s32.totalorder %s22, 0
      %p93 = por %p91, %p92
      %p94 = scmp.ne.s32.totalorder %s80, %s81
      %p95 = scmp.eq.s32.totalorder %s23, 1
      %p96 = por %p94, %p95
      %p98 = scmp.ne.s32.totalorder %s81, %s97
      %p99 = scmp.eq.s32.totalorder %s23, 0
      %p100 = por %p98, %p99
      %s101 = ssub.s32 %s24, %s36
      %p102 = scmp.eq.s32.totalorder %s101, 0
      %s104 = sadd.s32 %s103, 1
      %s105 = scalar_select %p102, %s103, %s104
      %p108 = pneg %p102
      %p109 = scmp.eq.s32.totalorder %s17, 1
      %p110 = por %p108, %p109
      %p111 = scmp.ne.s32.totalorder %s103, %s106
      %p112 = scmp.eq.s32.totalorder %s17, 0
      %p113 = por %p111, %p112
      %p114 = scmp.ne.s32.totalorder %s103, %s106
      %p115 = scmp.eq.s32.totalorder %s22, 1
      %p116 = por %p114, %p115
      %p117 = scmp.ne.s32.totalorder %s106, %s107
      %p118 = scmp.eq.s32.totalorder %s22, 0
      %p119 = por %p117, %p118
      %p120 = scmp.ne.s32.totalorder %s106, %s107
      %p121 = scmp.eq.s32.totalorder %s23, 1
      %p122 = por %p120, %p121
      %p124 = scmp.ne.s32.totalorder %s107, %s123
      %p125 = scmp.eq.s32.totalorder %s23, 0
      %p126 = por %p124, %p125
      %p127 = scmp.le.s32.totalorder 1, %s17
      %p128 = scmp.lt.s32.totalorder %s17, 3
      %p129 = pnand %p127, %p128
      %p130 = pneg %p129
      // Predicated region
      $region9: #{tpu_custom_call.1} parent=5 // pred_check
        _
      $region10: #{tpu_custom_call.1} parent=5 // pred_check_branch
        %132 = sbr.rel (%p129) target = $region12
      $region11: #{tpu_custom_call.1} parent=5 // pred_region
        %s133 = ssub.s32 %s17, 1
      $region12: #{tpu_custom_call.1} parent=5 // pred_fallthru
        _
      %p134 = scmp.lt.s32.totalorder %s17, 2
      // Predicated region
      $region13: #{tpu_custom_call.1} parent=5 // pred_check
        %p135 = pneg %p134
      $region14: #{tpu_custom_call.1} parent=5 // pred_check_branch
        %137 = sbr.rel (%p135) target = $region16
      $region15: #{tpu_custom_call.1} parent=5 // pred_region
        // Predicated region
        $region17: #{tpu_custom_call.1} parent=15 // pred_check
          %p138 = pneg %p55
        $region18: #{tpu_custom_call.1} parent=15 // pred_check_branch
          %140 = sbr.rel (%p138) target = $region20
        $region19: #{tpu_custom_call.1} parent=15 // pred_region
          %s141 = sand.u32 %s45, 1
          %s142 = scalar_lea.sflag [#allocation3], %s141
          %s143 = sand.u32 %s45, 1
          %s144 = smul.addr %s143, 4096
          %s145 = scalar_lea.vmem [#allocation2], %s144
          %s146 = sadd.s32 %s24, %s25
          %p147 = scmp.lt.s32.totalorder %s146, 1
          %s148 = scalar_select %p147, %s146, 1
          %s149 = smul.u32 512, %s148
          %151 = vsyncadd %s142, 0
          %s152 = smul.addr %s149, 8
          %s153 = scalar_lea.hbm %s0, %s152
          %s154 = sshll.u32 %s153, 4
          %s155 = int_to_ptr.hbm [resolvable:$true] %s154
          %s156 = sshll.u32 %s145, 4
          %s157 = int_to_ptr.vmem [resolvable:$true] %s156
          %162 = dma.hbm_to_vmem [thread:$0]  %s155, 65536, %s157, %s142, 128, 128, 8
        $region20: #{tpu_custom_call.1} parent=15 // pred_fallthru
          _
        // Predicated region
        $region21: #{tpu_custom_call.1} parent=15 // pred_check
          %p163 = pneg %p87
        $region22: #{tpu_custom_call.1} parent=15 // pred_check_branch
          %165 = sbr.rel (%p163) target = $region24
        $region23: #{tpu_custom_call.1} parent=15 // pred_region
          %s166 = sand.u32 %s77, 1
          %s167 = scalar_lea.sflag [#allocation6], %s166
          %s168 = sand.u32 %s77, 1
          %s169 = smul.addr %s168, 4096
          %s170 = scalar_lea.vmem [#allocation5], %s169
          %s171 = sadd.s32 %s24, %s25
          %p172 = scmp.lt.s32.totalorder %s171, 1
          %s173 = scalar_select %p172, %s171, 1
          %s174 = smul.u32 512, %s173
          %176 = vsyncadd %s167, 0
          %s177 = smul.addr %s174, 8
          %s178 = scalar_lea.hbm %s1, %s177
          %s179 = sshll.u32 %s178, 4
          %s180 = int_to_ptr.hbm [resolvable:$true] %s179
          %s181 = sshll.u32 %s170, 4
          %s182 = int_to_ptr.vmem [resolvable:$true] %s181
          %187 = dma.hbm_to_vmem [thread:$0]  %s180, 65536, %s182, %s167, 128, 128, 8
        $region24: #{tpu_custom_call.1} parent=15 // pred_fallthru
          _
      $region16: #{tpu_custom_call.1} parent=5 // pred_fallthru
        _
      %p188 = scmp.le.s32.totalorder 1, %s17
      %p189 = scmp.lt.s32.totalorder %s17, 3
      %p190 = pnand %p188, %p189
      %p191 = pneg %p190
      // Predicated region
      $region25: #{tpu_custom_call.1} parent=5 // pred_check
        _
      $region26: #{tpu_custom_call.1} parent=5 // pred_check_branch
        %193 = sbr.rel (%p190) target = $region28
      $region27: #{tpu_custom_call.1} parent=5 // pred_region
        %s194 = ssub.s32 %s17, 1
        %s195 = sand.u32 %s48, 1
        %s196 = scalar_lea.sflag [#allocation3], %s195
        %s197 = sand.u32 %s48, 1
        %s198 = smul.addr %s197, 4096
        %s199 = scalar_lea.vmem [#allocation2], %s198
        // Predicated region
        $region29: #{tpu_custom_call.1} parent=27 // pred_check
          %p200 = pneg %p61
        $region30: #{tpu_custom_call.1} parent=27 // pred_check_branch
          %202 = sbr.rel (%p200) target = $region32
        $region31: #{tpu_custom_call.1} parent=27 // pred_region
          %204 = dma.done %s196, 65536
        $region32: #{tpu_custom_call.1} parent=27 // pred_fallthru
          _
        %s205 = sand.u32 %s80, 1
        %s206 = scalar_lea.sflag [#allocation6], %s205
        %s207 = sand.u32 %s80, 1
        %s208 = smul.addr %s207, 4096
        %s209 = scalar_lea.vmem [#allocation5], %s208
        // Predicated region
        $region33: #{tpu_custom_call.1} parent=27 // pred_check
          %p210 = pneg %p93
        $region34: #{tpu_custom_call.1} parent=27 // pred_check_branch
          %212 = sbr.rel (%p210) target = $region36
        $region35: #{tpu_custom_call.1} parent=27 // pred_region
          %214 = dma.done %s206, 65536
        $region36: #{tpu_custom_call.1} parent=27 // pred_fallthru
          _
        %s215 = sand.u32 %s48, 1
        %s216 = scalar_lea.sflag [#allocation3], %s215
        %s217 = sand.u32 %s48, 1
        %s218 = smul.addr %s217, 4096
        %s219 = scalar_lea.vmem [#allocation2], %s218
        %p220 = pneg %p61
        %p221 = pneg %p58
        %s222 = sand.u32 %s80, 1
        %s223 = scalar_lea.sflag [#allocation6], %s222
        %s224 = sand.u32 %s80, 1
        %s225 = smul.addr %s224, 4096
        %s226 = scalar_lea.vmem [#allocation5], %s225
        %p227 = pneg %p93
        %p228 = pneg %p90
        %p229 = pneg %p119
        %p230 = pneg %p116
        %s231 = sand.u32 %s106, 1
        %s232 = scalar_lea.sflag [#allocation4], %s231
        %s233 = sand.u32 %s106, 1
        %s234 = smul.addr %s233, 8
        %s235 = scalar_lea.vmem [#allocation7], %s234
        %s236 = sadd.s32 %s26, %s27
        %p237 = scmp.lt.s32.totalorder %s236, 1
        %s238 = scalar_select %p237, %s236, 1
        %s239 = smul.u32 512, %s238
        %s240 = sadd.s32 %s26, %s27
        %p241 = scmp.lt.s32.totalorder %s240, 1
        %s242 = scalar_select %p241, %s240, 1
        %s243 = smul.u32 512, %s242
        %p244 = scmp.eq.s32.totalorder %s27, 0
        // Predicated region
        $region37: #{tpu_custom_call.1} parent=27 // pred_check
          %p245 = pneg %p244
        $region38: #{tpu_custom_call.1} parent=27 // pred_check_branch
          %247 = sbr.rel (%p245) target = $region40
        $region39: #{tpu_custom_call.1} parent=27 // pred_region
          %248 = vst [vmem:[%s235] sm:$0xff] 0.0
        $region40: #{tpu_custom_call.1} parent=27 // pred_fallthru
          _
        %s249 = sadd.s32 %s26, %s27
        %s250 = smul.u32 %s249, 4096
        %v251 = vlaneseq
        %v252 = vshrl.u32 %v251, 7
        %v253 = vadd.s32 %v252, 8
        %v254 = vadd.s32 %v252, 16
        %v255 = vadd.s32 %v252, 24
        %v256 = vadd.s32 %v252, 32
        %v257 = vadd.s32 %v252, 40
        %v258 = vadd.s32 %v252, 48
        %v259 = vadd.s32 %v252, 56
        %v260 = vadd.s32 %v252, 64
        %v261 = vadd.s32 %v252, 72
        %v262 = vadd.s32 %v252, 80
        %v263 = vadd.s32 %v252, 88
        %v264 = vadd.s32 %v252, 96
        %v265 = vadd.s32 %v252, 104
        %v266 = vadd.s32 %v252, 112
        %v267 = vadd.s32 %v252, 120
        %v268 = vadd.s32 %v252, 128
        %v269 = vadd.s32 %v252, 136
        %v270 = vadd.s32 %v252, 144
        %v271 = vadd.s32 %v252, 152
        %v272 = vadd.s32 %v252, 160
        %v273 = vadd.s32 %v252, 168
        %v274 = vadd.s32 %v252, 176
        %v275 = vadd.s32 %v252, 184
        %v276 = vadd.s32 %v252, 192
        %v277 = vadd.s32 %v252, 200
        %v278 = vadd.s32 %v252, 208
        %v279 = vadd.s32 %v252, 216
        %v280 = vadd.s32 %v252, 224
        %v281 = vadd.s32 %v252, 232
        %v282 = vadd.s32 %v252, 240
        %v283 = vadd.s32 %v252, 248
        %v284 = vadd.s32 %v252, 256
        %v285 = vadd.s32 %v252, 264
        %v286 = vadd.s32 %v252, 272
        %v287 = vadd.s32 %v252, 280
        %v288 = vadd.s32 %v252, 288
        %v289 = vadd.s32 %v252, 296
        %v290 = vadd.s32 %v252, 304
        %v291 = vadd.s32 %v252, 312
        %v292 = vadd.s32 %v252, 320
        %v293 = vadd.s32 %v252, 328
        %v294 = vadd.s32 %v252, 336
        %v295 = vadd.s32 %v252, 344
        %v296 = vadd.s32 %v252, 352
        %v297 = vadd.s32 %v252, 360
        %v298 = vadd.s32 %v252, 368
        %v299 = vadd.s32 %v252, 376
        %v300 = vadd.s32 %v252, 384
        %v301 = vadd.s32 %v252, 392
        %v302 = vadd.s32 %v252, 400
        %v303 = vadd.s32 %v252, 408
        %v304 = vadd.s32 %v252, 416
        %v305 = vadd.s32 %v252, 424
        %v306 = vadd.s32 %v252, 432
        %v307 = vadd.s32 %v252, 440
        %v308 = vadd.s32 %v252, 448
        %v309 = vadd.s32 %v252, 456
        %v310 = vadd.s32 %v252, 464
        %v311 = vadd.s32 %v252, 472
        %v312 = vadd.s32 %v252, 480
        %v313 = vadd.s32 %v252, 488
        %v314 = vadd.s32 %v252, 496
        %v315 = vadd.s32 %v252, 504
        %v316 = vadd.s32 %v252, 512
        %v317 = vadd.s32 %v252, 520
        %v318 = vadd.s32 %v252, 528
        %v319 = vadd.s32 %v252, 536
        %v320 = vadd.s32 %v252, 544
        %v321 = vadd.s32 %v252, 552
        %v322 = vadd.s32 %v252, 560
        %v323 = vadd.s32 %v252, 568
        %v324 = vadd.s32 %v252, 576
        %v325 = vadd.s32 %v252, 584
        %v326 = vadd.s32 %v252, 592
        %v327 = vadd.s32 %v252, 600
        %v328 = vadd.s32 %v252, 608
        %v329 = vadd.s32 %v252, 616
        %v330 = vadd.s32 %v252, 624
        %v331 = vadd.s32 %v252, 632
        %v332 = vadd.s32 %v252, 640
        %v333 = vadd.s32 %v252, 648
        %v334 = vadd.s32 %v252, 656
        %v335 = vadd.s32 %v252, 664
        %v336 = vadd.s32 %v252, 672
        %v337 = vadd.s32 %v252, 680
        %v338 = vadd.s32 %v252, 688
        %v339 = vadd.s32 %v252, 696
        %v340 = vadd.s32 %v252, 704
        %v341 = vadd.s32 %v252, 712
        %v342 = vadd.s32 %v252, 720
        %v343 = vadd.s32 %v252, 728
        %v344 = vadd.s32 %v252, 736
        %v345 = vadd.s32 %v252, 744
        %v346 = vadd.s32 %v252, 752
        %v347 = vadd.s32 %v252, 760
        %v348 = vadd.s32 %v252, 768
        %v349 = vadd.s32 %v252, 776
        %v350 = vadd.s32 %v252, 784
        %v351 = vadd.s32 %v252, 792
        %v352 = vadd.s32 %v252, 800
        %v353 = vadd.s32 %v252, 808
        %v354 = vadd.s32 %v252, 816
        %v355 = vadd.s32 %v252, 824
        %v356 = vadd.s32 %v252, 832
        %v357 = vadd.s32 %v252, 840
        %v358 = vadd.s32 %v252, 848
        %v359 = vadd.s32 %v252, 856
        %v360 = vadd.s32 %v252, 864
        %v361 = vadd.s32 %v252, 872
        %v362 = vadd.s32 %v252, 880
        %v363 = vadd.s32 %v252, 888
        %v364 = vadd.s32 %v252, 896
        %v365 = vadd.s32 %v252, 904
        %v366 = vadd.s32 %v252, 912
        %v367 = vadd.s32 %v252, 920
        %v368 = vadd.s32 %v252, 928
        %v369 = vadd.s32 %v252, 936
        %v370 = vadd.s32 %v252, 944
        %v371 = vadd.s32 %v252, 952
        %v372 = vadd.s32 %v252, 960
        %v373 = vadd.s32 %v252, 968
        %v374 = vadd.s32 %v252, 976
        %v375 = vadd.s32 %v252, 984
        %v376 = vadd.s32 %v252, 992
        %v377 = vadd.s32 %v252, 1000
        %v378 = vadd.s32 %v252, 1008
        %v379 = vadd.s32 %v252, 1016
        %v380 = vadd.s32 %v252, 1024
        %v381 = vadd.s32 %v252, 1032
        %v382 = vadd.s32 %v252, 1040
        %v383 = vadd.s32 %v252, 1048
        %v384 = vadd.s32 %v252, 1056
        %v385 = vadd.s32 %v252, 1064
        %v386 = vadd.s32 %v252, 1072
        %v387 = vadd.s32 %v252, 1080
        %v388 = vadd.s32 %v252, 1088
        %v389 = vadd.s32 %v252, 1096
        %v390 = vadd.s32 %v252, 1104
        %v391 = vadd.s32 %v252, 1112
        %v392 = vadd.s32 %v252, 1120
        %v393 = vadd.s32 %v252, 1128
        %v394 = vadd.s32 %v252, 1136
        %v395 = vadd.s32 %v252, 1144
        %v396 = vadd.s32 %v252, 1152
        %v397 = vadd.s32 %v252, 1160
        %v398 = vadd.s32 %v252, 1168
        %v399 = vadd.s32 %v252, 1176
        %v400 = vadd.s32 %v252, 1184
        %v401 = vadd.s32 %v252, 1192
        %v402 = vadd.s32 %v252, 1200
        %v403 = vadd.s32 %v252, 1208
        %v404 = vadd.s32 %v252, 1216
        %v405 = vadd.s32 %v252, 1224
        %v406 = vadd.s32 %v252, 1232
        %v407 = vadd.s32 %v252, 1240
        %v408 = vadd.s32 %v252, 1248
        %v409 = vadd.s32 %v252, 1256
        %v410 = vadd.s32 %v252, 1264
        %v411 = vadd.s32 %v252, 1272
        %v412 = vadd.s32 %v252, 1280
        %v413 = vadd.s32 %v252, 1288
        %v414 = vadd.s32 %v252, 1296
        %v415 = vadd.s32 %v252, 1304
        %v416 = vadd.s32 %v252, 1312
        %v417 = vadd.s32 %v252, 1320
        %v418 = vadd.s32 %v252, 1328
        %v419 = vadd.s32 %v252, 1336
        %v420 = vadd.s32 %v252, 1344
        %v421 = vadd.s32 %v252, 1352
        %v422 = vadd.s32 %v252, 1360
        %v423 = vadd.s32 %v252, 1368
        %v424 = vadd.s32 %v252, 1376
        %v425 = vadd.s32 %v252, 1384
        %v426 = vadd.s32 %v252, 1392
        %v427 = vadd.s32 %v252, 1400
        %v428 = vadd.s32 %v252, 1408
        %v429 = vadd.s32 %v252, 1416
        %v430 = vadd.s32 %v252, 1424
        %v431 = vadd.s32 %v252, 1432
        %v432 = vadd.s32 %v252, 1440
        %v433 = vadd.s32 %v252, 1448
        %v434 = vadd.s32 %v252, 1456
        %v435 = vadd.s32 %v252, 1464
        %v436 = vadd.s32 %v252, 1472
        %v437 = vadd.s32 %v252, 1480
        %v438 = vadd.s32 %v252, 1488
        %v439 = vadd.s32 %v252, 1496
        %v440 = vadd.s32 %v252, 1504
        %v441 = vadd.s32 %v252, 1512
        %v442 = vadd.s32 %v252, 1520
        %v443 = vadd.s32 %v252, 1528
        %v444 = vadd.s32 %v252, 1536
        %v445 = vadd.s32 %v252, 1544
        %v446 = vadd.s32 %v252, 1552
        %v447 = vadd.s32 %v252, 1560
        %v448 = vadd.s32 %v252, 1568
        %v449 = vadd.s32 %v252, 1576
        %v450 = vadd.s32 %v252, 1584
        %v451 = vadd.s32 %v252, 1592
        %v452 = vadd.s32 %v252, 1600
        %v453 = vadd.s32 %v252, 1608
        %v454 = vadd.s32 %v252, 1616
        %v455 = vadd.s32 %v252, 1624
        %v456 = vadd.s32 %v252, 1632
        %v457 = vadd.s32 %v252, 1640
        %v458 = vadd.s32 %v252, 1648
        %v459 = vadd.s32 %v252, 1656
        %v460 = vadd.s32 %v252, 1664
        %v461 = vadd.s32 %v252, 1672
        %v462 = vadd.s32 %v252, 1680
        %v463 = vadd.s32 %v252, 1688
        %v464 = vadd.s32 %v252, 1696
        %v465 = vadd.s32 %v252, 1704
        %v466 = vadd.s32 %v252, 1712
        %v467 = vadd.s32 %v252, 1720
        %v468 = vadd.s32 %v252, 1728
        %v469 = vadd.s32 %v252, 1736
        %v470 = vadd.s32 %v252, 1744
        %v471 = vadd.s32 %v252, 1752
        %v472 = vadd.s32 %v252, 1760
        %v473 = vadd.s32 %v252, 1768
        %v474 = vadd.s32 %v252, 1776
        %v475 = vadd.s32 %v252, 1784
        %v476 = vadd.s32 %v252, 1792
        %v477 = vadd.s32 %v252, 1800
        %v478 = vadd.s32 %v252, 1808
        %v479 = vadd.s32 %v252, 1816
        %v480 = vadd.s32 %v252, 1824
        %v481 = vadd.s32 %v252, 1832
        %v482 = vadd.s32 %v252, 1840
        %v483 = vadd.s32 %v252, 1848
        %v484 = vadd.s32 %v252, 1856
        %v485 = vadd.s32 %v252, 1864
        %v486 = vadd.s32 %v252, 1872
        %v487 = vadd.s32 %v252, 1880
        %v488 = vadd.s32 %v252, 1888
        %v489 = vadd.s32 %v252, 1896
        %v490 = vadd.s32 %v252, 1904
        %v491 = vadd.s32 %v252, 1912
        %v492 = vadd.s32 %v252, 1920
        %v493 = vadd.s32 %v252, 1928
        %v494 = vadd.s32 %v252, 1936
        %v495 = vadd.s32 %v252, 1944
        %v496 = vadd.s32 %v252, 1952
        %v497 = vadd.s32 %v252, 1960
        %v498 = vadd.s32 %v252, 1968
        %v499 = vadd.s32 %v252, 1976
        %v500 = vadd.s32 %v252, 1984
        %v501 = vadd.s32 %v252, 1992
        %v502 = vadd.s32 %v252, 2000
        %v503 = vadd.s32 %v252, 2008
        %v504 = vadd.s32 %v252, 2016
        %v505 = vadd.s32 %v252, 2024
        %v506 = vadd.s32 %v252, 2032
        %v507 = vadd.s32 %v252, 2040
        %v508 = vadd.s32 %v252, 2048
        %v509 = vadd.s32 %v252, 2056
        %v510 = vadd.s32 %v252, 2064
        %v511 = vadd.s32 %v252, 2072
        %v512 = vadd.s32 %v252, 2080
        %v513 = vadd.s32 %v252, 2088
        %v514 = vadd.s32 %v252, 2096
        %v515 = vadd.s32 %v252, 2104
        %v516 = vadd.s32 %v252, 2112
        %v517 = vadd.s32 %v252, 2120
        %v518 = vadd.s32 %v252, 2128
        %v519 = vadd.s32 %v252, 2136
        %v520 = vadd.s32 %v252, 2144
        %v521 = vadd.s32 %v252, 2152
        %v522 = vadd.s32 %v252, 2160
        %v523 = vadd.s32 %v252, 2168
        %v524 = vadd.s32 %v252, 2176
        %v525 = vadd.s32 %v252, 2184
        %v526 = vadd.s32 %v252, 2192
        %v527 = vadd.s32 %v252, 2200
        %v528 = vadd.s32 %v252, 2208
        %v529 = vadd.s32 %v252, 2216
        %v530 = vadd.s32 %v252, 2224
        %v531 = vadd.s32 %v252, 2232
        %v532 = vadd.s32 %v252, 2240
        %v533 = vadd.s32 %v252, 2248
        %v534 = vadd.s32 %v252, 2256
        %v535 = vadd.s32 %v252, 2264
        %v536 = vadd.s32 %v252, 2272
        %v537 = vadd.s32 %v252, 2280
        %v538 = vadd.s32 %v252, 2288
        %v539 = vadd.s32 %v252, 2296
        %v540 = vadd.s32 %v252, 2304
        %v541 = vadd.s32 %v252, 2312
        %v542 = vadd.s32 %v252, 2320
        %v543 = vadd.s32 %v252, 2328
        %v544 = vadd.s32 %v252, 2336
        %v545 = vadd.s32 %v252, 2344
        %v546 = vadd.s32 %v252, 2352
        %v547 = vadd.s32 %v252, 2360
        %v548 = vadd.s32 %v252, 2368
        %v549 = vadd.s32 %v252, 2376
        %v550 = vadd.s32 %v252, 2384
        %v551 = vadd.s32 %v252, 2392
        %v552 = vadd.s32 %v252, 2400
        %v553 = vadd.s32 %v252, 2408
        %v554 = vadd.s32 %v252, 2416
        %v555 = vadd.s32 %v252, 2424
        %v556 = vadd.s32 %v252, 2432
        %v557 = vadd.s32 %v252, 2440
        %v558 = vadd.s32 %v252, 2448
        %v559 = vadd.s32 %v252, 2456
        %v560 = vadd.s32 %v252, 2464
        %v561 = vadd.s32 %v252, 2472
        %v562 = vadd.s32 %v252, 2480
        %v563 = vadd.s32 %v252, 2488
        %v564 = vadd.s32 %v252, 2496
        %v565 = vadd.s32 %v252, 2504
        %v566 = vadd.s32 %v252, 2512
        %v567 = vadd.s32 %v252, 2520
        %v568 = vadd.s32 %v252, 2528
        %v569 = vadd.s32 %v252, 2536
        %v570 = vadd.s32 %v252, 2544
        %v571 = vadd.s32 %v252, 2552
        %v572 = vadd.s32 %v252, 2560
        %v573 = vadd.s32 %v252, 2568
        %v574 = vadd.s32 %v252, 2576
        %v575 = vadd.s32 %v252, 2584
        %v576 = vadd.s32 %v252, 2592
        %v577 = vadd.s32 %v252, 2600
        %v578 = vadd.s32 %v252, 2608
        %v579 = vadd.s32 %v252, 2616
        %v580 = vadd.s32 %v252, 2624
        %v581 = vadd.s32 %v252, 2632
        %v582 = vadd.s32 %v252, 2640
        %v583 = vadd.s32 %v252, 2648
        %v584 = vadd.s32 %v252, 2656
        %v585 = vadd.s32 %v252, 2664
        %v586 = vadd.s32 %v252, 2672
        %v587 = vadd.s32 %v252, 2680
        %v588 = vadd.s32 %v252, 2688
        %v589 = vadd.s32 %v252, 2696
        %v590 = vadd.s32 %v252, 2704
        %v591 = vadd.s32 %v252, 2712
        %v592 = vadd.s32 %v252, 2720
        %v593 = vadd.s32 %v252, 2728
        %v594 = vadd.s32 %v252, 2736
        %v595 = vadd.s32 %v252, 2744
        %v596 = vadd.s32 %v252, 2752
        %v597 = vadd.s32 %v252, 2760
        %v598 = vadd.s32 %v252, 2768
        %v599 = vadd.s32 %v252, 2776
        %v600 = vadd.s32 %v252, 2784
        %v601 = vadd.s32 %v252, 2792
        %v602 = vadd.s32 %v252, 2800
        %v603 = vadd.s32 %v252, 2808
        %v604 = vadd.s32 %v252, 2816
        %v605 = vadd.s32 %v252, 2824
        %v606 = vadd.s32 %v252, 2832
        %v607 = vadd.s32 %v252, 2840
        %v608 = vadd.s32 %v252, 2848
        %v609 = vadd.s32 %v252, 2856
        %v610 = vadd.s32 %v252, 2864
        %v611 = vadd.s32 %v252, 2872
        %v612 = vadd.s32 %v252, 2880
        %v613 = vadd.s32 %v252, 2888
        %v614 = vadd.s32 %v252, 2896
        %v615 = vadd.s32 %v252, 2904
        %v616 = vadd.s32 %v252, 2912
        %v617 = vadd.s32 %v252, 2920
        %v618 = vadd.s32 %v252, 2928
        %v619 = vadd.s32 %v252, 2936
        %v620 = vadd.s32 %v252, 2944
        %v621 = vadd.s32 %v252, 2952
        %v622 = vadd.s32 %v252, 2960
        %v623 = vadd.s32 %v252, 2968
        %v624 = vadd.s32 %v252, 2976
        %v625 = vadd.s32 %v252, 2984
        %v626 = vadd.s32 %v252, 2992
        %v627 = vadd.s32 %v252, 3000
        %v628 = vadd.s32 %v252, 3008
        %v629 = vadd.s32 %v252, 3016
        %v630 = vadd.s32 %v252, 3024
        %v631 = vadd.s32 %v252, 3032
        %v632 = vadd.s32 %v252, 3040
        %v633 = vadd.s32 %v252, 3048
        %v634 = vadd.s32 %v252, 3056
        %v635 = vadd.s32 %v252, 3064
        %v636 = vadd.s32 %v252, 3072
        %v637 = vadd.s32 %v252, 3080
        %v638 = vadd.s32 %v252, 3088
        %v639 = vadd.s32 %v252, 3096
        %v640 = vadd.s32 %v252, 3104
        %v641 = vadd.s32 %v252, 3112
        %v642 = vadd.s32 %v252, 3120
        %v643 = vadd.s32 %v252, 3128
        %v644 = vadd.s32 %v252, 3136
        %v645 = vadd.s32 %v252, 3144
        %v646 = vadd.s32 %v252, 3152
        %v647 = vadd.s32 %v252, 3160
        %v648 = vadd.s32 %v252, 3168
        %v649 = vadd.s32 %v252, 3176
        %v650 = vadd.s32 %v252, 3184
        %v651 = vadd.s32 %v252, 3192
        %v652 = vadd.s32 %v252, 3200
        %v653 = vadd.s32 %v252, 3208
        %v654 = vadd.s32 %v252, 3216
        %v655 = vadd.s32 %v252, 3224
        %v656 = vadd.s32 %v252, 3232
        %v657 = vadd.s32 %v252, 3240
        %v658 = vadd.s32 %v252, 3248
        %v659 = vadd.s32 %v252, 3256
        %v660 = vadd.s32 %v252, 3264
        %v661 = vadd.s32 %v252, 3272
        %v662 = vadd.s32 %v252, 3280
        %v663 = vadd.s32 %v252, 3288
        %v664 = vadd.s32 %v252, 3296
        %v665 = vadd.s32 %v252, 3304
        %v666 = vadd.s32 %v252, 3312
        %v667 = vadd.s32 %v252, 3320
        %v668 = vadd.s32 %v252, 3328
        %v669 = vadd.s32 %v252, 3336
        %v670 = vadd.s32 %v252, 3344
        %v671 = vadd.s32 %v252, 3352
        %v672 = vadd.s32 %v252, 3360
        %v673 = vadd.s32 %v252, 3368
        %v674 = vadd.s32 %v252, 3376
        %v675 = vadd.s32 %v252, 3384
        %v676 = vadd.s32 %v252, 3392
        %v677 = vadd.s32 %v252, 3400
        %v678 = vadd.s32 %v252, 3408
        %v679 = vadd.s32 %v252, 3416
        %v680 = vadd.s32 %v252, 3424
        %v681 = vadd.s32 %v252, 3432
        %v682 = vadd.s32 %v252, 3440
        %v683 = vadd.s32 %v252, 3448
        %v684 = vadd.s32 %v252, 3456
        %v685 = vadd.s32 %v252, 3464
        %v686 = vadd.s32 %v252, 3472
        %v687 = vadd.s32 %v252, 3480
        %v688 = vadd.s32 %v252, 3488
        %v689 = vadd.s32 %v252, 3496
        %v690 = vadd.s32 %v252, 3504
        %v691 = vadd.s32 %v252, 3512
        %v692 = vadd.s32 %v252, 3520
        %v693 = vadd.s32 %v252, 3528
        %v694 = vadd.s32 %v252, 3536
        %v695 = vadd.s32 %v252, 3544
        %v696 = vadd.s32 %v252, 3552
        %v697 = vadd.s32 %v252, 3560
        %v698 = vadd.s32 %v252, 3568
        %v699 = vadd.s32 %v252, 3576
        %v700 = vadd.s32 %v252, 3584
        %v701 = vadd.s32 %v252, 3592
        %v702 = vadd.s32 %v252, 3600
        %v703 = vadd.s32 %v252, 3608
        %v704 = vadd.s32 %v252, 3616
        %v705 = vadd.s32 %v252, 3624
        %v706 = vadd.s32 %v252, 3632
        %v707 = vadd.s32 %v252, 3640
        %v708 = vadd.s32 %v252, 3648
        %v709 = vadd.s32 %v252, 3656
        %v710 = vadd.s32 %v252, 3664
        %v711 = vadd.s32 %v252, 3672
        %v712 = vadd.s32 %v252, 3680
        %v713 = vadd.s32 %v252, 3688
        %v714 = vadd.s32 %v252, 3696
        %v715 = vadd.s32 %v252, 3704
        %v716 = vadd.s32 %v252, 3712
        %v717 = vadd.s32 %v252, 3720
        %v718 = vadd.s32 %v252, 3728
        %v719 = vadd.s32 %v252, 3736
        %v720 = vadd.s32 %v252, 3744
        %v721 = vadd.s32 %v252, 3752
        %v722 = vadd.s32 %v252, 3760
        %v723 = vadd.s32 %v252, 3768
        %v724 = vadd.s32 %v252, 3776
        %v725 = vadd.s32 %v252, 3784
        %v726 = vadd.s32 %v252, 3792
        %v727 = vadd.s32 %v252, 3800
        %v728 = vadd.s32 %v252, 3808
        %v729 = vadd.s32 %v252, 3816
        %v730 = vadd.s32 %v252, 3824
        %v731 = vadd.s32 %v252, 3832
        %v732 = vadd.s32 %v252, 3840
        %v733 = vadd.s32 %v252, 3848
        %v734 = vadd.s32 %v252, 3856
        %v735 = vadd.s32 %v252, 3864
        %v736 = vadd.s32 %v252, 3872
        %v737 = vadd.s32 %v252, 3880
        %v738 = vadd.s32 %v252, 3888
        %v739 = vadd.s32 %v252, 3896
        %v740 = vadd.s32 %v252, 3904
        %v741 = vadd.s32 %v252, 3912
        %v742 = vadd.s32 %v252, 3920
        %v743 = vadd.s32 %v252, 3928
        %v744 = vadd.s32 %v252, 3936
        %v745 = vadd.s32 %v252, 3944
        %v746 = vadd.s32 %v252, 3952
        %v747 = vadd.s32 %v252, 3960
        %v748 = vadd.s32 %v252, 3968
        %v749 = vadd.s32 %v252, 3976
        %v750 = vadd.s32 %v252, 3984
        %v751 = vadd.s32 %v252, 3992
        %v752 = vadd.s32 %v252, 4000
        %v753 = vadd.s32 %v252, 4008
        %v754 = vadd.s32 %v252, 4016
        %v755 = vadd.s32 %v252, 4024
        %v756 = vadd.s32 %v252, 4032
        %v757 = vadd.s32 %v252, 4040
        %v758 = vadd.s32 %v252, 4048
        %v759 = vadd.s32 %v252, 4056
        %v760 = vadd.s32 %v252, 4064
        %v761 = vadd.s32 %v252, 4072
        %v762 = vadd.s32 %v252, 4080
        %v763 = vadd.s32 %v252, 4088
        %v764 = vstv %s250
        %v765 = vadd.s32 %v252, %v764
        %v766 = vadd.s32 %v253, %v764
        %v767 = vadd.s32 %v254, %v764
        %v768 = vadd.s32 %v255, %v764
        %v769 = vadd.s32 %v256, %v764
        %v770 = vadd.s32 %v257, %v764
        %v771 = vadd.s32 %v258, %v764
        %v772 = vadd.s32 %v259, %v764
        %v773 = vadd.s32 %v260, %v764
        %v774 = vadd.s32 %v261, %v764
        %v775 = vadd.s32 %v262, %v764
        %v776 = vadd.s32 %v263, %v764
        %v777 = vadd.s32 %v264, %v764
        %v778 = vadd.s32 %v265, %v764
        %v779 = vadd.s32 %v266, %v764
        %v780 = vadd.s32 %v267, %v764
        %v781 = vadd.s32 %v268, %v764
        %v782 = vadd.s32 %v269, %v764
        %v783 = vadd.s32 %v270, %v764
        %v784 = vadd.s32 %v271, %v764
        %v785 = vadd.s32 %v272, %v764
        %v786 = vadd.s32 %v273, %v764
        %v787 = vadd.s32 %v274, %v764
        %v788 = vadd.s32 %v275, %v764
        %v789 = vadd.s32 %v276, %v764
        %v790 = vadd.s32 %v277, %v764
        %v791 = vadd.s32 %v278, %v764
        %v792 = vadd.s32 %v279, %v764
        %v793 = vadd.s32 %v280, %v764
        %v794 = vadd.s32 %v281, %v764
        %v795 = vadd.s32 %v282, %v764
        %v796 = vadd.s32 %v283, %v764
        %v797 = vadd.s32 %v284, %v764
        %v798 = vadd.s32 %v285, %v764
        %v799 = vadd.s32 %v286, %v764
        %v800 = vadd.s32 %v287, %v764
        %v801 = vadd.s32 %v288, %v764
        %v802 = vadd.s32 %v289, %v764
        %v803 = vadd.s32 %v290, %v764
        %v804 = vadd.s32 %v291, %v764
        %v805 = vadd.s32 %v292, %v764
        %v806 = vadd.s32 %v293, %v764
        %v807 = vadd.s32 %v294, %v764
        %v808 = vadd.s32 %v295, %v764
        %v809 = vadd.s32 %v296, %v764
        %v810 = vadd.s32 %v297, %v764
        %v811 = vadd.s32 %v298, %v764
        %v812 = vadd.s32 %v299, %v764
        %v813 = vadd.s32 %v300, %v764
        %v814 = vadd.s32 %v301, %v764
        %v815 = vadd.s32 %v302, %v764
        %v816 = vadd.s32 %v303, %v764
        %v817 = vadd.s32 %v304, %v764
        %v818 = vadd.s32 %v305, %v764
        %v819 = vadd.s32 %v306, %v764
        %v820 = vadd.s32 %v307, %v764
        %v821 = vadd.s32 %v308, %v764
        %v822 = vadd.s32 %v309, %v764
        %v823 = vadd.s32 %v310, %v764
        %v824 = vadd.s32 %v311, %v764
        %v825 = vadd.s32 %v312, %v764
        %v826 = vadd.s32 %v313, %v764
        %v827 = vadd.s32 %v314, %v764
        %v828 = vadd.s32 %v315, %v764
        %v829 = vadd.s32 %v316, %v764
        %v830 = vadd.s32 %v317, %v764
        %v831 = vadd.s32 %v318, %v764
        %v832 = vadd.s32 %v319, %v764
        %v833 = vadd.s32 %v320, %v764
        %v834 = vadd.s32 %v321, %v764
        %v835 = vadd.s32 %v322, %v764
        %v836 = vadd.s32 %v323, %v764
        %v837 = vadd.s32 %v324, %v764
        %v838 = vadd.s32 %v325, %v764
        %v839 = vadd.s32 %v326, %v764
        %v840 = vadd.s32 %v327, %v764
        %v841 = vadd.s32 %v328, %v764
        %v842 = vadd.s32 %v329, %v764
        %v843 = vadd.s32 %v330, %v764
        %v844 = vadd.s32 %v331, %v764
        %v845 = vadd.s32 %v332, %v764
        %v846 = vadd.s32 %v333, %v764
        %v847 = vadd.s32 %v334, %v764
        %v848 = vadd.s32 %v335, %v764
        %v849 = vadd.s32 %v336, %v764
        %v850 = vadd.s32 %v337, %v764
        %v851 = vadd.s32 %v338, %v764
        %v852 = vadd.s32 %v339, %v764
        %v853 = vadd.s32 %v340, %v764
        %v854 = vadd.s32 %v341, %v764
        %v855 = vadd.s32 %v342, %v764
        %v856 = vadd.s32 %v343, %v764
        %v857 = vadd.s32 %v344, %v764
        %v858 = vadd.s32 %v345, %v764
        %v859 = vadd.s32 %v346, %v764
        %v860 = vadd.s32 %v347, %v764
        %v861 = vadd.s32 %v348, %v764
        %v862 = vadd.s32 %v349, %v764
        %v863 = vadd.s32 %v350, %v764
        %v864 = vadd.s32 %v351, %v764
        %v865 = vadd.s32 %v352, %v764
        %v866 = vadd.s32 %v353, %v764
        %v867 = vadd.s32 %v354, %v764
        %v868 = vadd.s32 %v355, %v764
        %v869 = vadd.s32 %v356, %v764
        %v870 = vadd.s32 %v357, %v764
        %v871 = vadd.s32 %v358, %v764
        %v872 = vadd.s32 %v359, %v764
        %v873 = vadd.s32 %v360, %v764
        %v874 = vadd.s32 %v361, %v764
        %v875 = vadd.s32 %v362, %v764
        %v876 = vadd.s32 %v363, %v764
        %v877 = vadd.s32 %v364, %v764
        %v878 = vadd.s32 %v365, %v764
        %v879 = vadd.s32 %v366, %v764
        %v880 = vadd.s32 %v367, %v764
        %v881 = vadd.s32 %v368, %v764
        %v882 = vadd.s32 %v369, %v764
        %v883 = vadd.s32 %v370, %v764
        %v884 = vadd.s32 %v371, %v764
        %v885 = vadd.s32 %v372, %v764
        %v886 = vadd.s32 %v373, %v764
        %v887 = vadd.s32 %v374, %v764
        %v888 = vadd.s32 %v375, %v764
        %v889 = vadd.s32 %v376, %v764
        %v890 = vadd.s32 %v377, %v764
        %v891 = vadd.s32 %v378, %v764
        %v892 = vadd.s32 %v379, %v764
        %v893 = vadd.s32 %v380, %v764
        %v894 = vadd.s32 %v381, %v764
        %v895 = vadd.s32 %v382, %v764
        %v896 = vadd.s32 %v383, %v764
        %v897 = vadd.s32 %v384, %v764
        %v898 = vadd.s32 %v385, %v764
        %v899 = vadd.s32 %v386, %v764
        %v900 = vadd.s32 %v387, %v764
        %v901 = vadd.s32 %v388, %v764
        %v902 = vadd.s32 %v389, %v764
        %v903 = vadd.s32 %v390, %v764
        %v904 = vadd.s32 %v391, %v764
        %v905 = vadd.s32 %v392, %v764
        %v906 = vadd.s32 %v393, %v764
        %v907 = vadd.s32 %v394, %v764
        %v908 = vadd.s32 %v395, %v764
        %v909 = vadd.s32 %v396, %v764
        %v910 = vadd.s32 %v397, %v764
        %v911 = vadd.s32 %v398, %v764
        %v912 = vadd.s32 %v399, %v764
        %v913 = vadd.s32 %v400, %v764
        %v914 = vadd.s32 %v401, %v764
        %v915 = vadd.s32 %v402, %v764
        %v916 = vadd.s32 %v403, %v764
        %v917 = vadd.s32 %v404, %v764
        %v918 = vadd.s32 %v405, %v764
        %v919 = vadd.s32 %v406, %v764
        %v920 = vadd.s32 %v407, %v764
        %v921 = vadd.s32 %v408, %v764
        %v922 = vadd.s32 %v409, %v764
        %v923 = vadd.s32 %v410, %v764
        %v924 = vadd.s32 %v411, %v764
        %v925 = vadd.s32 %v412, %v764
        %v926 = vadd.s32 %v413, %v764
        %v927 = vadd.s32 %v414, %v764
        %v928 = vadd.s32 %v415, %v764
        %v929 = vadd.s32 %v416, %v764
        %v930 = vadd.s32 %v417, %v764
        %v931 = vadd.s32 %v418, %v764
        %v932 = vadd.s32 %v419, %v764
        %v933 = vadd.s32 %v420, %v764
        %v934 = vadd.s32 %v421, %v764
        %v935 = vadd.s32 %v422, %v764
        %v936 = vadd.s32 %v423, %v764
        %v937 = vadd.s32 %v424, %v764
        %v938 = vadd.s32 %v425, %v764
        %v939 = vadd.s32 %v426, %v764
        %v940 = vadd.s32 %v427, %v764
        %v941 = vadd.s32 %v428, %v764
        %v942 = vadd.s32 %v429, %v764
        %v943 = vadd.s32 %v430, %v764
        %v944 = vadd.s32 %v431, %v764
        %v945 = vadd.s32 %v432, %v764
        %v946 = vadd.s32 %v433, %v764
        %v947 = vadd.s32 %v434, %v764
        %v948 = vadd.s32 %v435, %v764
        %v949 = vadd.s32 %v436, %v764
        %v950 = vadd.s32 %v437, %v764
        %v951 = vadd.s32 %v438, %v764
        %v952 = vadd.s32 %v439, %v764
        %v953 = vadd.s32 %v440, %v764
        %v954 = vadd.s32 %v441, %v764
        %v955 = vadd.s32 %v442, %v764
        %v956 = vadd.s32 %v443, %v764
        %v957 = vadd.s32 %v444, %v764
        %v958 = vadd.s32 %v445, %v764
        %v959 = vadd.s32 %v446, %v764
        %v960 = vadd.s32 %v447, %v764
        %v961 = vadd.s32 %v448, %v764
        %v962 = vadd.s32 %v449, %v764
        %v963 = vadd.s32 %v450, %v764
        %v964 = vadd.s32 %v451, %v764
        %v965 = vadd.s32 %v452, %v764
        %v966 = vadd.s32 %v453, %v764
        %v967 = vadd.s32 %v454, %v764
        %v968 = vadd.s32 %v455, %v764
        %v969 = vadd.s32 %v456, %v764
        %v970 = vadd.s32 %v457, %v764
        %v971 = vadd.s32 %v458, %v764
        %v972 = vadd.s32 %v459, %v764
        %v973 = vadd.s32 %v460, %v764
        %v974 = vadd.s32 %v461, %v764
        %v975 = vadd.s32 %v462, %v764
        %v976 = vadd.s32 %v463, %v764
        %v977 = vadd.s32 %v464, %v764
        %v978 = vadd.s32 %v465, %v764
        %v979 = vadd.s32 %v466, %v764
        %v980 = vadd.s32 %v467, %v764
        %v981 = vadd.s32 %v468, %v764
        %v982 = vadd.s32 %v469, %v764
        %v983 = vadd.s32 %v470, %v764
        %v984 = vadd.s32 %v471, %v764
        %v985 = vadd.s32 %v472, %v764
        %v986 = vadd.s32 %v473, %v764
        %v987 = vadd.s32 %v474, %v764
        %v988 = vadd.s32 %v475, %v764
        %v989 = vadd.s32 %v476, %v764
        %v990 = vadd.s32 %v477, %v764
        %v991 = vadd.s32 %v478, %v764
        %v992 = vadd.s32 %v479, %v764
        %v993 = vadd.s32 %v480, %v764
        %v994 = vadd.s32 %v481, %v764
        %v995 = vadd.s32 %v482, %v764
        %v996 = vadd.s32 %v483, %v764
        %v997 = vadd.s32 %v484, %v764
        %v998 = vadd.s32 %v485, %v764
        %v999 = vadd.s32 %v486, %v764
        %v1000 = vadd.s32 %v487, %v764
        %v1001 = vadd.s32 %v488, %v764
        %v1002 = vadd.s32 %v489, %v764
        %v1003 = vadd.s32 %v490, %v764
        %v1004 = vadd.s32 %v491, %v764
        %v1005 = vadd.s32 %v492, %v764
        %v1006 = vadd.s32 %v493, %v764
        %v1007 = vadd.s32 %v494, %v764
        %v1008 = vadd.s32 %v495, %v764
        %v1009 = vadd.s32 %v496, %v764
        %v1010 = vadd.s32 %v497, %v764
        %v1011 = vadd.s32 %v498, %v764
        %v1012 = vadd.s32 %v499, %v764
        %v1013 = vadd.s32 %v500, %v764
        %v1014 = vadd.s32 %v501, %v764
        %v1015 = vadd.s32 %v502, %v764
        %v1016 = vadd.s32 %v503, %v764
        %v1017 = vadd.s32 %v504, %v764
        %v1018 = vadd.s32 %v505, %v764
        %v1019 = vadd.s32 %v506, %v764
        %v1020 = vadd.s32 %v507, %v764
        %v1021 = vadd.s32 %v508, %v764
        %v1022 = vadd.s32 %v509, %v764
        %v1023 = vadd.s32 %v510, %v764
        %v1024 = vadd.s32 %v511, %v764
        %v1025 = vadd.s32 %v512, %v764
        %v1026 = vadd.s32 %v513, %v764
        %v1027 = vadd.s32 %v514, %v764
        %v1028 = vadd.s32 %v515, %v764
        %v1029 = vadd.s32 %v516, %v764
        %v1030 = vadd.s32 %v517, %v764
        %v1031 = vadd.s32 %v518, %v764
        %v1032 = vadd.s32 %v519, %v764
        %v1033 = vadd.s32 %v520, %v764
        %v1034 = vadd.s32 %v521, %v764
        %v1035 = vadd.s32 %v522, %v764
        %v1036 = vadd.s32 %v523, %v764
        %v1037 = vadd.s32 %v524, %v764
        %v1038 = vadd.s32 %v525, %v764
        %v1039 = vadd.s32 %v526, %v764
        %v1040 = vadd.s32 %v527, %v764
        %v1041 = vadd.s32 %v528, %v764
        %v1042 = vadd.s32 %v529, %v764
        %v1043 = vadd.s32 %v530, %v764
        %v1044 = vadd.s32 %v531, %v764
        %v1045 = vadd.s32 %v532, %v764
        %v1046 = vadd.s32 %v533, %v764
        %v1047 = vadd.s32 %v534, %v764
        %v1048 = vadd.s32 %v535, %v764
        %v1049 = vadd.s32 %v536, %v764
        %v1050 = vadd.s32 %v537, %v764
        %v1051 = vadd.s32 %v538, %v764
        %v1052 = vadd.s32 %v539, %v764
        %v1053 = vadd.s32 %v540, %v764
        %v1054 = vadd.s32 %v541, %v764
        %v1055 = vadd.s32 %v542, %v764
        %v1056 = vadd.s32 %v543, %v764
        %v1057 = vadd.s32 %v544, %v764
        %v1058 = vadd.s32 %v545, %v764
        %v1059 = vadd.s32 %v546, %v764
        %v1060 = vadd.s32 %v547, %v764
        %v1061 = vadd.s32 %v548, %v764
        %v1062 = vadd.s32 %v549, %v764
        %v1063 = vadd.s32 %v550, %v764
        %v1064 = vadd.s32 %v551, %v764
        %v1065 = vadd.s32 %v552, %v764
        %v1066 = vadd.s32 %v553, %v764
        %v1067 = vadd.s32 %v554, %v764
        %v1068 = vadd.s32 %v555, %v764
        %v1069 = vadd.s32 %v556, %v764
        %v1070 = vadd.s32 %v557, %v764
        %v1071 = vadd.s32 %v558, %v764
        %v1072 = vadd.s32 %v559, %v764
        %v1073 = vadd.s32 %v560, %v764
        %v1074 = vadd.s32 %v561, %v764
        %v1075 = vadd.s32 %v562, %v764
        %v1076 = vadd.s32 %v563, %v764
        %v1077 = vadd.s32 %v564, %v764
        %v1078 = vadd.s32 %v565, %v764
        %v1079 = vadd.s32 %v566, %v764
        %v1080 = vadd.s32 %v567, %v764
        %v1081 = vadd.s32 %v568, %v764
        %v1082 = vadd.s32 %v569, %v764
        %v1083 = vadd.s32 %v570, %v764
        %v1084 = vadd.s32 %v571, %v764
        %v1085 = vadd.s32 %v572, %v764
        %v1086 = vadd.s32 %v573, %v764
        %v1087 = vadd.s32 %v574, %v764
        %v1088 = vadd.s32 %v575, %v764
        %v1089 = vadd.s32 %v576, %v764
        %v1090 = vadd.s32 %v577, %v764
        %v1091 = vadd.s32 %v578, %v764
        %v1092 = vadd.s32 %v579, %v764
        %v1093 = vadd.s32 %v580, %v764
        %v1094 = vadd.s32 %v581, %v764
        %v1095 = vadd.s32 %v582, %v764
        %v1096 = vadd.s32 %v583, %v764
        %v1097 = vadd.s32 %v584, %v764
        %v1098 = vadd.s32 %v585, %v764
        %v1099 = vadd.s32 %v586, %v764
        %v1100 = vadd.s32 %v587, %v764
        %v1101 = vadd.s32 %v588, %v764
        %v1102 = vadd.s32 %v589, %v764
        %v1103 = vadd.s32 %v590, %v764
        %v1104 = vadd.s32 %v591, %v764
        %v1105 = vadd.s32 %v592, %v764
        %v1106 = vadd.s32 %v593, %v764
        %v1107 = vadd.s32 %v594, %v764
        %v1108 = vadd.s32 %v595, %v764
        %v1109 = vadd.s32 %v596, %v764
        %v1110 = vadd.s32 %v597, %v764
        %v1111 = vadd.s32 %v598, %v764
        %v1112 = vadd.s32 %v599, %v764
        %v1113 = vadd.s32 %v600, %v764
        %v1114 = vadd.s32 %v601, %v764
        %v1115 = vadd.s32 %v602, %v764
        %v1116 = vadd.s32 %v603, %v764
        %v1117 = vadd.s32 %v604, %v764
        %v1118 = vadd.s32 %v605, %v764
        %v1119 = vadd.s32 %v606, %v764
        %v1120 = vadd.s32 %v607, %v764
        %v1121 = vadd.s32 %v608, %v764
        %v1122 = vadd.s32 %v609, %v764
        %v1123 = vadd.s32 %v610, %v764
        %v1124 = vadd.s32 %v611, %v764
        %v1125 = vadd.s32 %v612, %v764
        %v1126 = vadd.s32 %v613, %v764
        %v1127 = vadd.s32 %v614, %v764
        %v1128 = vadd.s32 %v615, %v764
        %v1129 = vadd.s32 %v616, %v764
        %v1130 = vadd.s32 %v617, %v764
        %v1131 = vadd.s32 %v618, %v764
        %v1132 = vadd.s32 %v619, %v764
        %v1133 = vadd.s32 %v620, %v764
        %v1134 = vadd.s32 %v621, %v764
        %v1135 = vadd.s32 %v622, %v764
        %v1136 = vadd.s32 %v623, %v764
        %v1137 = vadd.s32 %v624, %v764
        %v1138 = vadd.s32 %v625, %v764
        %v1139 = vadd.s32 %v626, %v764
        %v1140 = vadd.s32 %v627, %v764
        %v1141 = vadd.s32 %v628, %v764
        %v1142 = vadd.s32 %v629, %v764
        %v1143 = vadd.s32 %v630, %v764
        %v1144 = vadd.s32 %v631, %v764
        %v1145 = vadd.s32 %v632, %v764
        %v1146 = vadd.s32 %v633, %v764
        %v1147 = vadd.s32 %v634, %v764
        %v1148 = vadd.s32 %v635, %v764
        %v1149 = vadd.s32 %v636, %v764
        %v1150 = vadd.s32 %v637, %v764
        %v1151 = vadd.s32 %v638, %v764
        %v1152 = vadd.s32 %v639, %v764
        %v1153 = vadd.s32 %v640, %v764
        %v1154 = vadd.s32 %v641, %v764
        %v1155 = vadd.s32 %v642, %v764
        %v1156 = vadd.s32 %v643, %v764
        %v1157 = vadd.s32 %v644, %v764
        %v1158 = vadd.s32 %v645, %v764
        %v1159 = vadd.s32 %v646, %v764
        %v1160 = vadd.s32 %v647, %v764
        %v1161 = vadd.s32 %v648, %v764
        %v1162 = vadd.s32 %v649, %v764
        %v1163 = vadd.s32 %v650, %v764
        %v1164 = vadd.s32 %v651, %v764
        %v1165 = vadd.s32 %v652, %v764
        %v1166 = vadd.s32 %v653, %v764
        %v1167 = vadd.s32 %v654, %v764
        %v1168 = vadd.s32 %v655, %v764
        %v1169 = vadd.s32 %v656, %v764
        %v1170 = vadd.s32 %v657, %v764
        %v1171 = vadd.s32 %v658, %v764
        %v1172 = vadd.s32 %v659, %v764
        %v1173 = vadd.s32 %v660, %v764
        %v1174 = vadd.s32 %v661, %v764
        %v1175 = vadd.s32 %v662, %v764
        %v1176 = vadd.s32 %v663, %v764
        %v1177 = vadd.s32 %v664, %v764
        %v1178 = vadd.s32 %v665, %v764
        %v1179 = vadd.s32 %v666, %v764
        %v1180 = vadd.s32 %v667, %v764
        %v1181 = vadd.s32 %v668, %v764
        %v1182 = vadd.s32 %v669, %v764
        %v1183 = vadd.s32 %v670, %v764
        %v1184 = vadd.s32 %v671, %v764
        %v1185 = vadd.s32 %v672, %v764
        %v1186 = vadd.s32 %v673, %v764
        %v1187 = vadd.s32 %v674, %v764
        %v1188 = vadd.s32 %v675, %v764
        %v1189 = vadd.s32 %v676, %v764
        %v1190 = vadd.s32 %v677, %v764
        %v1191 = vadd.s32 %v678, %v764
        %v1192 = vadd.s32 %v679, %v764
        %v1193 = vadd.s32 %v680, %v764
        %v1194 = vadd.s32 %v681, %v764
        %v1195 = vadd.s32 %v682, %v764
        %v1196 = vadd.s32 %v683, %v764
        %v1197 = vadd.s32 %v684, %v764
        %v1198 = vadd.s32 %v685, %v764
        %v1199 = vadd.s32 %v686, %v764
        %v1200 = vadd.s32 %v687, %v764
        %v1201 = vadd.s32 %v688, %v764
        %v1202 = vadd.s32 %v689, %v764
        %v1203 = vadd.s32 %v690, %v764
        %v1204 = vadd.s32 %v691, %v764
        %v1205 = vadd.s32 %v692, %v764
        %v1206 = vadd.s32 %v693, %v764
        %v1207 = vadd.s32 %v694, %v764
        %v1208 = vadd.s32 %v695, %v764
        %v1209 = vadd.s32 %v696, %v764
        %v1210 = vadd.s32 %v697, %v764
        %v1211 = vadd.s32 %v698, %v764
        %v1212 = vadd.s32 %v699, %v764
        %v1213 = vadd.s32 %v700, %v764
        %v1214 = vadd.s32 %v701, %v764
        %v1215 = vadd.s32 %v702, %v764
        %v1216 = vadd.s32 %v703, %v764
        %v1217 = vadd.s32 %v704, %v764
        %v1218 = vadd.s32 %v705, %v764
        %v1219 = vadd.s32 %v706, %v764
        %v1220 = vadd.s32 %v707, %v764
        %v1221 = vadd.s32 %v708, %v764
        %v1222 = vadd.s32 %v709, %v764
        %v1223 = vadd.s32 %v710, %v764
        %v1224 = vadd.s32 %v711, %v764
        %v1225 = vadd.s32 %v712, %v764
        %v1226 = vadd.s32 %v713, %v764
        %v1227 = vadd.s32 %v714, %v764
        %v1228 = vadd.s32 %v715, %v764
        %v1229 = vadd.s32 %v716, %v764
        %v1230 = vadd.s32 %v717, %v764
        %v1231 = vadd.s32 %v718, %v764
        %v1232 = vadd.s32 %v719, %v764
        %v1233 = vadd.s32 %v720, %v764
        %v1234 = vadd.s32 %v721, %v764
        %v1235 = vadd.s32 %v722, %v764
        %v1236 = vadd.s32 %v723, %v764
        %v1237 = vadd.s32 %v724, %v764
        %v1238 = vadd.s32 %v725, %v764
        %v1239 = vadd.s32 %v726, %v764
        %v1240 = vadd.s32 %v727, %v764
        %v1241 = vadd.s32 %v728, %v764
        %v1242 = vadd.s32 %v729, %v764
        %v1243 = vadd.s32 %v730, %v764
        %v1244 = vadd.s32 %v731, %v764
        %v1245 = vadd.s32 %v732, %v764
        %v1246 = vadd.s32 %v733, %v764
        %v1247 = vadd.s32 %v734, %v764
        %v1248 = vadd.s32 %v735, %v764
        %v1249 = vadd.s32 %v736, %v764
        %v1250 = vadd.s32 %v737, %v764
        %v1251 = vadd.s32 %v738, %v764
        %v1252 = vadd.s32 %v739, %v764
        %v1253 = vadd.s32 %v740, %v764
        %v1254 = vadd.s32 %v741, %v764
        %v1255 = vadd.s32 %v742, %v764
        %v1256 = vadd.s32 %v743, %v764
        %v1257 = vadd.s32 %v744, %v764
        %v1258 = vadd.s32 %v745, %v764
        %v1259 = vadd.s32 %v746, %v764
        %v1260 = vadd.s32 %v747, %v764
        %v1261 = vadd.s32 %v748, %v764
        %v1262 = vadd.s32 %v749, %v764
        %v1263 = vadd.s32 %v750, %v764
        %v1264 = vadd.s32 %v751, %v764
        %v1265 = vadd.s32 %v752, %v764
        %v1266 = vadd.s32 %v753, %v764
        %v1267 = vadd.s32 %v754, %v764
        %v1268 = vadd.s32 %v755, %v764
        %v1269 = vadd.s32 %v756, %v764
        %v1270 = vadd.s32 %v757, %v764
        %v1271 = vadd.s32 %v758, %v764
        %v1272 = vadd.s32 %v759, %v764
        %v1273 = vadd.s32 %v760, %v764
        %v1274 = vadd.s32 %v761, %v764
        %v1275 = vadd.s32 %v762, %v764
        %v1276 = vadd.s32 %v763, %v764
        %vm1277 = vcmp.lt.s32.totalorder %v765, 8192
        %vm1278 = vcmp.lt.s32.totalorder %v766, 8192
        %vm1279 = vcmp.lt.s32.totalorder %v767, 8192
        %vm1280 = vcmp.lt.s32.totalorder %v768, 8192
        %vm1281 = vcmp.lt.s32.totalorder %v769, 8192
        %vm1282 = vcmp.lt.s32.totalorder %v770, 8192
        %vm1283 = vcmp.lt.s32.totalorder %v771, 8192
        %vm1284 = vcmp.lt.s32.totalorder %v772, 8192
        %vm1285 = vcmp.lt.s32.totalorder %v773, 8192
        %vm1286 = vcmp.lt.s32.totalorder %v774, 8192
        %vm1287 = vcmp.lt.s32.totalorder %v775, 8192
        %vm1288 = vcmp.lt.s32.totalorder %v776, 8192
        %vm1289 = vcmp.lt.s32.totalorder %v777, 8192
        %vm1290 = vcmp.lt.s32.totalorder %v778, 8192
        %vm1291 = vcmp.lt.s32.totalorder %v779, 8192
        %vm1292 = vcmp.lt.s32.totalorder %v780, 8192
        %vm1293 = vcmp.lt.s32.totalorder %v781, 8192
        %vm1294 = vcmp.lt.s32.totalorder %v782, 8192
        %vm1295 = vcmp.lt.s32.totalorder %v783, 8192
        %vm1296 = vcmp.lt.s32.totalorder %v784, 8192
        %vm1297 = vcmp.lt.s32.totalorder %v785, 8192
        %vm1298 = vcmp.lt.s32.totalorder %v786, 8192
        %vm1299 = vcmp.lt.s32.totalorder %v787, 8192
        %vm1300 = vcmp.lt.s32.totalorder %v788, 8192
        %vm1301 = vcmp.lt.s32.totalorder %v789, 8192
        %vm1302 = vcmp.lt.s32.totalorder %v790, 8192
        %vm1303 = vcmp.lt.s32.totalorder %v791, 8192
        %vm1304 = vcmp.lt.s32.totalorder %v792, 8192
        %vm1305 = vcmp.lt.s32.totalorder %v793, 8192
        %vm1306 = vcmp.lt.s32.totalorder %v794, 8192
        %vm1307 = vcmp.lt.s32.totalorder %v795, 8192
        %vm1308 = vcmp.lt.s32.totalorder %v796, 8192
        %vm1309 = vcmp.lt.s32.totalorder %v797, 8192
        %vm1310 = vcmp.lt.s32.totalorder %v798, 8192
        %vm1311 = vcmp.lt.s32.totalorder %v799, 8192
        %vm1312 = vcmp.lt.s32.totalorder %v800, 8192
        %vm1313 = vcmp.lt.s32.totalorder %v801, 8192
        %vm1314 = vcmp.lt.s32.totalorder %v802, 8192
        %vm1315 = vcmp.lt.s32.totalorder %v803, 8192
        %vm1316 = vcmp.lt.s32.totalorder %v804, 8192
        %vm1317 = vcmp.lt.s32.totalorder %v805, 8192
        %vm1318 = vcmp.lt.s32.totalorder %v806, 8192
        %vm1319 = vcmp.lt.s32.totalorder %v807, 8192
        %vm1320 = vcmp.lt.s32.totalorder %v808, 8192
        %vm1321 = vcmp.lt.s32.totalorder %v809, 8192
        %vm1322 = vcmp.lt.s32.totalorder %v810, 8192
        %vm1323 = vcmp.lt.s32.totalorder %v811, 8192
        %vm1324 = vcmp.lt.s32.totalorder %v812, 8192
        %vm1325 = vcmp.lt.s32.totalorder %v813, 8192
        %vm1326 = vcmp.lt.s32.totalorder %v814, 8192
        %vm1327 = vcmp.lt.s32.totalorder %v815, 8192
        %vm1328 = vcmp.lt.s32.totalorder %v816, 8192
        %vm1329 = vcmp.lt.s32.totalorder %v817, 8192
        %vm1330 = vcmp.lt.s32.totalorder %v818, 8192
        %vm1331 = vcmp.lt.s32.totalorder %v819, 8192
        %vm1332 = vcmp.lt.s32.totalorder %v820, 8192
        %vm1333 = vcmp.lt.s32.totalorder %v821, 8192
        %vm1334 = vcmp.lt.s32.totalorder %v822, 8192
        %vm1335 = vcmp.lt.s32.totalorder %v823, 8192
        %vm1336 = vcmp.lt.s32.totalorder %v824, 8192
        %vm1337 = vcmp.lt.s32.totalorder %v825, 8192
        %vm1338 = vcmp.lt.s32.totalorder %v826, 8192
        %vm1339 = vcmp.lt.s32.totalorder %v827, 8192
        %vm1340 = vcmp.lt.s32.totalorder %v828, 8192
        %vm1341 = vcmp.lt.s32.totalorder %v829, 8192
        %vm1342 = vcmp.lt.s32.totalorder %v830, 8192
        %vm1343 = vcmp.lt.s32.totalorder %v831, 8192
        %vm1344 = vcmp.lt.s32.totalorder %v832, 8192
        %vm1345 = vcmp.lt.s32.totalorder %v833, 8192
        %vm1346 = vcmp.lt.s32.totalorder %v834, 8192
        %vm1347 = vcmp.lt.s32.totalorder %v835, 8192
        %vm1348 = vcmp.lt.s32.totalorder %v836, 8192
        %vm1349 = vcmp.lt.s32.totalorder %v837, 8192
        %vm1350 = vcmp.lt.s32.totalorder %v838, 8192
        %vm1351 = vcmp.lt.s32.totalorder %v839, 8192
        %vm1352 = vcmp.lt.s32.totalorder %v840, 8192
        %vm1353 = vcmp.lt.s32.totalorder %v841, 8192
        %vm1354 = vcmp.lt.s32.totalorder %v842, 8192
        %vm1355 = vcmp.lt.s32.totalorder %v843, 8192
        %vm1356 = vcmp.lt.s32.totalorder %v844, 8192
        %vm1357 = vcmp.lt.s32.totalorder %v845, 8192
        %vm1358 = vcmp.lt.s32.totalorder %v846, 8192
        %vm1359 = vcmp.lt.s32.totalorder %v847, 8192
        %vm1360 = vcmp.lt.s32.totalorder %v848, 8192
        %vm1361 = vcmp.lt.s32.totalorder %v849, 8192
        %vm1362 = vcmp.lt.s32.totalorder %v850, 8192
        %vm1363 = vcmp.lt.s32.totalorder %v851, 8192
        %vm1364 = vcmp.lt.s32.totalorder %v852, 8192
        %vm1365 = vcmp.lt.s32.totalorder %v853, 8192
        %vm1366 = vcmp.lt.s32.totalorder %v854, 8192
        %vm1367 = vcmp.lt.s32.totalorder %v855, 8192
        %vm1368 = vcmp.lt.s32.totalorder %v856, 8192
        %vm1369 = vcmp.lt.s32.totalorder %v857, 8192
        %vm1370 = vcmp.lt.s32.totalorder %v858, 8192
        %vm1371 = vcmp.lt.s32.totalorder %v859, 8192
        %vm1372 = vcmp.lt.s32.totalorder %v860, 8192
        %vm1373 = vcmp.lt.s32.totalorder %v861, 8192
        %vm1374 = vcmp.lt.s32.totalorder %v862, 8192
        %vm1375 = vcmp.lt.s32.totalorder %v863, 8192
        %vm1376 = vcmp.lt.s32.totalorder %v864, 8192
        %vm1377 = vcmp.lt.s32.totalorder %v865, 8192
        %vm1378 = vcmp.lt.s32.totalorder %v866, 8192
        %vm1379 = vcmp.lt.s32.totalorder %v867, 8192
        %vm1380 = vcmp.lt.s32.totalorder %v868, 8192
        %vm1381 = vcmp.lt.s32.totalorder %v869, 8192
        %vm1382 = vcmp.lt.s32.totalorder %v870, 8192
        %vm1383 = vcmp.lt.s32.totalorder %v871, 8192
        %vm1384 = vcmp.lt.s32.totalorder %v872, 8192
        %vm1385 = vcmp.lt.s32.totalorder %v873, 8192
        %vm1386 = vcmp.lt.s32.totalorder %v874, 8192
        %vm1387 = vcmp.lt.s32.totalorder %v875, 8192
        %vm1388 = vcmp.lt.s32.totalorder %v876, 8192
        %vm1389 = vcmp.lt.s32.totalorder %v877, 8192
        %vm1390 = vcmp.lt.s32.totalorder %v878, 8192
        %vm1391 = vcmp.lt.s32.totalorder %v879, 8192
        %vm1392 = vcmp.lt.s32.totalorder %v880, 8192
        %vm1393 = vcmp.lt.s32.totalorder %v881, 8192
        %vm1394 = vcmp.lt.s32.totalorder %v882, 8192
        %vm1395 = vcmp.lt.s32.totalorder %v883, 8192
        %vm1396 = vcmp.lt.s32.totalorder %v884, 8192
        %vm1397 = vcmp.lt.s32.totalorder %v885, 8192
        %vm1398 = vcmp.lt.s32.totalorder %v886, 8192
        %vm1399 = vcmp.lt.s32.totalorder %v887, 8192
        %vm1400 = vcmp.lt.s32.totalorder %v888, 8192
        %vm1401 = vcmp.lt.s32.totalorder %v889, 8192
        %vm1402 = vcmp.lt.s32.totalorder %v890, 8192
        %vm1403 = vcmp.lt.s32.totalorder %v891, 8192
        %vm1404 = vcmp.lt.s32.totalorder %v892, 8192
        %vm1405 = vcmp.lt.s32.totalorder %v893, 8192
        %vm1406 = vcmp.lt.s32.totalorder %v894, 8192
        %vm1407 = vcmp.lt.s32.totalorder %v895, 8192
        %vm1408 = vcmp.lt.s32.totalorder %v896, 8192
        %vm1409 = vcmp.lt.s32.totalorder %v897, 8192
        %vm1410 = vcmp.lt.s32.totalorder %v898, 8192
        %vm1411 = vcmp.lt.s32.totalorder %v899, 8192
        %vm1412 = vcmp.lt.s32.totalorder %v900, 8192
        %vm1413 = vcmp.lt.s32.totalorder %v901, 8192
        %vm1414 = vcmp.lt.s32.totalorder %v902, 8192
        %vm1415 = vcmp.lt.s32.totalorder %v903, 8192
        %vm1416 = vcmp.lt.s32.totalorder %v904, 8192
        %vm1417 = vcmp.lt.s32.totalorder %v905, 8192
        %vm1418 = vcmp.lt.s32.totalorder %v906, 8192
        %vm1419 = vcmp.lt.s32.totalorder %v907, 8192
        %vm1420 = vcmp.lt.s32.totalorder %v908, 8192
        %vm1421 = vcmp.lt.s32.totalorder %v909, 8192
        %vm1422 = vcmp.lt.s32.totalorder %v910, 8192
        %vm1423 = vcmp.lt.s32.totalorder %v911, 8192
        %vm1424 = vcmp.lt.s32.totalorder %v912, 8192
        %vm1425 = vcmp.lt.s32.totalorder %v913, 8192
        %vm1426 = vcmp.lt.s32.totalorder %v914, 8192
        %vm1427 = vcmp.lt.s32.totalorder %v915, 8192
        %vm1428 = vcmp.lt.s32.totalorder %v916, 8192
        %vm1429 = vcmp.lt.s32.totalorder %v917, 8192
        %vm1430 = vcmp.lt.s32.totalorder %v918, 8192
        %vm1431 = vcmp.lt.s32.totalorder %v919, 8192
        %vm1432 = vcmp.lt.s32.totalorder %v920, 8192
        %vm1433 = vcmp.lt.s32.totalorder %v921, 8192
        %vm1434 = vcmp.lt.s32.totalorder %v922, 8192
        %vm1435 = vcmp.lt.s32.totalorder %v923, 8192
        %vm1436 = vcmp.lt.s32.totalorder %v924, 8192
        %vm1437 = vcmp.lt.s32.totalorder %v925, 8192
        %vm1438 = vcmp.lt.s32.totalorder %v926, 8192
        %vm1439 = vcmp.lt.s32.totalorder %v927, 8192
        %vm1440 = vcmp.lt.s32.totalorder %v928, 8192
        %vm1441 = vcmp.lt.s32.totalorder %v929, 8192
        %vm1442 = vcmp.lt.s32.totalorder %v930, 8192
        %vm1443 = vcmp.lt.s32.totalorder %v931, 8192
        %vm1444 = vcmp.lt.s32.totalorder %v932, 8192
        %vm1445 = vcmp.lt.s32.totalorder %v933, 8192
        %vm1446 = vcmp.lt.s32.totalorder %v934, 8192
        %vm1447 = vcmp.lt.s32.totalorder %v935, 8192
        %vm1448 = vcmp.lt.s32.totalorder %v936, 8192
        %vm1449 = vcmp.lt.s32.totalorder %v937, 8192
        %vm1450 = vcmp.lt.s32.totalorder %v938, 8192
        %vm1451 = vcmp.lt.s32.totalorder %v939, 8192
        %vm1452 = vcmp.lt.s32.totalorder %v940, 8192
        %vm1453 = vcmp.lt.s32.totalorder %v941, 8192
        %vm1454 = vcmp.lt.s32.totalorder %v942, 8192
        %vm1455 = vcmp.lt.s32.totalorder %v943, 8192
        %vm1456 = vcmp.lt.s32.totalorder %v944, 8192
        %vm1457 = vcmp.lt.s32.totalorder %v945, 8192
        %vm1458 = vcmp.lt.s32.totalorder %v946, 8192
        %vm1459 = vcmp.lt.s32.totalorder %v947, 8192
        %vm1460 = vcmp.lt.s32.totalorder %v948, 8192
        %vm1461 = vcmp.lt.s32.totalorder %v949, 8192
        %vm1462 = vcmp.lt.s32.totalorder %v950, 8192
        %vm1463 = vcmp.lt.s32.totalorder %v951, 8192
        %vm1464 = vcmp.lt.s32.totalorder %v952, 8192
        %vm1465 = vcmp.lt.s32.totalorder %v953, 8192
        %vm1466 = vcmp.lt.s32.totalorder %v954, 8192
        %vm1467 = vcmp.lt.s32.totalorder %v955, 8192
        %vm1468 = vcmp.lt.s32.totalorder %v956, 8192
        %vm1469 = vcmp.lt.s32.totalorder %v957, 8192
        %vm1470 = vcmp.lt.s32.totalorder %v958, 8192
        %vm1471 = vcmp.lt.s32.totalorder %v959, 8192
        %vm1472 = vcmp.lt.s32.totalorder %v960, 8192
        %vm1473 = vcmp.lt.s32.totalorder %v961, 8192
        %vm1474 = vcmp.lt.s32.totalorder %v962, 8192
        %vm1475 = vcmp.lt.s32.totalorder %v963, 8192
        %vm1476 = vcmp.lt.s32.totalorder %v964, 8192
        %vm1477 = vcmp.lt.s32.totalorder %v965, 8192
        %vm1478 = vcmp.lt.s32.totalorder %v966, 8192
        %vm1479 = vcmp.lt.s32.totalorder %v967, 8192
        %vm1480 = vcmp.lt.s32.totalorder %v968, 8192
        %vm1481 = vcmp.lt.s32.totalorder %v969, 8192
        %vm1482 = vcmp.lt.s32.totalorder %v970, 8192
        %vm1483 = vcmp.lt.s32.totalorder %v971, 8192
        %vm1484 = vcmp.lt.s32.totalorder %v972, 8192
        %vm1485 = vcmp.lt.s32.totalorder %v973, 8192
        %vm1486 = vcmp.lt.s32.totalorder %v974, 8192
        %vm1487 = vcmp.lt.s32.totalorder %v975, 8192
        %vm1488 = vcmp.lt.s32.totalorder %v976, 8192
        %vm1489 = vcmp.lt.s32.totalorder %v977, 8192
        %vm1490 = vcmp.lt.s32.totalorder %v978, 8192
        %vm1491 = vcmp.lt.s32.totalorder %v979, 8192
        %vm1492 = vcmp.lt.s32.totalorder %v980, 8192
        %vm1493 = vcmp.lt.s32.totalorder %v981, 8192
        %vm1494 = vcmp.lt.s32.totalorder %v982, 8192
        %vm1495 = vcmp.lt.s32.totalorder %v983, 8192
        %vm1496 = vcmp.lt.s32.totalorder %v984, 8192
        %vm1497 = vcmp.lt.s32.totalorder %v985, 8192
        %vm1498 = vcmp.lt.s32.totalorder %v986, 8192
        %vm1499 = vcmp.lt.s32.totalorder %v987, 8192
        %vm1500 = vcmp.lt.s32.totalorder %v988, 8192
        %vm1501 = vcmp.lt.s32.totalorder %v989, 8192
        %vm1502 = vcmp.lt.s32.totalorder %v990, 8192
        %vm1503 = vcmp.lt.s32.totalorder %v991, 8192
        %vm1504 = vcmp.lt.s32.totalorder %v992, 8192
        %vm1505 = vcmp.lt.s32.totalorder %v993, 8192
        %vm1506 = vcmp.lt.s32.totalorder %v994, 8192
        %vm1507 = vcmp.lt.s32.totalorder %v995, 8192
        %vm1508 = vcmp.lt.s32.totalorder %v996, 8192
        %vm1509 = vcmp.lt.s32.totalorder %v997, 8192
        %vm1510 = vcmp.lt.s32.totalorder %v998, 8192
        %vm1511 = vcmp.lt.s32.totalorder %v999, 8192
        %vm1512 = vcmp.lt.s32.totalorder %v1000, 8192
        %vm1513 = vcmp.lt.s32.totalorder %v1001, 8192
        %vm1514 = vcmp.lt.s32.totalorder %v1002, 8192
        %vm1515 = vcmp.lt.s32.totalorder %v1003, 8192
        %vm1516 = vcmp.lt.s32.totalorder %v1004, 8192
        %vm1517 = vcmp.lt.s32.totalorder %v1005, 8192
        %vm1518 = vcmp.lt.s32.totalorder %v1006, 8192
        %vm1519 = vcmp.lt.s32.totalorder %v1007, 8192
        %vm1520 = vcmp.lt.s32.totalorder %v1008, 8192
        %vm1521 = vcmp.lt.s32.totalorder %v1009, 8192
        %vm1522 = vcmp.lt.s32.totalorder %v1010, 8192
        %vm1523 = vcmp.lt.s32.totalorder %v1011, 8192
        %vm1524 = vcmp.lt.s32.totalorder %v1012, 8192
        %vm1525 = vcmp.lt.s32.totalorder %v1013, 8192
        %vm1526 = vcmp.lt.s32.totalorder %v1014, 8192
        %vm1527 = vcmp.lt.s32.totalorder %v1015, 8192
        %vm1528 = vcmp.lt.s32.totalorder %v1016, 8192
        %vm1529 = vcmp.lt.s32.totalorder %v1017, 8192
        %vm1530 = vcmp.lt.s32.totalorder %v1018, 8192
        %vm1531 = vcmp.lt.s32.totalorder %v1019, 8192
        %vm1532 = vcmp.lt.s32.totalorder %v1020, 8192
        %vm1533 = vcmp.lt.s32.totalorder %v1021, 8192
        %vm1534 = vcmp.lt.s32.totalorder %v1022, 8192
        %vm1535 = vcmp.lt.s32.totalorder %v1023, 8192
        %vm1536 = vcmp.lt.s32.totalorder %v1024, 8192
        %vm1537 = vcmp.lt.s32.totalorder %v1025, 8192
        %vm1538 = vcmp.lt.s32.totalorder %v1026, 8192
        %vm1539 = vcmp.lt.s32.totalorder %v1027, 8192
        %vm1540 = vcmp.lt.s32.totalorder %v1028, 8192
        %vm1541 = vcmp.lt.s32.totalorder %v1029, 8192
        %vm1542 = vcmp.lt.s32.totalorder %v1030, 8192
        %vm1543 = vcmp.lt.s32.totalorder %v1031, 8192
        %vm1544 = vcmp.lt.s32.totalorder %v1032, 8192
        %vm1545 = vcmp.lt.s32.totalorder %v1033, 8192
        %vm1546 = vcmp.lt.s32.totalorder %v1034, 8192
        %vm1547 = vcmp.lt.s32.totalorder %v1035, 8192
        %vm1548 = vcmp.lt.s32.totalorder %v1036, 8192
        %vm1549 = vcmp.lt.s32.totalorder %v1037, 8192
        %vm1550 = vcmp.lt.s32.totalorder %v1038, 8192
        %vm1551 = vcmp.lt.s32.totalorder %v1039, 8192
        %vm1552 = vcmp.lt.s32.totalorder %v1040, 8192
        %vm1553 = vcmp.lt.s32.totalorder %v1041, 8192
        %vm1554 = vcmp.lt.s32.totalorder %v1042, 8192
        %vm1555 = vcmp.lt.s32.totalorder %v1043, 8192
        %vm1556 = vcmp.lt.s32.totalorder %v1044, 8192
        %vm1557 = vcmp.lt.s32.totalorder %v1045, 8192
        %vm1558 = vcmp.lt.s32.totalorder %v1046, 8192
        %vm1559 = vcmp.lt.s32.totalorder %v1047, 8192
        %vm1560 = vcmp.lt.s32.totalorder %v1048, 8192
        %vm1561 = vcmp.lt.s32.totalorder %v1049, 8192
        %vm1562 = vcmp.lt.s32.totalorder %v1050, 8192
        %vm1563 = vcmp.lt.s32.totalorder %v1051, 8192
        %vm1564 = vcmp.lt.s32.totalorder %v1052, 8192
        %vm1565 = vcmp.lt.s32.totalorder %v1053, 8192
        %vm1566 = vcmp.lt.s32.totalorder %v1054, 8192
        %vm1567 = vcmp.lt.s32.totalorder %v1055, 8192
        %vm1568 = vcmp.lt.s32.totalorder %v1056, 8192
        %vm1569 = vcmp.lt.s32.totalorder %v1057, 8192
        %vm1570 = vcmp.lt.s32.totalorder %v1058, 8192
        %vm1571 = vcmp.lt.s32.totalorder %v1059, 8192
        %vm1572 = vcmp.lt.s32.totalorder %v1060, 8192
        %vm1573 = vcmp.lt.s32.totalorder %v1061, 8192
        %vm1574 = vcmp.lt.s32.totalorder %v1062, 8192
        %vm1575 = vcmp.lt.s32.totalorder %v1063, 8192
        %vm1576 = vcmp.lt.s32.totalorder %v1064, 8192
        %vm1577 = vcmp.lt.s32.totalorder %v1065, 8192
        %vm1578 = vcmp.lt.s32.totalorder %v1066, 8192
        %vm1579 = vcmp.lt.s32.totalorder %v1067, 8192
        %vm1580 = vcmp.lt.s32.totalorder %v1068, 8192
        %vm1581 = vcmp.lt.s32.totalorder %v1069, 8192
        %vm1582 = vcmp.lt.s32.totalorder %v1070, 8192
        %vm1583 = vcmp.lt.s32.totalorder %v1071, 8192
        %vm1584 = vcmp.lt.s32.totalorder %v1072, 8192
        %vm1585 = vcmp.lt.s32.totalorder %v1073, 8192
        %vm1586 = vcmp.lt.s32.totalorder %v1074, 8192
        %vm1587 = vcmp.lt.s32.totalorder %v1075, 8192
        %vm1588 = vcmp.lt.s32.totalorder %v1076, 8192
        %vm1589 = vcmp.lt.s32.totalorder %v1077, 8192
        %vm1590 = vcmp.lt.s32.totalorder %v1078, 8192
        %vm1591 = vcmp.lt.s32.totalorder %v1079, 8192
        %vm1592 = vcmp.lt.s32.totalorder %v1080, 8192
        %vm1593 = vcmp.lt.s32.totalorder %v1081, 8192
        %vm1594 = vcmp.lt.s32.totalorder %v1082, 8192
        %vm1595 = vcmp.lt.s32.totalorder %v1083, 8192
        %vm1596 = vcmp.lt.s32.totalorder %v1084, 8192
        %vm1597 = vcmp.lt.s32.totalorder %v1085, 8192
        %vm1598 = vcmp.lt.s32.totalorder %v1086, 8192
        %vm1599 = vcmp.lt.s32.totalorder %v1087, 8192
        %vm1600 = vcmp.lt.s32.totalorder %v1088, 8192
        %vm1601 = vcmp.lt.s32.totalorder %v1089, 8192
        %vm1602 = vcmp.lt.s32.totalorder %v1090, 8192
        %vm1603 = vcmp.lt.s32.totalorder %v1091, 8192
        %vm1604 = vcmp.lt.s32.totalorder %v1092, 8192
        %vm1605 = vcmp.lt.s32.totalorder %v1093, 8192
        %vm1606 = vcmp.lt.s32.totalorder %v1094, 8192
        %vm1607 = vcmp.lt.s32.totalorder %v1095, 8192
        %vm1608 = vcmp.lt.s32.totalorder %v1096, 8192
        %vm1609 = vcmp.lt.s32.totalorder %v1097, 8192
        %vm1610 = vcmp.lt.s32.totalorder %v1098, 8192
        %vm1611 = vcmp.lt.s32.totalorder %v1099, 8192
        %vm1612 = vcmp.lt.s32.totalorder %v1100, 8192
        %vm1613 = vcmp.lt.s32.totalorder %v1101, 8192
        %vm1614 = vcmp.lt.s32.totalorder %v1102, 8192
        %vm1615 = vcmp.lt.s32.totalorder %v1103, 8192
        %vm1616 = vcmp.lt.s32.totalorder %v1104, 8192
        %vm1617 = vcmp.lt.s32.totalorder %v1105, 8192
        %vm1618 = vcmp.lt.s32.totalorder %v1106, 8192
        %vm1619 = vcmp.lt.s32.totalorder %v1107, 8192
        %vm1620 = vcmp.lt.s32.totalorder %v1108, 8192
        %vm1621 = vcmp.lt.s32.totalorder %v1109, 8192
        %vm1622 = vcmp.lt.s32.totalorder %v1110, 8192
        %vm1623 = vcmp.lt.s32.totalorder %v1111, 8192
        %vm1624 = vcmp.lt.s32.totalorder %v1112, 8192
        %vm1625 = vcmp.lt.s32.totalorder %v1113, 8192
        %vm1626 = vcmp.lt.s32.totalorder %v1114, 8192
        %vm1627 = vcmp.lt.s32.totalorder %v1115, 8192
        %vm1628 = vcmp.lt.s32.totalorder %v1116, 8192
        %vm1629 = vcmp.lt.s32.totalorder %v1117, 8192
        %vm1630 = vcmp.lt.s32.totalorder %v1118, 8192
        %vm1631 = vcmp.lt.s32.totalorder %v1119, 8192
        %vm1632 = vcmp.lt.s32.totalorder %v1120, 8192
        %vm1633 = vcmp.lt.s32.totalorder %v1121, 8192
        %vm1634 = vcmp.lt.s32.totalorder %v1122, 8192
        %vm1635 = vcmp.lt.s32.totalorder %v1123, 8192
        %vm1636 = vcmp.lt.s32.totalorder %v1124, 8192
        %vm1637 = vcmp.lt.s32.totalorder %v1125, 8192
        %vm1638 = vcmp.lt.s32.totalorder %v1126, 8192
        %vm1639 = vcmp.lt.s32.totalorder %v1127, 8192
        %vm1640 = vcmp.lt.s32.totalorder %v1128, 8192
        %vm1641 = vcmp.lt.s32.totalorder %v1129, 8192
        %vm1642 = vcmp.lt.s32.totalorder %v1130, 8192
        %vm1643 = vcmp.lt.s32.totalorder %v1131, 8192
        %vm1644 = vcmp.lt.s32.totalorder %v1132, 8192
        %vm1645 = vcmp.lt.s32.totalorder %v1133, 8192
        %vm1646 = vcmp.lt.s32.totalorder %v1134, 8192
        %vm1647 = vcmp.lt.s32.totalorder %v1135, 8192
        %vm1648 = vcmp.lt.s32.totalorder %v1136, 8192
        %vm1649 = vcmp.lt.s32.totalorder %v1137, 8192
        %vm1650 = vcmp.lt.s32.totalorder %v1138, 8192
        %vm1651 = vcmp.lt.s32.totalorder %v1139, 8192
        %vm1652 = vcmp.lt.s32.totalorder %v1140, 8192
        %vm1653 = vcmp.lt.s32.totalorder %v1141, 8192
        %vm1654 = vcmp.lt.s32.totalorder %v1142, 8192
        %vm1655 = vcmp.lt.s32.totalorder %v1143, 8192
        %vm1656 = vcmp.lt.s32.totalorder %v1144, 8192
        %vm1657 = vcmp.lt.s32.totalorder %v1145, 8192
        %vm1658 = vcmp.lt.s32.totalorder %v1146, 8192
        %vm1659 = vcmp.lt.s32.totalorder %v1147, 8192
        %vm1660 = vcmp.lt.s32.totalorder %v1148, 8192
        %vm1661 = vcmp.lt.s32.totalorder %v1149, 8192
        %vm1662 = vcmp.lt.s32.totalorder %v1150, 8192
        %vm1663 = vcmp.lt.s32.totalorder %v1151, 8192
        %vm1664 = vcmp.lt.s32.totalorder %v1152, 8192
        %vm1665 = vcmp.lt.s32.totalorder %v1153, 8192
        %vm1666 = vcmp.lt.s32.totalorder %v1154, 8192
        %vm1667 = vcmp.lt.s32.totalorder %v1155, 8192
        %vm1668 = vcmp.lt.s32.totalorder %v1156, 8192
        %vm1669 = vcmp.lt.s32.totalorder %v1157, 8192
        %vm1670 = vcmp.lt.s32.totalorder %v1158, 8192
        %vm1671 = vcmp.lt.s32.totalorder %v1159, 8192
        %vm1672 = vcmp.lt.s32.totalorder %v1160, 8192
        %vm1673 = vcmp.lt.s32.totalorder %v1161, 8192
        %vm1674 = vcmp.lt.s32.totalorder %v1162, 8192
        %vm1675 = vcmp.lt.s32.totalorder %v1163, 8192
        %vm1676 = vcmp.lt.s32.totalorder %v1164, 8192
        %vm1677 = vcmp.lt.s32.totalorder %v1165, 8192
        %vm1678 = vcmp.lt.s32.totalorder %v1166, 8192
        %vm1679 = vcmp.lt.s32.totalorder %v1167, 8192
        %vm1680 = vcmp.lt.s32.totalorder %v1168, 8192
        %vm1681 = vcmp.lt.s32.totalorder %v1169, 8192
        %vm1682 = vcmp.lt.s32.totalorder %v1170, 8192
        %vm1683 = vcmp.lt.s32.totalorder %v1171, 8192
        %vm1684 = vcmp.lt.s32.totalorder %v1172, 8192
        %vm1685 = vcmp.lt.s32.totalorder %v1173, 8192
        %vm1686 = vcmp.lt.s32.totalorder %v1174, 8192
        %vm1687 = vcmp.lt.s32.totalorder %v1175, 8192
        %vm1688 = vcmp.lt.s32.totalorder %v1176, 8192
        %vm1689 = vcmp.lt.s32.totalorder %v1177, 8192
        %vm1690 = vcmp.lt.s32.totalorder %v1178, 8192
        %vm1691 = vcmp.lt.s32.totalorder %v1179, 8192
        %vm1692 = vcmp.lt.s32.totalorder %v1180, 8192
        %vm1693 = vcmp.lt.s32.totalorder %v1181, 8192
        %vm1694 = vcmp.lt.s32.totalorder %v1182, 8192
        %vm1695 = vcmp.lt.s32.totalorder %v1183, 8192
        %vm1696 = vcmp.lt.s32.totalorder %v1184, 8192
        %vm1697 = vcmp.lt.s32.totalorder %v1185, 8192
        %vm1698 = vcmp.lt.s32.totalorder %v1186, 8192
        %vm1699 = vcmp.lt.s32.totalorder %v1187, 8192
        %vm1700 = vcmp.lt.s32.totalorder %v1188, 8192
        %vm1701 = vcmp.lt.s32.totalorder %v1189, 8192
        %vm1702 = vcmp.lt.s32.totalorder %v1190, 8192
        %vm1703 = vcmp.lt.s32.totalorder %v1191, 8192
        %vm1704 = vcmp.lt.s32.totalorder %v1192, 8192
        %vm1705 = vcmp.lt.s32.totalorder %v1193, 8192
        %vm1706 = vcmp.lt.s32.totalorder %v1194, 8192
        %vm1707 = vcmp.lt.s32.totalorder %v1195, 8192
        %vm1708 = vcmp.lt.s32.totalorder %v1196, 8192
        %vm1709 = vcmp.lt.s32.totalorder %v1197, 8192
        %vm1710 = vcmp.lt.s32.totalorder %v1198, 8192
        %vm1711 = vcmp.lt.s32.totalorder %v1199, 8192
        %vm1712 = vcmp.lt.s32.totalorder %v1200, 8192
        %vm1713 = vcmp.lt.s32.totalorder %v1201, 8192
        %vm1714 = vcmp.lt.s32.totalorder %v1202, 8192
        %vm1715 = vcmp.lt.s32.totalorder %v1203, 8192
        %vm1716 = vcmp.lt.s32.totalorder %v1204, 8192
        %vm1717 = vcmp.lt.s32.totalorder %v1205, 8192
        %vm1718 = vcmp.lt.s32.totalorder %v1206, 8192
        %vm1719 = vcmp.lt.s32.totalorder %v1207, 8192
        %vm1720 = vcmp.lt.s32.totalorder %v1208, 8192
        %vm1721 = vcmp.lt.s32.totalorder %v1209, 8192
        %vm1722 = vcmp.lt.s32.totalorder %v1210, 8192
        %vm1723 = vcmp.lt.s32.totalorder %v1211, 8192
        %vm1724 = vcmp.lt.s32.totalorder %v1212, 8192
        %vm1725 = vcmp.lt.s32.totalorder %v1213, 8192
        %vm1726 = vcmp.lt.s32.totalorder %v1214, 8192
        %vm1727 = vcmp.lt.s32.totalorder %v1215, 8192
        %vm1728 = vcmp.lt.s32.totalorder %v1216, 8192
        %vm1729 = vcmp.lt.s32.totalorder %v1217, 8192
        %vm1730 = vcmp.lt.s32.totalorder %v1218, 8192
        %vm1731 = vcmp.lt.s32.totalorder %v1219, 8192
        %vm1732 = vcmp.lt.s32.totalorder %v1220, 8192
        %vm1733 = vcmp.lt.s32.totalorder %v1221, 8192
        %vm1734 = vcmp.lt.s32.totalorder %v1222, 8192
        %vm1735 = vcmp.lt.s32.totalorder %v1223, 8192
        %vm1736 = vcmp.lt.s32.totalorder %v1224, 8192
        %vm1737 = vcmp.lt.s32.totalorder %v1225, 8192
        %vm1738 = vcmp.lt.s32.totalorder %v1226, 8192
        %vm1739 = vcmp.lt.s32.totalorder %v1227, 8192
        %vm1740 = vcmp.lt.s32.totalorder %v1228, 8192
        %vm1741 = vcmp.lt.s32.totalorder %v1229, 8192
        %vm1742 = vcmp.lt.s32.totalorder %v1230, 8192
        %vm1743 = vcmp.lt.s32.totalorder %v1231, 8192
        %vm1744 = vcmp.lt.s32.totalorder %v1232, 8192
        %vm1745 = vcmp.lt.s32.totalorder %v1233, 8192
        %vm1746 = vcmp.lt.s32.totalorder %v1234, 8192
        %vm1747 = vcmp.lt.s32.totalorder %v1235, 8192
        %vm1748 = vcmp.lt.s32.totalorder %v1236, 8192
        %vm1749 = vcmp.lt.s32.totalorder %v1237, 8192
        %vm1750 = vcmp.lt.s32.totalorder %v1238, 8192
        %vm1751 = vcmp.lt.s32.totalorder %v1239, 8192
        %vm1752 = vcmp.lt.s32.totalorder %v1240, 8192
        %vm1753 = vcmp.lt.s32.totalorder %v1241, 8192
        %vm1754 = vcmp.lt.s32.totalorder %v1242, 8192
        %vm1755 = vcmp.lt.s32.totalorder %v1243, 8192
        %vm1756 = vcmp.lt.s32.totalorder %v1244, 8192
        %vm1757 = vcmp.lt.s32.totalorder %v1245, 8192
        %vm1758 = vcmp.lt.s32.totalorder %v1246, 8192
        %vm1759 = vcmp.lt.s32.totalorder %v1247, 8192
        %vm1760 = vcmp.lt.s32.totalorder %v1248, 8192
        %vm1761 = vcmp.lt.s32.totalorder %v1249, 8192
        %vm1762 = vcmp.lt.s32.totalorder %v1250, 8192
        %vm1763 = vcmp.lt.s32.totalorder %v1251, 8192
        %vm1764 = vcmp.lt.s32.totalorder %v1252, 8192
        %vm1765 = vcmp.lt.s32.totalorder %v1253, 8192
        %vm1766 = vcmp.lt.s32.totalorder %v1254, 8192
        %vm1767 = vcmp.lt.s32.totalorder %v1255, 8192
        %vm1768 = vcmp.lt.s32.totalorder %v1256, 8192
        %vm1769 = vcmp.lt.s32.totalorder %v1257, 8192
        %vm1770 = vcmp.lt.s32.totalorder %v1258, 8192
        %vm1771 = vcmp.lt.s32.totalorder %v1259, 8192
        %vm1772 = vcmp.lt.s32.totalorder %v1260, 8192
        %vm1773 = vcmp.lt.s32.totalorder %v1261, 8192
        %vm1774 = vcmp.lt.s32.totalorder %v1262, 8192
        %vm1775 = vcmp.lt.s32.totalorder %v1263, 8192
        %vm1776 = vcmp.lt.s32.totalorder %v1264, 8192
        %vm1777 = vcmp.lt.s32.totalorder %v1265, 8192
        %vm1778 = vcmp.lt.s32.totalorder %v1266, 8192
        %vm1779 = vcmp.lt.s32.totalorder %v1267, 8192
        %vm1780 = vcmp.lt.s32.totalorder %v1268, 8192
        %vm1781 = vcmp.lt.s32.totalorder %v1269, 8192
        %vm1782 = vcmp.lt.s32.totalorder %v1270, 8192
        %vm1783 = vcmp.lt.s32.totalorder %v1271, 8192
        %vm1784 = vcmp.lt.s32.totalorder %v1272, 8192
        %vm1785 = vcmp.lt.s32.totalorder %v1273, 8192
        %vm1786 = vcmp.lt.s32.totalorder %v1274, 8192
        %vm1787 = vcmp.lt.s32.totalorder %v1275, 8192
        %vm1788 = vcmp.lt.s32.totalorder %v1276, 8192
        %v1789 = vld [vmem:[%s199] sm:$0xff]
        %v1790 = vld [vmem:[%s199 + $0x8] sm:$0xff]
        %v1791 = vld [vmem:[%s199 + $0x10] sm:$0xff]
        %v1792 = vld [vmem:[%s199 + $0x18] sm:$0xff]
        %v1793 = vld [vmem:[%s199 + $0x20] sm:$0xff]
        %v1794 = vld [vmem:[%s199 + $0x28] sm:$0xff]
        %v1795 = vld [vmem:[%s199 + $0x30] sm:$0xff]
        %v1796 = vld [vmem:[%s199 + $0x38] sm:$0xff]
        %v1797 = vld [vmem:[%s199 + $0x40] sm:$0xff]
        %v1798 = vld [vmem:[%s199 + $0x48] sm:$0xff]
        %v1799 = vld [vmem:[%s199 + $0x50] sm:$0xff]
        %v1800 = vld [vmem:[%s199 + $0x58] sm:$0xff]
        %v1801 = vld [vmem:[%s199 + $0x60] sm:$0xff]
        %v1802 = vld [vmem:[%s199 + $0x68] sm:$0xff]
        %v1803 = vld [vmem:[%s199 + $0x70] sm:$0xff]
        %v1804 = vld [vmem:[%s199 + $0x78] sm:$0xff]
        %v1805 = vld [vmem:[%s199 + $0x80] sm:$0xff]
        %v1806 = vld [vmem:[%s199 + $0x88] sm:$0xff]
        %v1807 = vld [vmem:[%s199 + $0x90] sm:$0xff]
        %v1808 = vld [vmem:[%s199 + $0x98] sm:$0xff]
        %v1809 = vld [vmem:[%s199 + $0xa0] sm:$0xff]
        %v1810 = vld [vmem:[%s199 + $0xa8] sm:$0xff]
        %v1811 = vld [vmem:[%s199 + $0xb0] sm:$0xff]
        %v1812 = vld [vmem:[%s199 + $0xb8] sm:$0xff]
        %v1813 = vld [vmem:[%s199 + $0xc0] sm:$0xff]
        %v1814 = vld [vmem:[%s199 + $0xc8] sm:$0xff]
        %v1815 = vld [vmem:[%s199 + $0xd0] sm:$0xff]
        %v1816 = vld [vmem:[%s199 + $0xd8] sm:$0xff]
        %v1817 = vld [vmem:[%s199 + $0xe0] sm:$0xff]
        %v1818 = vld [vmem:[%s199 + $0xe8] sm:$0xff]
        %v1819 = vld [vmem:[%s199 + $0xf0] sm:$0xff]
        %v1820 = vld [vmem:[%s199 + $0xf8] sm:$0xff]
        %v1821 = vld [vmem:[%s199 + $0x100] sm:$0xff]
        %v1822 = vld [vmem:[%s199 + $0x108] sm:$0xff]
        %v1823 = vld [vmem:[%s199 + $0x110] sm:$0xff]
        %v1824 = vld [vmem:[%s199 + $0x118] sm:$0xff]
        %v1825 = vld [vmem:[%s199 + $0x120] sm:$0xff]
        %v1826 = vld [vmem:[%s199 + $0x128] sm:$0xff]
        %v1827 = vld [vmem:[%s199 + $0x130] sm:$0xff]
        %v1828 = vld [vmem:[%s199 + $0x138] sm:$0xff]
        %v1829 = vld [vmem:[%s199 + $0x140] sm:$0xff]
        %v1830 = vld [vmem:[%s199 + $0x148] sm:$0xff]
        %v1831 = vld [vmem:[%s199 + $0x150] sm:$0xff]
        %v1832 = vld [vmem:[%s199 + $0x158] sm:$0xff]
        %v1833 = vld [vmem:[%s199 + $0x160] sm:$0xff]
        %v1834 = vld [vmem:[%s199 + $0x168] sm:$0xff]
        %v1835 = vld [vmem:[%s199 + $0x170] sm:$0xff]
        %v1836 = vld [vmem:[%s199 + $0x178] sm:$0xff]
        %v1837 = vld [vmem:[%s199 + $0x180] sm:$0xff]
        %v1838 = vld [vmem:[%s199 + $0x188] sm:$0xff]
        %v1839 = vld [vmem:[%s199 + $0x190] sm:$0xff]
        %v1840 = vld [vmem:[%s199 + $0x198] sm:$0xff]
        %v1841 = vld [vmem:[%s199 + $0x1a0] sm:$0xff]
        %v1842 = vld [vmem:[%s199 + $0x1a8] sm:$0xff]
        %v1843 = vld [vmem:[%s199 + $0x1b0] sm:$0xff]
        %v1844 = vld [vmem:[%s199 + $0x1b8] sm:$0xff]
        %v1845 = vld [vmem:[%s199 + $0x1c0] sm:$0xff]
        %v1846 = vld [vmem:[%s199 + $0x1c8] sm:$0xff]
        %v1847 = vld [vmem:[%s199 + $0x1d0] sm:$0xff]
        %v1848 = vld [vmem:[%s199 + $0x1d8] sm:$0xff]
        %v1849 = vld [vmem:[%s199 + $0x1e0] sm:$0xff]
        %v1850 = vld [vmem:[%s199 + $0x1e8] sm:$0xff]
        %v1851 = vld [vmem:[%s199 + $0x1f0] sm:$0xff]
        %v1852 = vld [vmem:[%s199 + $0x1f8] sm:$0xff]
        %v1853 = vld [vmem:[%s199 + $0x200] sm:$0xff]
        %v1854 = vld [vmem:[%s199 + $0x208] sm:$0xff]
        %v1855 = vld [vmem:[%s199 + $0x210] sm:$0xff]
        %v1856 = vld [vmem:[%s199 + $0x218] sm:$0xff]
        %v1857 = vld [vmem:[%s199 + $0x220] sm:$0xff]
        %v1858 = vld [vmem:[%s199 + $0x228] sm:$0xff]
        %v1859 = vld [vmem:[%s199 + $0x230] sm:$0xff]
        %v1860 = vld [vmem:[%s199 + $0x238] sm:$0xff]
        %v1861 = vld [vmem:[%s199 + $0x240] sm:$0xff]
        %v1862 = vld [vmem:[%s199 + $0x248] sm:$0xff]
        %v1863 = vld [vmem:[%s199 + $0x250] sm:$0xff]
        %v1864 = vld [vmem:[%s199 + $0x258] sm:$0xff]
        %v1865 = vld [vmem:[%s199 + $0x260] sm:$0xff]
        %v1866 = vld [vmem:[%s199 + $0x268] sm:$0xff]
        %v1867 = vld [vmem:[%s199 + $0x270] sm:$0xff]
        %v1868 = vld [vmem:[%s199 + $0x278] sm:$0xff]
        %v1869 = vld [vmem:[%s199 + $0x280] sm:$0xff]
        %v1870 = vld [vmem:[%s199 + $0x288] sm:$0xff]
        %v1871 = vld [vmem:[%s199 + $0x290] sm:$0xff]
        %v1872 = vld [vmem:[%s199 + $0x298] sm:$0xff]
        %v1873 = vld [vmem:[%s199 + $0x2a0] sm:$0xff]
        %v1874 = vld [vmem:[%s199 + $0x2a8] sm:$0xff]
        %v1875 = vld [vmem:[%s199 + $0x2b0] sm:$0xff]
        %v1876 = vld [vmem:[%s199 + $0x2b8] sm:$0xff]
        %v1877 = vld [vmem:[%s199 + $0x2c0] sm:$0xff]
        %v1878 = vld [vmem:[%s199 + $0x2c8] sm:$0xff]
        %v1879 = vld [vmem:[%s199 + $0x2d0] sm:$0xff]
        %v1880 = vld [vmem:[%s199 + $0x2d8] sm:$0xff]
        %v1881 = vld [vmem:[%s199 + $0x2e0] sm:$0xff]
        %v1882 = vld [vmem:[%s199 + $0x2e8] sm:$0xff]
        %v1883 = vld [vmem:[%s199 + $0x2f0] sm:$0xff]
        %v1884 = vld [vmem:[%s199 + $0x2f8] sm:$0xff]
        %v1885 = vld [vmem:[%s199 + $0x300] sm:$0xff]
        %v1886 = vld [vmem:[%s199 + $0x308] sm:$0xff]
        %v1887 = vld [vmem:[%s199 + $0x310] sm:$0xff]
        %v1888 = vld [vmem:[%s199 + $0x318] sm:$0xff]
        %v1889 = vld [vmem:[%s199 + $0x320] sm:$0xff]
        %v1890 = vld [vmem:[%s199 + $0x328] sm:$0xff]
        %v1891 = vld [vmem:[%s199 + $0x330] sm:$0xff]
        %v1892 = vld [vmem:[%s199 + $0x338] sm:$0xff]
        %v1893 = vld [vmem:[%s199 + $0x340] sm:$0xff]
        %v1894 = vld [vmem:[%s199 + $0x348] sm:$0xff]
        %v1895 = vld [vmem:[%s199 + $0x350] sm:$0xff]
        %v1896 = vld [vmem:[%s199 + $0x358] sm:$0xff]
        %v1897 = vld [vmem:[%s199 + $0x360] sm:$0xff]
        %v1898 = vld [vmem:[%s199 + $0x368] sm:$0xff]
        %v1899 = vld [vmem:[%s199 + $0x370] sm:$0xff]
        %v1900 = vld [vmem:[%s199 + $0x378] sm:$0xff]
        %v1901 = vld [vmem:[%s199 + $0x380] sm:$0xff]
        %v1902 = vld [vmem:[%s199 + $0x388] sm:$0xff]
        %v1903 = vld [vmem:[%s199 + $0x390] sm:$0xff]
        %v1904 = vld [vmem:[%s199 + $0x398] sm:$0xff]
        %v1905 = vld [vmem:[%s199 + $0x3a0] sm:$0xff]
        %v1906 = vld [vmem:[%s199 + $0x3a8] sm:$0xff]
        %v1907 = vld [vmem:[%s199 + $0x3b0] sm:$0xff]
        %v1908 = vld [vmem:[%s199 + $0x3b8] sm:$0xff]
        %v1909 = vld [vmem:[%s199 + $0x3c0] sm:$0xff]
        %v1910 = vld [vmem:[%s199 + $0x3c8] sm:$0xff]
        %v1911 = vld [vmem:[%s199 + $0x3d0] sm:$0xff]
        %v1912 = vld [vmem:[%s199 + $0x3d8] sm:$0xff]
        %v1913 = vld [vmem:[%s199 + $0x3e0] sm:$0xff]
        %v1914 = vld [vmem:[%s199 + $0x3e8] sm:$0xff]
        %v1915 = vld [vmem:[%s199 + $0x3f0] sm:$0xff]
        %v1916 = vld [vmem:[%s199 + $0x3f8] sm:$0xff]
        %v1917 = vld [vmem:[%s199 + $0x400] sm:$0xff]
        %v1918 = vld [vmem:[%s199 + $0x408] sm:$0xff]
        %v1919 = vld [vmem:[%s199 + $0x410] sm:$0xff]
        %v1920 = vld [vmem:[%s199 + $0x418] sm:$0xff]
        %v1921 = vld [vmem:[%s199 + $0x420] sm:$0xff]
        %v1922 = vld [vmem:[%s199 + $0x428] sm:$0xff]
        %v1923 = vld [vmem:[%s199 + $0x430] sm:$0xff]
        %v1924 = vld [vmem:[%s199 + $0x438] sm:$0xff]
        %v1925 = vld [vmem:[%s199 + $0x440] sm:$0xff]
        %v1926 = vld [vmem:[%s199 + $0x448] sm:$0xff]
        %v1927 = vld [vmem:[%s199 + $0x450] sm:$0xff]
        %v1928 = vld [vmem:[%s199 + $0x458] sm:$0xff]
        %v1929 = vld [vmem:[%s199 + $0x460] sm:$0xff]
        %v1930 = vld [vmem:[%s199 + $0x468] sm:$0xff]
        %v1931 = vld [vmem:[%s199 + $0x470] sm:$0xff]
        %v1932 = vld [vmem:[%s199 + $0x478] sm:$0xff]
        %v1933 = vld [vmem:[%s199 + $0x480] sm:$0xff]
        %v1934 = vld [vmem:[%s199 + $0x488] sm:$0xff]
        %v1935 = vld [vmem:[%s199 + $0x490] sm:$0xff]
        %v1936 = vld [vmem:[%s199 + $0x498] sm:$0xff]
        %v1937 = vld [vmem:[%s199 + $0x4a0] sm:$0xff]
        %v1938 = vld [vmem:[%s199 + $0x4a8] sm:$0xff]
        %v1939 = vld [vmem:[%s199 + $0x4b0] sm:$0xff]
        %v1940 = vld [vmem:[%s199 + $0x4b8] sm:$0xff]
        %v1941 = vld [vmem:[%s199 + $0x4c0] sm:$0xff]
        %v1942 = vld [vmem:[%s199 + $0x4c8] sm:$0xff]
        %v1943 = vld [vmem:[%s199 + $0x4d0] sm:$0xff]
        %v1944 = vld [vmem:[%s199 + $0x4d8] sm:$0xff]
        %v1945 = vld [vmem:[%s199 + $0x4e0] sm:$0xff]
        %v1946 = vld [vmem:[%s199 + $0x4e8] sm:$0xff]
        %v1947 = vld [vmem:[%s199 + $0x4f0] sm:$0xff]
        %v1948 = vld [vmem:[%s199 + $0x4f8] sm:$0xff]
        %v1949 = vld [vmem:[%s199 + $0x500] sm:$0xff]
        %v1950 = vld [vmem:[%s199 + $0x508] sm:$0xff]
        %v1951 = vld [vmem:[%s199 + $0x510] sm:$0xff]
        %v1952 = vld [vmem:[%s199 + $0x518] sm:$0xff]
        %v1953 = vld [vmem:[%s199 + $0x520] sm:$0xff]
        %v1954 = vld [vmem:[%s199 + $0x528] sm:$0xff]
        %v1955 = vld [vmem:[%s199 + $0x530] sm:$0xff]
        %v1956 = vld [vmem:[%s199 + $0x538] sm:$0xff]
        %v1957 = vld [vmem:[%s199 + $0x540] sm:$0xff]
        %v1958 = vld [vmem:[%s199 + $0x548] sm:$0xff]
        %v1959 = vld [vmem:[%s199 + $0x550] sm:$0xff]
        %v1960 = vld [vmem:[%s199 + $0x558] sm:$0xff]
        %v1961 = vld [vmem:[%s199 + $0x560] sm:$0xff]
        %v1962 = vld [vmem:[%s199 + $0x568] sm:$0xff]
        %v1963 = vld [vmem:[%s199 + $0x570] sm:$0xff]
        %v1964 = vld [vmem:[%s199 + $0x578] sm:$0xff]
        %v1965 = vld [vmem:[%s199 + $0x580] sm:$0xff]
        %v1966 = vld [vmem:[%s199 + $0x588] sm:$0xff]
        %v1967 = vld [vmem:[%s199 + $0x590] sm:$0xff]
        %v1968 = vld [vmem:[%s199 + $0x598] sm:$0xff]
        %v1969 = vld [vmem:[%s199 + $0x5a0] sm:$0xff]
        %v1970 = vld [vmem:[%s199 + $0x5a8] sm:$0xff]
        %v1971 = vld [vmem:[%s199 + $0x5b0] sm:$0xff]
        %v1972 = vld [vmem:[%s199 + $0x5b8] sm:$0xff]
        %v1973 = vld [vmem:[%s199 + $0x5c0] sm:$0xff]
        %v1974 = vld [vmem:[%s199 + $0x5c8] sm:$0xff]
        %v1975 = vld [vmem:[%s199 + $0x5d0] sm:$0xff]
        %v1976 = vld [vmem:[%s199 + $0x5d8] sm:$0xff]
        %v1977 = vld [vmem:[%s199 + $0x5e0] sm:$0xff]
        %v1978 = vld [vmem:[%s199 + $0x5e8] sm:$0xff]
        %v1979 = vld [vmem:[%s199 + $0x5f0] sm:$0xff]
        %v1980 = vld [vmem:[%s199 + $0x5f8] sm:$0xff]
        %v1981 = vld [vmem:[%s199 + $0x600] sm:$0xff]
        %v1982 = vld [vmem:[%s199 + $0x608] sm:$0xff]
        %v1983 = vld [vmem:[%s199 + $0x610] sm:$0xff]
        %v1984 = vld [vmem:[%s199 + $0x618] sm:$0xff]
        %v1985 = vld [vmem:[%s199 + $0x620] sm:$0xff]
        %v1986 = vld [vmem:[%s199 + $0x628] sm:$0xff]
        %v1987 = vld [vmem:[%s199 + $0x630] sm:$0xff]
        %v1988 = vld [vmem:[%s199 + $0x638] sm:$0xff]
        %v1989 = vld [vmem:[%s199 + $0x640] sm:$0xff]
        %v1990 = vld [vmem:[%s199 + $0x648] sm:$0xff]
        %v1991 = vld [vmem:[%s199 + $0x650] sm:$0xff]
        %v1992 = vld [vmem:[%s199 + $0x658] sm:$0xff]
        %v1993 = vld [vmem:[%s199 + $0x660] sm:$0xff]
        %v1994 = vld [vmem:[%s199 + $0x668] sm:$0xff]
        %v1995 = vld [vmem:[%s199 + $0x670] sm:$0xff]
        %v1996 = vld [vmem:[%s199 + $0x678] sm:$0xff]
        %v1997 = vld [vmem:[%s199 + $0x680] sm:$0xff]
        %v1998 = vld [vmem:[%s199 + $0x688] sm:$0xff]
        %v1999 = vld [vmem:[%s199 + $0x690] sm:$0xff]
        %v2000 = vld [vmem:[%s199 + $0x698] sm:$0xff]
        %v2001 = vld [vmem:[%s199 + $0x6a0] sm:$0xff]
        %v2002 = vld [vmem:[%s199 + $0x6a8] sm:$0xff]
        %v2003 = vld [vmem:[%s199 + $0x6b0] sm:$0xff]
        %v2004 = vld [vmem:[%s199 + $0x6b8] sm:$0xff]
        %v2005 = vld [vmem:[%s199 + $0x6c0] sm:$0xff]
        %v2006 = vld [vmem:[%s199 + $0x6c8] sm:$0xff]
        %v2007 = vld [vmem:[%s199 + $0x6d0] sm:$0xff]
        %v2008 = vld [vmem:[%s199 + $0x6d8] sm:$0xff]
        %v2009 = vld [vmem:[%s199 + $0x6e0] sm:$0xff]
        %v2010 = vld [vmem:[%s199 + $0x6e8] sm:$0xff]
        %v2011 = vld [vmem:[%s199 + $0x6f0] sm:$0xff]
        %v2012 = vld [vmem:[%s199 + $0x6f8] sm:$0xff]
        %v2013 = vld [vmem:[%s199 + $0x700] sm:$0xff]
        %v2014 = vld [vmem:[%s199 + $0x708] sm:$0xff]
        %v2015 = vld [vmem:[%s199 + $0x710] sm:$0xff]
        %v2016 = vld [vmem:[%s199 + $0x718] sm:$0xff]
        %v2017 = vld [vmem:[%s199 + $0x720] sm:$0xff]
        %v2018 = vld [vmem:[%s199 + $0x728] sm:$0xff]
        %v2019 = vld [vmem:[%s199 + $0x730] sm:$0xff]
        %v2020 = vld [vmem:[%s199 + $0x738] sm:$0xff]
        %v2021 = vld [vmem:[%s199 + $0x740] sm:$0xff]
        %v2022 = vld [vmem:[%s199 + $0x748] sm:$0xff]
        %v2023 = vld [vmem:[%s199 + $0x750] sm:$0xff]
        %v2024 = vld [vmem:[%s199 + $0x758] sm:$0xff]
        %v2025 = vld [vmem:[%s199 + $0x760] sm:$0xff]
        %v2026 = vld [vmem:[%s199 + $0x768] sm:$0xff]
        %v2027 = vld [vmem:[%s199 + $0x770] sm:$0xff]
        %v2028 = vld [vmem:[%s199 + $0x778] sm:$0xff]
        %v2029 = vld [vmem:[%s199 + $0x780] sm:$0xff]
        %v2030 = vld [vmem:[%s199 + $0x788] sm:$0xff]
        %v2031 = vld [vmem:[%s199 + $0x790] sm:$0xff]
        %v2032 = vld [vmem:[%s199 + $0x798] sm:$0xff]
        %v2033 = vld [vmem:[%s199 + $0x7a0] sm:$0xff]
        %v2034 = vld [vmem:[%s199 + $0x7a8] sm:$0xff]
        %v2035 = vld [vmem:[%s199 + $0x7b0] sm:$0xff]
        %v2036 = vld [vmem:[%s199 + $0x7b8] sm:$0xff]
        %v2037 = vld [vmem:[%s199 + $0x7c0] sm:$0xff]
        %v2038 = vld [vmem:[%s199 + $0x7c8] sm:$0xff]
        %v2039 = vld [vmem:[%s199 + $0x7d0] sm:$0xff]
        %v2040 = vld [vmem:[%s199 + $0x7d8] sm:$0xff]
        %v2041 = vld [vmem:[%s199 + $0x7e0] sm:$0xff]
        %v2042 = vld [vmem:[%s199 + $0x7e8] sm:$0xff]
        %v2043 = vld [vmem:[%s199 + $0x7f0] sm:$0xff]
        %v2044 = vld [vmem:[%s199 + $0x7f8] sm:$0xff]
        %v2045 = vld [vmem:[%s199 + $0x800] sm:$0xff]
        %v2046 = vld [vmem:[%s199 + $0x808] sm:$0xff]
        %v2047 = vld [vmem:[%s199 + $0x810] sm:$0xff]
        %v2048 = vld [vmem:[%s199 + $0x818] sm:$0xff]
        %v2049 = vld [vmem:[%s199 + $0x820] sm:$0xff]
        %v2050 = vld [vmem:[%s199 + $0x828] sm:$0xff]
        %v2051 = vld [vmem:[%s199 + $0x830] sm:$0xff]
        %v2052 = vld [vmem:[%s199 + $0x838] sm:$0xff]
        %v2053 = vld [vmem:[%s199 + $0x840] sm:$0xff]
        %v2054 = vld [vmem:[%s199 + $0x848] sm:$0xff]
        %v2055 = vld [vmem:[%s199 + $0x850] sm:$0xff]
        %v2056 = vld [vmem:[%s199 + $0x858] sm:$0xff]
        %v2057 = vld [vmem:[%s199 + $0x860] sm:$0xff]
        %v2058 = vld [vmem:[%s199 + $0x868] sm:$0xff]
        %v2059 = vld [vmem:[%s199 + $0x870] sm:$0xff]
        %v2060 = vld [vmem:[%s199 + $0x878] sm:$0xff]
        %v2061 = vld [vmem:[%s199 + $0x880] sm:$0xff]
        %v2062 = vld [vmem:[%s199 + $0x888] sm:$0xff]
        %v2063 = vld [vmem:[%s199 + $0x890] sm:$0xff]
        %v2064 = vld [vmem:[%s199 + $0x898] sm:$0xff]
        %v2065 = vld [vmem:[%s199 + $0x8a0] sm:$0xff]
        %v2066 = vld [vmem:[%s199 + $0x8a8] sm:$0xff]
        %v2067 = vld [vmem:[%s199 + $0x8b0] sm:$0xff]
        %v2068 = vld [vmem:[%s199 + $0x8b8] sm:$0xff]
        %v2069 = vld [vmem:[%s199 + $0x8c0] sm:$0xff]
        %v2070 = vld [vmem:[%s199 + $0x8c8] sm:$0xff]
        %v2071 = vld [vmem:[%s199 + $0x8d0] sm:$0xff]
        %v2072 = vld [vmem:[%s199 + $0x8d8] sm:$0xff]
        %v2073 = vld [vmem:[%s199 + $0x8e0] sm:$0xff]
        %v2074 = vld [vmem:[%s199 + $0x8e8] sm:$0xff]
        %v2075 = vld [vmem:[%s199 + $0x8f0] sm:$0xff]
        %v2076 = vld [vmem:[%s199 + $0x8f8] sm:$0xff]
        %v2077 = vld [vmem:[%s199 + $0x900] sm:$0xff]
        %v2078 = vld [vmem:[%s199 + $0x908] sm:$0xff]
        %v2079 = vld [vmem:[%s199 + $0x910] sm:$0xff]
        %v2080 = vld [vmem:[%s199 + $0x918] sm:$0xff]
        %v2081 = vld [vmem:[%s199 + $0x920] sm:$0xff]
        %v2082 = vld [vmem:[%s199 + $0x928] sm:$0xff]
        %v2083 = vld [vmem:[%s199 + $0x930] sm:$0xff]
        %v2084 = vld [vmem:[%s199 + $0x938] sm:$0xff]
        %v2085 = vld [vmem:[%s199 + $0x940] sm:$0xff]
        %v2086 = vld [vmem:[%s199 + $0x948] sm:$0xff]
        %v2087 = vld [vmem:[%s199 + $0x950] sm:$0xff]
        %v2088 = vld [vmem:[%s199 + $0x958] sm:$0xff]
        %v2089 = vld [vmem:[%s199 + $0x960] sm:$0xff]
        %v2090 = vld [vmem:[%s199 + $0x968] sm:$0xff]
        %v2091 = vld [vmem:[%s199 + $0x970] sm:$0xff]
        %v2092 = vld [vmem:[%s199 + $0x978] sm:$0xff]
        %v2093 = vld [vmem:[%s199 + $0x980] sm:$0xff]
        %v2094 = vld [vmem:[%s199 + $0x988] sm:$0xff]
        %v2095 = vld [vmem:[%s199 + $0x990] sm:$0xff]
        %v2096 = vld [vmem:[%s199 + $0x998] sm:$0xff]
        %v2097 = vld [vmem:[%s199 + $0x9a0] sm:$0xff]
        %v2098 = vld [vmem:[%s199 + $0x9a8] sm:$0xff]
        %v2099 = vld [vmem:[%s199 + $0x9b0] sm:$0xff]
        %v2100 = vld [vmem:[%s199 + $0x9b8] sm:$0xff]
        %v2101 = vld [vmem:[%s199 + $0x9c0] sm:$0xff]
        %v2102 = vld [vmem:[%s199 + $0x9c8] sm:$0xff]
        %v2103 = vld [vmem:[%s199 + $0x9d0] sm:$0xff]
        %v2104 = vld [vmem:[%s199 + $0x9d8] sm:$0xff]
        %v2105 = vld [vmem:[%s199 + $0x9e0] sm:$0xff]
        %v2106 = vld [vmem:[%s199 + $0x9e8] sm:$0xff]
        %v2107 = vld [vmem:[%s199 + $0x9f0] sm:$0xff]
        %v2108 = vld [vmem:[%s199 + $0x9f8] sm:$0xff]
        %v2109 = vld [vmem:[%s199 + $0xa00] sm:$0xff]
        %v2110 = vld [vmem:[%s199 + $0xa08] sm:$0xff]
        %v2111 = vld [vmem:[%s199 + $0xa10] sm:$0xff]
        %v2112 = vld [vmem:[%s199 + $0xa18] sm:$0xff]
        %v2113 = vld [vmem:[%s199 + $0xa20] sm:$0xff]
        %v2114 = vld [vmem:[%s199 + $0xa28] sm:$0xff]
        %v2115 = vld [vmem:[%s199 + $0xa30] sm:$0xff]
        %v2116 = vld [vmem:[%s199 + $0xa38] sm:$0xff]
        %v2117 = vld [vmem:[%s199 + $0xa40] sm:$0xff]
        %v2118 = vld [vmem:[%s199 + $0xa48] sm:$0xff]
        %v2119 = vld [vmem:[%s199 + $0xa50] sm:$0xff]
        %v2120 = vld [vmem:[%s199 + $0xa58] sm:$0xff]
        %v2121 = vld [vmem:[%s199 + $0xa60] sm:$0xff]
        %v2122 = vld [vmem:[%s199 + $0xa68] sm:$0xff]
        %v2123 = vld [vmem:[%s199 + $0xa70] sm:$0xff]
        %v2124 = vld [vmem:[%s199 + $0xa78] sm:$0xff]
        %v2125 = vld [vmem:[%s199 + $0xa80] sm:$0xff]
        %v2126 = vld [vmem:[%s199 + $0xa88] sm:$0xff]
        %v2127 = vld [vmem:[%s199 + $0xa90] sm:$0xff]
        %v2128 = vld [vmem:[%s199 + $0xa98] sm:$0xff]
        %v2129 = vld [vmem:[%s199 + $0xaa0] sm:$0xff]
        %v2130 = vld [vmem:[%s199 + $0xaa8] sm:$0xff]
        %v2131 = vld [vmem:[%s199 + $0xab0] sm:$0xff]
        %v2132 = vld [vmem:[%s199 + $0xab8] sm:$0xff]
        %v2133 = vld [vmem:[%s199 + $0xac0] sm:$0xff]
        %v2134 = vld [vmem:[%s199 + $0xac8] sm:$0xff]
        %v2135 = vld [vmem:[%s199 + $0xad0] sm:$0xff]
        %v2136 = vld [vmem:[%s199 + $0xad8] sm:$0xff]
        %v2137 = vld [vmem:[%s199 + $0xae0] sm:$0xff]
        %v2138 = vld [vmem:[%s199 + $0xae8] sm:$0xff]
        %v2139 = vld [vmem:[%s199 + $0xaf0] sm:$0xff]
        %v2140 = vld [vmem:[%s199 + $0xaf8] sm:$0xff]
        %v2141 = vld [vmem:[%s199 + $0xb00] sm:$0xff]
        %v2142 = vld [vmem:[%s199 + $0xb08] sm:$0xff]
        %v2143 = vld [vmem:[%s199 + $0xb10] sm:$0xff]
        %v2144 = vld [vmem:[%s199 + $0xb18] sm:$0xff]
        %v2145 = vld [vmem:[%s199 + $0xb20] sm:$0xff]
        %v2146 = vld [vmem:[%s199 + $0xb28] sm:$0xff]
        %v2147 = vld [vmem:[%s199 + $0xb30] sm:$0xff]
        %v2148 = vld [vmem:[%s199 + $0xb38] sm:$0xff]
        %v2149 = vld [vmem:[%s199 + $0xb40] sm:$0xff]
        %v2150 = vld [vmem:[%s199 + $0xb48] sm:$0xff]
        %v2151 = vld [vmem:[%s199 + $0xb50] sm:$0xff]
        %v2152 = vld [vmem:[%s199 + $0xb58] sm:$0xff]
        %v2153 = vld [vmem:[%s199 + $0xb60] sm:$0xff]
        %v2154 = vld [vmem:[%s199 + $0xb68] sm:$0xff]
        %v2155 = vld [vmem:[%s199 + $0xb70] sm:$0xff]
        %v2156 = vld [vmem:[%s199 + $0xb78] sm:$0xff]
        %v2157 = vld [vmem:[%s199 + $0xb80] sm:$0xff]
        %v2158 = vld [vmem:[%s199 + $0xb88] sm:$0xff]
        %v2159 = vld [vmem:[%s199 + $0xb90] sm:$0xff]
        %v2160 = vld [vmem:[%s199 + $0xb98] sm:$0xff]
        %v2161 = vld [vmem:[%s199 + $0xba0] sm:$0xff]
        %v2162 = vld [vmem:[%s199 + $0xba8] sm:$0xff]
        %v2163 = vld [vmem:[%s199 + $0xbb0] sm:$0xff]
        %v2164 = vld [vmem:[%s199 + $0xbb8] sm:$0xff]
        %v2165 = vld [vmem:[%s199 + $0xbc0] sm:$0xff]
        %v2166 = vld [vmem:[%s199 + $0xbc8] sm:$0xff]
        %v2167 = vld [vmem:[%s199 + $0xbd0] sm:$0xff]
        %v2168 = vld [vmem:[%s199 + $0xbd8] sm:$0xff]
        %v2169 = vld [vmem:[%s199 + $0xbe0] sm:$0xff]
        %v2170 = vld [vmem:[%s199 + $0xbe8] sm:$0xff]
        %v2171 = vld [vmem:[%s199 + $0xbf0] sm:$0xff]
        %v2172 = vld [vmem:[%s199 + $0xbf8] sm:$0xff]
        %v2173 = vld [vmem:[%s199 + $0xc00] sm:$0xff]
        %v2174 = vld [vmem:[%s199 + $0xc08] sm:$0xff]
        %v2175 = vld [vmem:[%s199 + $0xc10] sm:$0xff]
        %v2176 = vld [vmem:[%s199 + $0xc18] sm:$0xff]
        %v2177 = vld [vmem:[%s199 + $0xc20] sm:$0xff]
        %v2178 = vld [vmem:[%s199 + $0xc28] sm:$0xff]
        %v2179 = vld [vmem:[%s199 + $0xc30] sm:$0xff]
        %v2180 = vld [vmem:[%s199 + $0xc38] sm:$0xff]
        %v2181 = vld [vmem:[%s199 + $0xc40] sm:$0xff]
        %v2182 = vld [vmem:[%s199 + $0xc48] sm:$0xff]
        %v2183 = vld [vmem:[%s199 + $0xc50] sm:$0xff]
        %v2184 = vld [vmem:[%s199 + $0xc58] sm:$0xff]
        %v2185 = vld [vmem:[%s199 + $0xc60] sm:$0xff]
        %v2186 = vld [vmem:[%s199 + $0xc68] sm:$0xff]
        %v2187 = vld [vmem:[%s199 + $0xc70] sm:$0xff]
        %v2188 = vld [vmem:[%s199 + $0xc78] sm:$0xff]
        %v2189 = vld [vmem:[%s199 + $0xc80] sm:$0xff]
        %v2190 = vld [vmem:[%s199 + $0xc88] sm:$0xff]
        %v2191 = vld [vmem:[%s199 + $0xc90] sm:$0xff]
        %v2192 = vld [vmem:[%s199 + $0xc98] sm:$0xff]
        %v2193 = vld [vmem:[%s199 + $0xca0] sm:$0xff]
        %v2194 = vld [vmem:[%s199 + $0xca8] sm:$0xff]
        %v2195 = vld [vmem:[%s199 + $0xcb0] sm:$0xff]
        %v2196 = vld [vmem:[%s199 + $0xcb8] sm:$0xff]
        %v2197 = vld [vmem:[%s199 + $0xcc0] sm:$0xff]
        %v2198 = vld [vmem:[%s199 + $0xcc8] sm:$0xff]
        %v2199 = vld [vmem:[%s199 + $0xcd0] sm:$0xff]
        %v2200 = vld [vmem:[%s199 + $0xcd8] sm:$0xff]
        %v2201 = vld [vmem:[%s199 + $0xce0] sm:$0xff]
        %v2202 = vld [vmem:[%s199 + $0xce8] sm:$0xff]
        %v2203 = vld [vmem:[%s199 + $0xcf0] sm:$0xff]
        %v2204 = vld [vmem:[%s199 + $0xcf8] sm:$0xff]
        %v2205 = vld [vmem:[%s199 + $0xd00] sm:$0xff]
        %v2206 = vld [vmem:[%s199 + $0xd08] sm:$0xff]
        %v2207 = vld [vmem:[%s199 + $0xd10] sm:$0xff]
        %v2208 = vld [vmem:[%s199 + $0xd18] sm:$0xff]
        %v2209 = vld [vmem:[%s199 + $0xd20] sm:$0xff]
        %v2210 = vld [vmem:[%s199 + $0xd28] sm:$0xff]
        %v2211 = vld [vmem:[%s199 + $0xd30] sm:$0xff]
        %v2212 = vld [vmem:[%s199 + $0xd38] sm:$0xff]
        %v2213 = vld [vmem:[%s199 + $0xd40] sm:$0xff]
        %v2214 = vld [vmem:[%s199 + $0xd48] sm:$0xff]
        %v2215 = vld [vmem:[%s199 + $0xd50] sm:$0xff]
        %v2216 = vld [vmem:[%s199 + $0xd58] sm:$0xff]
        %v2217 = vld [vmem:[%s199 + $0xd60] sm:$0xff]
        %v2218 = vld [vmem:[%s199 + $0xd68] sm:$0xff]
        %v2219 = vld [vmem:[%s199 + $0xd70] sm:$0xff]
        %v2220 = vld [vmem:[%s199 + $0xd78] sm:$0xff]
        %v2221 = vld [vmem:[%s199 + $0xd80] sm:$0xff]
        %v2222 = vld [vmem:[%s199 + $0xd88] sm:$0xff]
        %v2223 = vld [vmem:[%s199 + $0xd90] sm:$0xff]
        %v2224 = vld [vmem:[%s199 + $0xd98] sm:$0xff]
        %v2225 = vld [vmem:[%s199 + $0xda0] sm:$0xff]
        %v2226 = vld [vmem:[%s199 + $0xda8] sm:$0xff]
        %v2227 = vld [vmem:[%s199 + $0xdb0] sm:$0xff]
        %v2228 = vld [vmem:[%s199 + $0xdb8] sm:$0xff]
        %v2229 = vld [vmem:[%s199 + $0xdc0] sm:$0xff]
        %v2230 = vld [vmem:[%s199 + $0xdc8] sm:$0xff]
        %v2231 = vld [vmem:[%s199 + $0xdd0] sm:$0xff]
        %v2232 = vld [vmem:[%s199 + $0xdd8] sm:$0xff]
        %v2233 = vld [vmem:[%s199 + $0xde0] sm:$0xff]
        %v2234 = vld [vmem:[%s199 + $0xde8] sm:$0xff]
        %v2235 = vld [vmem:[%s199 + $0xdf0] sm:$0xff]
        %v2236 = vld [vmem:[%s199 + $0xdf8] sm:$0xff]
        %v2237 = vld [vmem:[%s199 + $0xe00] sm:$0xff]
        %v2238 = vld [vmem:[%s199 + $0xe08] sm:$0xff]
        %v2239 = vld [vmem:[%s199 + $0xe10] sm:$0xff]
        %v2240 = vld [vmem:[%s199 + $0xe18] sm:$0xff]
        %v2241 = vld [vmem:[%s199 + $0xe20] sm:$0xff]
        %v2242 = vld [vmem:[%s199 + $0xe28] sm:$0xff]
        %v2243 = vld [vmem:[%s199 + $0xe30] sm:$0xff]
        %v2244 = vld [vmem:[%s199 + $0xe38] sm:$0xff]
        %v2245 = vld [vmem:[%s199 + $0xe40] sm:$0xff]
        %v2246 = vld [vmem:[%s199 + $0xe48] sm:$0xff]
        %v2247 = vld [vmem:[%s199 + $0xe50] sm:$0xff]
        %v2248 = vld [vmem:[%s199 + $0xe58] sm:$0xff]
        %v2249 = vld [vmem:[%s199 + $0xe60] sm:$0xff]
        %v2250 = vld [vmem:[%s199 + $0xe68] sm:$0xff]
        %v2251 = vld [vmem:[%s199 + $0xe70] sm:$0xff]
        %v2252 = vld [vmem:[%s199 + $0xe78] sm:$0xff]
        %v2253 = vld [vmem:[%s199 + $0xe80] sm:$0xff]
        %v2254 = vld [vmem:[%s199 + $0xe88] sm:$0xff]
        %v2255 = vld [vmem:[%s199 + $0xe90] sm:$0xff]
        %v2256 = vld [vmem:[%s199 + $0xe98] sm:$0xff]
        %v2257 = vld [vmem:[%s199 + $0xea0] sm:$0xff]
        %v2258 = vld [vmem:[%s199 + $0xea8] sm:$0xff]
        %v2259 = vld [vmem:[%s199 + $0xeb0] sm:$0xff]
        %v2260 = vld [vmem:[%s199 + $0xeb8] sm:$0xff]
        %v2261 = vld [vmem:[%s199 + $0xec0] sm:$0xff]
        %v2262 = vld [vmem:[%s199 + $0xec8] sm:$0xff]
        %v2263 = vld [vmem:[%s199 + $0xed0] sm:$0xff]
        %v2264 = vld [vmem:[%s199 + $0xed8] sm:$0xff]
        %v2265 = vld [vmem:[%s199 + $0xee0] sm:$0xff]
        %v2266 = vld [vmem:[%s199 + $0xee8] sm:$0xff]
        %v2267 = vld [vmem:[%s199 + $0xef0] sm:$0xff]
        %v2268 = vld [vmem:[%s199 + $0xef8] sm:$0xff]
        %v2269 = vld [vmem:[%s199 + $0xf00] sm:$0xff]
        %v2270 = vld [vmem:[%s199 + $0xf08] sm:$0xff]
        %v2271 = vld [vmem:[%s199 + $0xf10] sm:$0xff]
        %v2272 = vld [vmem:[%s199 + $0xf18] sm:$0xff]
        %v2273 = vld [vmem:[%s199 + $0xf20] sm:$0xff]
        %v2274 = vld [vmem:[%s199 + $0xf28] sm:$0xff]
        %v2275 = vld [vmem:[%s199 + $0xf30] sm:$0xff]
        %v2276 = vld [vmem:[%s199 + $0xf38] sm:$0xff]
        %v2277 = vld [vmem:[%s199 + $0xf40] sm:$0xff]
        %v2278 = vld [vmem:[%s199 + $0xf48] sm:$0xff]
        %v2279 = vld [vmem:[%s199 + $0xf50] sm:$0xff]
        %v2280 = vld [vmem:[%s199 + $0xf58] sm:$0xff]
        %v2281 = vld [vmem:[%s199 + $0xf60] sm:$0xff]
        %v2282 = vld [vmem:[%s199 + $0xf68] sm:$0xff]
        %v2283 = vld [vmem:[%s199 + $0xf70] sm:$0xff]
        %v2284 = vld [vmem:[%s199 + $0xf78] sm:$0xff]
        %v2285 = vld [vmem:[%s199 + $0xf80] sm:$0xff]
        %v2286 = vld [vmem:[%s199 + $0xf88] sm:$0xff]
        %v2287 = vld [vmem:[%s199 + $0xf90] sm:$0xff]
        %v2288 = vld [vmem:[%s199 + $0xf98] sm:$0xff]
        %v2289 = vld [vmem:[%s199 + $0xfa0] sm:$0xff]
        %v2290 = vld [vmem:[%s199 + $0xfa8] sm:$0xff]
        %v2291 = vld [vmem:[%s199 + $0xfb0] sm:$0xff]
        %v2292 = vld [vmem:[%s199 + $0xfb8] sm:$0xff]
        %v2293 = vld [vmem:[%s199 + $0xfc0] sm:$0xff]
        %v2294 = vld [vmem:[%s199 + $0xfc8] sm:$0xff]
        %v2295 = vld [vmem:[%s199 + $0xfd0] sm:$0xff]
        %v2296 = vld [vmem:[%s199 + $0xfd8] sm:$0xff]
        %v2297 = vld [vmem:[%s199 + $0xfe0] sm:$0xff]
        %v2298 = vld [vmem:[%s199 + $0xfe8] sm:$0xff]
        %v2299 = vld [vmem:[%s199 + $0xff0] sm:$0xff]
        %v2300 = vld [vmem:[%s199 + $0xff8] sm:$0xff]
        %v2301 = vld [vmem:[%s209] sm:$0xff]
        %v2302 = vld [vmem:[%s209 + $0x8] sm:$0xff]
        %v2303 = vld [vmem:[%s209 + $0x10] sm:$0xff]
        %v2304 = vld [vmem:[%s209 + $0x18] sm:$0xff]
        %v2305 = vld [vmem:[%s209 + $0x20] sm:$0xff]
        %v2306 = vld [vmem:[%s209 + $0x28] sm:$0xff]
        %v2307 = vld [vmem:[%s209 + $0x30] sm:$0xff]
        %v2308 = vld [vmem:[%s209 + $0x38] sm:$0xff]
        %v2309 = vld [vmem:[%s209 + $0x40] sm:$0xff]
        %v2310 = vld [vmem:[%s209 + $0x48] sm:$0xff]
        %v2311 = vld [vmem:[%s209 + $0x50] sm:$0xff]
        %v2312 = vld [vmem:[%s209 + $0x58] sm:$0xff]
        %v2313 = vld [vmem:[%s209 + $0x60] sm:$0xff]
        %v2314 = vld [vmem:[%s209 + $0x68] sm:$0xff]
        %v2315 = vld [vmem:[%s209 + $0x70] sm:$0xff]
        %v2316 = vld [vmem:[%s209 + $0x78] sm:$0xff]
        %v2317 = vld [vmem:[%s209 + $0x80] sm:$0xff]
        %v2318 = vld [vmem:[%s209 + $0x88] sm:$0xff]
        %v2319 = vld [vmem:[%s209 + $0x90] sm:$0xff]
        %v2320 = vld [vmem:[%s209 + $0x98] sm:$0xff]
        %v2321 = vld [vmem:[%s209 + $0xa0] sm:$0xff]
        %v2322 = vld [vmem:[%s209 + $0xa8] sm:$0xff]
        %v2323 = vld [vmem:[%s209 + $0xb0] sm:$0xff]
        %v2324 = vld [vmem:[%s209 + $0xb8] sm:$0xff]
        %v2325 = vld [vmem:[%s209 + $0xc0] sm:$0xff]
        %v2326 = vld [vmem:[%s209 + $0xc8] sm:$0xff]
        %v2327 = vld [vmem:[%s209 + $0xd0] sm:$0xff]
        %v2328 = vld [vmem:[%s209 + $0xd8] sm:$0xff]
        %v2329 = vld [vmem:[%s209 + $0xe0] sm:$0xff]
        %v2330 = vld [vmem:[%s209 + $0xe8] sm:$0xff]
        %v2331 = vld [vmem:[%s209 + $0xf0] sm:$0xff]
        %v2332 = vld [vmem:[%s209 + $0xf8] sm:$0xff]
        %v2333 = vld [vmem:[%s209 + $0x100] sm:$0xff]
        %v2334 = vld [vmem:[%s209 + $0x108] sm:$0xff]
        %v2335 = vld [vmem:[%s209 + $0x110] sm:$0xff]
        %v2336 = vld [vmem:[%s209 + $0x118] sm:$0xff]
        %v2337 = vld [vmem:[%s209 + $0x120] sm:$0xff]
        %v2338 = vld [vmem:[%s209 + $0x128] sm:$0xff]
        %v2339 = vld [vmem:[%s209 + $0x130] sm:$0xff]
        %v2340 = vld [vmem:[%s209 + $0x138] sm:$0xff]
        %v2341 = vld [vmem:[%s209 + $0x140] sm:$0xff]
        %v2342 = vld [vmem:[%s209 + $0x148] sm:$0xff]
        %v2343 = vld [vmem:[%s209 + $0x150] sm:$0xff]
        %v2344 = vld [vmem:[%s209 + $0x158] sm:$0xff]
        %v2345 = vld [vmem:[%s209 + $0x160] sm:$0xff]
        %v2346 = vld [vmem:[%s209 + $0x168] sm:$0xff]
        %v2347 = vld [vmem:[%s209 + $0x170] sm:$0xff]
        %v2348 = vld [vmem:[%s209 + $0x178] sm:$0xff]
        %v2349 = vld [vmem:[%s209 + $0x180] sm:$0xff]
        %v2350 = vld [vmem:[%s209 + $0x188] sm:$0xff]
        %v2351 = vld [vmem:[%s209 + $0x190] sm:$0xff]
        %v2352 = vld [vmem:[%s209 + $0x198] sm:$0xff]
        %v2353 = vld [vmem:[%s209 + $0x1a0] sm:$0xff]
        %v2354 = vld [vmem:[%s209 + $0x1a8] sm:$0xff]
        %v2355 = vld [vmem:[%s209 + $0x1b0] sm:$0xff]
        %v2356 = vld [vmem:[%s209 + $0x1b8] sm:$0xff]
        %v2357 = vld [vmem:[%s209 + $0x1c0] sm:$0xff]
        %v2358 = vld [vmem:[%s209 + $0x1c8] sm:$0xff]
        %v2359 = vld [vmem:[%s209 + $0x1d0] sm:$0xff]
        %v2360 = vld [vmem:[%s209 + $0x1d8] sm:$0xff]
        %v2361 = vld [vmem:[%s209 + $0x1e0] sm:$0xff]
        %v2362 = vld [vmem:[%s209 + $0x1e8] sm:$0xff]
        %v2363 = vld [vmem:[%s209 + $0x1f0] sm:$0xff]
        %v2364 = vld [vmem:[%s209 + $0x1f8] sm:$0xff]
        %v2365 = vld [vmem:[%s209 + $0x200] sm:$0xff]
        %v2366 = vld [vmem:[%s209 + $0x208] sm:$0xff]
        %v2367 = vld [vmem:[%s209 + $0x210] sm:$0xff]
        %v2368 = vld [vmem:[%s209 + $0x218] sm:$0xff]
        %v2369 = vld [vmem:[%s209 + $0x220] sm:$0xff]
        %v2370 = vld [vmem:[%s209 + $0x228] sm:$0xff]
        %v2371 = vld [vmem:[%s209 + $0x230] sm:$0xff]
        %v2372 = vld [vmem:[%s209 + $0x238] sm:$0xff]
        %v2373 = vld [vmem:[%s209 + $0x240] sm:$0xff]
        %v2374 = vld [vmem:[%s209 + $0x248] sm:$0xff]
        %v2375 = vld [vmem:[%s209 + $0x250] sm:$0xff]
        %v2376 = vld [vmem:[%s209 + $0x258] sm:$0xff]
        %v2377 = vld [vmem:[%s209 + $0x260] sm:$0xff]
        %v2378 = vld [vmem:[%s209 + $0x268] sm:$0xff]
        %v2379 = vld [vmem:[%s209 + $0x270] sm:$0xff]
        %v2380 = vld [vmem:[%s209 + $0x278] sm:$0xff]
        %v2381 = vld [vmem:[%s209 + $0x280] sm:$0xff]
        %v2382 = vld [vmem:[%s209 + $0x288] sm:$0xff]
        %v2383 = vld [vmem:[%s209 + $0x290] sm:$0xff]
        %v2384 = vld [vmem:[%s209 + $0x298] sm:$0xff]
        %v2385 = vld [vmem:[%s209 + $0x2a0] sm:$0xff]
        %v2386 = vld [vmem:[%s209 + $0x2a8] sm:$0xff]
        %v2387 = vld [vmem:[%s209 + $0x2b0] sm:$0xff]
        %v2388 = vld [vmem:[%s209 + $0x2b8] sm:$0xff]
        %v2389 = vld [vmem:[%s209 + $0x2c0] sm:$0xff]
        %v2390 = vld [vmem:[%s209 + $0x2c8] sm:$0xff]
        %v2391 = vld [vmem:[%s209 + $0x2d0] sm:$0xff]
        %v2392 = vld [vmem:[%s209 + $0x2d8] sm:$0xff]
        %v2393 = vld [vmem:[%s209 + $0x2e0] sm:$0xff]
        %v2394 = vld [vmem:[%s209 + $0x2e8] sm:$0xff]
        %v2395 = vld [vmem:[%s209 + $0x2f0] sm:$0xff]
        %v2396 = vld [vmem:[%s209 + $0x2f8] sm:$0xff]
        %v2397 = vld [vmem:[%s209 + $0x300] sm:$0xff]
        %v2398 = vld [vmem:[%s209 + $0x308] sm:$0xff]
        %v2399 = vld [vmem:[%s209 + $0x310] sm:$0xff]
        %v2400 = vld [vmem:[%s209 + $0x318] sm:$0xff]
        %v2401 = vld [vmem:[%s209 + $0x320] sm:$0xff]
        %v2402 = vld [vmem:[%s209 + $0x328] sm:$0xff]
        %v2403 = vld [vmem:[%s209 + $0x330] sm:$0xff]
        %v2404 = vld [vmem:[%s209 + $0x338] sm:$0xff]
        %v2405 = vld [vmem:[%s209 + $0x340] sm:$0xff]
        %v2406 = vld [vmem:[%s209 + $0x348] sm:$0xff]
        %v2407 = vld [vmem:[%s209 + $0x350] sm:$0xff]
        %v2408 = vld [vmem:[%s209 + $0x358] sm:$0xff]
        %v2409 = vld [vmem:[%s209 + $0x360] sm:$0xff]
        %v2410 = vld [vmem:[%s209 + $0x368] sm:$0xff]
        %v2411 = vld [vmem:[%s209 + $0x370] sm:$0xff]
        %v2412 = vld [vmem:[%s209 + $0x378] sm:$0xff]
        %v2413 = vld [vmem:[%s209 + $0x380] sm:$0xff]
        %v2414 = vld [vmem:[%s209 + $0x388] sm:$0xff]
        %v2415 = vld [vmem:[%s209 + $0x390] sm:$0xff]
        %v2416 = vld [vmem:[%s209 + $0x398] sm:$0xff]
        %v2417 = vld [vmem:[%s209 + $0x3a0] sm:$0xff]
        %v2418 = vld [vmem:[%s209 + $0x3a8] sm:$0xff]
        %v2419 = vld [vmem:[%s209 + $0x3b0] sm:$0xff]
        %v2420 = vld [vmem:[%s209 + $0x3b8] sm:$0xff]
        %v2421 = vld [vmem:[%s209 + $0x3c0] sm:$0xff]
        %v2422 = vld [vmem:[%s209 + $0x3c8] sm:$0xff]
        %v2423 = vld [vmem:[%s209 + $0x3d0] sm:$0xff]
        %v2424 = vld [vmem:[%s209 + $0x3d8] sm:$0xff]
        %v2425 = vld [vmem:[%s209 + $0x3e0] sm:$0xff]
        %v2426 = vld [vmem:[%s209 + $0x3e8] sm:$0xff]
        %v2427 = vld [vmem:[%s209 + $0x3f0] sm:$0xff]
        %v2428 = vld [vmem:[%s209 + $0x3f8] sm:$0xff]
        %v2429 = vld [vmem:[%s209 + $0x400] sm:$0xff]
        %v2430 = vld [vmem:[%s209 + $0x408] sm:$0xff]
        %v2431 = vld [vmem:[%s209 + $0x410] sm:$0xff]
        %v2432 = vld [vmem:[%s209 + $0x418] sm:$0xff]
        %v2433 = vld [vmem:[%s209 + $0x420] sm:$0xff]
        %v2434 = vld [vmem:[%s209 + $0x428] sm:$0xff]
        %v2435 = vld [vmem:[%s209 + $0x430] sm:$0xff]
        %v2436 = vld [vmem:[%s209 + $0x438] sm:$0xff]
        %v2437 = vld [vmem:[%s209 + $0x440] sm:$0xff]
        %v2438 = vld [vmem:[%s209 + $0x448] sm:$0xff]
        %v2439 = vld [vmem:[%s209 + $0x450] sm:$0xff]
        %v2440 = vld [vmem:[%s209 + $0x458] sm:$0xff]
        %v2441 = vld [vmem:[%s209 + $0x460] sm:$0xff]
        %v2442 = vld [vmem:[%s209 + $0x468] sm:$0xff]
        %v2443 = vld [vmem:[%s209 + $0x470] sm:$0xff]
        %v2444 = vld [vmem:[%s209 + $0x478] sm:$0xff]
        %v2445 = vld [vmem:[%s209 + $0x480] sm:$0xff]
        %v2446 = vld [vmem:[%s209 + $0x488] sm:$0xff]
        %v2447 = vld [vmem:[%s209 + $0x490] sm:$0xff]
        %v2448 = vld [vmem:[%s209 + $0x498] sm:$0xff]
        %v2449 = vld [vmem:[%s209 + $0x4a0] sm:$0xff]
        %v2450 = vld [vmem:[%s209 + $0x4a8] sm:$0xff]
        %v2451 = vld [vmem:[%s209 + $0x4b0] sm:$0xff]
        %v2452 = vld [vmem:[%s209 + $0x4b8] sm:$0xff]
        %v2453 = vld [vmem:[%s209 + $0x4c0] sm:$0xff]
        %v2454 = vld [vmem:[%s209 + $0x4c8] sm:$0xff]
        %v2455 = vld [vmem:[%s209 + $0x4d0] sm:$0xff]
        %v2456 = vld [vmem:[%s209 + $0x4d8] sm:$0xff]
        %v2457 = vld [vmem:[%s209 + $0x4e0] sm:$0xff]
        %v2458 = vld [vmem:[%s209 + $0x4e8] sm:$0xff]
        %v2459 = vld [vmem:[%s209 + $0x4f0] sm:$0xff]
        %v2460 = vld [vmem:[%s209 + $0x4f8] sm:$0xff]
        %v2461 = vld [vmem:[%s209 + $0x500] sm:$0xff]
        %v2462 = vld [vmem:[%s209 + $0x508] sm:$0xff]
        %v2463 = vld [vmem:[%s209 + $0x510] sm:$0xff]
        %v2464 = vld [vmem:[%s209 + $0x518] sm:$0xff]
        %v2465 = vld [vmem:[%s209 + $0x520] sm:$0xff]
        %v2466 = vld [vmem:[%s209 + $0x528] sm:$0xff]
        %v2467 = vld [vmem:[%s209 + $0x530] sm:$0xff]
        %v2468 = vld [vmem:[%s209 + $0x538] sm:$0xff]
        %v2469 = vld [vmem:[%s209 + $0x540] sm:$0xff]
        %v2470 = vld [vmem:[%s209 + $0x548] sm:$0xff]
        %v2471 = vld [vmem:[%s209 + $0x550] sm:$0xff]
        %v2472 = vld [vmem:[%s209 + $0x558] sm:$0xff]
        %v2473 = vld [vmem:[%s209 + $0x560] sm:$0xff]
        %v2474 = vld [vmem:[%s209 + $0x568] sm:$0xff]
        %v2475 = vld [vmem:[%s209 + $0x570] sm:$0xff]
        %v2476 = vld [vmem:[%s209 + $0x578] sm:$0xff]
        %v2477 = vld [vmem:[%s209 + $0x580] sm:$0xff]
        %v2478 = vld [vmem:[%s209 + $0x588] sm:$0xff]
        %v2479 = vld [vmem:[%s209 + $0x590] sm:$0xff]
        %v2480 = vld [vmem:[%s209 + $0x598] sm:$0xff]
        %v2481 = vld [vmem:[%s209 + $0x5a0] sm:$0xff]
        %v2482 = vld [vmem:[%s209 + $0x5a8] sm:$0xff]
        %v2483 = vld [vmem:[%s209 + $0x5b0] sm:$0xff]
        %v2484 = vld [vmem:[%s209 + $0x5b8] sm:$0xff]
        %v2485 = vld [vmem:[%s209 + $0x5c0] sm:$0xff]
        %v2486 = vld [vmem:[%s209 + $0x5c8] sm:$0xff]
        %v2487 = vld [vmem:[%s209 + $0x5d0] sm:$0xff]
        %v2488 = vld [vmem:[%s209 + $0x5d8] sm:$0xff]
        %v2489 = vld [vmem:[%s209 + $0x5e0] sm:$0xff]
        %v2490 = vld [vmem:[%s209 + $0x5e8] sm:$0xff]
        %v2491 = vld [vmem:[%s209 + $0x5f0] sm:$0xff]
        %v2492 = vld [vmem:[%s209 + $0x5f8] sm:$0xff]
        %v2493 = vld [vmem:[%s209 + $0x600] sm:$0xff]
        %v2494 = vld [vmem:[%s209 + $0x608] sm:$0xff]
        %v2495 = vld [vmem:[%s209 + $0x610] sm:$0xff]
        %v2496 = vld [vmem:[%s209 + $0x618] sm:$0xff]
        %v2497 = vld [vmem:[%s209 + $0x620] sm:$0xff]
        %v2498 = vld [vmem:[%s209 + $0x628] sm:$0xff]
        %v2499 = vld [vmem:[%s209 + $0x630] sm:$0xff]
        %v2500 = vld [vmem:[%s209 + $0x638] sm:$0xff]
        %v2501 = vld [vmem:[%s209 + $0x640] sm:$0xff]
        %v2502 = vld [vmem:[%s209 + $0x648] sm:$0xff]
        %v2503 = vld [vmem:[%s209 + $0x650] sm:$0xff]
        %v2504 = vld [vmem:[%s209 + $0x658] sm:$0xff]
        %v2505 = vld [vmem:[%s209 + $0x660] sm:$0xff]
        %v2506 = vld [vmem:[%s209 + $0x668] sm:$0xff]
        %v2507 = vld [vmem:[%s209 + $0x670] sm:$0xff]
        %v2508 = vld [vmem:[%s209 + $0x678] sm:$0xff]
        %v2509 = vld [vmem:[%s209 + $0x680] sm:$0xff]
        %v2510 = vld [vmem:[%s209 + $0x688] sm:$0xff]
        %v2511 = vld [vmem:[%s209 + $0x690] sm:$0xff]
        %v2512 = vld [vmem:[%s209 + $0x698] sm:$0xff]
        %v2513 = vld [vmem:[%s209 + $0x6a0] sm:$0xff]
        %v2514 = vld [vmem:[%s209 + $0x6a8] sm:$0xff]
        %v2515 = vld [vmem:[%s209 + $0x6b0] sm:$0xff]
        %v2516 = vld [vmem:[%s209 + $0x6b8] sm:$0xff]
        %v2517 = vld [vmem:[%s209 + $0x6c0] sm:$0xff]
        %v2518 = vld [vmem:[%s209 + $0x6c8] sm:$0xff]
        %v2519 = vld [vmem:[%s209 + $0x6d0] sm:$0xff]
        %v2520 = vld [vmem:[%s209 + $0x6d8] sm:$0xff]
        %v2521 = vld [vmem:[%s209 + $0x6e0] sm:$0xff]
        %v2522 = vld [vmem:[%s209 + $0x6e8] sm:$0xff]
        %v2523 = vld [vmem:[%s209 + $0x6f0] sm:$0xff]
        %v2524 = vld [vmem:[%s209 + $0x6f8] sm:$0xff]
        %v2525 = vld [vmem:[%s209 + $0x700] sm:$0xff]
        %v2526 = vld [vmem:[%s209 + $0x708] sm:$0xff]
        %v2527 = vld [vmem:[%s209 + $0x710] sm:$0xff]
        %v2528 = vld [vmem:[%s209 + $0x718] sm:$0xff]
        %v2529 = vld [vmem:[%s209 + $0x720] sm:$0xff]
        %v2530 = vld [vmem:[%s209 + $0x728] sm:$0xff]
        %v2531 = vld [vmem:[%s209 + $0x730] sm:$0xff]
        %v2532 = vld [vmem:[%s209 + $0x738] sm:$0xff]
        %v2533 = vld [vmem:[%s209 + $0x740] sm:$0xff]
        %v2534 = vld [vmem:[%s209 + $0x748] sm:$0xff]
        %v2535 = vld [vmem:[%s209 + $0x750] sm:$0xff]
        %v2536 = vld [vmem:[%s209 + $0x758] sm:$0xff]
        %v2537 = vld [vmem:[%s209 + $0x760] sm:$0xff]
        %v2538 = vld [vmem:[%s209 + $0x768] sm:$0xff]
        %v2539 = vld [vmem:[%s209 + $0x770] sm:$0xff]
        %v2540 = vld [vmem:[%s209 + $0x778] sm:$0xff]
        %v2541 = vld [vmem:[%s209 + $0x780] sm:$0xff]
        %v2542 = vld [vmem:[%s209 + $0x788] sm:$0xff]
        %v2543 = vld [vmem:[%s209 + $0x790] sm:$0xff]
        %v2544 = vld [vmem:[%s209 + $0x798] sm:$0xff]
        %v2545 = vld [vmem:[%s209 + $0x7a0] sm:$0xff]
        %v2546 = vld [vmem:[%s209 + $0x7a8] sm:$0xff]
        %v2547 = vld [vmem:[%s209 + $0x7b0] sm:$0xff]
        %v2548 = vld [vmem:[%s209 + $0x7b8] sm:$0xff]
        %v2549 = vld [vmem:[%s209 + $0x7c0] sm:$0xff]
        %v2550 = vld [vmem:[%s209 + $0x7c8] sm:$0xff]
        %v2551 = vld [vmem:[%s209 + $0x7d0] sm:$0xff]
        %v2552 = vld [vmem:[%s209 + $0x7d8] sm:$0xff]
        %v2553 = vld [vmem:[%s209 + $0x7e0] sm:$0xff]
        %v2554 = vld [vmem:[%s209 + $0x7e8] sm:$0xff]
        %v2555 = vld [vmem:[%s209 + $0x7f0] sm:$0xff]
        %v2556 = vld [vmem:[%s209 + $0x7f8] sm:$0xff]
        %v2557 = vld [vmem:[%s209 + $0x800] sm:$0xff]
        %v2558 = vld [vmem:[%s209 + $0x808] sm:$0xff]
        %v2559 = vld [vmem:[%s209 + $0x810] sm:$0xff]
        %v2560 = vld [vmem:[%s209 + $0x818] sm:$0xff]
        %v2561 = vld [vmem:[%s209 + $0x820] sm:$0xff]
        %v2562 = vld [vmem:[%s209 + $0x828] sm:$0xff]
        %v2563 = vld [vmem:[%s209 + $0x830] sm:$0xff]
        %v2564 = vld [vmem:[%s209 + $0x838] sm:$0xff]
        %v2565 = vld [vmem:[%s209 + $0x840] sm:$0xff]
        %v2566 = vld [vmem:[%s209 + $0x848] sm:$0xff]
        %v2567 = vld [vmem:[%s209 + $0x850] sm:$0xff]
        %v2568 = vld [vmem:[%s209 + $0x858] sm:$0xff]
        %v2569 = vld [vmem:[%s209 + $0x860] sm:$0xff]
        %v2570 = vld [vmem:[%s209 + $0x868] sm:$0xff]
        %v2571 = vld [vmem:[%s209 + $0x870] sm:$0xff]
        %v2572 = vld [vmem:[%s209 + $0x878] sm:$0xff]
        %v2573 = vld [vmem:[%s209 + $0x880] sm:$0xff]
        %v2574 = vld [vmem:[%s209 + $0x888] sm:$0xff]
        %v2575 = vld [vmem:[%s209 + $0x890] sm:$0xff]
        %v2576 = vld [vmem:[%s209 + $0x898] sm:$0xff]
        %v2577 = vld [vmem:[%s209 + $0x8a0] sm:$0xff]
        %v2578 = vld [vmem:[%s209 + $0x8a8] sm:$0xff]
        %v2579 = vld [vmem:[%s209 + $0x8b0] sm:$0xff]
        %v2580 = vld [vmem:[%s209 + $0x8b8] sm:$0xff]
        %v2581 = vld [vmem:[%s209 + $0x8c0] sm:$0xff]
        %v2582 = vld [vmem:[%s209 + $0x8c8] sm:$0xff]
        %v2583 = vld [vmem:[%s209 + $0x8d0] sm:$0xff]
        %v2584 = vld [vmem:[%s209 + $0x8d8] sm:$0xff]
        %v2585 = vld [vmem:[%s209 + $0x8e0] sm:$0xff]
        %v2586 = vld [vmem:[%s209 + $0x8e8] sm:$0xff]
        %v2587 = vld [vmem:[%s209 + $0x8f0] sm:$0xff]
        %v2588 = vld [vmem:[%s209 + $0x8f8] sm:$0xff]
        %v2589 = vld [vmem:[%s209 + $0x900] sm:$0xff]
        %v2590 = vld [vmem:[%s209 + $0x908] sm:$0xff]
        %v2591 = vld [vmem:[%s209 + $0x910] sm:$0xff]
        %v2592 = vld [vmem:[%s209 + $0x918] sm:$0xff]
        %v2593 = vld [vmem:[%s209 + $0x920] sm:$0xff]
        %v2594 = vld [vmem:[%s209 + $0x928] sm:$0xff]
        %v2595 = vld [vmem:[%s209 + $0x930] sm:$0xff]
        %v2596 = vld [vmem:[%s209 + $0x938] sm:$0xff]
        %v2597 = vld [vmem:[%s209 + $0x940] sm:$0xff]
        %v2598 = vld [vmem:[%s209 + $0x948] sm:$0xff]
        %v2599 = vld [vmem:[%s209 + $0x950] sm:$0xff]
        %v2600 = vld [vmem:[%s209 + $0x958] sm:$0xff]
        %v2601 = vld [vmem:[%s209 + $0x960] sm:$0xff]
        %v2602 = vld [vmem:[%s209 + $0x968] sm:$0xff]
        %v2603 = vld [vmem:[%s209 + $0x970] sm:$0xff]
        %v2604 = vld [vmem:[%s209 + $0x978] sm:$0xff]
        %v2605 = vld [vmem:[%s209 + $0x980] sm:$0xff]
        %v2606 = vld [vmem:[%s209 + $0x988] sm:$0xff]
        %v2607 = vld [vmem:[%s209 + $0x990] sm:$0xff]
        %v2608 = vld [vmem:[%s209 + $0x998] sm:$0xff]
        %v2609 = vld [vmem:[%s209 + $0x9a0] sm:$0xff]
        %v2610 = vld [vmem:[%s209 + $0x9a8] sm:$0xff]
        %v2611 = vld [vmem:[%s209 + $0x9b0] sm:$0xff]
        %v2612 = vld [vmem:[%s209 + $0x9b8] sm:$0xff]
        %v2613 = vld [vmem:[%s209 + $0x9c0] sm:$0xff]
        %v2614 = vld [vmem:[%s209 + $0x9c8] sm:$0xff]
        %v2615 = vld [vmem:[%s209 + $0x9d0] sm:$0xff]
        %v2616 = vld [vmem:[%s209 + $0x9d8] sm:$0xff]
        %v2617 = vld [vmem:[%s209 + $0x9e0] sm:$0xff]
        %v2618 = vld [vmem:[%s209 + $0x9e8] sm:$0xff]
        %v2619 = vld [vmem:[%s209 + $0x9f0] sm:$0xff]
        %v2620 = vld [vmem:[%s209 + $0x9f8] sm:$0xff]
        %v2621 = vld [vmem:[%s209 + $0xa00] sm:$0xff]
        %v2622 = vld [vmem:[%s209 + $0xa08] sm:$0xff]
        %v2623 = vld [vmem:[%s209 + $0xa10] sm:$0xff]
        %v2624 = vld [vmem:[%s209 + $0xa18] sm:$0xff]
        %v2625 = vld [vmem:[%s209 + $0xa20] sm:$0xff]
        %v2626 = vld [vmem:[%s209 + $0xa28] sm:$0xff]
        %v2627 = vld [vmem:[%s209 + $0xa30] sm:$0xff]
        %v2628 = vld [vmem:[%s209 + $0xa38] sm:$0xff]
        %v2629 = vld [vmem:[%s209 + $0xa40] sm:$0xff]
        %v2630 = vld [vmem:[%s209 + $0xa48] sm:$0xff]
        %v2631 = vld [vmem:[%s209 + $0xa50] sm:$0xff]
        %v2632 = vld [vmem:[%s209 + $0xa58] sm:$0xff]
        %v2633 = vld [vmem:[%s209 + $0xa60] sm:$0xff]
        %v2634 = vld [vmem:[%s209 + $0xa68] sm:$0xff]
        %v2635 = vld [vmem:[%s209 + $0xa70] sm:$0xff]
        %v2636 = vld [vmem:[%s209 + $0xa78] sm:$0xff]
        %v2637 = vld [vmem:[%s209 + $0xa80] sm:$0xff]
        %v2638 = vld [vmem:[%s209 + $0xa88] sm:$0xff]
        %v2639 = vld [vmem:[%s209 + $0xa90] sm:$0xff]
        %v2640 = vld [vmem:[%s209 + $0xa98] sm:$0xff]
        %v2641 = vld [vmem:[%s209 + $0xaa0] sm:$0xff]
        %v2642 = vld [vmem:[%s209 + $0xaa8] sm:$0xff]
        %v2643 = vld [vmem:[%s209 + $0xab0] sm:$0xff]
        %v2644 = vld [vmem:[%s209 + $0xab8] sm:$0xff]
        %v2645 = vld [vmem:[%s209 + $0xac0] sm:$0xff]
        %v2646 = vld [vmem:[%s209 + $0xac8] sm:$0xff]
        %v2647 = vld [vmem:[%s209 + $0xad0] sm:$0xff]
        %v2648 = vld [vmem:[%s209 + $0xad8] sm:$0xff]
        %v2649 = vld [vmem:[%s209 + $0xae0] sm:$0xff]
        %v2650 = vld [vmem:[%s209 + $0xae8] sm:$0xff]
        %v2651 = vld [vmem:[%s209 + $0xaf0] sm:$0xff]
        %v2652 = vld [vmem:[%s209 + $0xaf8] sm:$0xff]
        %v2653 = vld [vmem:[%s209 + $0xb00] sm:$0xff]
        %v2654 = vld [vmem:[%s209 + $0xb08] sm:$0xff]
        %v2655 = vld [vmem:[%s209 + $0xb10] sm:$0xff]
        %v2656 = vld [vmem:[%s209 + $0xb18] sm:$0xff]
        %v2657 = vld [vmem:[%s209 + $0xb20] sm:$0xff]
        %v2658 = vld [vmem:[%s209 + $0xb28] sm:$0xff]
        %v2659 = vld [vmem:[%s209 + $0xb30] sm:$0xff]
        %v2660 = vld [vmem:[%s209 + $0xb38] sm:$0xff]
        %v2661 = vld [vmem:[%s209 + $0xb40] sm:$0xff]
        %v2662 = vld [vmem:[%s209 + $0xb48] sm:$0xff]
        %v2663 = vld [vmem:[%s209 + $0xb50] sm:$0xff]
        %v2664 = vld [vmem:[%s209 + $0xb58] sm:$0xff]
        %v2665 = vld [vmem:[%s209 + $0xb60] sm:$0xff]
        %v2666 = vld [vmem:[%s209 + $0xb68] sm:$0xff]
        %v2667 = vld [vmem:[%s209 + $0xb70] sm:$0xff]
        %v2668 = vld [vmem:[%s209 + $0xb78] sm:$0xff]
        %v2669 = vld [vmem:[%s209 + $0xb80] sm:$0xff]
        %v2670 = vld [vmem:[%s209 + $0xb88] sm:$0xff]
        %v2671 = vld [vmem:[%s209 + $0xb90] sm:$0xff]
        %v2672 = vld [vmem:[%s209 + $0xb98] sm:$0xff]
        %v2673 = vld [vmem:[%s209 + $0xba0] sm:$0xff]
        %v2674 = vld [vmem:[%s209 + $0xba8] sm:$0xff]
        %v2675 = vld [vmem:[%s209 + $0xbb0] sm:$0xff]
        %v2676 = vld [vmem:[%s209 + $0xbb8] sm:$0xff]
        %v2677 = vld [vmem:[%s209 + $0xbc0] sm:$0xff]
        %v2678 = vld [vmem:[%s209 + $0xbc8] sm:$0xff]
        %v2679 = vld [vmem:[%s209 + $0xbd0] sm:$0xff]
        %v2680 = vld [vmem:[%s209 + $0xbd8] sm:$0xff]
        %v2681 = vld [vmem:[%s209 + $0xbe0] sm:$0xff]
        %v2682 = vld [vmem:[%s209 + $0xbe8] sm:$0xff]
        %v2683 = vld [vmem:[%s209 + $0xbf0] sm:$0xff]
        %v2684 = vld [vmem:[%s209 + $0xbf8] sm:$0xff]
        %v2685 = vld [vmem:[%s209 + $0xc00] sm:$0xff]
        %v2686 = vld [vmem:[%s209 + $0xc08] sm:$0xff]
        %v2687 = vld [vmem:[%s209 + $0xc10] sm:$0xff]
        %v2688 = vld [vmem:[%s209 + $0xc18] sm:$0xff]
        %v2689 = vld [vmem:[%s209 + $0xc20] sm:$0xff]
        %v2690 = vld [vmem:[%s209 + $0xc28] sm:$0xff]
        %v2691 = vld [vmem:[%s209 + $0xc30] sm:$0xff]
        %v2692 = vld [vmem:[%s209 + $0xc38] sm:$0xff]
        %v2693 = vld [vmem:[%s209 + $0xc40] sm:$0xff]
        %v2694 = vld [vmem:[%s209 + $0xc48] sm:$0xff]
        %v2695 = vld [vmem:[%s209 + $0xc50] sm:$0xff]
        %v2696 = vld [vmem:[%s209 + $0xc58] sm:$0xff]
        %v2697 = vld [vmem:[%s209 + $0xc60] sm:$0xff]
        %v2698 = vld [vmem:[%s209 + $0xc68] sm:$0xff]
        %v2699 = vld [vmem:[%s209 + $0xc70] sm:$0xff]
        %v2700 = vld [vmem:[%s209 + $0xc78] sm:$0xff]
        %v2701 = vld [vmem:[%s209 + $0xc80] sm:$0xff]
        %v2702 = vld [vmem:[%s209 + $0xc88] sm:$0xff]
        %v2703 = vld [vmem:[%s209 + $0xc90] sm:$0xff]
        %v2704 = vld [vmem:[%s209 + $0xc98] sm:$0xff]
        %v2705 = vld [vmem:[%s209 + $0xca0] sm:$0xff]
        %v2706 = vld [vmem:[%s209 + $0xca8] sm:$0xff]
        %v2707 = vld [vmem:[%s209 + $0xcb0] sm:$0xff]
        %v2708 = vld [vmem:[%s209 + $0xcb8] sm:$0xff]
        %v2709 = vld [vmem:[%s209 + $0xcc0] sm:$0xff]
        %v2710 = vld [vmem:[%s209 + $0xcc8] sm:$0xff]
        %v2711 = vld [vmem:[%s209 + $0xcd0] sm:$0xff]
        %v2712 = vld [vmem:[%s209 + $0xcd8] sm:$0xff]
        %v2713 = vld [vmem:[%s209 + $0xce0] sm:$0xff]
        %v2714 = vld [vmem:[%s209 + $0xce8] sm:$0xff]
        %v2715 = vld [vmem:[%s209 + $0xcf0] sm:$0xff]
        %v2716 = vld [vmem:[%s209 + $0xcf8] sm:$0xff]
        %v2717 = vld [vmem:[%s209 + $0xd00] sm:$0xff]
        %v2718 = vld [vmem:[%s209 + $0xd08] sm:$0xff]
        %v2719 = vld [vmem:[%s209 + $0xd10] sm:$0xff]
        %v2720 = vld [vmem:[%s209 + $0xd18] sm:$0xff]
        %v2721 = vld [vmem:[%s209 + $0xd20] sm:$0xff]
        %v2722 = vld [vmem:[%s209 + $0xd28] sm:$0xff]
        %v2723 = vld [vmem:[%s209 + $0xd30] sm:$0xff]
        %v2724 = vld [vmem:[%s209 + $0xd38] sm:$0xff]
        %v2725 = vld [vmem:[%s209 + $0xd40] sm:$0xff]
        %v2726 = vld [vmem:[%s209 + $0xd48] sm:$0xff]
        %v2727 = vld [vmem:[%s209 + $0xd50] sm:$0xff]
        %v2728 = vld [vmem:[%s209 + $0xd58] sm:$0xff]
        %v2729 = vld [vmem:[%s209 + $0xd60] sm:$0xff]
        %v2730 = vld [vmem:[%s209 + $0xd68] sm:$0xff]
        %v2731 = vld [vmem:[%s209 + $0xd70] sm:$0xff]
        %v2732 = vld [vmem:[%s209 + $0xd78] sm:$0xff]
        %v2733 = vld [vmem:[%s209 + $0xd80] sm:$0xff]
        %v2734 = vld [vmem:[%s209 + $0xd88] sm:$0xff]
        %v2735 = vld [vmem:[%s209 + $0xd90] sm:$0xff]
        %v2736 = vld [vmem:[%s209 + $0xd98] sm:$0xff]
        %v2737 = vld [vmem:[%s209 + $0xda0] sm:$0xff]
        %v2738 = vld [vmem:[%s209 + $0xda8] sm:$0xff]
        %v2739 = vld [vmem:[%s209 + $0xdb0] sm:$0xff]
        %v2740 = vld [vmem:[%s209 + $0xdb8] sm:$0xff]
        %v2741 = vld [vmem:[%s209 + $0xdc0] sm:$0xff]
        %v2742 = vld [vmem:[%s209 + $0xdc8] sm:$0xff]
        %v2743 = vld [vmem:[%s209 + $0xdd0] sm:$0xff]
        %v2744 = vld [vmem:[%s209 + $0xdd8] sm:$0xff]
        %v2745 = vld [vmem:[%s209 + $0xde0] sm:$0xff]
        %v2746 = vld [vmem:[%s209 + $0xde8] sm:$0xff]
        %v2747 = vld [vmem:[%s209 + $0xdf0] sm:$0xff]
        %v2748 = vld [vmem:[%s209 + $0xdf8] sm:$0xff]
        %v2749 = vld [vmem:[%s209 + $0xe00] sm:$0xff]
        %v2750 = vld [vmem:[%s209 + $0xe08] sm:$0xff]
        %v2751 = vld [vmem:[%s209 + $0xe10] sm:$0xff]
        %v2752 = vld [vmem:[%s209 + $0xe18] sm:$0xff]
        %v2753 = vld [vmem:[%s209 + $0xe20] sm:$0xff]
        %v2754 = vld [vmem:[%s209 + $0xe28] sm:$0xff]
        %v2755 = vld [vmem:[%s209 + $0xe30] sm:$0xff]
        %v2756 = vld [vmem:[%s209 + $0xe38] sm:$0xff]
        %v2757 = vld [vmem:[%s209 + $0xe40] sm:$0xff]
        %v2758 = vld [vmem:[%s209 + $0xe48] sm:$0xff]
        %v2759 = vld [vmem:[%s209 + $0xe50] sm:$0xff]
        %v2760 = vld [vmem:[%s209 + $0xe58] sm:$0xff]
        %v2761 = vld [vmem:[%s209 + $0xe60] sm:$0xff]
        %v2762 = vld [vmem:[%s209 + $0xe68] sm:$0xff]
        %v2763 = vld [vmem:[%s209 + $0xe70] sm:$0xff]
        %v2764 = vld [vmem:[%s209 + $0xe78] sm:$0xff]
        %v2765 = vld [vmem:[%s209 + $0xe80] sm:$0xff]
        %v2766 = vld [vmem:[%s209 + $0xe88] sm:$0xff]
        %v2767 = vld [vmem:[%s209 + $0xe90] sm:$0xff]
        %v2768 = vld [vmem:[%s209 + $0xe98] sm:$0xff]
        %v2769 = vld [vmem:[%s209 + $0xea0] sm:$0xff]
        %v2770 = vld [vmem:[%s209 + $0xea8] sm:$0xff]
        %v2771 = vld [vmem:[%s209 + $0xeb0] sm:$0xff]
        %v2772 = vld [vmem:[%s209 + $0xeb8] sm:$0xff]
        %v2773 = vld [vmem:[%s209 + $0xec0] sm:$0xff]
        %v2774 = vld [vmem:[%s209 + $0xec8] sm:$0xff]
        %v2775 = vld [vmem:[%s209 + $0xed0] sm:$0xff]
        %v2776 = vld [vmem:[%s209 + $0xed8] sm:$0xff]
        %v2777 = vld [vmem:[%s209 + $0xee0] sm:$0xff]
        %v2778 = vld [vmem:[%s209 + $0xee8] sm:$0xff]
        %v2779 = vld [vmem:[%s209 + $0xef0] sm:$0xff]
        %v2780 = vld [vmem:[%s209 + $0xef8] sm:$0xff]
        %v2781 = vld [vmem:[%s209 + $0xf00] sm:$0xff]
        %v2782 = vld [vmem:[%s209 + $0xf08] sm:$0xff]
        %v2783 = vld [vmem:[%s209 + $0xf10] sm:$0xff]
        %v2784 = vld [vmem:[%s209 + $0xf18] sm:$0xff]
        %v2785 = vld [vmem:[%s209 + $0xf20] sm:$0xff]
        %v2786 = vld [vmem:[%s209 + $0xf28] sm:$0xff]
        %v2787 = vld [vmem:[%s209 + $0xf30] sm:$0xff]
        %v2788 = vld [vmem:[%s209 + $0xf38] sm:$0xff]
        %v2789 = vld [vmem:[%s209 + $0xf40] sm:$0xff]
        %v2790 = vld [vmem:[%s209 + $0xf48] sm:$0xff]
        %v2791 = vld [vmem:[%s209 + $0xf50] sm:$0xff]
        %v2792 = vld [vmem:[%s209 + $0xf58] sm:$0xff]
        %v2793 = vld [vmem:[%s209 + $0xf60] sm:$0xff]
        %v2794 = vld [vmem:[%s209 + $0xf68] sm:$0xff]
        %v2795 = vld [vmem:[%s209 + $0xf70] sm:$0xff]
        %v2796 = vld [vmem:[%s209 + $0xf78] sm:$0xff]
        %v2797 = vld [vmem:[%s209 + $0xf80] sm:$0xff]
        %v2798 = vld [vmem:[%s209 + $0xf88] sm:$0xff]
        %v2799 = vld [vmem:[%s209 + $0xf90] sm:$0xff]
        %v2800 = vld [vmem:[%s209 + $0xf98] sm:$0xff]
        %v2801 = vld [vmem:[%s209 + $0xfa0] sm:$0xff]
        %v2802 = vld [vmem:[%s209 + $0xfa8] sm:$0xff]
        %v2803 = vld [vmem:[%s209 + $0xfb0] sm:$0xff]
        %v2804 = vld [vmem:[%s209 + $0xfb8] sm:$0xff]
        %v2805 = vld [vmem:[%s209 + $0xfc0] sm:$0xff]
        %v2806 = vld [vmem:[%s209 + $0xfc8] sm:$0xff]
        %v2807 = vld [vmem:[%s209 + $0xfd0] sm:$0xff]
        %v2808 = vld [vmem:[%s209 + $0xfd8] sm:$0xff]
        %v2809 = vld [vmem:[%s209 + $0xfe0] sm:$0xff]
        %v2810 = vld [vmem:[%s209 + $0xfe8] sm:$0xff]
        %v2811 = vld [vmem:[%s209 + $0xff0] sm:$0xff]
        %v2812 = vld [vmem:[%s209 + $0xff8] sm:$0xff]
        %v2813 = vsub.f32 1.0, %v1789
        %v2814 = vsub.f32 1.0, %v1790
        %v2815 = vsub.f32 1.0, %v1791
        %v2816 = vsub.f32 1.0, %v1792
        %v2817 = vsub.f32 1.0, %v1793
        %v2818 = vsub.f32 1.0, %v1794
        %v2819 = vsub.f32 1.0, %v1795
        %v2820 = vsub.f32 1.0, %v1796
        %v2821 = vsub.f32 1.0, %v1797
        %v2822 = vsub.f32 1.0, %v1798
        %v2823 = vsub.f32 1.0, %v1799
        %v2824 = vsub.f32 1.0, %v1800
        %v2825 = vsub.f32 1.0, %v1801
        %v2826 = vsub.f32 1.0, %v1802
        %v2827 = vsub.f32 1.0, %v1803
        %v2828 = vsub.f32 1.0, %v1804
        %v2829 = vsub.f32 1.0, %v1805
        %v2830 = vsub.f32 1.0, %v1806
        %v2831 = vsub.f32 1.0, %v1807
        %v2832 = vsub.f32 1.0, %v1808
        %v2833 = vsub.f32 1.0, %v1809
        %v2834 = vsub.f32 1.0, %v1810
        %v2835 = vsub.f32 1.0, %v1811
        %v2836 = vsub.f32 1.0, %v1812
        %v2837 = vsub.f32 1.0, %v1813
        %v2838 = vsub.f32 1.0, %v1814
        %v2839 = vsub.f32 1.0, %v1815
        %v2840 = vsub.f32 1.0, %v1816
        %v2841 = vsub.f32 1.0, %v1817
        %v2842 = vsub.f32 1.0, %v1818
        %v2843 = vsub.f32 1.0, %v1819
        %v2844 = vsub.f32 1.0, %v1820
        %v2845 = vsub.f32 1.0, %v1821
        %v2846 = vsub.f32 1.0, %v1822
        %v2847 = vsub.f32 1.0, %v1823
        %v2848 = vsub.f32 1.0, %v1824
        %v2849 = vsub.f32 1.0, %v1825
        %v2850 = vsub.f32 1.0, %v1826
        %v2851 = vsub.f32 1.0, %v1827
        %v2852 = vsub.f32 1.0, %v1828
        %v2853 = vsub.f32 1.0, %v1829
        %v2854 = vsub.f32 1.0, %v1830
        %v2855 = vsub.f32 1.0, %v1831
        %v2856 = vsub.f32 1.0, %v1832
        %v2857 = vsub.f32 1.0, %v1833
        %v2858 = vsub.f32 1.0, %v1834
        %v2859 = vsub.f32 1.0, %v1835
        %v2860 = vsub.f32 1.0, %v1836
        %v2861 = vsub.f32 1.0, %v1837
        %v2862 = vsub.f32 1.0, %v1838
        %v2863 = vsub.f32 1.0, %v1839
        %v2864 = vsub.f32 1.0, %v1840
        %v2865 = vsub.f32 1.0, %v1841
        %v2866 = vsub.f32 1.0, %v1842
        %v2867 = vsub.f32 1.0, %v1843
        %v2868 = vsub.f32 1.0, %v1844
        %v2869 = vsub.f32 1.0, %v1845
        %v2870 = vsub.f32 1.0, %v1846
        %v2871 = vsub.f32 1.0, %v1847
        %v2872 = vsub.f32 1.0, %v1848
        %v2873 = vsub.f32 1.0, %v1849
        %v2874 = vsub.f32 1.0, %v1850
        %v2875 = vsub.f32 1.0, %v1851
        %v2876 = vsub.f32 1.0, %v1852
        %v2877 = vsub.f32 1.0, %v1853
        %v2878 = vsub.f32 1.0, %v1854
        %v2879 = vsub.f32 1.0, %v1855
        %v2880 = vsub.f32 1.0, %v1856
        %v2881 = vsub.f32 1.0, %v1857
        %v2882 = vsub.f32 1.0, %v1858
        %v2883 = vsub.f32 1.0, %v1859
        %v2884 = vsub.f32 1.0, %v1860
        %v2885 = vsub.f32 1.0, %v1861
        %v2886 = vsub.f32 1.0, %v1862
        %v2887 = vsub.f32 1.0, %v1863
        %v2888 = vsub.f32 1.0, %v1864
        %v2889 = vsub.f32 1.0, %v1865
        %v2890 = vsub.f32 1.0, %v1866
        %v2891 = vsub.f32 1.0, %v1867
        %v2892 = vsub.f32 1.0, %v1868
        %v2893 = vsub.f32 1.0, %v1869
        %v2894 = vsub.f32 1.0, %v1870
        %v2895 = vsub.f32 1.0, %v1871
        %v2896 = vsub.f32 1.0, %v1872
        %v2897 = vsub.f32 1.0, %v1873
        %v2898 = vsub.f32 1.0, %v1874
        %v2899 = vsub.f32 1.0, %v1875
        %v2900 = vsub.f32 1.0, %v1876
        %v2901 = vsub.f32 1.0, %v1877
        %v2902 = vsub.f32 1.0, %v1878
        %v2903 = vsub.f32 1.0, %v1879
        %v2904 = vsub.f32 1.0, %v1880
        %v2905 = vsub.f32 1.0, %v1881
        %v2906 = vsub.f32 1.0, %v1882
        %v2907 = vsub.f32 1.0, %v1883
        %v2908 = vsub.f32 1.0, %v1884
        %v2909 = vsub.f32 1.0, %v1885
        %v2910 = vsub.f32 1.0, %v1886
        %v2911 = vsub.f32 1.0, %v1887
        %v2912 = vsub.f32 1.0, %v1888
        %v2913 = vsub.f32 1.0, %v1889
        %v2914 = vsub.f32 1.0, %v1890
        %v2915 = vsub.f32 1.0, %v1891
        %v2916 = vsub.f32 1.0, %v1892
        %v2917 = vsub.f32 1.0, %v1893
        %v2918 = vsub.f32 1.0, %v1894
        %v2919 = vsub.f32 1.0, %v1895
        %v2920 = vsub.f32 1.0, %v1896
        %v2921 = vsub.f32 1.0, %v1897
        %v2922 = vsub.f32 1.0, %v1898
        %v2923 = vsub.f32 1.0, %v1899
        %v2924 = vsub.f32 1.0, %v1900
        %v2925 = vsub.f32 1.0, %v1901
        %v2926 = vsub.f32 1.0, %v1902
        %v2927 = vsub.f32 1.0, %v1903
        %v2928 = vsub.f32 1.0, %v1904
        %v2929 = vsub.f32 1.0, %v1905
        %v2930 = vsub.f32 1.0, %v1906
        %v2931 = vsub.f32 1.0, %v1907
        %v2932 = vsub.f32 1.0, %v1908
        %v2933 = vsub.f32 1.0, %v1909
        %v2934 = vsub.f32 1.0, %v1910
        %v2935 = vsub.f32 1.0, %v1911
        %v2936 = vsub.f32 1.0, %v1912
        %v2937 = vsub.f32 1.0, %v1913
        %v2938 = vsub.f32 1.0, %v1914
        %v2939 = vsub.f32 1.0, %v1915
        %v2940 = vsub.f32 1.0, %v1916
        %v2941 = vsub.f32 1.0, %v1917
        %v2942 = vsub.f32 1.0, %v1918
        %v2943 = vsub.f32 1.0, %v1919
        %v2944 = vsub.f32 1.0, %v1920
        %v2945 = vsub.f32 1.0, %v1921
        %v2946 = vsub.f32 1.0, %v1922
        %v2947 = vsub.f32 1.0, %v1923
        %v2948 = vsub.f32 1.0, %v1924
        %v2949 = vsub.f32 1.0, %v1925
        %v2950 = vsub.f32 1.0, %v1926
        %v2951 = vsub.f32 1.0, %v1927
        %v2952 = vsub.f32 1.0, %v1928
        %v2953 = vsub.f32 1.0, %v1929
        %v2954 = vsub.f32 1.0, %v1930
        %v2955 = vsub.f32 1.0, %v1931
        %v2956 = vsub.f32 1.0, %v1932
        %v2957 = vsub.f32 1.0, %v1933
        %v2958 = vsub.f32 1.0, %v1934
        %v2959 = vsub.f32 1.0, %v1935
        %v2960 = vsub.f32 1.0, %v1936
        %v2961 = vsub.f32 1.0, %v1937
        %v2962 = vsub.f32 1.0, %v1938
        %v2963 = vsub.f32 1.0, %v1939
        %v2964 = vsub.f32 1.0, %v1940
        %v2965 = vsub.f32 1.0, %v1941
        %v2966 = vsub.f32 1.0, %v1942
        %v2967 = vsub.f32 1.0, %v1943
        %v2968 = vsub.f32 1.0, %v1944
        %v2969 = vsub.f32 1.0, %v1945
        %v2970 = vsub.f32 1.0, %v1946
        %v2971 = vsub.f32 1.0, %v1947
        %v2972 = vsub.f32 1.0, %v1948
        %v2973 = vsub.f32 1.0, %v1949
        %v2974 = vsub.f32 1.0, %v1950
        %v2975 = vsub.f32 1.0, %v1951
        %v2976 = vsub.f32 1.0, %v1952
        %v2977 = vsub.f32 1.0, %v1953
        %v2978 = vsub.f32 1.0, %v1954
        %v2979 = vsub.f32 1.0, %v1955
        %v2980 = vsub.f32 1.0, %v1956
        %v2981 = vsub.f32 1.0, %v1957
        %v2982 = vsub.f32 1.0, %v1958
        %v2983 = vsub.f32 1.0, %v1959
        %v2984 = vsub.f32 1.0, %v1960
        %v2985 = vsub.f32 1.0, %v1961
        %v2986 = vsub.f32 1.0, %v1962
        %v2987 = vsub.f32 1.0, %v1963
        %v2988 = vsub.f32 1.0, %v1964
        %v2989 = vsub.f32 1.0, %v1965
        %v2990 = vsub.f32 1.0, %v1966
        %v2991 = vsub.f32 1.0, %v1967
        %v2992 = vsub.f32 1.0, %v1968
        %v2993 = vsub.f32 1.0, %v1969
        %v2994 = vsub.f32 1.0, %v1970
        %v2995 = vsub.f32 1.0, %v1971
        %v2996 = vsub.f32 1.0, %v1972
        %v2997 = vsub.f32 1.0, %v1973
        %v2998 = vsub.f32 1.0, %v1974
        %v2999 = vsub.f32 1.0, %v1975
        %v3000 = vsub.f32 1.0, %v1976
        %v3001 = vsub.f32 1.0, %v1977
        %v3002 = vsub.f32 1.0, %v1978
        %v3003 = vsub.f32 1.0, %v1979
        %v3004 = vsub.f32 1.0, %v1980
        %v3005 = vsub.f32 1.0, %v1981
        %v3006 = vsub.f32 1.0, %v1982
        %v3007 = vsub.f32 1.0, %v1983
        %v3008 = vsub.f32 1.0, %v1984
        %v3009 = vsub.f32 1.0, %v1985
        %v3010 = vsub.f32 1.0, %v1986
        %v3011 = vsub.f32 1.0, %v1987
        %v3012 = vsub.f32 1.0, %v1988
        %v3013 = vsub.f32 1.0, %v1989
        %v3014 = vsub.f32 1.0, %v1990
        %v3015 = vsub.f32 1.0, %v1991
        %v3016 = vsub.f32 1.0, %v1992
        %v3017 = vsub.f32 1.0, %v1993
        %v3018 = vsub.f32 1.0, %v1994
        %v3019 = vsub.f32 1.0, %v1995
        %v3020 = vsub.f32 1.0, %v1996
        %v3021 = vsub.f32 1.0, %v1997
        %v3022 = vsub.f32 1.0, %v1998
        %v3023 = vsub.f32 1.0, %v1999
        %v3024 = vsub.f32 1.0, %v2000
        %v3025 = vsub.f32 1.0, %v2001
        %v3026 = vsub.f32 1.0, %v2002
        %v3027 = vsub.f32 1.0, %v2003
        %v3028 = vsub.f32 1.0, %v2004
        %v3029 = vsub.f32 1.0, %v2005
        %v3030 = vsub.f32 1.0, %v2006
        %v3031 = vsub.f32 1.0, %v2007
        %v3032 = vsub.f32 1.0, %v2008
        %v3033 = vsub.f32 1.0, %v2009
        %v3034 = vsub.f32 1.0, %v2010
        %v3035 = vsub.f32 1.0, %v2011
        %v3036 = vsub.f32 1.0, %v2012
        %v3037 = vsub.f32 1.0, %v2013
        %v3038 = vsub.f32 1.0, %v2014
        %v3039 = vsub.f32 1.0, %v2015
        %v3040 = vsub.f32 1.0, %v2016
        %v3041 = vsub.f32 1.0, %v2017
        %v3042 = vsub.f32 1.0, %v2018
        %v3043 = vsub.f32 1.0, %v2019
        %v3044 = vsub.f32 1.0, %v2020
        %v3045 = vsub.f32 1.0, %v2021
        %v3046 = vsub.f32 1.0, %v2022
        %v3047 = vsub.f32 1.0, %v2023
        %v3048 = vsub.f32 1.0, %v2024
        %v3049 = vsub.f32 1.0, %v2025
        %v3050 = vsub.f32 1.0, %v2026
        %v3051 = vsub.f32 1.0, %v2027
        %v3052 = vsub.f32 1.0, %v2028
        %v3053 = vsub.f32 1.0, %v2029
        %v3054 = vsub.f32 1.0, %v2030
        %v3055 = vsub.f32 1.0, %v2031
        %v3056 = vsub.f32 1.0, %v2032
        %v3057 = vsub.f32 1.0, %v2033
        %v3058 = vsub.f32 1.0, %v2034
        %v3059 = vsub.f32 1.0, %v2035
        %v3060 = vsub.f32 1.0, %v2036
        %v3061 = vsub.f32 1.0, %v2037
        %v3062 = vsub.f32 1.0, %v2038
        %v3063 = vsub.f32 1.0, %v2039
        %v3064 = vsub.f32 1.0, %v2040
        %v3065 = vsub.f32 1.0, %v2041
        %v3066 = vsub.f32 1.0, %v2042
        %v3067 = vsub.f32 1.0, %v2043
        %v3068 = vsub.f32 1.0, %v2044
        %v3069 = vsub.f32 1.0, %v2045
        %v3070 = vsub.f32 1.0, %v2046
        %v3071 = vsub.f32 1.0, %v2047
        %v3072 = vsub.f32 1.0, %v2048
        %v3073 = vsub.f32 1.0, %v2049
        %v3074 = vsub.f32 1.0, %v2050
        %v3075 = vsub.f32 1.0, %v2051
        %v3076 = vsub.f32 1.0, %v2052
        %v3077 = vsub.f32 1.0, %v2053
        %v3078 = vsub.f32 1.0, %v2054
        %v3079 = vsub.f32 1.0, %v2055
        %v3080 = vsub.f32 1.0, %v2056
        %v3081 = vsub.f32 1.0, %v2057
        %v3082 = vsub.f32 1.0, %v2058
        %v3083 = vsub.f32 1.0, %v2059
        %v3084 = vsub.f32 1.0, %v2060
        %v3085 = vsub.f32 1.0, %v2061
        %v3086 = vsub.f32 1.0, %v2062
        %v3087 = vsub.f32 1.0, %v2063
        %v3088 = vsub.f32 1.0, %v2064
        %v3089 = vsub.f32 1.0, %v2065
        %v3090 = vsub.f32 1.0, %v2066
        %v3091 = vsub.f32 1.0, %v2067
        %v3092 = vsub.f32 1.0, %v2068
        %v3093 = vsub.f32 1.0, %v2069
        %v3094 = vsub.f32 1.0, %v2070
        %v3095 = vsub.f32 1.0, %v2071
        %v3096 = vsub.f32 1.0, %v2072
        %v3097 = vsub.f32 1.0, %v2073
        %v3098 = vsub.f32 1.0, %v2074
        %v3099 = vsub.f32 1.0, %v2075
        %v3100 = vsub.f32 1.0, %v2076
        %v3101 = vsub.f32 1.0, %v2077
        %v3102 = vsub.f32 1.0, %v2078
        %v3103 = vsub.f32 1.0, %v2079
        %v3104 = vsub.f32 1.0, %v2080
        %v3105 = vsub.f32 1.0, %v2081
        %v3106 = vsub.f32 1.0, %v2082
        %v3107 = vsub.f32 1.0, %v2083
        %v3108 = vsub.f32 1.0, %v2084
        %v3109 = vsub.f32 1.0, %v2085
        %v3110 = vsub.f32 1.0, %v2086
        %v3111 = vsub.f32 1.0, %v2087
        %v3112 = vsub.f32 1.0, %v2088
        %v3113 = vsub.f32 1.0, %v2089
        %v3114 = vsub.f32 1.0, %v2090
        %v3115 = vsub.f32 1.0, %v2091
        %v3116 = vsub.f32 1.0, %v2092
        %v3117 = vsub.f32 1.0, %v2093
        %v3118 = vsub.f32 1.0, %v2094
        %v3119 = vsub.f32 1.0, %v2095
        %v3120 = vsub.f32 1.0, %v2096
        %v3121 = vsub.f32 1.0, %v2097
        %v3122 = vsub.f32 1.0, %v2098
        %v3123 = vsub.f32 1.0, %v2099
        %v3124 = vsub.f32 1.0, %v2100
        %v3125 = vsub.f32 1.0, %v2101
        %v3126 = vsub.f32 1.0, %v2102
        %v3127 = vsub.f32 1.0, %v2103
        %v3128 = vsub.f32 1.0, %v2104
        %v3129 = vsub.f32 1.0, %v2105
        %v3130 = vsub.f32 1.0, %v2106
        %v3131 = vsub.f32 1.0, %v2107
        %v3132 = vsub.f32 1.0, %v2108
        %v3133 = vsub.f32 1.0, %v2109
        %v3134 = vsub.f32 1.0, %v2110
        %v3135 = vsub.f32 1.0, %v2111
        %v3136 = vsub.f32 1.0, %v2112
        %v3137 = vsub.f32 1.0, %v2113
        %v3138 = vsub.f32 1.0, %v2114
        %v3139 = vsub.f32 1.0, %v2115
        %v3140 = vsub.f32 1.0, %v2116
        %v3141 = vsub.f32 1.0, %v2117
        %v3142 = vsub.f32 1.0, %v2118
        %v3143 = vsub.f32 1.0, %v2119
        %v3144 = vsub.f32 1.0, %v2120
        %v3145 = vsub.f32 1.0, %v2121
        %v3146 = vsub.f32 1.0, %v2122
        %v3147 = vsub.f32 1.0, %v2123
        %v3148 = vsub.f32 1.0, %v2124
        %v3149 = vsub.f32 1.0, %v2125
        %v3150 = vsub.f32 1.0, %v2126
        %v3151 = vsub.f32 1.0, %v2127
        %v3152 = vsub.f32 1.0, %v2128
        %v3153 = vsub.f32 1.0, %v2129
        %v3154 = vsub.f32 1.0, %v2130
        %v3155 = vsub.f32 1.0, %v2131
        %v3156 = vsub.f32 1.0, %v2132
        %v3157 = vsub.f32 1.0, %v2133
        %v3158 = vsub.f32 1.0, %v2134
        %v3159 = vsub.f32 1.0, %v2135
        %v3160 = vsub.f32 1.0, %v2136
        %v3161 = vsub.f32 1.0, %v2137
        %v3162 = vsub.f32 1.0, %v2138
        %v3163 = vsub.f32 1.0, %v2139
        %v3164 = vsub.f32 1.0, %v2140
        %v3165 = vsub.f32 1.0, %v2141
        %v3166 = vsub.f32 1.0, %v2142
        %v3167 = vsub.f32 1.0, %v2143
        %v3168 = vsub.f32 1.0, %v2144
        %v3169 = vsub.f32 1.0, %v2145
        %v3170 = vsub.f32 1.0, %v2146
        %v3171 = vsub.f32 1.0, %v2147
        %v3172 = vsub.f32 1.0, %v2148
        %v3173 = vsub.f32 1.0, %v2149
        %v3174 = vsub.f32 1.0, %v2150
        %v3175 = vsub.f32 1.0, %v2151
        %v3176 = vsub.f32 1.0, %v2152
        %v3177 = vsub.f32 1.0, %v2153
        %v3178 = vsub.f32 1.0, %v2154
        %v3179 = vsub.f32 1.0, %v2155
        %v3180 = vsub.f32 1.0, %v2156
        %v3181 = vsub.f32 1.0, %v2157
        %v3182 = vsub.f32 1.0, %v2158
        %v3183 = vsub.f32 1.0, %v2159
        %v3184 = vsub.f32 1.0, %v2160
        %v3185 = vsub.f32 1.0, %v2161
        %v3186 = vsub.f32 1.0, %v2162
        %v3187 = vsub.f32 1.0, %v2163
        %v3188 = vsub.f32 1.0, %v2164
        %v3189 = vsub.f32 1.0, %v2165
        %v3190 = vsub.f32 1.0, %v2166
        %v3191 = vsub.f32 1.0, %v2167
        %v3192 = vsub.f32 1.0, %v2168
        %v3193 = vsub.f32 1.0, %v2169
        %v3194 = vsub.f32 1.0, %v2170
        %v3195 = vsub.f32 1.0, %v2171
        %v3196 = vsub.f32 1.0, %v2172
        %v3197 = vsub.f32 1.0, %v2173
        %v3198 = vsub.f32 1.0, %v2174
        %v3199 = vsub.f32 1.0, %v2175
        %v3200 = vsub.f32 1.0, %v2176
        %v3201 = vsub.f32 1.0, %v2177
        %v3202 = vsub.f32 1.0, %v2178
        %v3203 = vsub.f32 1.0, %v2179
        %v3204 = vsub.f32 1.0, %v2180
        %v3205 = vsub.f32 1.0, %v2181
        %v3206 = vsub.f32 1.0, %v2182
        %v3207 = vsub.f32 1.0, %v2183
        %v3208 = vsub.f32 1.0, %v2184
        %v3209 = vsub.f32 1.0, %v2185
        %v3210 = vsub.f32 1.0, %v2186
        %v3211 = vsub.f32 1.0, %v2187
        %v3212 = vsub.f32 1.0, %v2188
        %v3213 = vsub.f32 1.0, %v2189
        %v3214 = vsub.f32 1.0, %v2190
        %v3215 = vsub.f32 1.0, %v2191
        %v3216 = vsub.f32 1.0, %v2192
        %v3217 = vsub.f32 1.0, %v2193
        %v3218 = vsub.f32 1.0, %v2194
        %v3219 = vsub.f32 1.0, %v2195
        %v3220 = vsub.f32 1.0, %v2196
        %v3221 = vsub.f32 1.0, %v2197
        %v3222 = vsub.f32 1.0, %v2198
        %v3223 = vsub.f32 1.0, %v2199
        %v3224 = vsub.f32 1.0, %v2200
        %v3225 = vsub.f32 1.0, %v2201
        %v3226 = vsub.f32 1.0, %v2202
        %v3227 = vsub.f32 1.0, %v2203
        %v3228 = vsub.f32 1.0, %v2204
        %v3229 = vsub.f32 1.0, %v2205
        %v3230 = vsub.f32 1.0, %v2206
        %v3231 = vsub.f32 1.0, %v2207
        %v3232 = vsub.f32 1.0, %v2208
        %v3233 = vsub.f32 1.0, %v2209
        %v3234 = vsub.f32 1.0, %v2210
        %v3235 = vsub.f32 1.0, %v2211
        %v3236 = vsub.f32 1.0, %v2212
        %v3237 = vsub.f32 1.0, %v2213
        %v3238 = vsub.f32 1.0, %v2214
        %v3239 = vsub.f32 1.0, %v2215
        %v3240 = vsub.f32 1.0, %v2216
        %v3241 = vsub.f32 1.0, %v2217
        %v3242 = vsub.f32 1.0, %v2218
        %v3243 = vsub.f32 1.0, %v2219
        %v3244 = vsub.f32 1.0, %v2220
        %v3245 = vsub.f32 1.0, %v2221
        %v3246 = vsub.f32 1.0, %v2222
        %v3247 = vsub.f32 1.0, %v2223
        %v3248 = vsub.f32 1.0, %v2224
        %v3249 = vsub.f32 1.0, %v2225
        %v3250 = vsub.f32 1.0, %v2226
        %v3251 = vsub.f32 1.0, %v2227
        %v3252 = vsub.f32 1.0, %v2228
        %v3253 = vsub.f32 1.0, %v2229
        %v3254 = vsub.f32 1.0, %v2230
        %v3255 = vsub.f32 1.0, %v2231
        %v3256 = vsub.f32 1.0, %v2232
        %v3257 = vsub.f32 1.0, %v2233
        %v3258 = vsub.f32 1.0, %v2234
        %v3259 = vsub.f32 1.0, %v2235
        %v3260 = vsub.f32 1.0, %v2236
        %v3261 = vsub.f32 1.0, %v2237
        %v3262 = vsub.f32 1.0, %v2238
        %v3263 = vsub.f32 1.0, %v2239
        %v3264 = vsub.f32 1.0, %v2240
        %v3265 = vsub.f32 1.0, %v2241
        %v3266 = vsub.f32 1.0, %v2242
        %v3267 = vsub.f32 1.0, %v2243
        %v3268 = vsub.f32 1.0, %v2244
        %v3269 = vsub.f32 1.0, %v2245
        %v3270 = vsub.f32 1.0, %v2246
        %v3271 = vsub.f32 1.0, %v2247
        %v3272 = vsub.f32 1.0, %v2248
        %v3273 = vsub.f32 1.0, %v2249
        %v3274 = vsub.f32 1.0, %v2250
        %v3275 = vsub.f32 1.0, %v2251
        %v3276 = vsub.f32 1.0, %v2252
        %v3277 = vsub.f32 1.0, %v2253
        %v3278 = vsub.f32 1.0, %v2254
        %v3279 = vsub.f32 1.0, %v2255
        %v3280 = vsub.f32 1.0, %v2256
        %v3281 = vsub.f32 1.0, %v2257
        %v3282 = vsub.f32 1.0, %v2258
        %v3283 = vsub.f32 1.0, %v2259
        %v3284 = vsub.f32 1.0, %v2260
        %v3285 = vsub.f32 1.0, %v2261
        %v3286 = vsub.f32 1.0, %v2262
        %v3287 = vsub.f32 1.0, %v2263
        %v3288 = vsub.f32 1.0, %v2264
        %v3289 = vsub.f32 1.0, %v2265
        %v3290 = vsub.f32 1.0, %v2266
        %v3291 = vsub.f32 1.0, %v2267
        %v3292 = vsub.f32 1.0, %v2268
        %v3293 = vsub.f32 1.0, %v2269
        %v3294 = vsub.f32 1.0, %v2270
        %v3295 = vsub.f32 1.0, %v2271
        %v3296 = vsub.f32 1.0, %v2272
        %v3297 = vsub.f32 1.0, %v2273
        %v3298 = vsub.f32 1.0, %v2274
        %v3299 = vsub.f32 1.0, %v2275
        %v3300 = vsub.f32 1.0, %v2276
        %v3301 = vsub.f32 1.0, %v2277
        %v3302 = vsub.f32 1.0, %v2278
        %v3303 = vsub.f32 1.0, %v2279
        %v3304 = vsub.f32 1.0, %v2280
        %v3305 = vsub.f32 1.0, %v2281
        %v3306 = vsub.f32 1.0, %v2282
        %v3307 = vsub.f32 1.0, %v2283
        %v3308 = vsub.f32 1.0, %v2284
        %v3309 = vsub.f32 1.0, %v2285
        %v3310 = vsub.f32 1.0, %v2286
        %v3311 = vsub.f32 1.0, %v2287
        %v3312 = vsub.f32 1.0, %v2288
        %v3313 = vsub.f32 1.0, %v2289
        %v3314 = vsub.f32 1.0, %v2290
        %v3315 = vsub.f32 1.0, %v2291
        %v3316 = vsub.f32 1.0, %v2292
        %v3317 = vsub.f32 1.0, %v2293
        %v3318 = vsub.f32 1.0, %v2294
        %v3319 = vsub.f32 1.0, %v2295
        %v3320 = vsub.f32 1.0, %v2296
        %v3321 = vsub.f32 1.0, %v2297
        %v3322 = vsub.f32 1.0, %v2298
        %v3323 = vsub.f32 1.0, %v2299
        %v3324 = vsub.f32 1.0, %v2300
        %v3325 = vsel %vm1277, %v2813, 0.0
        %v3326 = vsel %vm1278, %v2814, 0.0
        %v3327 = vsel %vm1279, %v2815, 0.0
        %v3328 = vsel %vm1280, %v2816, 0.0
        %v3329 = vsel %vm1281, %v2817, 0.0
        %v3330 = vsel %vm1282, %v2818, 0.0
        %v3331 = vsel %vm1283, %v2819, 0.0
        %v3332 = vsel %vm1284, %v2820, 0.0
        %v3333 = vsel %vm1285, %v2821, 0.0
        %v3334 = vsel %vm1286, %v2822, 0.0
        %v3335 = vsel %vm1287, %v2823, 0.0
        %v3336 = vsel %vm1288, %v2824, 0.0
        %v3337 = vsel %vm1289, %v2825, 0.0
        %v3338 = vsel %vm1290, %v2826, 0.0
        %v3339 = vsel %vm1291, %v2827, 0.0
        %v3340 = vsel %vm1292, %v2828, 0.0
        %v3341 = vsel %vm1293, %v2829, 0.0
        %v3342 = vsel %vm1294, %v2830, 0.0
        %v3343 = vsel %vm1295, %v2831, 0.0
        %v3344 = vsel %vm1296, %v2832, 0.0
        %v3345 = vsel %vm1297, %v2833, 0.0
        %v3346 = vsel %vm1298, %v2834, 0.0
        %v3347 = vsel %vm1299, %v2835, 0.0
        %v3348 = vsel %vm1300, %v2836, 0.0
        %v3349 = vsel %vm1301, %v2837, 0.0
        %v3350 = vsel %vm1302, %v2838, 0.0
        %v3351 = vsel %vm1303, %v2839, 0.0
        %v3352 = vsel %vm1304, %v2840, 0.0
        %v3353 = vsel %vm1305, %v2841, 0.0
        %v3354 = vsel %vm1306, %v2842, 0.0
        %v3355 = vsel %vm1307, %v2843, 0.0
        %v3356 = vsel %vm1308, %v2844, 0.0
        %v3357 = vsel %vm1309, %v2845, 0.0
        %v3358 = vsel %vm1310, %v2846, 0.0
        %v3359 = vsel %vm1311, %v2847, 0.0
        %v3360 = vsel %vm1312, %v2848, 0.0
        %v3361 = vsel %vm1313, %v2849, 0.0
        %v3362 = vsel %vm1314, %v2850, 0.0
        %v3363 = vsel %vm1315, %v2851, 0.0
        %v3364 = vsel %vm1316, %v2852, 0.0
        %v3365 = vsel %vm1317, %v2853, 0.0
        %v3366 = vsel %vm1318, %v2854, 0.0
        %v3367 = vsel %vm1319, %v2855, 0.0
        %v3368 = vsel %vm1320, %v2856, 0.0
        %v3369 = vsel %vm1321, %v2857, 0.0
        %v3370 = vsel %vm1322, %v2858, 0.0
        %v3371 = vsel %vm1323, %v2859, 0.0
        %v3372 = vsel %vm1324, %v2860, 0.0
        %v3373 = vsel %vm1325, %v2861, 0.0
        %v3374 = vsel %vm1326, %v2862, 0.0
        %v3375 = vsel %vm1327, %v2863, 0.0
        %v3376 = vsel %vm1328, %v2864, 0.0
        %v3377 = vsel %vm1329, %v2865, 0.0
        %v3378 = vsel %vm1330, %v2866, 0.0
        %v3379 = vsel %vm1331, %v2867, 0.0
        %v3380 = vsel %vm1332, %v2868, 0.0
        %v3381 = vsel %vm1333, %v2869, 0.0
        %v3382 = vsel %vm1334, %v2870, 0.0
        %v3383 = vsel %vm1335, %v2871, 0.0
        %v3384 = vsel %vm1336, %v2872, 0.0
        %v3385 = vsel %vm1337, %v2873, 0.0
        %v3386 = vsel %vm1338, %v2874, 0.0
        %v3387 = vsel %vm1339, %v2875, 0.0
        %v3388 = vsel %vm1340, %v2876, 0.0
        %v3389 = vsel %vm1341, %v2877, 0.0
        %v3390 = vsel %vm1342, %v2878, 0.0
        %v3391 = vsel %vm1343, %v2879, 0.0
        %v3392 = vsel %vm1344, %v2880, 0.0
        %v3393 = vsel %vm1345, %v2881, 0.0
        %v3394 = vsel %vm1346, %v2882, 0.0
        %v3395 = vsel %vm1347, %v2883, 0.0
        %v3396 = vsel %vm1348, %v2884, 0.0
        %v3397 = vsel %vm1349, %v2885, 0.0
        %v3398 = vsel %vm1350, %v2886, 0.0
        %v3399 = vsel %vm1351, %v2887, 0.0
        %v3400 = vsel %vm1352, %v2888, 0.0
        %v3401 = vsel %vm1353, %v2889, 0.0
        %v3402 = vsel %vm1354, %v2890, 0.0
        %v3403 = vsel %vm1355, %v2891, 0.0
        %v3404 = vsel %vm1356, %v2892, 0.0
        %v3405 = vsel %vm1357, %v2893, 0.0
        %v3406 = vsel %vm1358, %v2894, 0.0
        %v3407 = vsel %vm1359, %v2895, 0.0
        %v3408 = vsel %vm1360, %v2896, 0.0
        %v3409 = vsel %vm1361, %v2897, 0.0
        %v3410 = vsel %vm1362, %v2898, 0.0
        %v3411 = vsel %vm1363, %v2899, 0.0
        %v3412 = vsel %vm1364, %v2900, 0.0
        %v3413 = vsel %vm1365, %v2901, 0.0
        %v3414 = vsel %vm1366, %v2902, 0.0
        %v3415 = vsel %vm1367, %v2903, 0.0
        %v3416 = vsel %vm1368, %v2904, 0.0
        %v3417 = vsel %vm1369, %v2905, 0.0
        %v3418 = vsel %vm1370, %v2906, 0.0
        %v3419 = vsel %vm1371, %v2907, 0.0
        %v3420 = vsel %vm1372, %v2908, 0.0
        %v3421 = vsel %vm1373, %v2909, 0.0
        %v3422 = vsel %vm1374, %v2910, 0.0
        %v3423 = vsel %vm1375, %v2911, 0.0
        %v3424 = vsel %vm1376, %v2912, 0.0
        %v3425 = vsel %vm1377, %v2913, 0.0
        %v3426 = vsel %vm1378, %v2914, 0.0
        %v3427 = vsel %vm1379, %v2915, 0.0
        %v3428 = vsel %vm1380, %v2916, 0.0
        %v3429 = vsel %vm1381, %v2917, 0.0
        %v3430 = vsel %vm1382, %v2918, 0.0
        %v3431 = vsel %vm1383, %v2919, 0.0
        %v3432 = vsel %vm1384, %v2920, 0.0
        %v3433 = vsel %vm1385, %v2921, 0.0
        %v3434 = vsel %vm1386, %v2922, 0.0
        %v3435 = vsel %vm1387, %v2923, 0.0
        %v3436 = vsel %vm1388, %v2924, 0.0
        %v3437 = vsel %vm1389, %v2925, 0.0
        %v3438 = vsel %vm1390, %v2926, 0.0
        %v3439 = vsel %vm1391, %v2927, 0.0
        %v3440 = vsel %vm1392, %v2928, 0.0
        %v3441 = vsel %vm1393, %v2929, 0.0
        %v3442 = vsel %vm1394, %v2930, 0.0
        %v3443 = vsel %vm1395, %v2931, 0.0
        %v3444 = vsel %vm1396, %v2932, 0.0
        %v3445 = vsel %vm1397, %v2933, 0.0
        %v3446 = vsel %vm1398, %v2934, 0.0
        %v3447 = vsel %vm1399, %v2935, 0.0
        %v3448 = vsel %vm1400, %v2936, 0.0
        %v3449 = vsel %vm1401, %v2937, 0.0
        %v3450 = vsel %vm1402, %v2938, 0.0
        %v3451 = vsel %vm1403, %v2939, 0.0
        %v3452 = vsel %vm1404, %v2940, 0.0
        %v3453 = vsel %vm1405, %v2941, 0.0
        %v3454 = vsel %vm1406, %v2942, 0.0
        %v3455 = vsel %vm1407, %v2943, 0.0
        %v3456 = vsel %vm1408, %v2944, 0.0
        %v3457 = vsel %vm1409, %v2945, 0.0
        %v3458 = vsel %vm1410, %v2946, 0.0
        %v3459 = vsel %vm1411, %v2947, 0.0
        %v3460 = vsel %vm1412, %v2948, 0.0
        %v3461 = vsel %vm1413, %v2949, 0.0
        %v3462 = vsel %vm1414, %v2950, 0.0
        %v3463 = vsel %vm1415, %v2951, 0.0
        %v3464 = vsel %vm1416, %v2952, 0.0
        %v3465 = vsel %vm1417, %v2953, 0.0
        %v3466 = vsel %vm1418, %v2954, 0.0
        %v3467 = vsel %vm1419, %v2955, 0.0
        %v3468 = vsel %vm1420, %v2956, 0.0
        %v3469 = vsel %vm1421, %v2957, 0.0
        %v3470 = vsel %vm1422, %v2958, 0.0
        %v3471 = vsel %vm1423, %v2959, 0.0
        %v3472 = vsel %vm1424, %v2960, 0.0
        %v3473 = vsel %vm1425, %v2961, 0.0
        %v3474 = vsel %vm1426, %v2962, 0.0
        %v3475 = vsel %vm1427, %v2963, 0.0
        %v3476 = vsel %vm1428, %v2964, 0.0
        %v3477 = vsel %vm1429, %v2965, 0.0
        %v3478 = vsel %vm1430, %v2966, 0.0
        %v3479 = vsel %vm1431, %v2967, 0.0
        %v3480 = vsel %vm1432, %v2968, 0.0
        %v3481 = vsel %vm1433, %v2969, 0.0
        %v3482 = vsel %vm1434, %v2970, 0.0
        %v3483 = vsel %vm1435, %v2971, 0.0
        %v3484 = vsel %vm1436, %v2972, 0.0
        %v3485 = vsel %vm1437, %v2973, 0.0
        %v3486 = vsel %vm1438, %v2974, 0.0
        %v3487 = vsel %vm1439, %v2975, 0.0
        %v3488 = vsel %vm1440, %v2976, 0.0
        %v3489 = vsel %vm1441, %v2977, 0.0
        %v3490 = vsel %vm1442, %v2978, 0.0
        %v3491 = vsel %vm1443, %v2979, 0.0
        %v3492 = vsel %vm1444, %v2980, 0.0
        %v3493 = vsel %vm1445, %v2981, 0.0
        %v3494 = vsel %vm1446, %v2982, 0.0
        %v3495 = vsel %vm1447, %v2983, 0.0
        %v3496 = vsel %vm1448, %v2984, 0.0
        %v3497 = vsel %vm1449, %v2985, 0.0
        %v3498 = vsel %vm1450, %v2986, 0.0
        %v3499 = vsel %vm1451, %v2987, 0.0
        %v3500 = vsel %vm1452, %v2988, 0.0
        %v3501 = vsel %vm1453, %v2989, 0.0
        %v3502 = vsel %vm1454, %v2990, 0.0
        %v3503 = vsel %vm1455, %v2991, 0.0
        %v3504 = vsel %vm1456, %v2992, 0.0
        %v3505 = vsel %vm1457, %v2993, 0.0
        %v3506 = vsel %vm1458, %v2994, 0.0
        %v3507 = vsel %vm1459, %v2995, 0.0
        %v3508 = vsel %vm1460, %v2996, 0.0
        %v3509 = vsel %vm1461, %v2997, 0.0
        %v3510 = vsel %vm1462, %v2998, 0.0
        %v3511 = vsel %vm1463, %v2999, 0.0
        %v3512 = vsel %vm1464, %v3000, 0.0
        %v3513 = vsel %vm1465, %v3001, 0.0
        %v3514 = vsel %vm1466, %v3002, 0.0
        %v3515 = vsel %vm1467, %v3003, 0.0
        %v3516 = vsel %vm1468, %v3004, 0.0
        %v3517 = vsel %vm1469, %v3005, 0.0
        %v3518 = vsel %vm1470, %v3006, 0.0
        %v3519 = vsel %vm1471, %v3007, 0.0
        %v3520 = vsel %vm1472, %v3008, 0.0
        %v3521 = vsel %vm1473, %v3009, 0.0
        %v3522 = vsel %vm1474, %v3010, 0.0
        %v3523 = vsel %vm1475, %v3011, 0.0
        %v3524 = vsel %vm1476, %v3012, 0.0
        %v3525 = vsel %vm1477, %v3013, 0.0
        %v3526 = vsel %vm1478, %v3014, 0.0
        %v3527 = vsel %vm1479, %v3015, 0.0
        %v3528 = vsel %vm1480, %v3016, 0.0
        %v3529 = vsel %vm1481, %v3017, 0.0
        %v3530 = vsel %vm1482, %v3018, 0.0
        %v3531 = vsel %vm1483, %v3019, 0.0
        %v3532 = vsel %vm1484, %v3020, 0.0
        %v3533 = vsel %vm1485, %v3021, 0.0
        %v3534 = vsel %vm1486, %v3022, 0.0
        %v3535 = vsel %vm1487, %v3023, 0.0
        %v3536 = vsel %vm1488, %v3024, 0.0
        %v3537 = vsel %vm1489, %v3025, 0.0
        %v3538 = vsel %vm1490, %v3026, 0.0
        %v3539 = vsel %vm1491, %v3027, 0.0
        %v3540 = vsel %vm1492, %v3028, 0.0
        %v3541 = vsel %vm1493, %v3029, 0.0
        %v3542 = vsel %vm1494, %v3030, 0.0
        %v3543 = vsel %vm1495, %v3031, 0.0
        %v3544 = vsel %vm1496, %v3032, 0.0
        %v3545 = vsel %vm1497, %v3033, 0.0
        %v3546 = vsel %vm1498, %v3034, 0.0
        %v3547 = vsel %vm1499, %v3035, 0.0
        %v3548 = vsel %vm1500, %v3036, 0.0
        %v3549 = vsel %vm1501, %v3037, 0.0
        %v3550 = vsel %vm1502, %v3038, 0.0
        %v3551 = vsel %vm1503, %v3039, 0.0
        %v3552 = vsel %vm1504, %v3040, 0.0
        %v3553 = vsel %vm1505, %v3041, 0.0
        %v3554 = vsel %vm1506, %v3042, 0.0
        %v3555 = vsel %vm1507, %v3043, 0.0
        %v3556 = vsel %vm1508, %v3044, 0.0
        %v3557 = vsel %vm1509, %v3045, 0.0
        %v3558 = vsel %vm1510, %v3046, 0.0
        %v3559 = vsel %vm1511, %v3047, 0.0
        %v3560 = vsel %vm1512, %v3048, 0.0
        %v3561 = vsel %vm1513, %v3049, 0.0
        %v3562 = vsel %vm1514, %v3050, 0.0
        %v3563 = vsel %vm1515, %v3051, 0.0
        %v3564 = vsel %vm1516, %v3052, 0.0
        %v3565 = vsel %vm1517, %v3053, 0.0
        %v3566 = vsel %vm1518, %v3054, 0.0
        %v3567 = vsel %vm1519, %v3055, 0.0
        %v3568 = vsel %vm1520, %v3056, 0.0
        %v3569 = vsel %vm1521, %v3057, 0.0
        %v3570 = vsel %vm1522, %v3058, 0.0
        %v3571 = vsel %vm1523, %v3059, 0.0
        %v3572 = vsel %vm1524, %v3060, 0.0
        %v3573 = vsel %vm1525, %v3061, 0.0
        %v3574 = vsel %vm1526, %v3062, 0.0
        %v3575 = vsel %vm1527, %v3063, 0.0
        %v3576 = vsel %vm1528, %v3064, 0.0
        %v3577 = vsel %vm1529, %v3065, 0.0
        %v3578 = vsel %vm1530, %v3066, 0.0
        %v3579 = vsel %vm1531, %v3067, 0.0
        %v3580 = vsel %vm1532, %v3068, 0.0
        %v3581 = vsel %vm1533, %v3069, 0.0
        %v3582 = vsel %vm1534, %v3070, 0.0
        %v3583 = vsel %vm1535, %v3071, 0.0
        %v3584 = vsel %vm1536, %v3072, 0.0
        %v3585 = vsel %vm1537, %v3073, 0.0
        %v3586 = vsel %vm1538, %v3074, 0.0
        %v3587 = vsel %vm1539, %v3075, 0.0
        %v3588 = vsel %vm1540, %v3076, 0.0
        %v3589 = vsel %vm1541, %v3077, 0.0
        %v3590 = vsel %vm1542, %v3078, 0.0
        %v3591 = vsel %vm1543, %v3079, 0.0
        %v3592 = vsel %vm1544, %v3080, 0.0
        %v3593 = vsel %vm1545, %v3081, 0.0
        %v3594 = vsel %vm1546, %v3082, 0.0
        %v3595 = vsel %vm1547, %v3083, 0.0
        %v3596 = vsel %vm1548, %v3084, 0.0
        %v3597 = vsel %vm1549, %v3085, 0.0
        %v3598 = vsel %vm1550, %v3086, 0.0
        %v3599 = vsel %vm1551, %v3087, 0.0
        %v3600 = vsel %vm1552, %v3088, 0.0
        %v3601 = vsel %vm1553, %v3089, 0.0
        %v3602 = vsel %vm1554, %v3090, 0.0
        %v3603 = vsel %vm1555, %v3091, 0.0
        %v3604 = vsel %vm1556, %v3092, 0.0
        %v3605 = vsel %vm1557, %v3093, 0.0
        %v3606 = vsel %vm1558, %v3094, 0.0
        %v3607 = vsel %vm1559, %v3095, 0.0
        %v3608 = vsel %vm1560, %v3096, 0.0
        %v3609 = vsel %vm1561, %v3097, 0.0
        %v3610 = vsel %vm1562, %v3098, 0.0
        %v3611 = vsel %vm1563, %v3099, 0.0
        %v3612 = vsel %vm1564, %v3100, 0.0
        %v3613 = vsel %vm1565, %v3101, 0.0
        %v3614 = vsel %vm1566, %v3102, 0.0
        %v3615 = vsel %vm1567, %v3103, 0.0
        %v3616 = vsel %vm1568, %v3104, 0.0
        %v3617 = vsel %vm1569, %v3105, 0.0
        %v3618 = vsel %vm1570, %v3106, 0.0
        %v3619 = vsel %vm1571, %v3107, 0.0
        %v3620 = vsel %vm1572, %v3108, 0.0
        %v3621 = vsel %vm1573, %v3109, 0.0
        %v3622 = vsel %vm1574, %v3110, 0.0
        %v3623 = vsel %vm1575, %v3111, 0.0
        %v3624 = vsel %vm1576, %v3112, 0.0
        %v3625 = vsel %vm1577, %v3113, 0.0
        %v3626 = vsel %vm1578, %v3114, 0.0
        %v3627 = vsel %vm1579, %v3115, 0.0
        %v3628 = vsel %vm1580, %v3116, 0.0
        %v3629 = vsel %vm1581, %v3117, 0.0
        %v3630 = vsel %vm1582, %v3118, 0.0
        %v3631 = vsel %vm1583, %v3119, 0.0
        %v3632 = vsel %vm1584, %v3120, 0.0
        %v3633 = vsel %vm1585, %v3121, 0.0
        %v3634 = vsel %vm1586, %v3122, 0.0
        %v3635 = vsel %vm1587, %v3123, 0.0
        %v3636 = vsel %vm1588, %v3124, 0.0
        %v3637 = vsel %vm1589, %v3125, 0.0
        %v3638 = vsel %vm1590, %v3126, 0.0
        %v3639 = vsel %vm1591, %v3127, 0.0
        %v3640 = vsel %vm1592, %v3128, 0.0
        %v3641 = vsel %vm1593, %v3129, 0.0
        %v3642 = vsel %vm1594, %v3130, 0.0
        %v3643 = vsel %vm1595, %v3131, 0.0
        %v3644 = vsel %vm1596, %v3132, 0.0
        %v3645 = vsel %vm1597, %v3133, 0.0
        %v3646 = vsel %vm1598, %v3134, 0.0
        %v3647 = vsel %vm1599, %v3135, 0.0
        %v3648 = vsel %vm1600, %v3136, 0.0
        %v3649 = vsel %vm1601, %v3137, 0.0
        %v3650 = vsel %vm1602, %v3138, 0.0
        %v3651 = vsel %vm1603, %v3139, 0.0
        %v3652 = vsel %vm1604, %v3140, 0.0
        %v3653 = vsel %vm1605, %v3141, 0.0
        %v3654 = vsel %vm1606, %v3142, 0.0
        %v3655 = vsel %vm1607, %v3143, 0.0
        %v3656 = vsel %vm1608, %v3144, 0.0
        %v3657 = vsel %vm1609, %v3145, 0.0
        %v3658 = vsel %vm1610, %v3146, 0.0
        %v3659 = vsel %vm1611, %v3147, 0.0
        %v3660 = vsel %vm1612, %v3148, 0.0
        %v3661 = vsel %vm1613, %v3149, 0.0
        %v3662 = vsel %vm1614, %v3150, 0.0
        %v3663 = vsel %vm1615, %v3151, 0.0
        %v3664 = vsel %vm1616, %v3152, 0.0
        %v3665 = vsel %vm1617, %v3153, 0.0
        %v3666 = vsel %vm1618, %v3154, 0.0
        %v3667 = vsel %vm1619, %v3155, 0.0
        %v3668 = vsel %vm1620, %v3156, 0.0
        %v3669 = vsel %vm1621, %v3157, 0.0
        %v3670 = vsel %vm1622, %v3158, 0.0
        %v3671 = vsel %vm1623, %v3159, 0.0
        %v3672 = vsel %vm1624, %v3160, 0.0
        %v3673 = vsel %vm1625, %v3161, 0.0
        %v3674 = vsel %vm1626, %v3162, 0.0
        %v3675 = vsel %vm1627, %v3163, 0.0
        %v3676 = vsel %vm1628, %v3164, 0.0
        %v3677 = vsel %vm1629, %v3165, 0.0
        %v3678 = vsel %vm1630, %v3166, 0.0
        %v3679 = vsel %vm1631, %v3167, 0.0
        %v3680 = vsel %vm1632, %v3168, 0.0
        %v3681 = vsel %vm1633, %v3169, 0.0
        %v3682 = vsel %vm1634, %v3170, 0.0
        %v3683 = vsel %vm1635, %v3171, 0.0
        %v3684 = vsel %vm1636, %v3172, 0.0
        %v3685 = vsel %vm1637, %v3173, 0.0
        %v3686 = vsel %vm1638, %v3174, 0.0
        %v3687 = vsel %vm1639, %v3175, 0.0
        %v3688 = vsel %vm1640, %v3176, 0.0
        %v3689 = vsel %vm1641, %v3177, 0.0
        %v3690 = vsel %vm1642, %v3178, 0.0
        %v3691 = vsel %vm1643, %v3179, 0.0
        %v3692 = vsel %vm1644, %v3180, 0.0
        %v3693 = vsel %vm1645, %v3181, 0.0
        %v3694 = vsel %vm1646, %v3182, 0.0
        %v3695 = vsel %vm1647, %v3183, 0.0
        %v3696 = vsel %vm1648, %v3184, 0.0
        %v3697 = vsel %vm1649, %v3185, 0.0
        %v3698 = vsel %vm1650, %v3186, 0.0
        %v3699 = vsel %vm1651, %v3187, 0.0
        %v3700 = vsel %vm1652, %v3188, 0.0
        %v3701 = vsel %vm1653, %v3189, 0.0
        %v3702 = vsel %vm1654, %v3190, 0.0
        %v3703 = vsel %vm1655, %v3191, 0.0
        %v3704 = vsel %vm1656, %v3192, 0.0
        %v3705 = vsel %vm1657, %v3193, 0.0
        %v3706 = vsel %vm1658, %v3194, 0.0
        %v3707 = vsel %vm1659, %v3195, 0.0
        %v3708 = vsel %vm1660, %v3196, 0.0
        %v3709 = vsel %vm1661, %v3197, 0.0
        %v3710 = vsel %vm1662, %v3198, 0.0
        %v3711 = vsel %vm1663, %v3199, 0.0
        %v3712 = vsel %vm1664, %v3200, 0.0
        %v3713 = vsel %vm1665, %v3201, 0.0
        %v3714 = vsel %vm1666, %v3202, 0.0
        %v3715 = vsel %vm1667, %v3203, 0.0
        %v3716 = vsel %vm1668, %v3204, 0.0
        %v3717 = vsel %vm1669, %v3205, 0.0
        %v3718 = vsel %vm1670, %v3206, 0.0
        %v3719 = vsel %vm1671, %v3207, 0.0
        %v3720 = vsel %vm1672, %v3208, 0.0
        %v3721 = vsel %vm1673, %v3209, 0.0
        %v3722 = vsel %vm1674, %v3210, 0.0
        %v3723 = vsel %vm1675, %v3211, 0.0
        %v3724 = vsel %vm1676, %v3212, 0.0
        %v3725 = vsel %vm1677, %v3213, 0.0
        %v3726 = vsel %vm1678, %v3214, 0.0
        %v3727 = vsel %vm1679, %v3215, 0.0
        %v3728 = vsel %vm1680, %v3216, 0.0
        %v3729 = vsel %vm1681, %v3217, 0.0
        %v3730 = vsel %vm1682, %v3218, 0.0
        %v3731 = vsel %vm1683, %v3219, 0.0
        %v3732 = vsel %vm1684, %v3220, 0.0
        %v3733 = vsel %vm1685, %v3221, 0.0
        %v3734 = vsel %vm1686, %v3222, 0.0
        %v3735 = vsel %vm1687, %v3223, 0.0
        %v3736 = vsel %vm1688, %v3224, 0.0
        %v3737 = vsel %vm1689, %v3225, 0.0
        %v3738 = vsel %vm1690, %v3226, 0.0
        %v3739 = vsel %vm1691, %v3227, 0.0
        %v3740 = vsel %vm1692, %v3228, 0.0
        %v3741 = vsel %vm1693, %v3229, 0.0
        %v3742 = vsel %vm1694, %v3230, 0.0
        %v3743 = vsel %vm1695, %v3231, 0.0
        %v3744 = vsel %vm1696, %v3232, 0.0
        %v3745 = vsel %vm1697, %v3233, 0.0
        %v3746 = vsel %vm1698, %v3234, 0.0
        %v3747 = vsel %vm1699, %v3235, 0.0
        %v3748 = vsel %vm1700, %v3236, 0.0
        %v3749 = vsel %vm1701, %v3237, 0.0
        %v3750 = vsel %vm1702, %v3238, 0.0
        %v3751 = vsel %vm1703, %v3239, 0.0
        %v3752 = vsel %vm1704, %v3240, 0.0
        %v3753 = vsel %vm1705, %v3241, 0.0
        %v3754 = vsel %vm1706, %v3242, 0.0
        %v3755 = vsel %vm1707, %v3243, 0.0
        %v3756 = vsel %vm1708, %v3244, 0.0
        %v3757 = vsel %vm1709, %v3245, 0.0
        %v3758 = vsel %vm1710, %v3246, 0.0
        %v3759 = vsel %vm1711, %v3247, 0.0
        %v3760 = vsel %vm1712, %v3248, 0.0
        %v3761 = vsel %vm1713, %v3249, 0.0
        %v3762 = vsel %vm1714, %v3250, 0.0
        %v3763 = vsel %vm1715, %v3251, 0.0
        %v3764 = vsel %vm1716, %v3252, 0.0
        %v3765 = vsel %vm1717, %v3253, 0.0
        %v3766 = vsel %vm1718, %v3254, 0.0
        %v3767 = vsel %vm1719, %v3255, 0.0
        %v3768 = vsel %vm1720, %v3256, 0.0
        %v3769 = vsel %vm1721, %v3257, 0.0
        %v3770 = vsel %vm1722, %v3258, 0.0
        %v3771 = vsel %vm1723, %v3259, 0.0
        %v3772 = vsel %vm1724, %v3260, 0.0
        %v3773 = vsel %vm1725, %v3261, 0.0
        %v3774 = vsel %vm1726, %v3262, 0.0
        %v3775 = vsel %vm1727, %v3263, 0.0
        %v3776 = vsel %vm1728, %v3264, 0.0
        %v3777 = vsel %vm1729, %v3265, 0.0
        %v3778 = vsel %vm1730, %v3266, 0.0
        %v3779 = vsel %vm1731, %v3267, 0.0
        %v3780 = vsel %vm1732, %v3268, 0.0
        %v3781 = vsel %vm1733, %v3269, 0.0
        %v3782 = vsel %vm1734, %v3270, 0.0
        %v3783 = vsel %vm1735, %v3271, 0.0
        %v3784 = vsel %vm1736, %v3272, 0.0
        %v3785 = vsel %vm1737, %v3273, 0.0
        %v3786 = vsel %vm1738, %v3274, 0.0
        %v3787 = vsel %vm1739, %v3275, 0.0
        %v3788 = vsel %vm1740, %v3276, 0.0
        %v3789 = vsel %vm1741, %v3277, 0.0
        %v3790 = vsel %vm1742, %v3278, 0.0
        %v3791 = vsel %vm1743, %v3279, 0.0
        %v3792 = vsel %vm1744, %v3280, 0.0
        %v3793 = vsel %vm1745, %v3281, 0.0
        %v3794 = vsel %vm1746, %v3282, 0.0
        %v3795 = vsel %vm1747, %v3283, 0.0
        %v3796 = vsel %vm1748, %v3284, 0.0
        %v3797 = vsel %vm1749, %v3285, 0.0
        %v3798 = vsel %vm1750, %v3286, 0.0
        %v3799 = vsel %vm1751, %v3287, 0.0
        %v3800 = vsel %vm1752, %v3288, 0.0
        %v3801 = vsel %vm1753, %v3289, 0.0
        %v3802 = vsel %vm1754, %v3290, 0.0
        %v3803 = vsel %vm1755, %v3291, 0.0
        %v3804 = vsel %vm1756, %v3292, 0.0
        %v3805 = vsel %vm1757, %v3293, 0.0
        %v3806 = vsel %vm1758, %v3294, 0.0
        %v3807 = vsel %vm1759, %v3295, 0.0
        %v3808 = vsel %vm1760, %v3296, 0.0
        %v3809 = vsel %vm1761, %v3297, 0.0
        %v3810 = vsel %vm1762, %v3298, 0.0
        %v3811 = vsel %vm1763, %v3299, 0.0
        %v3812 = vsel %vm1764, %v3300, 0.0
        %v3813 = vsel %vm1765, %v3301, 0.0
        %v3814 = vsel %vm1766, %v3302, 0.0
        %v3815 = vsel %vm1767, %v3303, 0.0
        %v3816 = vsel %vm1768, %v3304, 0.0
        %v3817 = vsel %vm1769, %v3305, 0.0
        %v3818 = vsel %vm1770, %v3306, 0.0
        %v3819 = vsel %vm1771, %v3307, 0.0
        %v3820 = vsel %vm1772, %v3308, 0.0
        %v3821 = vsel %vm1773, %v3309, 0.0
        %v3822 = vsel %vm1774, %v3310, 0.0
        %v3823 = vsel %vm1775, %v3311, 0.0
        %v3824 = vsel %vm1776, %v3312, 0.0
        %v3825 = vsel %vm1777, %v3313, 0.0
        %v3826 = vsel %vm1778, %v3314, 0.0
        %v3827 = vsel %vm1779, %v3315, 0.0
        %v3828 = vsel %vm1780, %v3316, 0.0
        %v3829 = vsel %vm1781, %v3317, 0.0
        %v3830 = vsel %vm1782, %v3318, 0.0
        %v3831 = vsel %vm1783, %v3319, 0.0
        %v3832 = vsel %vm1784, %v3320, 0.0
        %v3833 = vsel %vm1785, %v3321, 0.0
        %v3834 = vsel %vm1786, %v3322, 0.0
        %v3835 = vsel %vm1787, %v3323, 0.0
        %v3836 = vsel %vm1788, %v3324, 0.0
        %v3837 = vsel %vm1277, %v2301, 0.0
        %v3838 = vsel %vm1278, %v2302, 0.0
        %v3839 = vsel %vm1279, %v2303, 0.0
        %v3840 = vsel %vm1280, %v2304, 0.0
        %v3841 = vsel %vm1281, %v2305, 0.0
        %v3842 = vsel %vm1282, %v2306, 0.0
        %v3843 = vsel %vm1283, %v2307, 0.0
        %v3844 = vsel %vm1284, %v2308, 0.0
        %v3845 = vsel %vm1285, %v2309, 0.0
        %v3846 = vsel %vm1286, %v2310, 0.0
        %v3847 = vsel %vm1287, %v2311, 0.0
        %v3848 = vsel %vm1288, %v2312, 0.0
        %v3849 = vsel %vm1289, %v2313, 0.0
        %v3850 = vsel %vm1290, %v2314, 0.0
        %v3851 = vsel %vm1291, %v2315, 0.0
        %v3852 = vsel %vm1292, %v2316, 0.0
        %v3853 = vsel %vm1293, %v2317, 0.0
        %v3854 = vsel %vm1294, %v2318, 0.0
        %v3855 = vsel %vm1295, %v2319, 0.0
        %v3856 = vsel %vm1296, %v2320, 0.0
        %v3857 = vsel %vm1297, %v2321, 0.0
        %v3858 = vsel %vm1298, %v2322, 0.0
        %v3859 = vsel %vm1299, %v2323, 0.0
        %v3860 = vsel %vm1300, %v2324, 0.0
        %v3861 = vsel %vm1301, %v2325, 0.0
        %v3862 = vsel %vm1302, %v2326, 0.0
        %v3863 = vsel %vm1303, %v2327, 0.0
        %v3864 = vsel %vm1304, %v2328, 0.0
        %v3865 = vsel %vm1305, %v2329, 0.0
        %v3866 = vsel %vm1306, %v2330, 0.0
        %v3867 = vsel %vm1307, %v2331, 0.0
        %v3868 = vsel %vm1308, %v2332, 0.0
        %v3869 = vsel %vm1309, %v2333, 0.0
        %v3870 = vsel %vm1310, %v2334, 0.0
        %v3871 = vsel %vm1311, %v2335, 0.0
        %v3872 = vsel %vm1312, %v2336, 0.0
        %v3873 = vsel %vm1313, %v2337, 0.0
        %v3874 = vsel %vm1314, %v2338, 0.0
        %v3875 = vsel %vm1315, %v2339, 0.0
        %v3876 = vsel %vm1316, %v2340, 0.0
        %v3877 = vsel %vm1317, %v2341, 0.0
        %v3878 = vsel %vm1318, %v2342, 0.0
        %v3879 = vsel %vm1319, %v2343, 0.0
        %v3880 = vsel %vm1320, %v2344, 0.0
        %v3881 = vsel %vm1321, %v2345, 0.0
        %v3882 = vsel %vm1322, %v2346, 0.0
        %v3883 = vsel %vm1323, %v2347, 0.0
        %v3884 = vsel %vm1324, %v2348, 0.0
        %v3885 = vsel %vm1325, %v2349, 0.0
        %v3886 = vsel %vm1326, %v2350, 0.0
        %v3887 = vsel %vm1327, %v2351, 0.0
        %v3888 = vsel %vm1328, %v2352, 0.0
        %v3889 = vsel %vm1329, %v2353, 0.0
        %v3890 = vsel %vm1330, %v2354, 0.0
        %v3891 = vsel %vm1331, %v2355, 0.0
        %v3892 = vsel %vm1332, %v2356, 0.0
        %v3893 = vsel %vm1333, %v2357, 0.0
        %v3894 = vsel %vm1334, %v2358, 0.0
        %v3895 = vsel %vm1335, %v2359, 0.0
        %v3896 = vsel %vm1336, %v2360, 0.0
        %v3897 = vsel %vm1337, %v2361, 0.0
        %v3898 = vsel %vm1338, %v2362, 0.0
        %v3899 = vsel %vm1339, %v2363, 0.0
        %v3900 = vsel %vm1340, %v2364, 0.0
        %v3901 = vsel %vm1341, %v2365, 0.0
        %v3902 = vsel %vm1342, %v2366, 0.0
        %v3903 = vsel %vm1343, %v2367, 0.0
        %v3904 = vsel %vm1344, %v2368, 0.0
        %v3905 = vsel %vm1345, %v2369, 0.0
        %v3906 = vsel %vm1346, %v2370, 0.0
        %v3907 = vsel %vm1347, %v2371, 0.0
        %v3908 = vsel %vm1348, %v2372, 0.0
        %v3909 = vsel %vm1349, %v2373, 0.0
        %v3910 = vsel %vm1350, %v2374, 0.0
        %v3911 = vsel %vm1351, %v2375, 0.0
        %v3912 = vsel %vm1352, %v2376, 0.0
        %v3913 = vsel %vm1353, %v2377, 0.0
        %v3914 = vsel %vm1354, %v2378, 0.0
        %v3915 = vsel %vm1355, %v2379, 0.0
        %v3916 = vsel %vm1356, %v2380, 0.0
        %v3917 = vsel %vm1357, %v2381, 0.0
        %v3918 = vsel %vm1358, %v2382, 0.0
        %v3919 = vsel %vm1359, %v2383, 0.0
        %v3920 = vsel %vm1360, %v2384, 0.0
        %v3921 = vsel %vm1361, %v2385, 0.0
        %v3922 = vsel %vm1362, %v2386, 0.0
        %v3923 = vsel %vm1363, %v2387, 0.0
        %v3924 = vsel %vm1364, %v2388, 0.0
        %v3925 = vsel %vm1365, %v2389, 0.0
        %v3926 = vsel %vm1366, %v2390, 0.0
        %v3927 = vsel %vm1367, %v2391, 0.0
        %v3928 = vsel %vm1368, %v2392, 0.0
        %v3929 = vsel %vm1369, %v2393, 0.0
        %v3930 = vsel %vm1370, %v2394, 0.0
        %v3931 = vsel %vm1371, %v2395, 0.0
        %v3932 = vsel %vm1372, %v2396, 0.0
        %v3933 = vsel %vm1373, %v2397, 0.0
        %v3934 = vsel %vm1374, %v2398, 0.0
        %v3935 = vsel %vm1375, %v2399, 0.0
        %v3936 = vsel %vm1376, %v2400, 0.0
        %v3937 = vsel %vm1377, %v2401, 0.0
        %v3938 = vsel %vm1378, %v2402, 0.0
        %v3939 = vsel %vm1379, %v2403, 0.0
        %v3940 = vsel %vm1380, %v2404, 0.0
        %v3941 = vsel %vm1381, %v2405, 0.0
        %v3942 = vsel %vm1382, %v2406, 0.0
        %v3943 = vsel %vm1383, %v2407, 0.0
        %v3944 = vsel %vm1384, %v2408, 0.0
        %v3945 = vsel %vm1385, %v2409, 0.0
        %v3946 = vsel %vm1386, %v2410, 0.0
        %v3947 = vsel %vm1387, %v2411, 0.0
        %v3948 = vsel %vm1388, %v2412, 0.0
        %v3949 = vsel %vm1389, %v2413, 0.0
        %v3950 = vsel %vm1390, %v2414, 0.0
        %v3951 = vsel %vm1391, %v2415, 0.0
        %v3952 = vsel %vm1392, %v2416, 0.0
        %v3953 = vsel %vm1393, %v2417, 0.0
        %v3954 = vsel %vm1394, %v2418, 0.0
        %v3955 = vsel %vm1395, %v2419, 0.0
        %v3956 = vsel %vm1396, %v2420, 0.0
        %v3957 = vsel %vm1397, %v2421, 0.0
        %v3958 = vsel %vm1398, %v2422, 0.0
        %v3959 = vsel %vm1399, %v2423, 0.0
        %v3960 = vsel %vm1400, %v2424, 0.0
        %v3961 = vsel %vm1401, %v2425, 0.0
        %v3962 = vsel %vm1402, %v2426, 0.0
        %v3963 = vsel %vm1403, %v2427, 0.0
        %v3964 = vsel %vm1404, %v2428, 0.0
        %v3965 = vsel %vm1405, %v2429, 0.0
        %v3966 = vsel %vm1406, %v2430, 0.0
        %v3967 = vsel %vm1407, %v2431, 0.0
        %v3968 = vsel %vm1408, %v2432, 0.0
        %v3969 = vsel %vm1409, %v2433, 0.0
        %v3970 = vsel %vm1410, %v2434, 0.0
        %v3971 = vsel %vm1411, %v2435, 0.0
        %v3972 = vsel %vm1412, %v2436, 0.0
        %v3973 = vsel %vm1413, %v2437, 0.0
        %v3974 = vsel %vm1414, %v2438, 0.0
        %v3975 = vsel %vm1415, %v2439, 0.0
        %v3976 = vsel %vm1416, %v2440, 0.0
        %v3977 = vsel %vm1417, %v2441, 0.0
        %v3978 = vsel %vm1418, %v2442, 0.0
        %v3979 = vsel %vm1419, %v2443, 0.0
        %v3980 = vsel %vm1420, %v2444, 0.0
        %v3981 = vsel %vm1421, %v2445, 0.0
        %v3982 = vsel %vm1422, %v2446, 0.0
        %v3983 = vsel %vm1423, %v2447, 0.0
        %v3984 = vsel %vm1424, %v2448, 0.0
        %v3985 = vsel %vm1425, %v2449, 0.0
        %v3986 = vsel %vm1426, %v2450, 0.0
        %v3987 = vsel %vm1427, %v2451, 0.0
        %v3988 = vsel %vm1428, %v2452, 0.0
        %v3989 = vsel %vm1429, %v2453, 0.0
        %v3990 = vsel %vm1430, %v2454, 0.0
        %v3991 = vsel %vm1431, %v2455, 0.0
        %v3992 = vsel %vm1432, %v2456, 0.0
        %v3993 = vsel %vm1433, %v2457, 0.0
        %v3994 = vsel %vm1434, %v2458, 0.0
        %v3995 = vsel %vm1435, %v2459, 0.0
        %v3996 = vsel %vm1436, %v2460, 0.0
        %v3997 = vsel %vm1437, %v2461, 0.0
        %v3998 = vsel %vm1438, %v2462, 0.0
        %v3999 = vsel %vm1439, %v2463, 0.0
        %v4000 = vsel %vm1440, %v2464, 0.0
        %v4001 = vsel %vm1441, %v2465, 0.0
        %v4002 = vsel %vm1442, %v2466, 0.0
        %v4003 = vsel %vm1443, %v2467, 0.0
        %v4004 = vsel %vm1444, %v2468, 0.0
        %v4005 = vsel %vm1445, %v2469, 0.0
        %v4006 = vsel %vm1446, %v2470, 0.0
        %v4007 = vsel %vm1447, %v2471, 0.0
        %v4008 = vsel %vm1448, %v2472, 0.0
        %v4009 = vsel %vm1449, %v2473, 0.0
        %v4010 = vsel %vm1450, %v2474, 0.0
        %v4011 = vsel %vm1451, %v2475, 0.0
        %v4012 = vsel %vm1452, %v2476, 0.0
        %v4013 = vsel %vm1453, %v2477, 0.0
        %v4014 = vsel %vm1454, %v2478, 0.0
        %v4015 = vsel %vm1455, %v2479, 0.0
        %v4016 = vsel %vm1456, %v2480, 0.0
        %v4017 = vsel %vm1457, %v2481, 0.0
        %v4018 = vsel %vm1458, %v2482, 0.0
        %v4019 = vsel %vm1459, %v2483, 0.0
        %v4020 = vsel %vm1460, %v2484, 0.0
        %v4021 = vsel %vm1461, %v2485, 0.0
        %v4022 = vsel %vm1462, %v2486, 0.0
        %v4023 = vsel %vm1463, %v2487, 0.0
        %v4024 = vsel %vm1464, %v2488, 0.0
        %v4025 = vsel %vm1465, %v2489, 0.0
        %v4026 = vsel %vm1466, %v2490, 0.0
        %v4027 = vsel %vm1467, %v2491, 0.0
        %v4028 = vsel %vm1468, %v2492, 0.0
        %v4029 = vsel %vm1469, %v2493, 0.0
        %v4030 = vsel %vm1470, %v2494, 0.0
        %v4031 = vsel %vm1471, %v2495, 0.0
        %v4032 = vsel %vm1472, %v2496, 0.0
        %v4033 = vsel %vm1473, %v2497, 0.0
        %v4034 = vsel %vm1474, %v2498, 0.0
        %v4035 = vsel %vm1475, %v2499, 0.0
        %v4036 = vsel %vm1476, %v2500, 0.0
        %v4037 = vsel %vm1477, %v2501, 0.0
        %v4038 = vsel %vm1478, %v2502, 0.0
        %v4039 = vsel %vm1479, %v2503, 0.0
        %v4040 = vsel %vm1480, %v2504, 0.0
        %v4041 = vsel %vm1481, %v2505, 0.0
        %v4042 = vsel %vm1482, %v2506, 0.0
        %v4043 = vsel %vm1483, %v2507, 0.0
        %v4044 = vsel %vm1484, %v2508, 0.0
        %v4045 = vsel %vm1485, %v2509, 0.0
        %v4046 = vsel %vm1486, %v2510, 0.0
        %v4047 = vsel %vm1487, %v2511, 0.0
        %v4048 = vsel %vm1488, %v2512, 0.0
        %v4049 = vsel %vm1489, %v2513, 0.0
        %v4050 = vsel %vm1490, %v2514, 0.0
        %v4051 = vsel %vm1491, %v2515, 0.0
        %v4052 = vsel %vm1492, %v2516, 0.0
        %v4053 = vsel %vm1493, %v2517, 0.0
        %v4054 = vsel %vm1494, %v2518, 0.0
        %v4055 = vsel %vm1495, %v2519, 0.0
        %v4056 = vsel %vm1496, %v2520, 0.0
        %v4057 = vsel %vm1497, %v2521, 0.0
        %v4058 = vsel %vm1498, %v2522, 0.0
        %v4059 = vsel %vm1499, %v2523, 0.0
        %v4060 = vsel %vm1500, %v2524, 0.0
        %v4061 = vsel %vm1501, %v2525, 0.0
        %v4062 = vsel %vm1502, %v2526, 0.0
        %v4063 = vsel %vm1503, %v2527, 0.0
        %v4064 = vsel %vm1504, %v2528, 0.0
        %v4065 = vsel %vm1505, %v2529, 0.0
        %v4066 = vsel %vm1506, %v2530, 0.0
        %v4067 = vsel %vm1507, %v2531, 0.0
        %v4068 = vsel %vm1508, %v2532, 0.0
        %v4069 = vsel %vm1509, %v2533, 0.0
        %v4070 = vsel %vm1510, %v2534, 0.0
        %v4071 = vsel %vm1511, %v2535, 0.0
        %v4072 = vsel %vm1512, %v2536, 0.0
        %v4073 = vsel %vm1513, %v2537, 0.0
        %v4074 = vsel %vm1514, %v2538, 0.0
        %v4075 = vsel %vm1515, %v2539, 0.0
        %v4076 = vsel %vm1516, %v2540, 0.0
        %v4077 = vsel %vm1517, %v2541, 0.0
        %v4078 = vsel %vm1518, %v2542, 0.0
        %v4079 = vsel %vm1519, %v2543, 0.0
        %v4080 = vsel %vm1520, %v2544, 0.0
        %v4081 = vsel %vm1521, %v2545, 0.0
        %v4082 = vsel %vm1522, %v2546, 0.0
        %v4083 = vsel %vm1523, %v2547, 0.0
        %v4084 = vsel %vm1524, %v2548, 0.0
        %v4085 = vsel %vm1525, %v2549, 0.0
        %v4086 = vsel %vm1526, %v2550, 0.0
        %v4087 = vsel %vm1527, %v2551, 0.0
        %v4088 = vsel %vm1528, %v2552, 0.0
        %v4089 = vsel %vm1529, %v2553, 0.0
        %v4090 = vsel %vm1530, %v2554, 0.0
        %v4091 = vsel %vm1531, %v2555, 0.0
        %v4092 = vsel %vm1532, %v2556, 0.0
        %v4093 = vsel %vm1533, %v2557, 0.0
        %v4094 = vsel %vm1534, %v2558, 0.0
        %v4095 = vsel %vm1535, %v2559, 0.0
        %v4096 = vsel %vm1536, %v2560, 0.0
        %v4097 = vsel %vm1537, %v2561, 0.0
        %v4098 = vsel %vm1538, %v2562, 0.0
        %v4099 = vsel %vm1539, %v2563, 0.0
        %v4100 = vsel %vm1540, %v2564, 0.0
        %v4101 = vsel %vm1541, %v2565, 0.0
        %v4102 = vsel %vm1542, %v2566, 0.0
        %v4103 = vsel %vm1543, %v2567, 0.0
        %v4104 = vsel %vm1544, %v2568, 0.0
        %v4105 = vsel %vm1545, %v2569, 0.0
        %v4106 = vsel %vm1546, %v2570, 0.0
        %v4107 = vsel %vm1547, %v2571, 0.0
        %v4108 = vsel %vm1548, %v2572, 0.0
        %v4109 = vsel %vm1549, %v2573, 0.0
        %v4110 = vsel %vm1550, %v2574, 0.0
        %v4111 = vsel %vm1551, %v2575, 0.0
        %v4112 = vsel %vm1552, %v2576, 0.0
        %v4113 = vsel %vm1553, %v2577, 0.0
        %v4114 = vsel %vm1554, %v2578, 0.0
        %v4115 = vsel %vm1555, %v2579, 0.0
        %v4116 = vsel %vm1556, %v2580, 0.0
        %v4117 = vsel %vm1557, %v2581, 0.0
        %v4118 = vsel %vm1558, %v2582, 0.0
        %v4119 = vsel %vm1559, %v2583, 0.0
        %v4120 = vsel %vm1560, %v2584, 0.0
        %v4121 = vsel %vm1561, %v2585, 0.0
        %v4122 = vsel %vm1562, %v2586, 0.0
        %v4123 = vsel %vm1563, %v2587, 0.0
        %v4124 = vsel %vm1564, %v2588, 0.0
        %v4125 = vsel %vm1565, %v2589, 0.0
        %v4126 = vsel %vm1566, %v2590, 0.0
        %v4127 = vsel %vm1567, %v2591, 0.0
        %v4128 = vsel %vm1568, %v2592, 0.0
        %v4129 = vsel %vm1569, %v2593, 0.0
        %v4130 = vsel %vm1570, %v2594, 0.0
        %v4131 = vsel %vm1571, %v2595, 0.0
        %v4132 = vsel %vm1572, %v2596, 0.0
        %v4133 = vsel %vm1573, %v2597, 0.0
        %v4134 = vsel %vm1574, %v2598, 0.0
        %v4135 = vsel %vm1575, %v2599, 0.0
        %v4136 = vsel %vm1576, %v2600, 0.0
        %v4137 = vsel %vm1577, %v2601, 0.0
        %v4138 = vsel %vm1578, %v2602, 0.0
        %v4139 = vsel %vm1579, %v2603, 0.0
        %v4140 = vsel %vm1580, %v2604, 0.0
        %v4141 = vsel %vm1581, %v2605, 0.0
        %v4142 = vsel %vm1582, %v2606, 0.0
        %v4143 = vsel %vm1583, %v2607, 0.0
        %v4144 = vsel %vm1584, %v2608, 0.0
        %v4145 = vsel %vm1585, %v2609, 0.0
        %v4146 = vsel %vm1586, %v2610, 0.0
        %v4147 = vsel %vm1587, %v2611, 0.0
        %v4148 = vsel %vm1588, %v2612, 0.0
        %v4149 = vsel %vm1589, %v2613, 0.0
        %v4150 = vsel %vm1590, %v2614, 0.0
        %v4151 = vsel %vm1591, %v2615, 0.0
        %v4152 = vsel %vm1592, %v2616, 0.0
        %v4153 = vsel %vm1593, %v2617, 0.0
        %v4154 = vsel %vm1594, %v2618, 0.0
        %v4155 = vsel %vm1595, %v2619, 0.0
        %v4156 = vsel %vm1596, %v2620, 0.0
        %v4157 = vsel %vm1597, %v2621, 0.0
        %v4158 = vsel %vm1598, %v2622, 0.0
        %v4159 = vsel %vm1599, %v2623, 0.0
        %v4160 = vsel %vm1600, %v2624, 0.0
        %v4161 = vsel %vm1601, %v2625, 0.0
        %v4162 = vsel %vm1602, %v2626, 0.0
        %v4163 = vsel %vm1603, %v2627, 0.0
        %v4164 = vsel %vm1604, %v2628, 0.0
        %v4165 = vsel %vm1605, %v2629, 0.0
        %v4166 = vsel %vm1606, %v2630, 0.0
        %v4167 = vsel %vm1607, %v2631, 0.0
        %v4168 = vsel %vm1608, %v2632, 0.0
        %v4169 = vsel %vm1609, %v2633, 0.0
        %v4170 = vsel %vm1610, %v2634, 0.0
        %v4171 = vsel %vm1611, %v2635, 0.0
        %v4172 = vsel %vm1612, %v2636, 0.0
        %v4173 = vsel %vm1613, %v2637, 0.0
        %v4174 = vsel %vm1614, %v2638, 0.0
        %v4175 = vsel %vm1615, %v2639, 0.0
        %v4176 = vsel %vm1616, %v2640, 0.0
        %v4177 = vsel %vm1617, %v2641, 0.0
        %v4178 = vsel %vm1618, %v2642, 0.0
        %v4179 = vsel %vm1619, %v2643, 0.0
        %v4180 = vsel %vm1620, %v2644, 0.0
        %v4181 = vsel %vm1621, %v2645, 0.0
        %v4182 = vsel %vm1622, %v2646, 0.0
        %v4183 = vsel %vm1623, %v2647, 0.0
        %v4184 = vsel %vm1624, %v2648, 0.0
        %v4185 = vsel %vm1625, %v2649, 0.0
        %v4186 = vsel %vm1626, %v2650, 0.0
        %v4187 = vsel %vm1627, %v2651, 0.0
        %v4188 = vsel %vm1628, %v2652, 0.0
        %v4189 = vsel %vm1629, %v2653, 0.0
        %v4190 = vsel %vm1630, %v2654, 0.0
        %v4191 = vsel %vm1631, %v2655, 0.0
        %v4192 = vsel %vm1632, %v2656, 0.0
        %v4193 = vsel %vm1633, %v2657, 0.0
        %v4194 = vsel %vm1634, %v2658, 0.0
        %v4195 = vsel %vm1635, %v2659, 0.0
        %v4196 = vsel %vm1636, %v2660, 0.0
        %v4197 = vsel %vm1637, %v2661, 0.0
        %v4198 = vsel %vm1638, %v2662, 0.0
        %v4199 = vsel %vm1639, %v2663, 0.0
        %v4200 = vsel %vm1640, %v2664, 0.0
        %v4201 = vsel %vm1641, %v2665, 0.0
        %v4202 = vsel %vm1642, %v2666, 0.0
        %v4203 = vsel %vm1643, %v2667, 0.0
        %v4204 = vsel %vm1644, %v2668, 0.0
        %v4205 = vsel %vm1645, %v2669, 0.0
        %v4206 = vsel %vm1646, %v2670, 0.0
        %v4207 = vsel %vm1647, %v2671, 0.0
        %v4208 = vsel %vm1648, %v2672, 0.0
        %v4209 = vsel %vm1649, %v2673, 0.0
        %v4210 = vsel %vm1650, %v2674, 0.0
        %v4211 = vsel %vm1651, %v2675, 0.0
        %v4212 = vsel %vm1652, %v2676, 0.0
        %v4213 = vsel %vm1653, %v2677, 0.0
        %v4214 = vsel %vm1654, %v2678, 0.0
        %v4215 = vsel %vm1655, %v2679, 0.0
        %v4216 = vsel %vm1656, %v2680, 0.0
        %v4217 = vsel %vm1657, %v2681, 0.0
        %v4218 = vsel %vm1658, %v2682, 0.0
        %v4219 = vsel %vm1659, %v2683, 0.0
        %v4220 = vsel %vm1660, %v2684, 0.0
        %v4221 = vsel %vm1661, %v2685, 0.0
        %v4222 = vsel %vm1662, %v2686, 0.0
        %v4223 = vsel %vm1663, %v2687, 0.0
        %v4224 = vsel %vm1664, %v2688, 0.0
        %v4225 = vsel %vm1665, %v2689, 0.0
        %v4226 = vsel %vm1666, %v2690, 0.0
        %v4227 = vsel %vm1667, %v2691, 0.0
        %v4228 = vsel %vm1668, %v2692, 0.0
        %v4229 = vsel %vm1669, %v2693, 0.0
        %v4230 = vsel %vm1670, %v2694, 0.0
        %v4231 = vsel %vm1671, %v2695, 0.0
        %v4232 = vsel %vm1672, %v2696, 0.0
        %v4233 = vsel %vm1673, %v2697, 0.0
        %v4234 = vsel %vm1674, %v2698, 0.0
        %v4235 = vsel %vm1675, %v2699, 0.0
        %v4236 = vsel %vm1676, %v2700, 0.0
        %v4237 = vsel %vm1677, %v2701, 0.0
        %v4238 = vsel %vm1678, %v2702, 0.0
        %v4239 = vsel %vm1679, %v2703, 0.0
        %v4240 = vsel %vm1680, %v2704, 0.0
        %v4241 = vsel %vm1681, %v2705, 0.0
        %v4242 = vsel %vm1682, %v2706, 0.0
        %v4243 = vsel %vm1683, %v2707, 0.0
        %v4244 = vsel %vm1684, %v2708, 0.0
        %v4245 = vsel %vm1685, %v2709, 0.0
        %v4246 = vsel %vm1686, %v2710, 0.0
        %v4247 = vsel %vm1687, %v2711, 0.0
        %v4248 = vsel %vm1688, %v2712, 0.0
        %v4249 = vsel %vm1689, %v2713, 0.0
        %v4250 = vsel %vm1690, %v2714, 0.0
        %v4251 = vsel %vm1691, %v2715, 0.0
        %v4252 = vsel %vm1692, %v2716, 0.0
        %v4253 = vsel %vm1693, %v2717, 0.0
        %v4254 = vsel %vm1694, %v2718, 0.0
        %v4255 = vsel %vm1695, %v2719, 0.0
        %v4256 = vsel %vm1696, %v2720, 0.0
        %v4257 = vsel %vm1697, %v2721, 0.0
        %v4258 = vsel %vm1698, %v2722, 0.0
        %v4259 = vsel %vm1699, %v2723, 0.0
        %v4260 = vsel %vm1700, %v2724, 0.0
        %v4261 = vsel %vm1701, %v2725, 0.0
        %v4262 = vsel %vm1702, %v2726, 0.0
        %v4263 = vsel %vm1703, %v2727, 0.0
        %v4264 = vsel %vm1704, %v2728, 0.0
        %v4265 = vsel %vm1705, %v2729, 0.0
        %v4266 = vsel %vm1706, %v2730, 0.0
        %v4267 = vsel %vm1707, %v2731, 0.0
        %v4268 = vsel %vm1708, %v2732, 0.0
        %v4269 = vsel %vm1709, %v2733, 0.0
        %v4270 = vsel %vm1710, %v2734, 0.0
        %v4271 = vsel %vm1711, %v2735, 0.0
        %v4272 = vsel %vm1712, %v2736, 0.0
        %v4273 = vsel %vm1713, %v2737, 0.0
        %v4274 = vsel %vm1714, %v2738, 0.0
        %v4275 = vsel %vm1715, %v2739, 0.0
        %v4276 = vsel %vm1716, %v2740, 0.0
        %v4277 = vsel %vm1717, %v2741, 0.0
        %v4278 = vsel %vm1718, %v2742, 0.0
        %v4279 = vsel %vm1719, %v2743, 0.0
        %v4280 = vsel %vm1720, %v2744, 0.0
        %v4281 = vsel %vm1721, %v2745, 0.0
        %v4282 = vsel %vm1722, %v2746, 0.0
        %v4283 = vsel %vm1723, %v2747, 0.0
        %v4284 = vsel %vm1724, %v2748, 0.0
        %v4285 = vsel %vm1725, %v2749, 0.0
        %v4286 = vsel %vm1726, %v2750, 0.0
        %v4287 = vsel %vm1727, %v2751, 0.0
        %v4288 = vsel %vm1728, %v2752, 0.0
        %v4289 = vsel %vm1729, %v2753, 0.0
        %v4290 = vsel %vm1730, %v2754, 0.0
        %v4291 = vsel %vm1731, %v2755, 0.0
        %v4292 = vsel %vm1732, %v2756, 0.0
        %v4293 = vsel %vm1733, %v2757, 0.0
        %v4294 = vsel %vm1734, %v2758, 0.0
        %v4295 = vsel %vm1735, %v2759, 0.0
        %v4296 = vsel %vm1736, %v2760, 0.0
        %v4297 = vsel %vm1737, %v2761, 0.0
        %v4298 = vsel %vm1738, %v2762, 0.0
        %v4299 = vsel %vm1739, %v2763, 0.0
        %v4300 = vsel %vm1740, %v2764, 0.0
        %v4301 = vsel %vm1741, %v2765, 0.0
        %v4302 = vsel %vm1742, %v2766, 0.0
        %v4303 = vsel %vm1743, %v2767, 0.0
        %v4304 = vsel %vm1744, %v2768, 0.0
        %v4305 = vsel %vm1745, %v2769, 0.0
        %v4306 = vsel %vm1746, %v2770, 0.0
        %v4307 = vsel %vm1747, %v2771, 0.0
        %v4308 = vsel %vm1748, %v2772, 0.0
        %v4309 = vsel %vm1749, %v2773, 0.0
        %v4310 = vsel %vm1750, %v2774, 0.0
        %v4311 = vsel %vm1751, %v2775, 0.0
        %v4312 = vsel %vm1752, %v2776, 0.0
        %v4313 = vsel %vm1753, %v2777, 0.0
        %v4314 = vsel %vm1754, %v2778, 0.0
        %v4315 = vsel %vm1755, %v2779, 0.0
        %v4316 = vsel %vm1756, %v2780, 0.0
        %v4317 = vsel %vm1757, %v2781, 0.0
        %v4318 = vsel %vm1758, %v2782, 0.0
        %v4319 = vsel %vm1759, %v2783, 0.0
        %v4320 = vsel %vm1760, %v2784, 0.0
        %v4321 = vsel %vm1761, %v2785, 0.0
        %v4322 = vsel %vm1762, %v2786, 0.0
        %v4323 = vsel %vm1763, %v2787, 0.0
        %v4324 = vsel %vm1764, %v2788, 0.0
        %v4325 = vsel %vm1765, %v2789, 0.0
        %v4326 = vsel %vm1766, %v2790, 0.0
        %v4327 = vsel %vm1767, %v2791, 0.0
        %v4328 = vsel %vm1768, %v2792, 0.0
        %v4329 = vsel %vm1769, %v2793, 0.0
        %v4330 = vsel %vm1770, %v2794, 0.0
        %v4331 = vsel %vm1771, %v2795, 0.0
        %v4332 = vsel %vm1772, %v2796, 0.0
        %v4333 = vsel %vm1773, %v2797, 0.0
        %v4334 = vsel %vm1774, %v2798, 0.0
        %v4335 = vsel %vm1775, %v2799, 0.0
        %v4336 = vsel %vm1776, %v2800, 0.0
        %v4337 = vsel %vm1777, %v2801, 0.0
        %v4338 = vsel %vm1778, %v2802, 0.0
        %v4339 = vsel %vm1779, %v2803, 0.0
        %v4340 = vsel %vm1780, %v2804, 0.0
        %v4341 = vsel %vm1781, %v2805, 0.0
        %v4342 = vsel %vm1782, %v2806, 0.0
        %v4343 = vsel %vm1783, %v2807, 0.0
        %v4344 = vsel %vm1784, %v2808, 0.0
        %v4345 = vsel %vm1785, %v2809, 0.0
        %v4346 = vsel %vm1786, %v2810, 0.0
        %v4347 = vsel %vm1787, %v2811, 0.0
        %v4348 = vsel %vm1788, %v2812, 0.0
        %v4349 = vmul.f32 %v3325, %v3325
        %v4350 = vmul.f32 %v3326, %v3326
        %v4351 = vmul.f32 %v3327, %v3327
        %v4352 = vmul.f32 %v3328, %v3328
        %v4353 = vmul.f32 %v3329, %v3329
        %v4354 = vmul.f32 %v3330, %v3330
        %v4355 = vmul.f32 %v3331, %v3331
        %v4356 = vmul.f32 %v3332, %v3332
        %v4357 = vmul.f32 %v3333, %v3333
        %v4358 = vmul.f32 %v3334, %v3334
        %v4359 = vmul.f32 %v3335, %v3335
        %v4360 = vmul.f32 %v3336, %v3336
        %v4361 = vmul.f32 %v3337, %v3337
        %v4362 = vmul.f32 %v3338, %v3338
        %v4363 = vmul.f32 %v3339, %v3339
        %v4364 = vmul.f32 %v3340, %v3340
        %v4365 = vmul.f32 %v3341, %v3341
        %v4366 = vmul.f32 %v3342, %v3342
        %v4367 = vmul.f32 %v3343, %v3343
        %v4368 = vmul.f32 %v3344, %v3344
        %v4369 = vmul.f32 %v3345, %v3345
        %v4370 = vmul.f32 %v3346, %v3346
        %v4371 = vmul.f32 %v3347, %v3347
        %v4372 = vmul.f32 %v3348, %v3348
        %v4373 = vmul.f32 %v3349, %v3349
        %v4374 = vmul.f32 %v3350, %v3350
        %v4375 = vmul.f32 %v3351, %v3351
        %v4376 = vmul.f32 %v3352, %v3352
        %v4377 = vmul.f32 %v3353, %v3353
        %v4378 = vmul.f32 %v3354, %v3354
        %v4379 = vmul.f32 %v3355, %v3355
        %v4380 = vmul.f32 %v3356, %v3356
        %v4381 = vmul.f32 %v3357, %v3357
        %v4382 = vmul.f32 %v3358, %v3358
        %v4383 = vmul.f32 %v3359, %v3359
        %v4384 = vmul.f32 %v3360, %v3360
        %v4385 = vmul.f32 %v3361, %v3361
        %v4386 = vmul.f32 %v3362, %v3362
        %v4387 = vmul.f32 %v3363, %v3363
        %v4388 = vmul.f32 %v3364, %v3364
        %v4389 = vmul.f32 %v3365, %v3365
        %v4390 = vmul.f32 %v3366, %v3366
        %v4391 = vmul.f32 %v3367, %v3367
        %v4392 = vmul.f32 %v3368, %v3368
        %v4393 = vmul.f32 %v3369, %v3369
        %v4394 = vmul.f32 %v3370, %v3370
        %v4395 = vmul.f32 %v3371, %v3371
        %v4396 = vmul.f32 %v3372, %v3372
        %v4397 = vmul.f32 %v3373, %v3373
        %v4398 = vmul.f32 %v3374, %v3374
        %v4399 = vmul.f32 %v3375, %v3375
        %v4400 = vmul.f32 %v3376, %v3376
        %v4401 = vmul.f32 %v3377, %v3377
        %v4402 = vmul.f32 %v3378, %v3378
        %v4403 = vmul.f32 %v3379, %v3379
        %v4404 = vmul.f32 %v3380, %v3380
        %v4405 = vmul.f32 %v3381, %v3381
        %v4406 = vmul.f32 %v3382, %v3382
        %v4407 = vmul.f32 %v3383, %v3383
        %v4408 = vmul.f32 %v3384, %v3384
        %v4409 = vmul.f32 %v3385, %v3385
        %v4410 = vmul.f32 %v3386, %v3386
        %v4411 = vmul.f32 %v3387, %v3387
        %v4412 = vmul.f32 %v3388, %v3388
        %v4413 = vmul.f32 %v3389, %v3389
        %v4414 = vmul.f32 %v3390, %v3390
        %v4415 = vmul.f32 %v3391, %v3391
        %v4416 = vmul.f32 %v3392, %v3392
        %v4417 = vmul.f32 %v3393, %v3393
        %v4418 = vmul.f32 %v3394, %v3394
        %v4419 = vmul.f32 %v3395, %v3395
        %v4420 = vmul.f32 %v3396, %v3396
        %v4421 = vmul.f32 %v3397, %v3397
        %v4422 = vmul.f32 %v3398, %v3398
        %v4423 = vmul.f32 %v3399, %v3399
        %v4424 = vmul.f32 %v3400, %v3400
        %v4425 = vmul.f32 %v3401, %v3401
        %v4426 = vmul.f32 %v3402, %v3402
        %v4427 = vmul.f32 %v3403, %v3403
        %v4428 = vmul.f32 %v3404, %v3404
        %v4429 = vmul.f32 %v3405, %v3405
        %v4430 = vmul.f32 %v3406, %v3406
        %v4431 = vmul.f32 %v3407, %v3407
        %v4432 = vmul.f32 %v3408, %v3408
        %v4433 = vmul.f32 %v3409, %v3409
        %v4434 = vmul.f32 %v3410, %v3410
        %v4435 = vmul.f32 %v3411, %v3411
        %v4436 = vmul.f32 %v3412, %v3412
        %v4437 = vmul.f32 %v3413, %v3413
        %v4438 = vmul.f32 %v3414, %v3414
        %v4439 = vmul.f32 %v3415, %v3415
        %v4440 = vmul.f32 %v3416, %v3416
        %v4441 = vmul.f32 %v3417, %v3417
        %v4442 = vmul.f32 %v3418, %v3418
        %v4443 = vmul.f32 %v3419, %v3419
        %v4444 = vmul.f32 %v3420, %v3420
        %v4445 = vmul.f32 %v3421, %v3421
        %v4446 = vmul.f32 %v3422, %v3422
        %v4447 = vmul.f32 %v3423, %v3423
        %v4448 = vmul.f32 %v3424, %v3424
        %v4449 = vmul.f32 %v3425, %v3425
        %v4450 = vmul.f32 %v3426, %v3426
        %v4451 = vmul.f32 %v3427, %v3427
        %v4452 = vmul.f32 %v3428, %v3428
        %v4453 = vmul.f32 %v3429, %v3429
        %v4454 = vmul.f32 %v3430, %v3430
        %v4455 = vmul.f32 %v3431, %v3431
        %v4456 = vmul.f32 %v3432, %v3432
        %v4457 = vmul.f32 %v3433, %v3433
        %v4458 = vmul.f32 %v3434, %v3434
        %v4459 = vmul.f32 %v3435, %v3435
        %v4460 = vmul.f32 %v3436, %v3436
        %v4461 = vmul.f32 %v3437, %v3437
        %v4462 = vmul.f32 %v3438, %v3438
        %v4463 = vmul.f32 %v3439, %v3439
        %v4464 = vmul.f32 %v3440, %v3440
        %v4465 = vmul.f32 %v3441, %v3441
        %v4466 = vmul.f32 %v3442, %v3442
        %v4467 = vmul.f32 %v3443, %v3443
        %v4468 = vmul.f32 %v3444, %v3444
        %v4469 = vmul.f32 %v3445, %v3445
        %v4470 = vmul.f32 %v3446, %v3446
        %v4471 = vmul.f32 %v3447, %v3447
        %v4472 = vmul.f32 %v3448, %v3448
        %v4473 = vmul.f32 %v3449, %v3449
        %v4474 = vmul.f32 %v3450, %v3450
        %v4475 = vmul.f32 %v3451, %v3451
        %v4476 = vmul.f32 %v3452, %v3452
        %v4477 = vmul.f32 %v3453, %v3453
        %v4478 = vmul.f32 %v3454, %v3454
        %v4479 = vmul.f32 %v3455, %v3455
        %v4480 = vmul.f32 %v3456, %v3456
        %v4481 = vmul.f32 %v3457, %v3457
        %v4482 = vmul.f32 %v3458, %v3458
        %v4483 = vmul.f32 %v3459, %v3459
        %v4484 = vmul.f32 %v3460, %v3460
        %v4485 = vmul.f32 %v3461, %v3461
        %v4486 = vmul.f32 %v3462, %v3462
        %v4487 = vmul.f32 %v3463, %v3463
        %v4488 = vmul.f32 %v3464, %v3464
        %v4489 = vmul.f32 %v3465, %v3465
        %v4490 = vmul.f32 %v3466, %v3466
        %v4491 = vmul.f32 %v3467, %v3467
        %v4492 = vmul.f32 %v3468, %v3468
        %v4493 = vmul.f32 %v3469, %v3469
        %v4494 = vmul.f32 %v3470, %v3470
        %v4495 = vmul.f32 %v3471, %v3471
        %v4496 = vmul.f32 %v3472, %v3472
        %v4497 = vmul.f32 %v3473, %v3473
        %v4498 = vmul.f32 %v3474, %v3474
        %v4499 = vmul.f32 %v3475, %v3475
        %v4500 = vmul.f32 %v3476, %v3476
        %v4501 = vmul.f32 %v3477, %v3477
        %v4502 = vmul.f32 %v3478, %v3478
        %v4503 = vmul.f32 %v3479, %v3479
        %v4504 = vmul.f32 %v3480, %v3480
        %v4505 = vmul.f32 %v3481, %v3481
        %v4506 = vmul.f32 %v3482, %v3482
        %v4507 = vmul.f32 %v3483, %v3483
        %v4508 = vmul.f32 %v3484, %v3484
        %v4509 = vmul.f32 %v3485, %v3485
        %v4510 = vmul.f32 %v3486, %v3486
        %v4511 = vmul.f32 %v3487, %v3487
        %v4512 = vmul.f32 %v3488, %v3488
        %v4513 = vmul.f32 %v3489, %v3489
        %v4514 = vmul.f32 %v3490, %v3490
        %v4515 = vmul.f32 %v3491, %v3491
        %v4516 = vmul.f32 %v3492, %v3492
        %v4517 = vmul.f32 %v3493, %v3493
        %v4518 = vmul.f32 %v3494, %v3494
        %v4519 = vmul.f32 %v3495, %v3495
        %v4520 = vmul.f32 %v3496, %v3496
        %v4521 = vmul.f32 %v3497, %v3497
        %v4522 = vmul.f32 %v3498, %v3498
        %v4523 = vmul.f32 %v3499, %v3499
        %v4524 = vmul.f32 %v3500, %v3500
        %v4525 = vmul.f32 %v3501, %v3501
        %v4526 = vmul.f32 %v3502, %v3502
        %v4527 = vmul.f32 %v3503, %v3503
        %v4528 = vmul.f32 %v3504, %v3504
        %v4529 = vmul.f32 %v3505, %v3505
        %v4530 = vmul.f32 %v3506, %v3506
        %v4531 = vmul.f32 %v3507, %v3507
        %v4532 = vmul.f32 %v3508, %v3508
        %v4533 = vmul.f32 %v3509, %v3509
        %v4534 = vmul.f32 %v3510, %v3510
        %v4535 = vmul.f32 %v3511, %v3511
        %v4536 = vmul.f32 %v3512, %v3512
        %v4537 = vmul.f32 %v3513, %v3513
        %v4538 = vmul.f32 %v3514, %v3514
        %v4539 = vmul.f32 %v3515, %v3515
        %v4540 = vmul.f32 %v3516, %v3516
        %v4541 = vmul.f32 %v3517, %v3517
        %v4542 = vmul.f32 %v3518, %v3518
        %v4543 = vmul.f32 %v3519, %v3519
        %v4544 = vmul.f32 %v3520, %v3520
        %v4545 = vmul.f32 %v3521, %v3521
        %v4546 = vmul.f32 %v3522, %v3522
        %v4547 = vmul.f32 %v3523, %v3523
        %v4548 = vmul.f32 %v3524, %v3524
        %v4549 = vmul.f32 %v3525, %v3525
        %v4550 = vmul.f32 %v3526, %v3526
        %v4551 = vmul.f32 %v3527, %v3527
        %v4552 = vmul.f32 %v3528, %v3528
        %v4553 = vmul.f32 %v3529, %v3529
        %v4554 = vmul.f32 %v3530, %v3530
        %v4555 = vmul.f32 %v3531, %v3531
        %v4556 = vmul.f32 %v3532, %v3532
        %v4557 = vmul.f32 %v3533, %v3533
        %v4558 = vmul.f32 %v3534, %v3534
        %v4559 = vmul.f32 %v3535, %v3535
        %v4560 = vmul.f32 %v3536, %v3536
        %v4561 = vmul.f32 %v3537, %v3537
        %v4562 = vmul.f32 %v3538, %v3538
        %v4563 = vmul.f32 %v3539, %v3539
        %v4564 = vmul.f32 %v3540, %v3540
        %v4565 = vmul.f32 %v3541, %v3541
        %v4566 = vmul.f32 %v3542, %v3542
        %v4567 = vmul.f32 %v3543, %v3543
        %v4568 = vmul.f32 %v3544, %v3544
        %v4569 = vmul.f32 %v3545, %v3545
        %v4570 = vmul.f32 %v3546, %v3546
        %v4571 = vmul.f32 %v3547, %v3547
        %v4572 = vmul.f32 %v3548, %v3548
        %v4573 = vmul.f32 %v3549, %v3549
        %v4574 = vmul.f32 %v3550, %v3550
        %v4575 = vmul.f32 %v3551, %v3551
        %v4576 = vmul.f32 %v3552, %v3552
        %v4577 = vmul.f32 %v3553, %v3553
        %v4578 = vmul.f32 %v3554, %v3554
        %v4579 = vmul.f32 %v3555, %v3555
        %v4580 = vmul.f32 %v3556, %v3556
        %v4581 = vmul.f32 %v3557, %v3557
        %v4582 = vmul.f32 %v3558, %v3558
        %v4583 = vmul.f32 %v3559, %v3559
        %v4584 = vmul.f32 %v3560, %v3560
        %v4585 = vmul.f32 %v3561, %v3561
        %v4586 = vmul.f32 %v3562, %v3562
        %v4587 = vmul.f32 %v3563, %v3563
        %v4588 = vmul.f32 %v3564, %v3564
        %v4589 = vmul.f32 %v3565, %v3565
        %v4590 = vmul.f32 %v3566, %v3566
        %v4591 = vmul.f32 %v3567, %v3567
        %v4592 = vmul.f32 %v3568, %v3568
        %v4593 = vmul.f32 %v3569, %v3569
        %v4594 = vmul.f32 %v3570, %v3570
        %v4595 = vmul.f32 %v3571, %v3571
        %v4596 = vmul.f32 %v3572, %v3572
        %v4597 = vmul.f32 %v3573, %v3573
        %v4598 = vmul.f32 %v3574, %v3574
        %v4599 = vmul.f32 %v3575, %v3575
        %v4600 = vmul.f32 %v3576, %v3576
        %v4601 = vmul.f32 %v3577, %v3577
        %v4602 = vmul.f32 %v3578, %v3578
        %v4603 = vmul.f32 %v3579, %v3579
        %v4604 = vmul.f32 %v3580, %v3580
        %v4605 = vmul.f32 %v3581, %v3581
        %v4606 = vmul.f32 %v3582, %v3582
        %v4607 = vmul.f32 %v3583, %v3583
        %v4608 = vmul.f32 %v3584, %v3584
        %v4609 = vmul.f32 %v3585, %v3585
        %v4610 = vmul.f32 %v3586, %v3586
        %v4611 = vmul.f32 %v3587, %v3587
        %v4612 = vmul.f32 %v3588, %v3588
        %v4613 = vmul.f32 %v3589, %v3589
        %v4614 = vmul.f32 %v3590, %v3590
        %v4615 = vmul.f32 %v3591, %v3591
        %v4616 = vmul.f32 %v3592, %v3592
        %v4617 = vmul.f32 %v3593, %v3593
        %v4618 = vmul.f32 %v3594, %v3594
        %v4619 = vmul.f32 %v3595, %v3595
        %v4620 = vmul.f32 %v3596, %v3596
        %v4621 = vmul.f32 %v3597, %v3597
        %v4622 = vmul.f32 %v3598, %v3598
        %v4623 = vmul.f32 %v3599, %v3599
        %v4624 = vmul.f32 %v3600, %v3600
        %v4625 = vmul.f32 %v3601, %v3601
        %v4626 = vmul.f32 %v3602, %v3602
        %v4627 = vmul.f32 %v3603, %v3603
        %v4628 = vmul.f32 %v3604, %v3604
        %v4629 = vmul.f32 %v3605, %v3605
        %v4630 = vmul.f32 %v3606, %v3606
        %v4631 = vmul.f32 %v3607, %v3607
        %v4632 = vmul.f32 %v3608, %v3608
        %v4633 = vmul.f32 %v3609, %v3609
        %v4634 = vmul.f32 %v3610, %v3610
        %v4635 = vmul.f32 %v3611, %v3611
        %v4636 = vmul.f32 %v3612, %v3612
        %v4637 = vmul.f32 %v3613, %v3613
        %v4638 = vmul.f32 %v3614, %v3614
        %v4639 = vmul.f32 %v3615, %v3615
        %v4640 = vmul.f32 %v3616, %v3616
        %v4641 = vmul.f32 %v3617, %v3617
        %v4642 = vmul.f32 %v3618, %v3618
        %v4643 = vmul.f32 %v3619, %v3619
        %v4644 = vmul.f32 %v3620, %v3620
        %v4645 = vmul.f32 %v3621, %v3621
        %v4646 = vmul.f32 %v3622, %v3622
        %v4647 = vmul.f32 %v3623, %v3623
        %v4648 = vmul.f32 %v3624, %v3624
        %v4649 = vmul.f32 %v3625, %v3625
        %v4650 = vmul.f32 %v3626, %v3626
        %v4651 = vmul.f32 %v3627, %v3627
        %v4652 = vmul.f32 %v3628, %v3628
        %v4653 = vmul.f32 %v3629, %v3629
        %v4654 = vmul.f32 %v3630, %v3630
        %v4655 = vmul.f32 %v3631, %v3631
        %v4656 = vmul.f32 %v3632, %v3632
        %v4657 = vmul.f32 %v3633, %v3633
        %v4658 = vmul.f32 %v3634, %v3634
        %v4659 = vmul.f32 %v3635, %v3635
        %v4660 = vmul.f32 %v3636, %v3636
        %v4661 = vmul.f32 %v3637, %v3637
        %v4662 = vmul.f32 %v3638, %v3638
        %v4663 = vmul.f32 %v3639, %v3639
        %v4664 = vmul.f32 %v3640, %v3640
        %v4665 = vmul.f32 %v3641, %v3641
        %v4666 = vmul.f32 %v3642, %v3642
        %v4667 = vmul.f32 %v3643, %v3643
        %v4668 = vmul.f32 %v3644, %v3644
        %v4669 = vmul.f32 %v3645, %v3645
        %v4670 = vmul.f32 %v3646, %v3646
        %v4671 = vmul.f32 %v3647, %v3647
        %v4672 = vmul.f32 %v3648, %v3648
        %v4673 = vmul.f32 %v3649, %v3649
        %v4674 = vmul.f32 %v3650, %v3650
        %v4675 = vmul.f32 %v3651, %v3651
        %v4676 = vmul.f32 %v3652, %v3652
        %v4677 = vmul.f32 %v3653, %v3653
        %v4678 = vmul.f32 %v3654, %v3654
        %v4679 = vmul.f32 %v3655, %v3655
        %v4680 = vmul.f32 %v3656, %v3656
        %v4681 = vmul.f32 %v3657, %v3657
        %v4682 = vmul.f32 %v3658, %v3658
        %v4683 = vmul.f32 %v3659, %v3659
        %v4684 = vmul.f32 %v3660, %v3660
        %v4685 = vmul.f32 %v3661, %v3661
        %v4686 = vmul.f32 %v3662, %v3662
        %v4687 = vmul.f32 %v3663, %v3663
        %v4688 = vmul.f32 %v3664, %v3664
        %v4689 = vmul.f32 %v3665, %v3665
        %v4690 = vmul.f32 %v3666, %v3666
        %v4691 = vmul.f32 %v3667, %v3667
        %v4692 = vmul.f32 %v3668, %v3668
        %v4693 = vmul.f32 %v3669, %v3669
        %v4694 = vmul.f32 %v3670, %v3670
        %v4695 = vmul.f32 %v3671, %v3671
        %v4696 = vmul.f32 %v3672, %v3672
        %v4697 = vmul.f32 %v3673, %v3673
        %v4698 = vmul.f32 %v3674, %v3674
        %v4699 = vmul.f32 %v3675, %v3675
        %v4700 = vmul.f32 %v3676, %v3676
        %v4701 = vmul.f32 %v3677, %v3677
        %v4702 = vmul.f32 %v3678, %v3678
        %v4703 = vmul.f32 %v3679, %v3679
        %v4704 = vmul.f32 %v3680, %v3680
        %v4705 = vmul.f32 %v3681, %v3681
        %v4706 = vmul.f32 %v3682, %v3682
        %v4707 = vmul.f32 %v3683, %v3683
        %v4708 = vmul.f32 %v3684, %v3684
        %v4709 = vmul.f32 %v3685, %v3685
        %v4710 = vmul.f32 %v3686, %v3686
        %v4711 = vmul.f32 %v3687, %v3687
        %v4712 = vmul.f32 %v3688, %v3688
        %v4713 = vmul.f32 %v3689, %v3689
        %v4714 = vmul.f32 %v3690, %v3690
        %v4715 = vmul.f32 %v3691, %v3691
        %v4716 = vmul.f32 %v3692, %v3692
        %v4717 = vmul.f32 %v3693, %v3693
        %v4718 = vmul.f32 %v3694, %v3694
        %v4719 = vmul.f32 %v3695, %v3695
        %v4720 = vmul.f32 %v3696, %v3696
        %v4721 = vmul.f32 %v3697, %v3697
        %v4722 = vmul.f32 %v3698, %v3698
        %v4723 = vmul.f32 %v3699, %v3699
        %v4724 = vmul.f32 %v3700, %v3700
        %v4725 = vmul.f32 %v3701, %v3701
        %v4726 = vmul.f32 %v3702, %v3702
        %v4727 = vmul.f32 %v3703, %v3703
        %v4728 = vmul.f32 %v3704, %v3704
        %v4729 = vmul.f32 %v3705, %v3705
        %v4730 = vmul.f32 %v3706, %v3706
        %v4731 = vmul.f32 %v3707, %v3707
        %v4732 = vmul.f32 %v3708, %v3708
        %v4733 = vmul.f32 %v3709, %v3709
        %v4734 = vmul.f32 %v3710, %v3710
        %v4735 = vmul.f32 %v3711, %v3711
        %v4736 = vmul.f32 %v3712, %v3712
        %v4737 = vmul.f32 %v3713, %v3713
        %v4738 = vmul.f32 %v3714, %v3714
        %v4739 = vmul.f32 %v3715, %v3715
        %v4740 = vmul.f32 %v3716, %v3716
        %v4741 = vmul.f32 %v3717, %v3717
        %v4742 = vmul.f32 %v3718, %v3718
        %v4743 = vmul.f32 %v3719, %v3719
        %v4744 = vmul.f32 %v3720, %v3720
        %v4745 = vmul.f32 %v3721, %v3721
        %v4746 = vmul.f32 %v3722, %v3722
        %v4747 = vmul.f32 %v3723, %v3723
        %v4748 = vmul.f32 %v3724, %v3724
        %v4749 = vmul.f32 %v3725, %v3725
        %v4750 = vmul.f32 %v3726, %v3726
        %v4751 = vmul.f32 %v3727, %v3727
        %v4752 = vmul.f32 %v3728, %v3728
        %v4753 = vmul.f32 %v3729, %v3729
        %v4754 = vmul.f32 %v3730, %v3730
        %v4755 = vmul.f32 %v3731, %v3731
        %v4756 = vmul.f32 %v3732, %v3732
        %v4757 = vmul.f32 %v3733, %v3733
        %v4758 = vmul.f32 %v3734, %v3734
        %v4759 = vmul.f32 %v3735, %v3735
        %v4760 = vmul.f32 %v3736, %v3736
        %v4761 = vmul.f32 %v3737, %v3737
        %v4762 = vmul.f32 %v3738, %v3738
        %v4763 = vmul.f32 %v3739, %v3739
        %v4764 = vmul.f32 %v3740, %v3740
        %v4765 = vmul.f32 %v3741, %v3741
        %v4766 = vmul.f32 %v3742, %v3742
        %v4767 = vmul.f32 %v3743, %v3743
        %v4768 = vmul.f32 %v3744, %v3744
        %v4769 = vmul.f32 %v3745, %v3745
        %v4770 = vmul.f32 %v3746, %v3746
        %v4771 = vmul.f32 %v3747, %v3747
        %v4772 = vmul.f32 %v3748, %v3748
        %v4773 = vmul.f32 %v3749, %v3749
        %v4774 = vmul.f32 %v3750, %v3750
        %v4775 = vmul.f32 %v3751, %v3751
        %v4776 = vmul.f32 %v3752, %v3752
        %v4777 = vmul.f32 %v3753, %v3753
        %v4778 = vmul.f32 %v3754, %v3754
        %v4779 = vmul.f32 %v3755, %v3755
        %v4780 = vmul.f32 %v3756, %v3756
        %v4781 = vmul.f32 %v3757, %v3757
        %v4782 = vmul.f32 %v3758, %v3758
        %v4783 = vmul.f32 %v3759, %v3759
        %v4784 = vmul.f32 %v3760, %v3760
        %v4785 = vmul.f32 %v3761, %v3761
        %v4786 = vmul.f32 %v3762, %v3762
        %v4787 = vmul.f32 %v3763, %v3763
        %v4788 = vmul.f32 %v3764, %v3764
        %v4789 = vmul.f32 %v3765, %v3765
        %v4790 = vmul.f32 %v3766, %v3766
        %v4791 = vmul.f32 %v3767, %v3767
        %v4792 = vmul.f32 %v3768, %v3768
        %v4793 = vmul.f32 %v3769, %v3769
        %v4794 = vmul.f32 %v3770, %v3770
        %v4795 = vmul.f32 %v3771, %v3771
        %v4796 = vmul.f32 %v3772, %v3772
        %v4797 = vmul.f32 %v3773, %v3773
        %v4798 = vmul.f32 %v3774, %v3774
        %v4799 = vmul.f32 %v3775, %v3775
        %v4800 = vmul.f32 %v3776, %v3776
        %v4801 = vmul.f32 %v3777, %v3777
        %v4802 = vmul.f32 %v3778, %v3778
        %v4803 = vmul.f32 %v3779, %v3779
        %v4804 = vmul.f32 %v3780, %v3780
        %v4805 = vmul.f32 %v3781, %v3781
        %v4806 = vmul.f32 %v3782, %v3782
        %v4807 = vmul.f32 %v3783, %v3783
        %v4808 = vmul.f32 %v3784, %v3784
        %v4809 = vmul.f32 %v3785, %v3785
        %v4810 = vmul.f32 %v3786, %v3786
        %v4811 = vmul.f32 %v3787, %v3787
        %v4812 = vmul.f32 %v3788, %v3788
        %v4813 = vmul.f32 %v3789, %v3789
        %v4814 = vmul.f32 %v3790, %v3790
        %v4815 = vmul.f32 %v3791, %v3791
        %v4816 = vmul.f32 %v3792, %v3792
        %v4817 = vmul.f32 %v3793, %v3793
        %v4818 = vmul.f32 %v3794, %v3794
        %v4819 = vmul.f32 %v3795, %v3795
        %v4820 = vmul.f32 %v3796, %v3796
        %v4821 = vmul.f32 %v3797, %v3797
        %v4822 = vmul.f32 %v3798, %v3798
        %v4823 = vmul.f32 %v3799, %v3799
        %v4824 = vmul.f32 %v3800, %v3800
        %v4825 = vmul.f32 %v3801, %v3801
        %v4826 = vmul.f32 %v3802, %v3802
        %v4827 = vmul.f32 %v3803, %v3803
        %v4828 = vmul.f32 %v3804, %v3804
        %v4829 = vmul.f32 %v3805, %v3805
        %v4830 = vmul.f32 %v3806, %v3806
        %v4831 = vmul.f32 %v3807, %v3807
        %v4832 = vmul.f32 %v3808, %v3808
        %v4833 = vmul.f32 %v3809, %v3809
        %v4834 = vmul.f32 %v3810, %v3810
        %v4835 = vmul.f32 %v3811, %v3811
        %v4836 = vmul.f32 %v3812, %v3812
        %v4837 = vmul.f32 %v3813, %v3813
        %v4838 = vmul.f32 %v3814, %v3814
        %v4839 = vmul.f32 %v3815, %v3815
        %v4840 = vmul.f32 %v3816, %v3816
        %v4841 = vmul.f32 %v3817, %v3817
        %v4842 = vmul.f32 %v3818, %v3818
        %v4843 = vmul.f32 %v3819, %v3819
        %v4844 = vmul.f32 %v3820, %v3820
        %v4845 = vmul.f32 %v3821, %v3821
        %v4846 = vmul.f32 %v3822, %v3822
        %v4847 = vmul.f32 %v3823, %v3823
        %v4848 = vmul.f32 %v3824, %v3824
        %v4849 = vmul.f32 %v3825, %v3825
        %v4850 = vmul.f32 %v3826, %v3826
        %v4851 = vmul.f32 %v3827, %v3827
        %v4852 = vmul.f32 %v3828, %v3828
        %v4853 = vmul.f32 %v3829, %v3829
        %v4854 = vmul.f32 %v3830, %v3830
        %v4855 = vmul.f32 %v3831, %v3831
        %v4856 = vmul.f32 %v3832, %v3832
        %v4857 = vmul.f32 %v3833, %v3833
        %v4858 = vmul.f32 %v3834, %v3834
        %v4859 = vmul.f32 %v3835, %v3835
        %v4860 = vmul.f32 %v3836, %v3836
        %v4861 = vmul.f32 %v3837, %v3837
        %v4862 = vmul.f32 %v3838, %v3838
        %v4863 = vmul.f32 %v3839, %v3839
        %v4864 = vmul.f32 %v3840, %v3840
        %v4865 = vmul.f32 %v3841, %v3841
        %v4866 = vmul.f32 %v3842, %v3842
        %v4867 = vmul.f32 %v3843, %v3843
        %v4868 = vmul.f32 %v3844, %v3844
        %v4869 = vmul.f32 %v3845, %v3845
        %v4870 = vmul.f32 %v3846, %v3846
        %v4871 = vmul.f32 %v3847, %v3847
        %v4872 = vmul.f32 %v3848, %v3848
        %v4873 = vmul.f32 %v3849, %v3849
        %v4874 = vmul.f32 %v3850, %v3850
        %v4875 = vmul.f32 %v3851, %v3851
        %v4876 = vmul.f32 %v3852, %v3852
        %v4877 = vmul.f32 %v3853, %v3853
        %v4878 = vmul.f32 %v3854, %v3854
        %v4879 = vmul.f32 %v3855, %v3855
        %v4880 = vmul.f32 %v3856, %v3856
        %v4881 = vmul.f32 %v3857, %v3857
        %v4882 = vmul.f32 %v3858, %v3858
        %v4883 = vmul.f32 %v3859, %v3859
        %v4884 = vmul.f32 %v3860, %v3860
        %v4885 = vmul.f32 %v3861, %v3861
        %v4886 = vmul.f32 %v3862, %v3862
        %v4887 = vmul.f32 %v3863, %v3863
        %v4888 = vmul.f32 %v3864, %v3864
        %v4889 = vmul.f32 %v3865, %v3865
        %v4890 = vmul.f32 %v3866, %v3866
        %v4891 = vmul.f32 %v3867, %v3867
        %v4892 = vmul.f32 %v3868, %v3868
        %v4893 = vmul.f32 %v3869, %v3869
        %v4894 = vmul.f32 %v3870, %v3870
        %v4895 = vmul.f32 %v3871, %v3871
        %v4896 = vmul.f32 %v3872, %v3872
        %v4897 = vmul.f32 %v3873, %v3873
        %v4898 = vmul.f32 %v3874, %v3874
        %v4899 = vmul.f32 %v3875, %v3875
        %v4900 = vmul.f32 %v3876, %v3876
        %v4901 = vmul.f32 %v3877, %v3877
        %v4902 = vmul.f32 %v3878, %v3878
        %v4903 = vmul.f32 %v3879, %v3879
        %v4904 = vmul.f32 %v3880, %v3880
        %v4905 = vmul.f32 %v3881, %v3881
        %v4906 = vmul.f32 %v3882, %v3882
        %v4907 = vmul.f32 %v3883, %v3883
        %v4908 = vmul.f32 %v3884, %v3884
        %v4909 = vmul.f32 %v3885, %v3885
        %v4910 = vmul.f32 %v3886, %v3886
        %v4911 = vmul.f32 %v3887, %v3887
        %v4912 = vmul.f32 %v3888, %v3888
        %v4913 = vmul.f32 %v3889, %v3889
        %v4914 = vmul.f32 %v3890, %v3890
        %v4915 = vmul.f32 %v3891, %v3891
        %v4916 = vmul.f32 %v3892, %v3892
        %v4917 = vmul.f32 %v3893, %v3893
        %v4918 = vmul.f32 %v3894, %v3894
        %v4919 = vmul.f32 %v3895, %v3895
        %v4920 = vmul.f32 %v3896, %v3896
        %v4921 = vmul.f32 %v3897, %v3897
        %v4922 = vmul.f32 %v3898, %v3898
        %v4923 = vmul.f32 %v3899, %v3899
        %v4924 = vmul.f32 %v3900, %v3900
        %v4925 = vmul.f32 %v3901, %v3901
        %v4926 = vmul.f32 %v3902, %v3902
        %v4927 = vmul.f32 %v3903, %v3903
        %v4928 = vmul.f32 %v3904, %v3904
        %v4929 = vmul.f32 %v3905, %v3905
        %v4930 = vmul.f32 %v3906, %v3906
        %v4931 = vmul.f32 %v3907, %v3907
        %v4932 = vmul.f32 %v3908, %v3908
        %v4933 = vmul.f32 %v3909, %v3909
        %v4934 = vmul.f32 %v3910, %v3910
        %v4935 = vmul.f32 %v3911, %v3911
        %v4936 = vmul.f32 %v3912, %v3912
        %v4937 = vmul.f32 %v3913, %v3913
        %v4938 = vmul.f32 %v3914, %v3914
        %v4939 = vmul.f32 %v3915, %v3915
        %v4940 = vmul.f32 %v3916, %v3916
        %v4941 = vmul.f32 %v3917, %v3917
        %v4942 = vmul.f32 %v3918, %v3918
        %v4943 = vmul.f32 %v3919, %v3919
        %v4944 = vmul.f32 %v3920, %v3920
        %v4945 = vmul.f32 %v3921, %v3921
        %v4946 = vmul.f32 %v3922, %v3922
        %v4947 = vmul.f32 %v3923, %v3923
        %v4948 = vmul.f32 %v3924, %v3924
        %v4949 = vmul.f32 %v3925, %v3925
        %v4950 = vmul.f32 %v3926, %v3926
        %v4951 = vmul.f32 %v3927, %v3927
        %v4952 = vmul.f32 %v3928, %v3928
        %v4953 = vmul.f32 %v3929, %v3929
        %v4954 = vmul.f32 %v3930, %v3930
        %v4955 = vmul.f32 %v3931, %v3931
        %v4956 = vmul.f32 %v3932, %v3932
        %v4957 = vmul.f32 %v3933, %v3933
        %v4958 = vmul.f32 %v3934, %v3934
        %v4959 = vmul.f32 %v3935, %v3935
        %v4960 = vmul.f32 %v3936, %v3936
        %v4961 = vmul.f32 %v3937, %v3937
        %v4962 = vmul.f32 %v3938, %v3938
        %v4963 = vmul.f32 %v3939, %v3939
        %v4964 = vmul.f32 %v3940, %v3940
        %v4965 = vmul.f32 %v3941, %v3941
        %v4966 = vmul.f32 %v3942, %v3942
        %v4967 = vmul.f32 %v3943, %v3943
        %v4968 = vmul.f32 %v3944, %v3944
        %v4969 = vmul.f32 %v3945, %v3945
        %v4970 = vmul.f32 %v3946, %v3946
        %v4971 = vmul.f32 %v3947, %v3947
        %v4972 = vmul.f32 %v3948, %v3948
        %v4973 = vmul.f32 %v3949, %v3949
        %v4974 = vmul.f32 %v3950, %v3950
        %v4975 = vmul.f32 %v3951, %v3951
        %v4976 = vmul.f32 %v3952, %v3952
        %v4977 = vmul.f32 %v3953, %v3953
        %v4978 = vmul.f32 %v3954, %v3954
        %v4979 = vmul.f32 %v3955, %v3955
        %v4980 = vmul.f32 %v3956, %v3956
        %v4981 = vmul.f32 %v3957, %v3957
        %v4982 = vmul.f32 %v3958, %v3958
        %v4983 = vmul.f32 %v3959, %v3959
        %v4984 = vmul.f32 %v3960, %v3960
        %v4985 = vmul.f32 %v3961, %v3961
        %v4986 = vmul.f32 %v3962, %v3962
        %v4987 = vmul.f32 %v3963, %v3963
        %v4988 = vmul.f32 %v3964, %v3964
        %v4989 = vmul.f32 %v3965, %v3965
        %v4990 = vmul.f32 %v3966, %v3966
        %v4991 = vmul.f32 %v3967, %v3967
        %v4992 = vmul.f32 %v3968, %v3968
        %v4993 = vmul.f32 %v3969, %v3969
        %v4994 = vmul.f32 %v3970, %v3970
        %v4995 = vmul.f32 %v3971, %v3971
        %v4996 = vmul.f32 %v3972, %v3972
        %v4997 = vmul.f32 %v3973, %v3973
        %v4998 = vmul.f32 %v3974, %v3974
        %v4999 = vmul.f32 %v3975, %v3975
        %v5000 = vmul.f32 %v3976, %v3976
        %v5001 = vmul.f32 %v3977, %v3977
        %v5002 = vmul.f32 %v3978, %v3978
        %v5003 = vmul.f32 %v3979, %v3979
        %v5004 = vmul.f32 %v3980, %v3980
        %v5005 = vmul.f32 %v3981, %v3981
        %v5006 = vmul.f32 %v3982, %v3982
        %v5007 = vmul.f32 %v3983, %v3983
        %v5008 = vmul.f32 %v3984, %v3984
        %v5009 = vmul.f32 %v3985, %v3985
        %v5010 = vmul.f32 %v3986, %v3986
        %v5011 = vmul.f32 %v3987, %v3987
        %v5012 = vmul.f32 %v3988, %v3988
        %v5013 = vmul.f32 %v3989, %v3989
        %v5014 = vmul.f32 %v3990, %v3990
        %v5015 = vmul.f32 %v3991, %v3991
        %v5016 = vmul.f32 %v3992, %v3992
        %v5017 = vmul.f32 %v3993, %v3993
        %v5018 = vmul.f32 %v3994, %v3994
        %v5019 = vmul.f32 %v3995, %v3995
        %v5020 = vmul.f32 %v3996, %v3996
        %v5021 = vmul.f32 %v3997, %v3997
        %v5022 = vmul.f32 %v3998, %v3998
        %v5023 = vmul.f32 %v3999, %v3999
        %v5024 = vmul.f32 %v4000, %v4000
        %v5025 = vmul.f32 %v4001, %v4001
        %v5026 = vmul.f32 %v4002, %v4002
        %v5027 = vmul.f32 %v4003, %v4003
        %v5028 = vmul.f32 %v4004, %v4004
        %v5029 = vmul.f32 %v4005, %v4005
        %v5030 = vmul.f32 %v4006, %v4006
        %v5031 = vmul.f32 %v4007, %v4007
        %v5032 = vmul.f32 %v4008, %v4008
        %v5033 = vmul.f32 %v4009, %v4009
        %v5034 = vmul.f32 %v4010, %v4010
        %v5035 = vmul.f32 %v4011, %v4011
        %v5036 = vmul.f32 %v4012, %v4012
        %v5037 = vmul.f32 %v4013, %v4013
        %v5038 = vmul.f32 %v4014, %v4014
        %v5039 = vmul.f32 %v4015, %v4015
        %v5040 = vmul.f32 %v4016, %v4016
        %v5041 = vmul.f32 %v4017, %v4017
        %v5042 = vmul.f32 %v4018, %v4018
        %v5043 = vmul.f32 %v4019, %v4019
        %v5044 = vmul.f32 %v4020, %v4020
        %v5045 = vmul.f32 %v4021, %v4021
        %v5046 = vmul.f32 %v4022, %v4022
        %v5047 = vmul.f32 %v4023, %v4023
        %v5048 = vmul.f32 %v4024, %v4024
        %v5049 = vmul.f32 %v4025, %v4025
        %v5050 = vmul.f32 %v4026, %v4026
        %v5051 = vmul.f32 %v4027, %v4027
        %v5052 = vmul.f32 %v4028, %v4028
        %v5053 = vmul.f32 %v4029, %v4029
        %v5054 = vmul.f32 %v4030, %v4030
        %v5055 = vmul.f32 %v4031, %v4031
        %v5056 = vmul.f32 %v4032, %v4032
        %v5057 = vmul.f32 %v4033, %v4033
        %v5058 = vmul.f32 %v4034, %v4034
        %v5059 = vmul.f32 %v4035, %v4035
        %v5060 = vmul.f32 %v4036, %v4036
        %v5061 = vmul.f32 %v4037, %v4037
        %v5062 = vmul.f32 %v4038, %v4038
        %v5063 = vmul.f32 %v4039, %v4039
        %v5064 = vmul.f32 %v4040, %v4040
        %v5065 = vmul.f32 %v4041, %v4041
        %v5066 = vmul.f32 %v4042, %v4042
        %v5067 = vmul.f32 %v4043, %v4043
        %v5068 = vmul.f32 %v4044, %v4044
        %v5069 = vmul.f32 %v4045, %v4045
        %v5070 = vmul.f32 %v4046, %v4046
        %v5071 = vmul.f32 %v4047, %v4047
        %v5072 = vmul.f32 %v4048, %v4048
        %v5073 = vmul.f32 %v4049, %v4049
        %v5074 = vmul.f32 %v4050, %v4050
        %v5075 = vmul.f32 %v4051, %v4051
        %v5076 = vmul.f32 %v4052, %v4052
        %v5077 = vmul.f32 %v4053, %v4053
        %v5078 = vmul.f32 %v4054, %v4054
        %v5079 = vmul.f32 %v4055, %v4055
        %v5080 = vmul.f32 %v4056, %v4056
        %v5081 = vmul.f32 %v4057, %v4057
        %v5082 = vmul.f32 %v4058, %v4058
        %v5083 = vmul.f32 %v4059, %v4059
        %v5084 = vmul.f32 %v4060, %v4060
        %v5085 = vmul.f32 %v4061, %v4061
        %v5086 = vmul.f32 %v4062, %v4062
        %v5087 = vmul.f32 %v4063, %v4063
        %v5088 = vmul.f32 %v4064, %v4064
        %v5089 = vmul.f32 %v4065, %v4065
        %v5090 = vmul.f32 %v4066, %v4066
        %v5091 = vmul.f32 %v4067, %v4067
        %v5092 = vmul.f32 %v4068, %v4068
        %v5093 = vmul.f32 %v4069, %v4069
        %v5094 = vmul.f32 %v4070, %v4070
        %v5095 = vmul.f32 %v4071, %v4071
        %v5096 = vmul.f32 %v4072, %v4072
        %v5097 = vmul.f32 %v4073, %v4073
        %v5098 = vmul.f32 %v4074, %v4074
        %v5099 = vmul.f32 %v4075, %v4075
        %v5100 = vmul.f32 %v4076, %v4076
        %v5101 = vmul.f32 %v4077, %v4077
        %v5102 = vmul.f32 %v4078, %v4078
        %v5103 = vmul.f32 %v4079, %v4079
        %v5104 = vmul.f32 %v4080, %v4080
        %v5105 = vmul.f32 %v4081, %v4081
        %v5106 = vmul.f32 %v4082, %v4082
        %v5107 = vmul.f32 %v4083, %v4083
        %v5108 = vmul.f32 %v4084, %v4084
        %v5109 = vmul.f32 %v4085, %v4085
        %v5110 = vmul.f32 %v4086, %v4086
        %v5111 = vmul.f32 %v4087, %v4087
        %v5112 = vmul.f32 %v4088, %v4088
        %v5113 = vmul.f32 %v4089, %v4089
        %v5114 = vmul.f32 %v4090, %v4090
        %v5115 = vmul.f32 %v4091, %v4091
        %v5116 = vmul.f32 %v4092, %v4092
        %v5117 = vmul.f32 %v4093, %v4093
        %v5118 = vmul.f32 %v4094, %v4094
        %v5119 = vmul.f32 %v4095, %v4095
        %v5120 = vmul.f32 %v4096, %v4096
        %v5121 = vmul.f32 %v4097, %v4097
        %v5122 = vmul.f32 %v4098, %v4098
        %v5123 = vmul.f32 %v4099, %v4099
        %v5124 = vmul.f32 %v4100, %v4100
        %v5125 = vmul.f32 %v4101, %v4101
        %v5126 = vmul.f32 %v4102, %v4102
        %v5127 = vmul.f32 %v4103, %v4103
        %v5128 = vmul.f32 %v4104, %v4104
        %v5129 = vmul.f32 %v4105, %v4105
        %v5130 = vmul.f32 %v4106, %v4106
        %v5131 = vmul.f32 %v4107, %v4107
        %v5132 = vmul.f32 %v4108, %v4108
        %v5133 = vmul.f32 %v4109, %v4109
        %v5134 = vmul.f32 %v4110, %v4110
        %v5135 = vmul.f32 %v4111, %v4111
        %v5136 = vmul.f32 %v4112, %v4112
        %v5137 = vmul.f32 %v4113, %v4113
        %v5138 = vmul.f32 %v4114, %v4114
        %v5139 = vmul.f32 %v4115, %v4115
        %v5140 = vmul.f32 %v4116, %v4116
        %v5141 = vmul.f32 %v4117, %v4117
        %v5142 = vmul.f32 %v4118, %v4118
        %v5143 = vmul.f32 %v4119, %v4119
        %v5144 = vmul.f32 %v4120, %v4120
        %v5145 = vmul.f32 %v4121, %v4121
        %v5146 = vmul.f32 %v4122, %v4122
        %v5147 = vmul.f32 %v4123, %v4123
        %v5148 = vmul.f32 %v4124, %v4124
        %v5149 = vmul.f32 %v4125, %v4125
        %v5150 = vmul.f32 %v4126, %v4126
        %v5151 = vmul.f32 %v4127, %v4127
        %v5152 = vmul.f32 %v4128, %v4128
        %v5153 = vmul.f32 %v4129, %v4129
        %v5154 = vmul.f32 %v4130, %v4130
        %v5155 = vmul.f32 %v4131, %v4131
        %v5156 = vmul.f32 %v4132, %v4132
        %v5157 = vmul.f32 %v4133, %v4133
        %v5158 = vmul.f32 %v4134, %v4134
        %v5159 = vmul.f32 %v4135, %v4135
        %v5160 = vmul.f32 %v4136, %v4136
        %v5161 = vmul.f32 %v4137, %v4137
        %v5162 = vmul.f32 %v4138, %v4138
        %v5163 = vmul.f32 %v4139, %v4139
        %v5164 = vmul.f32 %v4140, %v4140
        %v5165 = vmul.f32 %v4141, %v4141
        %v5166 = vmul.f32 %v4142, %v4142
        %v5167 = vmul.f32 %v4143, %v4143
        %v5168 = vmul.f32 %v4144, %v4144
        %v5169 = vmul.f32 %v4145, %v4145
        %v5170 = vmul.f32 %v4146, %v4146
        %v5171 = vmul.f32 %v4147, %v4147
        %v5172 = vmul.f32 %v4148, %v4148
        %v5173 = vmul.f32 %v4149, %v4149
        %v5174 = vmul.f32 %v4150, %v4150
        %v5175 = vmul.f32 %v4151, %v4151
        %v5176 = vmul.f32 %v4152, %v4152
        %v5177 = vmul.f32 %v4153, %v4153
        %v5178 = vmul.f32 %v4154, %v4154
        %v5179 = vmul.f32 %v4155, %v4155
        %v5180 = vmul.f32 %v4156, %v4156
        %v5181 = vmul.f32 %v4157, %v4157
        %v5182 = vmul.f32 %v4158, %v4158
        %v5183 = vmul.f32 %v4159, %v4159
        %v5184 = vmul.f32 %v4160, %v4160
        %v5185 = vmul.f32 %v4161, %v4161
        %v5186 = vmul.f32 %v4162, %v4162
        %v5187 = vmul.f32 %v4163, %v4163
        %v5188 = vmul.f32 %v4164, %v4164
        %v5189 = vmul.f32 %v4165, %v4165
        %v5190 = vmul.f32 %v4166, %v4166
        %v5191 = vmul.f32 %v4167, %v4167
        %v5192 = vmul.f32 %v4168, %v4168
        %v5193 = vmul.f32 %v4169, %v4169
        %v5194 = vmul.f32 %v4170, %v4170
        %v5195 = vmul.f32 %v4171, %v4171
        %v5196 = vmul.f32 %v4172, %v4172
        %v5197 = vmul.f32 %v4173, %v4173
        %v5198 = vmul.f32 %v4174, %v4174
        %v5199 = vmul.f32 %v4175, %v4175
        %v5200 = vmul.f32 %v4176, %v4176
        %v5201 = vmul.f32 %v4177, %v4177
        %v5202 = vmul.f32 %v4178, %v4178
        %v5203 = vmul.f32 %v4179, %v4179
        %v5204 = vmul.f32 %v4180, %v4180
        %v5205 = vmul.f32 %v4181, %v4181
        %v5206 = vmul.f32 %v4182, %v4182
        %v5207 = vmul.f32 %v4183, %v4183
        %v5208 = vmul.f32 %v4184, %v4184
        %v5209 = vmul.f32 %v4185, %v4185
        %v5210 = vmul.f32 %v4186, %v4186
        %v5211 = vmul.f32 %v4187, %v4187
        %v5212 = vmul.f32 %v4188, %v4188
        %v5213 = vmul.f32 %v4189, %v4189
        %v5214 = vmul.f32 %v4190, %v4190
        %v5215 = vmul.f32 %v4191, %v4191
        %v5216 = vmul.f32 %v4192, %v4192
        %v5217 = vmul.f32 %v4193, %v4193
        %v5218 = vmul.f32 %v4194, %v4194
        %v5219 = vmul.f32 %v4195, %v4195
        %v5220 = vmul.f32 %v4196, %v4196
        %v5221 = vmul.f32 %v4197, %v4197
        %v5222 = vmul.f32 %v4198, %v4198
        %v5223 = vmul.f32 %v4199, %v4199
        %v5224 = vmul.f32 %v4200, %v4200
        %v5225 = vmul.f32 %v4201, %v4201
        %v5226 = vmul.f32 %v4202, %v4202
        %v5227 = vmul.f32 %v4203, %v4203
        %v5228 = vmul.f32 %v4204, %v4204
        %v5229 = vmul.f32 %v4205, %v4205
        %v5230 = vmul.f32 %v4206, %v4206
        %v5231 = vmul.f32 %v4207, %v4207
        %v5232 = vmul.f32 %v4208, %v4208
        %v5233 = vmul.f32 %v4209, %v4209
        %v5234 = vmul.f32 %v4210, %v4210
        %v5235 = vmul.f32 %v4211, %v4211
        %v5236 = vmul.f32 %v4212, %v4212
        %v5237 = vmul.f32 %v4213, %v4213
        %v5238 = vmul.f32 %v4214, %v4214
        %v5239 = vmul.f32 %v4215, %v4215
        %v5240 = vmul.f32 %v4216, %v4216
        %v5241 = vmul.f32 %v4217, %v4217
        %v5242 = vmul.f32 %v4218, %v4218
        %v5243 = vmul.f32 %v4219, %v4219
        %v5244 = vmul.f32 %v4220, %v4220
        %v5245 = vmul.f32 %v4221, %v4221
        %v5246 = vmul.f32 %v4222, %v4222
        %v5247 = vmul.f32 %v4223, %v4223
        %v5248 = vmul.f32 %v4224, %v4224
        %v5249 = vmul.f32 %v4225, %v4225
        %v5250 = vmul.f32 %v4226, %v4226
        %v5251 = vmul.f32 %v4227, %v4227
        %v5252 = vmul.f32 %v4228, %v4228
        %v5253 = vmul.f32 %v4229, %v4229
        %v5254 = vmul.f32 %v4230, %v4230
        %v5255 = vmul.f32 %v4231, %v4231
        %v5256 = vmul.f32 %v4232, %v4232
        %v5257 = vmul.f32 %v4233, %v4233
        %v5258 = vmul.f32 %v4234, %v4234
        %v5259 = vmul.f32 %v4235, %v4235
        %v5260 = vmul.f32 %v4236, %v4236
        %v5261 = vmul.f32 %v4237, %v4237
        %v5262 = vmul.f32 %v4238, %v4238
        %v5263 = vmul.f32 %v4239, %v4239
        %v5264 = vmul.f32 %v4240, %v4240
        %v5265 = vmul.f32 %v4241, %v4241
        %v5266 = vmul.f32 %v4242, %v4242
        %v5267 = vmul.f32 %v4243, %v4243
        %v5268 = vmul.f32 %v4244, %v4244
        %v5269 = vmul.f32 %v4245, %v4245
        %v5270 = vmul.f32 %v4246, %v4246
        %v5271 = vmul.f32 %v4247, %v4247
        %v5272 = vmul.f32 %v4248, %v4248
        %v5273 = vmul.f32 %v4249, %v4249
        %v5274 = vmul.f32 %v4250, %v4250
        %v5275 = vmul.f32 %v4251, %v4251
        %v5276 = vmul.f32 %v4252, %v4252
        %v5277 = vmul.f32 %v4253, %v4253
        %v5278 = vmul.f32 %v4254, %v4254
        %v5279 = vmul.f32 %v4255, %v4255
        %v5280 = vmul.f32 %v4256, %v4256
        %v5281 = vmul.f32 %v4257, %v4257
        %v5282 = vmul.f32 %v4258, %v4258
        %v5283 = vmul.f32 %v4259, %v4259
        %v5284 = vmul.f32 %v4260, %v4260
        %v5285 = vmul.f32 %v4261, %v4261
        %v5286 = vmul.f32 %v4262, %v4262
        %v5287 = vmul.f32 %v4263, %v4263
        %v5288 = vmul.f32 %v4264, %v4264
        %v5289 = vmul.f32 %v4265, %v4265
        %v5290 = vmul.f32 %v4266, %v4266
        %v5291 = vmul.f32 %v4267, %v4267
        %v5292 = vmul.f32 %v4268, %v4268
        %v5293 = vmul.f32 %v4269, %v4269
        %v5294 = vmul.f32 %v4270, %v4270
        %v5295 = vmul.f32 %v4271, %v4271
        %v5296 = vmul.f32 %v4272, %v4272
        %v5297 = vmul.f32 %v4273, %v4273
        %v5298 = vmul.f32 %v4274, %v4274
        %v5299 = vmul.f32 %v4275, %v4275
        %v5300 = vmul.f32 %v4276, %v4276
        %v5301 = vmul.f32 %v4277, %v4277
        %v5302 = vmul.f32 %v4278, %v4278
        %v5303 = vmul.f32 %v4279, %v4279
        %v5304 = vmul.f32 %v4280, %v4280
        %v5305 = vmul.f32 %v4281, %v4281
        %v5306 = vmul.f32 %v4282, %v4282
        %v5307 = vmul.f32 %v4283, %v4283
        %v5308 = vmul.f32 %v4284, %v4284
        %v5309 = vmul.f32 %v4285, %v4285
        %v5310 = vmul.f32 %v4286, %v4286
        %v5311 = vmul.f32 %v4287, %v4287
        %v5312 = vmul.f32 %v4288, %v4288
        %v5313 = vmul.f32 %v4289, %v4289
        %v5314 = vmul.f32 %v4290, %v4290
        %v5315 = vmul.f32 %v4291, %v4291
        %v5316 = vmul.f32 %v4292, %v4292
        %v5317 = vmul.f32 %v4293, %v4293
        %v5318 = vmul.f32 %v4294, %v4294
        %v5319 = vmul.f32 %v4295, %v4295
        %v5320 = vmul.f32 %v4296, %v4296
        %v5321 = vmul.f32 %v4297, %v4297
        %v5322 = vmul.f32 %v4298, %v4298
        %v5323 = vmul.f32 %v4299, %v4299
        %v5324 = vmul.f32 %v4300, %v4300
        %v5325 = vmul.f32 %v4301, %v4301
        %v5326 = vmul.f32 %v4302, %v4302
        %v5327 = vmul.f32 %v4303, %v4303
        %v5328 = vmul.f32 %v4304, %v4304
        %v5329 = vmul.f32 %v4305, %v4305
        %v5330 = vmul.f32 %v4306, %v4306
        %v5331 = vmul.f32 %v4307, %v4307
        %v5332 = vmul.f32 %v4308, %v4308
        %v5333 = vmul.f32 %v4309, %v4309
        %v5334 = vmul.f32 %v4310, %v4310
        %v5335 = vmul.f32 %v4311, %v4311
        %v5336 = vmul.f32 %v4312, %v4312
        %v5337 = vmul.f32 %v4313, %v4313
        %v5338 = vmul.f32 %v4314, %v4314
        %v5339 = vmul.f32 %v4315, %v4315
        %v5340 = vmul.f32 %v4316, %v4316
        %v5341 = vmul.f32 %v4317, %v4317
        %v5342 = vmul.f32 %v4318, %v4318
        %v5343 = vmul.f32 %v4319, %v4319
        %v5344 = vmul.f32 %v4320, %v4320
        %v5345 = vmul.f32 %v4321, %v4321
        %v5346 = vmul.f32 %v4322, %v4322
        %v5347 = vmul.f32 %v4323, %v4323
        %v5348 = vmul.f32 %v4324, %v4324
        %v5349 = vmul.f32 %v4325, %v4325
        %v5350 = vmul.f32 %v4326, %v4326
        %v5351 = vmul.f32 %v4327, %v4327
        %v5352 = vmul.f32 %v4328, %v4328
        %v5353 = vmul.f32 %v4329, %v4329
        %v5354 = vmul.f32 %v4330, %v4330
        %v5355 = vmul.f32 %v4331, %v4331
        %v5356 = vmul.f32 %v4332, %v4332
        %v5357 = vmul.f32 %v4333, %v4333
        %v5358 = vmul.f32 %v4334, %v4334
        %v5359 = vmul.f32 %v4335, %v4335
        %v5360 = vmul.f32 %v4336, %v4336
        %v5361 = vmul.f32 %v4337, %v4337
        %v5362 = vmul.f32 %v4338, %v4338
        %v5363 = vmul.f32 %v4339, %v4339
        %v5364 = vmul.f32 %v4340, %v4340
        %v5365 = vmul.f32 %v4341, %v4341
        %v5366 = vmul.f32 %v4342, %v4342
        %v5367 = vmul.f32 %v4343, %v4343
        %v5368 = vmul.f32 %v4344, %v4344
        %v5369 = vmul.f32 %v4345, %v4345
        %v5370 = vmul.f32 %v4346, %v4346
        %v5371 = vmul.f32 %v4347, %v4347
        %v5372 = vmul.f32 %v4348, %v4348
        %v5373 = vadd.f32 %v4349, %v4861
        %v5374 = vadd.f32 %v4350, %v4862
        %v5375 = vadd.f32 %v4351, %v4863
        %v5376 = vadd.f32 %v4352, %v4864
        %v5377 = vadd.f32 %v4353, %v4865
        %v5378 = vadd.f32 %v4354, %v4866
        %v5379 = vadd.f32 %v4355, %v4867
        %v5380 = vadd.f32 %v4356, %v4868
        %v5381 = vadd.f32 %v4357, %v4869
        %v5382 = vadd.f32 %v4358, %v4870
        %v5383 = vadd.f32 %v4359, %v4871
        %v5384 = vadd.f32 %v4360, %v4872
        %v5385 = vadd.f32 %v4361, %v4873
        %v5386 = vadd.f32 %v4362, %v4874
        %v5387 = vadd.f32 %v4363, %v4875
        %v5388 = vadd.f32 %v4364, %v4876
        %v5389 = vadd.f32 %v4365, %v4877
        %v5390 = vadd.f32 %v4366, %v4878
        %v5391 = vadd.f32 %v4367, %v4879
        %v5392 = vadd.f32 %v4368, %v4880
        %v5393 = vadd.f32 %v4369, %v4881
        %v5394 = vadd.f32 %v4370, %v4882
        %v5395 = vadd.f32 %v4371, %v4883
        %v5396 = vadd.f32 %v4372, %v4884
        %v5397 = vadd.f32 %v4373, %v4885
        %v5398 = vadd.f32 %v4374, %v4886
        %v5399 = vadd.f32 %v4375, %v4887
        %v5400 = vadd.f32 %v4376, %v4888
        %v5401 = vadd.f32 %v4377, %v4889
        %v5402 = vadd.f32 %v4378, %v4890
        %v5403 = vadd.f32 %v4379, %v4891
        %v5404 = vadd.f32 %v4380, %v4892
        %v5405 = vadd.f32 %v4381, %v4893
        %v5406 = vadd.f32 %v4382, %v4894
        %v5407 = vadd.f32 %v4383, %v4895
        %v5408 = vadd.f32 %v4384, %v4896
        %v5409 = vadd.f32 %v4385, %v4897
        %v5410 = vadd.f32 %v4386, %v4898
        %v5411 = vadd.f32 %v4387, %v4899
        %v5412 = vadd.f32 %v4388, %v4900
        %v5413 = vadd.f32 %v4389, %v4901
        %v5414 = vadd.f32 %v4390, %v4902
        %v5415 = vadd.f32 %v4391, %v4903
        %v5416 = vadd.f32 %v4392, %v4904
        %v5417 = vadd.f32 %v4393, %v4905
        %v5418 = vadd.f32 %v4394, %v4906
        %v5419 = vadd.f32 %v4395, %v4907
        %v5420 = vadd.f32 %v4396, %v4908
        %v5421 = vadd.f32 %v4397, %v4909
        %v5422 = vadd.f32 %v4398, %v4910
        %v5423 = vadd.f32 %v4399, %v4911
        %v5424 = vadd.f32 %v4400, %v4912
        %v5425 = vadd.f32 %v4401, %v4913
        %v5426 = vadd.f32 %v4402, %v4914
        %v5427 = vadd.f32 %v4403, %v4915
        %v5428 = vadd.f32 %v4404, %v4916
        %v5429 = vadd.f32 %v4405, %v4917
        %v5430 = vadd.f32 %v4406, %v4918
        %v5431 = vadd.f32 %v4407, %v4919
        %v5432 = vadd.f32 %v4408, %v4920
        %v5433 = vadd.f32 %v4409, %v4921
        %v5434 = vadd.f32 %v4410, %v4922
        %v5435 = vadd.f32 %v4411, %v4923
        %v5436 = vadd.f32 %v4412, %v4924
        %v5437 = vadd.f32 %v4413, %v4925
        %v5438 = vadd.f32 %v4414, %v4926
        %v5439 = vadd.f32 %v4415, %v4927
        %v5440 = vadd.f32 %v4416, %v4928
        %v5441 = vadd.f32 %v4417, %v4929
        %v5442 = vadd.f32 %v4418, %v4930
        %v5443 = vadd.f32 %v4419, %v4931
        %v5444 = vadd.f32 %v4420, %v4932
        %v5445 = vadd.f32 %v4421, %v4933
        %v5446 = vadd.f32 %v4422, %v4934
        %v5447 = vadd.f32 %v4423, %v4935
        %v5448 = vadd.f32 %v4424, %v4936
        %v5449 = vadd.f32 %v4425, %v4937
        %v5450 = vadd.f32 %v4426, %v4938
        %v5451 = vadd.f32 %v4427, %v4939
        %v5452 = vadd.f32 %v4428, %v4940
        %v5453 = vadd.f32 %v4429, %v4941
        %v5454 = vadd.f32 %v4430, %v4942
        %v5455 = vadd.f32 %v4431, %v4943
        %v5456 = vadd.f32 %v4432, %v4944
        %v5457 = vadd.f32 %v4433, %v4945
        %v5458 = vadd.f32 %v4434, %v4946
        %v5459 = vadd.f32 %v4435, %v4947
        %v5460 = vadd.f32 %v4436, %v4948
        %v5461 = vadd.f32 %v4437, %v4949
        %v5462 = vadd.f32 %v4438, %v4950
        %v5463 = vadd.f32 %v4439, %v4951
        %v5464 = vadd.f32 %v4440, %v4952
        %v5465 = vadd.f32 %v4441, %v4953
        %v5466 = vadd.f32 %v4442, %v4954
        %v5467 = vadd.f32 %v4443, %v4955
        %v5468 = vadd.f32 %v4444, %v4956
        %v5469 = vadd.f32 %v4445, %v4957
        %v5470 = vadd.f32 %v4446, %v4958
        %v5471 = vadd.f32 %v4447, %v4959
        %v5472 = vadd.f32 %v4448, %v4960
        %v5473 = vadd.f32 %v4449, %v4961
        %v5474 = vadd.f32 %v4450, %v4962
        %v5475 = vadd.f32 %v4451, %v4963
        %v5476 = vadd.f32 %v4452, %v4964
        %v5477 = vadd.f32 %v4453, %v4965
        %v5478 = vadd.f32 %v4454, %v4966
        %v5479 = vadd.f32 %v4455, %v4967
        %v5480 = vadd.f32 %v4456, %v4968
        %v5481 = vadd.f32 %v4457, %v4969
        %v5482 = vadd.f32 %v4458, %v4970
        %v5483 = vadd.f32 %v4459, %v4971
        %v5484 = vadd.f32 %v4460, %v4972
        %v5485 = vadd.f32 %v4461, %v4973
        %v5486 = vadd.f32 %v4462, %v4974
        %v5487 = vadd.f32 %v4463, %v4975
        %v5488 = vadd.f32 %v4464, %v4976
        %v5489 = vadd.f32 %v4465, %v4977
        %v5490 = vadd.f32 %v4466, %v4978
        %v5491 = vadd.f32 %v4467, %v4979
        %v5492 = vadd.f32 %v4468, %v4980
        %v5493 = vadd.f32 %v4469, %v4981
        %v5494 = vadd.f32 %v4470, %v4982
        %v5495 = vadd.f32 %v4471, %v4983
        %v5496 = vadd.f32 %v4472, %v4984
        %v5497 = vadd.f32 %v4473, %v4985
        %v5498 = vadd.f32 %v4474, %v4986
        %v5499 = vadd.f32 %v4475, %v4987
        %v5500 = vadd.f32 %v4476, %v4988
        %v5501 = vadd.f32 %v4477, %v4989
        %v5502 = vadd.f32 %v4478, %v4990
        %v5503 = vadd.f32 %v4479, %v4991
        %v5504 = vadd.f32 %v4480, %v4992
        %v5505 = vadd.f32 %v4481, %v4993
        %v5506 = vadd.f32 %v4482, %v4994
        %v5507 = vadd.f32 %v4483, %v4995
        %v5508 = vadd.f32 %v4484, %v4996
        %v5509 = vadd.f32 %v4485, %v4997
        %v5510 = vadd.f32 %v4486, %v4998
        %v5511 = vadd.f32 %v4487, %v4999
        %v5512 = vadd.f32 %v4488, %v5000
        %v5513 = vadd.f32 %v4489, %v5001
        %v5514 = vadd.f32 %v4490, %v5002
        %v5515 = vadd.f32 %v4491, %v5003
        %v5516 = vadd.f32 %v4492, %v5004
        %v5517 = vadd.f32 %v4493, %v5005
        %v5518 = vadd.f32 %v4494, %v5006
        %v5519 = vadd.f32 %v4495, %v5007
        %v5520 = vadd.f32 %v4496, %v5008
        %v5521 = vadd.f32 %v4497, %v5009
        %v5522 = vadd.f32 %v4498, %v5010
        %v5523 = vadd.f32 %v4499, %v5011
        %v5524 = vadd.f32 %v4500, %v5012
        %v5525 = vadd.f32 %v4501, %v5013
        %v5526 = vadd.f32 %v4502, %v5014
        %v5527 = vadd.f32 %v4503, %v5015
        %v5528 = vadd.f32 %v4504, %v5016
        %v5529 = vadd.f32 %v4505, %v5017
        %v5530 = vadd.f32 %v4506, %v5018
        %v5531 = vadd.f32 %v4507, %v5019
        %v5532 = vadd.f32 %v4508, %v5020
        %v5533 = vadd.f32 %v4509, %v5021
        %v5534 = vadd.f32 %v4510, %v5022
        %v5535 = vadd.f32 %v4511, %v5023
        %v5536 = vadd.f32 %v4512, %v5024
        %v5537 = vadd.f32 %v4513, %v5025
        %v5538 = vadd.f32 %v4514, %v5026
        %v5539 = vadd.f32 %v4515, %v5027
        %v5540 = vadd.f32 %v4516, %v5028
        %v5541 = vadd.f32 %v4517, %v5029
        %v5542 = vadd.f32 %v4518, %v5030
        %v5543 = vadd.f32 %v4519, %v5031
        %v5544 = vadd.f32 %v4520, %v5032
        %v5545 = vadd.f32 %v4521, %v5033
        %v5546 = vadd.f32 %v4522, %v5034
        %v5547 = vadd.f32 %v4523, %v5035
        %v5548 = vadd.f32 %v4524, %v5036
        %v5549 = vadd.f32 %v4525, %v5037
        %v5550 = vadd.f32 %v4526, %v5038
        %v5551 = vadd.f32 %v4527, %v5039
        %v5552 = vadd.f32 %v4528, %v5040
        %v5553 = vadd.f32 %v4529, %v5041
        %v5554 = vadd.f32 %v4530, %v5042
        %v5555 = vadd.f32 %v4531, %v5043
        %v5556 = vadd.f32 %v4532, %v5044
        %v5557 = vadd.f32 %v4533, %v5045
        %v5558 = vadd.f32 %v4534, %v5046
        %v5559 = vadd.f32 %v4535, %v5047
        %v5560 = vadd.f32 %v4536, %v5048
        %v5561 = vadd.f32 %v4537, %v5049
        %v5562 = vadd.f32 %v4538, %v5050
        %v5563 = vadd.f32 %v4539, %v5051
        %v5564 = vadd.f32 %v4540, %v5052
        %v5565 = vadd.f32 %v4541, %v5053
        %v5566 = vadd.f32 %v4542, %v5054
        %v5567 = vadd.f32 %v4543, %v5055
        %v5568 = vadd.f32 %v4544, %v5056
        %v5569 = vadd.f32 %v4545, %v5057
        %v5570 = vadd.f32 %v4546, %v5058
        %v5571 = vadd.f32 %v4547, %v5059
        %v5572 = vadd.f32 %v4548, %v5060
        %v5573 = vadd.f32 %v4549, %v5061
        %v5574 = vadd.f32 %v4550, %v5062
        %v5575 = vadd.f32 %v4551, %v5063
        %v5576 = vadd.f32 %v4552, %v5064
        %v5577 = vadd.f32 %v4553, %v5065
        %v5578 = vadd.f32 %v4554, %v5066
        %v5579 = vadd.f32 %v4555, %v5067
        %v5580 = vadd.f32 %v4556, %v5068
        %v5581 = vadd.f32 %v4557, %v5069
        %v5582 = vadd.f32 %v4558, %v5070
        %v5583 = vadd.f32 %v4559, %v5071
        %v5584 = vadd.f32 %v4560, %v5072
        %v5585 = vadd.f32 %v4561, %v5073
        %v5586 = vadd.f32 %v4562, %v5074
        %v5587 = vadd.f32 %v4563, %v5075
        %v5588 = vadd.f32 %v4564, %v5076
        %v5589 = vadd.f32 %v4565, %v5077
        %v5590 = vadd.f32 %v4566, %v5078
        %v5591 = vadd.f32 %v4567, %v5079
        %v5592 = vadd.f32 %v4568, %v5080
        %v5593 = vadd.f32 %v4569, %v5081
        %v5594 = vadd.f32 %v4570, %v5082
        %v5595 = vadd.f32 %v4571, %v5083
        %v5596 = vadd.f32 %v4572, %v5084
        %v5597 = vadd.f32 %v4573, %v5085
        %v5598 = vadd.f32 %v4574, %v5086
        %v5599 = vadd.f32 %v4575, %v5087
        %v5600 = vadd.f32 %v4576, %v5088
        %v5601 = vadd.f32 %v4577, %v5089
        %v5602 = vadd.f32 %v4578, %v5090
        %v5603 = vadd.f32 %v4579, %v5091
        %v5604 = vadd.f32 %v4580, %v5092
        %v5605 = vadd.f32 %v4581, %v5093
        %v5606 = vadd.f32 %v4582, %v5094
        %v5607 = vadd.f32 %v4583, %v5095
        %v5608 = vadd.f32 %v4584, %v5096
        %v5609 = vadd.f32 %v4585, %v5097
        %v5610 = vadd.f32 %v4586, %v5098
        %v5611 = vadd.f32 %v4587, %v5099
        %v5612 = vadd.f32 %v4588, %v5100
        %v5613 = vadd.f32 %v4589, %v5101
        %v5614 = vadd.f32 %v4590, %v5102
        %v5615 = vadd.f32 %v4591, %v5103
        %v5616 = vadd.f32 %v4592, %v5104
        %v5617 = vadd.f32 %v4593, %v5105
        %v5618 = vadd.f32 %v4594, %v5106
        %v5619 = vadd.f32 %v4595, %v5107
        %v5620 = vadd.f32 %v4596, %v5108
        %v5621 = vadd.f32 %v4597, %v5109
        %v5622 = vadd.f32 %v4598, %v5110
        %v5623 = vadd.f32 %v4599, %v5111
        %v5624 = vadd.f32 %v4600, %v5112
        %v5625 = vadd.f32 %v4601, %v5113
        %v5626 = vadd.f32 %v4602, %v5114
        %v5627 = vadd.f32 %v4603, %v5115
        %v5628 = vadd.f32 %v4604, %v5116
        %v5629 = vadd.f32 %v4605, %v5117
        %v5630 = vadd.f32 %v4606, %v5118
        %v5631 = vadd.f32 %v4607, %v5119
        %v5632 = vadd.f32 %v4608, %v5120
        %v5633 = vadd.f32 %v4609, %v5121
        %v5634 = vadd.f32 %v4610, %v5122
        %v5635 = vadd.f32 %v4611, %v5123
        %v5636 = vadd.f32 %v4612, %v5124
        %v5637 = vadd.f32 %v4613, %v5125
        %v5638 = vadd.f32 %v4614, %v5126
        %v5639 = vadd.f32 %v4615, %v5127
        %v5640 = vadd.f32 %v4616, %v5128
        %v5641 = vadd.f32 %v4617, %v5129
        %v5642 = vadd.f32 %v4618, %v5130
        %v5643 = vadd.f32 %v4619, %v5131
        %v5644 = vadd.f32 %v4620, %v5132
        %v5645 = vadd.f32 %v4621, %v5133
        %v5646 = vadd.f32 %v4622, %v5134
        %v5647 = vadd.f32 %v4623, %v5135
        %v5648 = vadd.f32 %v4624, %v5136
        %v5649 = vadd.f32 %v4625, %v5137
        %v5650 = vadd.f32 %v4626, %v5138
        %v5651 = vadd.f32 %v4627, %v5139
        %v5652 = vadd.f32 %v4628, %v5140
        %v5653 = vadd.f32 %v4629, %v5141
        %v5654 = vadd.f32 %v4630, %v5142
        %v5655 = vadd.f32 %v4631, %v5143
        %v5656 = vadd.f32 %v4632, %v5144
        %v5657 = vadd.f32 %v4633, %v5145
        %v5658 = vadd.f32 %v4634, %v5146
        %v5659 = vadd.f32 %v4635, %v5147
        %v5660 = vadd.f32 %v4636, %v5148
        %v5661 = vadd.f32 %v4637, %v5149
        %v5662 = vadd.f32 %v4638, %v5150
        %v5663 = vadd.f32 %v4639, %v5151
        %v5664 = vadd.f32 %v4640, %v5152
        %v5665 = vadd.f32 %v4641, %v5153
        %v5666 = vadd.f32 %v4642, %v5154
        %v5667 = vadd.f32 %v4643, %v5155
        %v5668 = vadd.f32 %v4644, %v5156
        %v5669 = vadd.f32 %v4645, %v5157
        %v5670 = vadd.f32 %v4646, %v5158
        %v5671 = vadd.f32 %v4647, %v5159
        %v5672 = vadd.f32 %v4648, %v5160
        %v5673 = vadd.f32 %v4649, %v5161
        %v5674 = vadd.f32 %v4650, %v5162
        %v5675 = vadd.f32 %v4651, %v5163
        %v5676 = vadd.f32 %v4652, %v5164
        %v5677 = vadd.f32 %v4653, %v5165
        %v5678 = vadd.f32 %v4654, %v5166
        %v5679 = vadd.f32 %v4655, %v5167
        %v5680 = vadd.f32 %v4656, %v5168
        %v5681 = vadd.f32 %v4657, %v5169
        %v5682 = vadd.f32 %v4658, %v5170
        %v5683 = vadd.f32 %v4659, %v5171
        %v5684 = vadd.f32 %v4660, %v5172
        %v5685 = vadd.f32 %v4661, %v5173
        %v5686 = vadd.f32 %v4662, %v5174
        %v5687 = vadd.f32 %v4663, %v5175
        %v5688 = vadd.f32 %v4664, %v5176
        %v5689 = vadd.f32 %v4665, %v5177
        %v5690 = vadd.f32 %v4666, %v5178
        %v5691 = vadd.f32 %v4667, %v5179
        %v5692 = vadd.f32 %v4668, %v5180
        %v5693 = vadd.f32 %v4669, %v5181
        %v5694 = vadd.f32 %v4670, %v5182
        %v5695 = vadd.f32 %v4671, %v5183
        %v5696 = vadd.f32 %v4672, %v5184
        %v5697 = vadd.f32 %v4673, %v5185
        %v5698 = vadd.f32 %v4674, %v5186
        %v5699 = vadd.f32 %v4675, %v5187
        %v5700 = vadd.f32 %v4676, %v5188
        %v5701 = vadd.f32 %v4677, %v5189
        %v5702 = vadd.f32 %v4678, %v5190
        %v5703 = vadd.f32 %v4679, %v5191
        %v5704 = vadd.f32 %v4680, %v5192
        %v5705 = vadd.f32 %v4681, %v5193
        %v5706 = vadd.f32 %v4682, %v5194
        %v5707 = vadd.f32 %v4683, %v5195
        %v5708 = vadd.f32 %v4684, %v5196
        %v5709 = vadd.f32 %v4685, %v5197
        %v5710 = vadd.f32 %v4686, %v5198
        %v5711 = vadd.f32 %v4687, %v5199
        %v5712 = vadd.f32 %v4688, %v5200
        %v5713 = vadd.f32 %v4689, %v5201
        %v5714 = vadd.f32 %v4690, %v5202
        %v5715 = vadd.f32 %v4691, %v5203
        %v5716 = vadd.f32 %v4692, %v5204
        %v5717 = vadd.f32 %v4693, %v5205
        %v5718 = vadd.f32 %v4694, %v5206
        %v5719 = vadd.f32 %v4695, %v5207
        %v5720 = vadd.f32 %v4696, %v5208
        %v5721 = vadd.f32 %v4697, %v5209
        %v5722 = vadd.f32 %v4698, %v5210
        %v5723 = vadd.f32 %v4699, %v5211
        %v5724 = vadd.f32 %v4700, %v5212
        %v5725 = vadd.f32 %v4701, %v5213
        %v5726 = vadd.f32 %v4702, %v5214
        %v5727 = vadd.f32 %v4703, %v5215
        %v5728 = vadd.f32 %v4704, %v5216
        %v5729 = vadd.f32 %v4705, %v5217
        %v5730 = vadd.f32 %v4706, %v5218
        %v5731 = vadd.f32 %v4707, %v5219
        %v5732 = vadd.f32 %v4708, %v5220
        %v5733 = vadd.f32 %v4709, %v5221
        %v5734 = vadd.f32 %v4710, %v5222
        %v5735 = vadd.f32 %v4711, %v5223
        %v5736 = vadd.f32 %v4712, %v5224
        %v5737 = vadd.f32 %v4713, %v5225
        %v5738 = vadd.f32 %v4714, %v5226
        %v5739 = vadd.f32 %v4715, %v5227
        %v5740 = vadd.f32 %v4716, %v5228
        %v5741 = vadd.f32 %v4717, %v5229
        %v5742 = vadd.f32 %v4718, %v5230
        %v5743 = vadd.f32 %v4719, %v5231
        %v5744 = vadd.f32 %v4720, %v5232
        %v5745 = vadd.f32 %v4721, %v5233
        %v5746 = vadd.f32 %v4722, %v5234
        %v5747 = vadd.f32 %v4723, %v5235
        %v5748 = vadd.f32 %v4724, %v5236
        %v5749 = vadd.f32 %v4725, %v5237
        %v5750 = vadd.f32 %v4726, %v5238
        %v5751 = vadd.f32 %v4727, %v5239
        %v5752 = vadd.f32 %v4728, %v5240
        %v5753 = vadd.f32 %v4729, %v5241
        %v5754 = vadd.f32 %v4730, %v5242
        %v5755 = vadd.f32 %v4731, %v5243
        %v5756 = vadd.f32 %v4732, %v5244
        %v5757 = vadd.f32 %v4733, %v5245
        %v5758 = vadd.f32 %v4734, %v5246
        %v5759 = vadd.f32 %v4735, %v5247
        %v5760 = vadd.f32 %v4736, %v5248
        %v5761 = vadd.f32 %v4737, %v5249
        %v5762 = vadd.f32 %v4738, %v5250
        %v5763 = vadd.f32 %v4739, %v5251
        %v5764 = vadd.f32 %v4740, %v5252
        %v5765 = vadd.f32 %v4741, %v5253
        %v5766 = vadd.f32 %v4742, %v5254
        %v5767 = vadd.f32 %v4743, %v5255
        %v5768 = vadd.f32 %v4744, %v5256
        %v5769 = vadd.f32 %v4745, %v5257
        %v5770 = vadd.f32 %v4746, %v5258
        %v5771 = vadd.f32 %v4747, %v5259
        %v5772 = vadd.f32 %v4748, %v5260
        %v5773 = vadd.f32 %v4749, %v5261
        %v5774 = vadd.f32 %v4750, %v5262
        %v5775 = vadd.f32 %v4751, %v5263
        %v5776 = vadd.f32 %v4752, %v5264
        %v5777 = vadd.f32 %v4753, %v5265
        %v5778 = vadd.f32 %v4754, %v5266
        %v5779 = vadd.f32 %v4755, %v5267
        %v5780 = vadd.f32 %v4756, %v5268
        %v5781 = vadd.f32 %v4757, %v5269
        %v5782 = vadd.f32 %v4758, %v5270
        %v5783 = vadd.f32 %v4759, %v5271
        %v5784 = vadd.f32 %v4760, %v5272
        %v5785 = vadd.f32 %v4761, %v5273
        %v5786 = vadd.f32 %v4762, %v5274
        %v5787 = vadd.f32 %v4763, %v5275
        %v5788 = vadd.f32 %v4764, %v5276
        %v5789 = vadd.f32 %v4765, %v5277
        %v5790 = vadd.f32 %v4766, %v5278
        %v5791 = vadd.f32 %v4767, %v5279
        %v5792 = vadd.f32 %v4768, %v5280
        %v5793 = vadd.f32 %v4769, %v5281
        %v5794 = vadd.f32 %v4770, %v5282
        %v5795 = vadd.f32 %v4771, %v5283
        %v5796 = vadd.f32 %v4772, %v5284
        %v5797 = vadd.f32 %v4773, %v5285
        %v5798 = vadd.f32 %v4774, %v5286
        %v5799 = vadd.f32 %v4775, %v5287
        %v5800 = vadd.f32 %v4776, %v5288
        %v5801 = vadd.f32 %v4777, %v5289
        %v5802 = vadd.f32 %v4778, %v5290
        %v5803 = vadd.f32 %v4779, %v5291
        %v5804 = vadd.f32 %v4780, %v5292
        %v5805 = vadd.f32 %v4781, %v5293
        %v5806 = vadd.f32 %v4782, %v5294
        %v5807 = vadd.f32 %v4783, %v5295
        %v5808 = vadd.f32 %v4784, %v5296
        %v5809 = vadd.f32 %v4785, %v5297
        %v5810 = vadd.f32 %v4786, %v5298
        %v5811 = vadd.f32 %v4787, %v5299
        %v5812 = vadd.f32 %v4788, %v5300
        %v5813 = vadd.f32 %v4789, %v5301
        %v5814 = vadd.f32 %v4790, %v5302
        %v5815 = vadd.f32 %v4791, %v5303
        %v5816 = vadd.f32 %v4792, %v5304
        %v5817 = vadd.f32 %v4793, %v5305
        %v5818 = vadd.f32 %v4794, %v5306
        %v5819 = vadd.f32 %v4795, %v5307
        %v5820 = vadd.f32 %v4796, %v5308
        %v5821 = vadd.f32 %v4797, %v5309
        %v5822 = vadd.f32 %v4798, %v5310
        %v5823 = vadd.f32 %v4799, %v5311
        %v5824 = vadd.f32 %v4800, %v5312
        %v5825 = vadd.f32 %v4801, %v5313
        %v5826 = vadd.f32 %v4802, %v5314
        %v5827 = vadd.f32 %v4803, %v5315
        %v5828 = vadd.f32 %v4804, %v5316
        %v5829 = vadd.f32 %v4805, %v5317
        %v5830 = vadd.f32 %v4806, %v5318
        %v5831 = vadd.f32 %v4807, %v5319
        %v5832 = vadd.f32 %v4808, %v5320
        %v5833 = vadd.f32 %v4809, %v5321
        %v5834 = vadd.f32 %v4810, %v5322
        %v5835 = vadd.f32 %v4811, %v5323
        %v5836 = vadd.f32 %v4812, %v5324
        %v5837 = vadd.f32 %v4813, %v5325
        %v5838 = vadd.f32 %v4814, %v5326
        %v5839 = vadd.f32 %v4815, %v5327
        %v5840 = vadd.f32 %v4816, %v5328
        %v5841 = vadd.f32 %v4817, %v5329
        %v5842 = vadd.f32 %v4818, %v5330
        %v5843 = vadd.f32 %v4819, %v5331
        %v5844 = vadd.f32 %v4820, %v5332
        %v5845 = vadd.f32 %v4821, %v5333
        %v5846 = vadd.f32 %v4822, %v5334
        %v5847 = vadd.f32 %v4823, %v5335
        %v5848 = vadd.f32 %v4824, %v5336
        %v5849 = vadd.f32 %v4825, %v5337
        %v5850 = vadd.f32 %v4826, %v5338
        %v5851 = vadd.f32 %v4827, %v5339
        %v5852 = vadd.f32 %v4828, %v5340
        %v5853 = vadd.f32 %v4829, %v5341
        %v5854 = vadd.f32 %v4830, %v5342
        %v5855 = vadd.f32 %v4831, %v5343
        %v5856 = vadd.f32 %v4832, %v5344
        %v5857 = vadd.f32 %v4833, %v5345
        %v5858 = vadd.f32 %v4834, %v5346
        %v5859 = vadd.f32 %v4835, %v5347
        %v5860 = vadd.f32 %v4836, %v5348
        %v5861 = vadd.f32 %v4837, %v5349
        %v5862 = vadd.f32 %v4838, %v5350
        %v5863 = vadd.f32 %v4839, %v5351
        %v5864 = vadd.f32 %v4840, %v5352
        %v5865 = vadd.f32 %v4841, %v5353
        %v5866 = vadd.f32 %v4842, %v5354
        %v5867 = vadd.f32 %v4843, %v5355
        %v5868 = vadd.f32 %v4844, %v5356
        %v5869 = vadd.f32 %v4845, %v5357
        %v5870 = vadd.f32 %v4846, %v5358
        %v5871 = vadd.f32 %v4847, %v5359
        %v5872 = vadd.f32 %v4848, %v5360
        %v5873 = vadd.f32 %v4849, %v5361
        %v5874 = vadd.f32 %v4850, %v5362
        %v5875 = vadd.f32 %v4851, %v5363
        %v5876 = vadd.f32 %v4852, %v5364
        %v5877 = vadd.f32 %v4853, %v5365
        %v5878 = vadd.f32 %v4854, %v5366
        %v5879 = vadd.f32 %v4855, %v5367
        %v5880 = vadd.f32 %v4856, %v5368
        %v5881 = vadd.f32 %v4857, %v5369
        %v5882 = vadd.f32 %v4858, %v5370
        %v5883 = vadd.f32 %v4859, %v5371
        %v5884 = vadd.f32 %v4860, %v5372
        %v5885 = vld [vmem:[%s235] sm:$0xff]
        %v5886 = vadd.f32 %v5373, %v5374
        %v5887 = vadd.f32 %v5886, %v5375
        %v5888 = vadd.f32 %v5887, %v5376
        %v5889 = vadd.f32 %v5888, %v5377
        %v5890 = vadd.f32 %v5889, %v5378
        %v5891 = vadd.f32 %v5890, %v5379
        %v5892 = vadd.f32 %v5891, %v5380
        %v5893 = vadd.f32 %v5892, %v5381
        %v5894 = vadd.f32 %v5893, %v5382
        %v5895 = vadd.f32 %v5894, %v5383
        %v5896 = vadd.f32 %v5895, %v5384
        %v5897 = vadd.f32 %v5896, %v5385
        %v5898 = vadd.f32 %v5897, %v5386
        %v5899 = vadd.f32 %v5898, %v5387
        %v5900 = vadd.f32 %v5899, %v5388
        %v5901 = vadd.f32 %v5900, %v5389
        %v5902 = vadd.f32 %v5901, %v5390
        %v5903 = vadd.f32 %v5902, %v5391
        %v5904 = vadd.f32 %v5903, %v5392
        %v5905 = vadd.f32 %v5904, %v5393
        %v5906 = vadd.f32 %v5905, %v5394
        %v5907 = vadd.f32 %v5906, %v5395
        %v5908 = vadd.f32 %v5907, %v5396
        %v5909 = vadd.f32 %v5908, %v5397
        %v5910 = vadd.f32 %v5909, %v5398
        %v5911 = vadd.f32 %v5910, %v5399
        %v5912 = vadd.f32 %v5911, %v5400
        %v5913 = vadd.f32 %v5912, %v5401
        %v5914 = vadd.f32 %v5913, %v5402
        %v5915 = vadd.f32 %v5914, %v5403
        %v5916 = vadd.f32 %v5915, %v5404
        %v5917 = vadd.f32 %v5916, %v5405
        %v5918 = vadd.f32 %v5917, %v5406
        %v5919 = vadd.f32 %v5918, %v5407
        %v5920 = vadd.f32 %v5919, %v5408
        %v5921 = vadd.f32 %v5920, %v5409
        %v5922 = vadd.f32 %v5921, %v5410
        %v5923 = vadd.f32 %v5922, %v5411
        %v5924 = vadd.f32 %v5923, %v5412
        %v5925 = vadd.f32 %v5924, %v5413
        %v5926 = vadd.f32 %v5925, %v5414
        %v5927 = vadd.f32 %v5926, %v5415
        %v5928 = vadd.f32 %v5927, %v5416
        %v5929 = vadd.f32 %v5928, %v5417
        %v5930 = vadd.f32 %v5929, %v5418
        %v5931 = vadd.f32 %v5930, %v5419
        %v5932 = vadd.f32 %v5931, %v5420
        %v5933 = vadd.f32 %v5932, %v5421
        %v5934 = vadd.f32 %v5933, %v5422
        %v5935 = vadd.f32 %v5934, %v5423
        %v5936 = vadd.f32 %v5935, %v5424
        %v5937 = vadd.f32 %v5936, %v5425
        %v5938 = vadd.f32 %v5937, %v5426
        %v5939 = vadd.f32 %v5938, %v5427
        %v5940 = vadd.f32 %v5939, %v5428
        %v5941 = vadd.f32 %v5940, %v5429
        %v5942 = vadd.f32 %v5941, %v5430
        %v5943 = vadd.f32 %v5942, %v5431
        %v5944 = vadd.f32 %v5943, %v5432
        %v5945 = vadd.f32 %v5944, %v5433
        %v5946 = vadd.f32 %v5945, %v5434
        %v5947 = vadd.f32 %v5946, %v5435
        %v5948 = vadd.f32 %v5947, %v5436
        %v5949 = vadd.f32 %v5948, %v5437
        %v5950 = vadd.f32 %v5949, %v5438
        %v5951 = vadd.f32 %v5950, %v5439
        %v5952 = vadd.f32 %v5951, %v5440
        %v5953 = vadd.f32 %v5952, %v5441
        %v5954 = vadd.f32 %v5953, %v5442
        %v5955 = vadd.f32 %v5954, %v5443
        %v5956 = vadd.f32 %v5955, %v5444
        %v5957 = vadd.f32 %v5956, %v5445
        %v5958 = vadd.f32 %v5957, %v5446
        %v5959 = vadd.f32 %v5958, %v5447
        %v5960 = vadd.f32 %v5959, %v5448
        %v5961 = vadd.f32 %v5960, %v5449
        %v5962 = vadd.f32 %v5961, %v5450
        %v5963 = vadd.f32 %v5962, %v5451
        %v5964 = vadd.f32 %v5963, %v5452
        %v5965 = vadd.f32 %v5964, %v5453
        %v5966 = vadd.f32 %v5965, %v5454
        %v5967 = vadd.f32 %v5966, %v5455
        %v5968 = vadd.f32 %v5967, %v5456
        %v5969 = vadd.f32 %v5968, %v5457
        %v5970 = vadd.f32 %v5969, %v5458
        %v5971 = vadd.f32 %v5970, %v5459
        %v5972 = vadd.f32 %v5971, %v5460
        %v5973 = vadd.f32 %v5972, %v5461
        %v5974 = vadd.f32 %v5973, %v5462
        %v5975 = vadd.f32 %v5974, %v5463
        %v5976 = vadd.f32 %v5975, %v5464
        %v5977 = vadd.f32 %v5976, %v5465
        %v5978 = vadd.f32 %v5977, %v5466
        %v5979 = vadd.f32 %v5978, %v5467
        %v5980 = vadd.f32 %v5979, %v5468
        %v5981 = vadd.f32 %v5980, %v5469
        %v5982 = vadd.f32 %v5981, %v5470
        %v5983 = vadd.f32 %v5982, %v5471
        %v5984 = vadd.f32 %v5983, %v5472
        %v5985 = vadd.f32 %v5984, %v5473
        %v5986 = vadd.f32 %v5985, %v5474
        %v5987 = vadd.f32 %v5986, %v5475
        %v5988 = vadd.f32 %v5987, %v5476
        %v5989 = vadd.f32 %v5988, %v5477
        %v5990 = vadd.f32 %v5989, %v5478
        %v5991 = vadd.f32 %v5990, %v5479
        %v5992 = vadd.f32 %v5991, %v5480
        %v5993 = vadd.f32 %v5992, %v5481
        %v5994 = vadd.f32 %v5993, %v5482
        %v5995 = vadd.f32 %v5994, %v5483
        %v5996 = vadd.f32 %v5995, %v5484
        %v5997 = vadd.f32 %v5996, %v5485
        %v5998 = vadd.f32 %v5997, %v5486
        %v5999 = vadd.f32 %v5998, %v5487
        %v6000 = vadd.f32 %v5999, %v5488
        %v6001 = vadd.f32 %v6000, %v5489
        %v6002 = vadd.f32 %v6001, %v5490
        %v6003 = vadd.f32 %v6002, %v5491
        %v6004 = vadd.f32 %v6003, %v5492
        %v6005 = vadd.f32 %v6004, %v5493
        %v6006 = vadd.f32 %v6005, %v5494
        %v6007 = vadd.f32 %v6006, %v5495
        %v6008 = vadd.f32 %v6007, %v5496
        %v6009 = vadd.f32 %v6008, %v5497
        %v6010 = vadd.f32 %v6009, %v5498
        %v6011 = vadd.f32 %v6010, %v5499
        %v6012 = vadd.f32 %v6011, %v5500
        %v6013 = vadd.f32 %v6012, %v5501
        %v6014 = vadd.f32 %v6013, %v5502
        %v6015 = vadd.f32 %v6014, %v5503
        %v6016 = vadd.f32 %v6015, %v5504
        %v6017 = vadd.f32 %v6016, %v5505
        %v6018 = vadd.f32 %v6017, %v5506
        %v6019 = vadd.f32 %v6018, %v5507
        %v6020 = vadd.f32 %v6019, %v5508
        %v6021 = vadd.f32 %v6020, %v5509
        %v6022 = vadd.f32 %v6021, %v5510
        %v6023 = vadd.f32 %v6022, %v5511
        %v6024 = vadd.f32 %v6023, %v5512
        %v6025 = vadd.f32 %v6024, %v5513
        %v6026 = vadd.f32 %v6025, %v5514
        %v6027 = vadd.f32 %v6026, %v5515
        %v6028 = vadd.f32 %v6027, %v5516
        %v6029 = vadd.f32 %v6028, %v5517
        %v6030 = vadd.f32 %v6029, %v5518
        %v6031 = vadd.f32 %v6030, %v5519
        %v6032 = vadd.f32 %v6031, %v5520
        %v6033 = vadd.f32 %v6032, %v5521
        %v6034 = vadd.f32 %v6033, %v5522
        %v6035 = vadd.f32 %v6034, %v5523
        %v6036 = vadd.f32 %v6035, %v5524
        %v6037 = vadd.f32 %v6036, %v5525
        %v6038 = vadd.f32 %v6037, %v5526
        %v6039 = vadd.f32 %v6038, %v5527
        %v6040 = vadd.f32 %v6039, %v5528
        %v6041 = vadd.f32 %v6040, %v5529
        %v6042 = vadd.f32 %v6041, %v5530
        %v6043 = vadd.f32 %v6042, %v5531
        %v6044 = vadd.f32 %v6043, %v5532
        %v6045 = vadd.f32 %v6044, %v5533
        %v6046 = vadd.f32 %v6045, %v5534
        %v6047 = vadd.f32 %v6046, %v5535
        %v6048 = vadd.f32 %v6047, %v5536
        %v6049 = vadd.f32 %v6048, %v5537
        %v6050 = vadd.f32 %v6049, %v5538
        %v6051 = vadd.f32 %v6050, %v5539
        %v6052 = vadd.f32 %v6051, %v5540
        %v6053 = vadd.f32 %v6052, %v5541
        %v6054 = vadd.f32 %v6053, %v5542
        %v6055 = vadd.f32 %v6054, %v5543
        %v6056 = vadd.f32 %v6055, %v5544
        %v6057 = vadd.f32 %v6056, %v5545
        %v6058 = vadd.f32 %v6057, %v5546
        %v6059 = vadd.f32 %v6058, %v5547
        %v6060 = vadd.f32 %v6059, %v5548
        %v6061 = vadd.f32 %v6060, %v5549
        %v6062 = vadd.f32 %v6061, %v5550
        %v6063 = vadd.f32 %v6062, %v5551
        %v6064 = vadd.f32 %v6063, %v5552
        %v6065 = vadd.f32 %v6064, %v5553
        %v6066 = vadd.f32 %v6065, %v5554
        %v6067 = vadd.f32 %v6066, %v5555
        %v6068 = vadd.f32 %v6067, %v5556
        %v6069 = vadd.f32 %v6068, %v5557
        %v6070 = vadd.f32 %v6069, %v5558
        %v6071 = vadd.f32 %v6070, %v5559
        %v6072 = vadd.f32 %v6071, %v5560
        %v6073 = vadd.f32 %v6072, %v5561
        %v6074 = vadd.f32 %v6073, %v5562
        %v6075 = vadd.f32 %v6074, %v5563
        %v6076 = vadd.f32 %v6075, %v5564
        %v6077 = vadd.f32 %v6076, %v5565
        %v6078 = vadd.f32 %v6077, %v5566
        %v6079 = vadd.f32 %v6078, %v5567
        %v6080 = vadd.f32 %v6079, %v5568
        %v6081 = vadd.f32 %v6080, %v5569
        %v6082 = vadd.f32 %v6081, %v5570
        %v6083 = vadd.f32 %v6082, %v5571
        %v6084 = vadd.f32 %v6083, %v5572
        %v6085 = vadd.f32 %v6084, %v5573
        %v6086 = vadd.f32 %v6085, %v5574
        %v6087 = vadd.f32 %v6086, %v5575
        %v6088 = vadd.f32 %v6087, %v5576
        %v6089 = vadd.f32 %v6088, %v5577
        %v6090 = vadd.f32 %v6089, %v5578
        %v6091 = vadd.f32 %v6090, %v5579
        %v6092 = vadd.f32 %v6091, %v5580
        %v6093 = vadd.f32 %v6092, %v5581
        %v6094 = vadd.f32 %v6093, %v5582
        %v6095 = vadd.f32 %v6094, %v5583
        %v6096 = vadd.f32 %v6095, %v5584
        %v6097 = vadd.f32 %v6096, %v5585
        %v6098 = vadd.f32 %v6097, %v5586
        %v6099 = vadd.f32 %v6098, %v5587
        %v6100 = vadd.f32 %v6099, %v5588
        %v6101 = vadd.f32 %v6100, %v5589
        %v6102 = vadd.f32 %v6101, %v5590
        %v6103 = vadd.f32 %v6102, %v5591
        %v6104 = vadd.f32 %v6103, %v5592
        %v6105 = vadd.f32 %v6104, %v5593
        %v6106 = vadd.f32 %v6105, %v5594
        %v6107 = vadd.f32 %v6106, %v5595
        %v6108 = vadd.f32 %v6107, %v5596
        %v6109 = vadd.f32 %v6108, %v5597
        %v6110 = vadd.f32 %v6109, %v5598
        %v6111 = vadd.f32 %v6110, %v5599
        %v6112 = vadd.f32 %v6111, %v5600
        %v6113 = vadd.f32 %v6112, %v5601
        %v6114 = vadd.f32 %v6113, %v5602
        %v6115 = vadd.f32 %v6114, %v5603
        %v6116 = vadd.f32 %v6115, %v5604
        %v6117 = vadd.f32 %v6116, %v5605
        %v6118 = vadd.f32 %v6117, %v5606
        %v6119 = vadd.f32 %v6118, %v5607
        %v6120 = vadd.f32 %v6119, %v5608
        %v6121 = vadd.f32 %v6120, %v5609
        %v6122 = vadd.f32 %v6121, %v5610
        %v6123 = vadd.f32 %v6122, %v5611
        %v6124 = vadd.f32 %v6123, %v5612
        %v6125 = vadd.f32 %v6124, %v5613
        %v6126 = vadd.f32 %v6125, %v5614
        %v6127 = vadd.f32 %v6126, %v5615
        %v6128 = vadd.f32 %v6127, %v5616
        %v6129 = vadd.f32 %v6128, %v5617
        %v6130 = vadd.f32 %v6129, %v5618
        %v6131 = vadd.f32 %v6130, %v5619
        %v6132 = vadd.f32 %v6131, %v5620
        %v6133 = vadd.f32 %v6132, %v5621
        %v6134 = vadd.f32 %v6133, %v5622
        %v6135 = vadd.f32 %v6134, %v5623
        %v6136 = vadd.f32 %v6135, %v5624
        %v6137 = vadd.f32 %v6136, %v5625
        %v6138 = vadd.f32 %v6137, %v5626
        %v6139 = vadd.f32 %v6138, %v5627
        %v6140 = vadd.f32 %v6139, %v5628
        %v6141 = vadd.f32 %v6140, %v5629
        %v6142 = vadd.f32 %v6141, %v5630
        %v6143 = vadd.f32 %v6142, %v5631
        %v6144 = vadd.f32 %v6143, %v5632
        %v6145 = vadd.f32 %v6144, %v5633
        %v6146 = vadd.f32 %v6145, %v5634
        %v6147 = vadd.f32 %v6146, %v5635
        %v6148 = vadd.f32 %v6147, %v5636
        %v6149 = vadd.f32 %v6148, %v5637
        %v6150 = vadd.f32 %v6149, %v5638
        %v6151 = vadd.f32 %v6150, %v5639
        %v6152 = vadd.f32 %v6151, %v5640
        %v6153 = vadd.f32 %v6152, %v5641
        %v6154 = vadd.f32 %v6153, %v5642
        %v6155 = vadd.f32 %v6154, %v5643
        %v6156 = vadd.f32 %v6155, %v5644
        %v6157 = vadd.f32 %v6156, %v5645
        %v6158 = vadd.f32 %v6157, %v5646
        %v6159 = vadd.f32 %v6158, %v5647
        %v6160 = vadd.f32 %v6159, %v5648
        %v6161 = vadd.f32 %v6160, %v5649
        %v6162 = vadd.f32 %v6161, %v5650
        %v6163 = vadd.f32 %v6162, %v5651
        %v6164 = vadd.f32 %v6163, %v5652
        %v6165 = vadd.f32 %v6164, %v5653
        %v6166 = vadd.f32 %v6165, %v5654
        %v6167 = vadd.f32 %v6166, %v5655
        %v6168 = vadd.f32 %v6167, %v5656
        %v6169 = vadd.f32 %v6168, %v5657
        %v6170 = vadd.f32 %v6169, %v5658
        %v6171 = vadd.f32 %v6170, %v5659
        %v6172 = vadd.f32 %v6171, %v5660
        %v6173 = vadd.f32 %v6172, %v5661
        %v6174 = vadd.f32 %v6173, %v5662
        %v6175 = vadd.f32 %v6174, %v5663
        %v6176 = vadd.f32 %v6175, %v5664
        %v6177 = vadd.f32 %v6176, %v5665
        %v6178 = vadd.f32 %v6177, %v5666
        %v6179 = vadd.f32 %v6178, %v5667
        %v6180 = vadd.f32 %v6179, %v5668
        %v6181 = vadd.f32 %v6180, %v5669
        %v6182 = vadd.f32 %v6181, %v5670
        %v6183 = vadd.f32 %v6182, %v5671
        %v6184 = vadd.f32 %v6183, %v5672
        %v6185 = vadd.f32 %v6184, %v5673
        %v6186 = vadd.f32 %v6185, %v5674
        %v6187 = vadd.f32 %v6186, %v5675
        %v6188 = vadd.f32 %v6187, %v5676
        %v6189 = vadd.f32 %v6188, %v5677
        %v6190 = vadd.f32 %v6189, %v5678
        %v6191 = vadd.f32 %v6190, %v5679
        %v6192 = vadd.f32 %v6191, %v5680
        %v6193 = vadd.f32 %v6192, %v5681
        %v6194 = vadd.f32 %v6193, %v5682
        %v6195 = vadd.f32 %v6194, %v5683
        %v6196 = vadd.f32 %v6195, %v5684
        %v6197 = vadd.f32 %v6196, %v5685
        %v6198 = vadd.f32 %v6197, %v5686
        %v6199 = vadd.f32 %v6198, %v5687
        %v6200 = vadd.f32 %v6199, %v5688
        %v6201 = vadd.f32 %v6200, %v5689
        %v6202 = vadd.f32 %v6201, %v5690
        %v6203 = vadd.f32 %v6202, %v5691
        %v6204 = vadd.f32 %v6203, %v5692
        %v6205 = vadd.f32 %v6204, %v5693
        %v6206 = vadd.f32 %v6205, %v5694
        %v6207 = vadd.f32 %v6206, %v5695
        %v6208 = vadd.f32 %v6207, %v5696
        %v6209 = vadd.f32 %v6208, %v5697
        %v6210 = vadd.f32 %v6209, %v5698
        %v6211 = vadd.f32 %v6210, %v5699
        %v6212 = vadd.f32 %v6211, %v5700
        %v6213 = vadd.f32 %v6212, %v5701
        %v6214 = vadd.f32 %v6213, %v5702
        %v6215 = vadd.f32 %v6214, %v5703
        %v6216 = vadd.f32 %v6215, %v5704
        %v6217 = vadd.f32 %v6216, %v5705
        %v6218 = vadd.f32 %v6217, %v5706
        %v6219 = vadd.f32 %v6218, %v5707
        %v6220 = vadd.f32 %v6219, %v5708
        %v6221 = vadd.f32 %v6220, %v5709
        %v6222 = vadd.f32 %v6221, %v5710
        %v6223 = vadd.f32 %v6222, %v5711
        %v6224 = vadd.f32 %v6223, %v5712
        %v6225 = vadd.f32 %v6224, %v5713
        %v6226 = vadd.f32 %v6225, %v5714
        %v6227 = vadd.f32 %v6226, %v5715
        %v6228 = vadd.f32 %v6227, %v5716
        %v6229 = vadd.f32 %v6228, %v5717
        %v6230 = vadd.f32 %v6229, %v5718
        %v6231 = vadd.f32 %v6230, %v5719
        %v6232 = vadd.f32 %v6231, %v5720
        %v6233 = vadd.f32 %v6232, %v5721
        %v6234 = vadd.f32 %v6233, %v5722
        %v6235 = vadd.f32 %v6234, %v5723
        %v6236 = vadd.f32 %v6235, %v5724
        %v6237 = vadd.f32 %v6236, %v5725
        %v6238 = vadd.f32 %v6237, %v5726
        %v6239 = vadd.f32 %v6238, %v5727
        %v6240 = vadd.f32 %v6239, %v5728
        %v6241 = vadd.f32 %v6240, %v5729
        %v6242 = vadd.f32 %v6241, %v5730
        %v6243 = vadd.f32 %v6242, %v5731
        %v6244 = vadd.f32 %v6243, %v5732
        %v6245 = vadd.f32 %v6244, %v5733
        %v6246 = vadd.f32 %v6245, %v5734
        %v6247 = vadd.f32 %v6246, %v5735
        %v6248 = vadd.f32 %v6247, %v5736
        %v6249 = vadd.f32 %v6248, %v5737
        %v6250 = vadd.f32 %v6249, %v5738
        %v6251 = vadd.f32 %v6250, %v5739
        %v6252 = vadd.f32 %v6251, %v5740
        %v6253 = vadd.f32 %v6252, %v5741
        %v6254 = vadd.f32 %v6253, %v5742
        %v6255 = vadd.f32 %v6254, %v5743
        %v6256 = vadd.f32 %v6255, %v5744
        %v6257 = vadd.f32 %v6256, %v5745
        %v6258 = vadd.f32 %v6257, %v5746
        %v6259 = vadd.f32 %v6258, %v5747
        %v6260 = vadd.f32 %v6259, %v5748
        %v6261 = vadd.f32 %v6260, %v5749
        %v6262 = vadd.f32 %v6261, %v5750
        %v6263 = vadd.f32 %v6262, %v5751
        %v6264 = vadd.f32 %v6263, %v5752
        %v6265 = vadd.f32 %v6264, %v5753
        %v6266 = vadd.f32 %v6265, %v5754
        %v6267 = vadd.f32 %v6266, %v5755
        %v6268 = vadd.f32 %v6267, %v5756
        %v6269 = vadd.f32 %v6268, %v5757
        %v6270 = vadd.f32 %v6269, %v5758
        %v6271 = vadd.f32 %v6270, %v5759
        %v6272 = vadd.f32 %v6271, %v5760
        %v6273 = vadd.f32 %v6272, %v5761
        %v6274 = vadd.f32 %v6273, %v5762
        %v6275 = vadd.f32 %v6274, %v5763
        %v6276 = vadd.f32 %v6275, %v5764
        %v6277 = vadd.f32 %v6276, %v5765
        %v6278 = vadd.f32 %v6277, %v5766
        %v6279 = vadd.f32 %v6278, %v5767
        %v6280 = vadd.f32 %v6279, %v5768
        %v6281 = vadd.f32 %v6280, %v5769
        %v6282 = vadd.f32 %v6281, %v5770
        %v6283 = vadd.f32 %v6282, %v5771
        %v6284 = vadd.f32 %v6283, %v5772
        %v6285 = vadd.f32 %v6284, %v5773
        %v6286 = vadd.f32 %v6285, %v5774
        %v6287 = vadd.f32 %v6286, %v5775
        %v6288 = vadd.f32 %v6287, %v5776
        %v6289 = vadd.f32 %v6288, %v5777
        %v6290 = vadd.f32 %v6289, %v5778
        %v6291 = vadd.f32 %v6290, %v5779
        %v6292 = vadd.f32 %v6291, %v5780
        %v6293 = vadd.f32 %v6292, %v5781
        %v6294 = vadd.f32 %v6293, %v5782
        %v6295 = vadd.f32 %v6294, %v5783
        %v6296 = vadd.f32 %v6295, %v5784
        %v6297 = vadd.f32 %v6296, %v5785
        %v6298 = vadd.f32 %v6297, %v5786
        %v6299 = vadd.f32 %v6298, %v5787
        %v6300 = vadd.f32 %v6299, %v5788
        %v6301 = vadd.f32 %v6300, %v5789
        %v6302 = vadd.f32 %v6301, %v5790
        %v6303 = vadd.f32 %v6302, %v5791
        %v6304 = vadd.f32 %v6303, %v5792
        %v6305 = vadd.f32 %v6304, %v5793
        %v6306 = vadd.f32 %v6305, %v5794
        %v6307 = vadd.f32 %v6306, %v5795
        %v6308 = vadd.f32 %v6307, %v5796
        %v6309 = vadd.f32 %v6308, %v5797
        %v6310 = vadd.f32 %v6309, %v5798
        %v6311 = vadd.f32 %v6310, %v5799
        %v6312 = vadd.f32 %v6311, %v5800
        %v6313 = vadd.f32 %v6312, %v5801
        %v6314 = vadd.f32 %v6313, %v5802
        %v6315 = vadd.f32 %v6314, %v5803
        %v6316 = vadd.f32 %v6315, %v5804
        %v6317 = vadd.f32 %v6316, %v5805
        %v6318 = vadd.f32 %v6317, %v5806
        %v6319 = vadd.f32 %v6318, %v5807
        %v6320 = vadd.f32 %v6319, %v5808
        %v6321 = vadd.f32 %v6320, %v5809
        %v6322 = vadd.f32 %v6321, %v5810
        %v6323 = vadd.f32 %v6322, %v5811
        %v6324 = vadd.f32 %v6323, %v5812
        %v6325 = vadd.f32 %v6324, %v5813
        %v6326 = vadd.f32 %v6325, %v5814
        %v6327 = vadd.f32 %v6326, %v5815
        %v6328 = vadd.f32 %v6327, %v5816
        %v6329 = vadd.f32 %v6328, %v5817
        %v6330 = vadd.f32 %v6329, %v5818
        %v6331 = vadd.f32 %v6330, %v5819
        %v6332 = vadd.f32 %v6331, %v5820
        %v6333 = vadd.f32 %v6332, %v5821
        %v6334 = vadd.f32 %v6333, %v5822
        %v6335 = vadd.f32 %v6334, %v5823
        %v6336 = vadd.f32 %v6335, %v5824
        %v6337 = vadd.f32 %v6336, %v5825
        %v6338 = vadd.f32 %v6337, %v5826
        %v6339 = vadd.f32 %v6338, %v5827
        %v6340 = vadd.f32 %v6339, %v5828
        %v6341 = vadd.f32 %v6340, %v5829
        %v6342 = vadd.f32 %v6341, %v5830
        %v6343 = vadd.f32 %v6342, %v5831
        %v6344 = vadd.f32 %v6343, %v5832
        %v6345 = vadd.f32 %v6344, %v5833
        %v6346 = vadd.f32 %v6345, %v5834
        %v6347 = vadd.f32 %v6346, %v5835
        %v6348 = vadd.f32 %v6347, %v5836
        %v6349 = vadd.f32 %v6348, %v5837
        %v6350 = vadd.f32 %v6349, %v5838
        %v6351 = vadd.f32 %v6350, %v5839
        %v6352 = vadd.f32 %v6351, %v5840
        %v6353 = vadd.f32 %v6352, %v5841
        %v6354 = vadd.f32 %v6353, %v5842
        %v6355 = vadd.f32 %v6354, %v5843
        %v6356 = vadd.f32 %v6355, %v5844
        %v6357 = vadd.f32 %v6356, %v5845
        %v6358 = vadd.f32 %v6357, %v5846
        %v6359 = vadd.f32 %v6358, %v5847
        %v6360 = vadd.f32 %v6359, %v5848
        %v6361 = vadd.f32 %v6360, %v5849
        %v6362 = vadd.f32 %v6361, %v5850
        %v6363 = vadd.f32 %v6362, %v5851
        %v6364 = vadd.f32 %v6363, %v5852
        %v6365 = vadd.f32 %v6364, %v5853
        %v6366 = vadd.f32 %v6365, %v5854
        %v6367 = vadd.f32 %v6366, %v5855
        %v6368 = vadd.f32 %v6367, %v5856
        %v6369 = vadd.f32 %v6368, %v5857
        %v6370 = vadd.f32 %v6369, %v5858
        %v6371 = vadd.f32 %v6370, %v5859
        %v6372 = vadd.f32 %v6371, %v5860
        %v6373 = vadd.f32 %v6372, %v5861
        %v6374 = vadd.f32 %v6373, %v5862
        %v6375 = vadd.f32 %v6374, %v5863
        %v6376 = vadd.f32 %v6375, %v5864
        %v6377 = vadd.f32 %v6376, %v5865
        %v6378 = vadd.f32 %v6377, %v5866
        %v6379 = vadd.f32 %v6378, %v5867
        %v6380 = vadd.f32 %v6379, %v5868
        %v6381 = vadd.f32 %v6380, %v5869
        %v6382 = vadd.f32 %v6381, %v5870
        %v6383 = vadd.f32 %v6382, %v5871
        %v6384 = vadd.f32 %v6383, %v5872
        %v6385 = vadd.f32 %v6384, %v5873
        %v6386 = vadd.f32 %v6385, %v5874
        %v6387 = vadd.f32 %v6386, %v5875
        %v6388 = vadd.f32 %v6387, %v5876
        %v6389 = vadd.f32 %v6388, %v5877
        %v6390 = vadd.f32 %v6389, %v5878
        %v6391 = vadd.f32 %v6390, %v5879
        %v6392 = vadd.f32 %v6391, %v5880
        %v6393 = vadd.f32 %v6392, %v5881
        %v6394 = vadd.f32 %v6393, %v5882
        %v6395 = vadd.f32 %v6394, %v5883
        %v6396 = vadd.f32 %v6395, %v5884
        %v6397 = vadd.f32 %v5885, %v6396
        %6398 = vst [vmem:[%s235] sm:$0xff] %v6397
        %s6399 = sand.u32 %s106, 1
        %s6400 = scalar_lea.sflag [#allocation4], %s6399
        %s6401 = sand.u32 %s106, 1
        %s6402 = smul.addr %s6401, 8
        %s6403 = scalar_lea.vmem [#allocation7], %s6402
        // Predicated region
        $region41: #{tpu_custom_call.1} parent=27 // pred_check
          %p6404 = pneg %p116
        $region42: #{tpu_custom_call.1} parent=27 // pred_check_branch
          %6406 = sbr.rel (%p6404) target = $region44
        $region43: #{tpu_custom_call.1} parent=27 // pred_region
          %6408 = vsyncadd %s6400, 0
          %s6409 = smul.addr %s26, 8
          %s6410 = scalar_lea.hbm %s2, %s6409
          %s6412 = sshll.u32 %s6403, 4
          %s6413 = int_to_ptr.vmem [resolvable:$true] %s6412
          %s6414 = sshll.u32 %s6410, 4
          %s6415 = int_to_ptr.hbm [resolvable:$true] %s6414
          %6417 = dma.vmem_to_hbm [thread:$0]  %s6413, 128, %s6415, %s6400
        $region44: #{tpu_custom_call.1} parent=27 // pred_fallthru
          _
      $region28: #{tpu_custom_call.1} parent=5 // pred_fallthru
        _
      %p6418 = scmp.le.s32.totalorder 2, %s17
      // Predicated region
      $region45: #{tpu_custom_call.1} parent=5 // pred_check
        %p6419 = pneg %p6418
      $region46: #{tpu_custom_call.1} parent=5 // pred_check_branch
        %6421 = sbr.rel (%p6419) target = $region48
      $region47: #{tpu_custom_call.1} parent=5 // pred_region
        %s6422 = ssub.s32 %s17, 2
        // Predicated region
        $region49: #{tpu_custom_call.1} parent=47 // pred_check
          %p6423 = pneg %p122
        $region50: #{tpu_custom_call.1} parent=47 // pred_check_branch
          %6425 = sbr.rel (%p6423) target = $region52
        $region51: #{tpu_custom_call.1} parent=47 // pred_region
          %s6426 = sand.u32 %s107, 1
          %s6427 = scalar_lea.sflag [#allocation4], %s6426
          %s6428 = sand.u32 %s107, 1
          %s6429 = smul.addr %s6428, 8
          %s6430 = scalar_lea.vmem [#allocation7], %s6429
          %6432 = dma.done %s6427, 128
        $region52: #{tpu_custom_call.1} parent=47 // pred_fallthru
          _
      $region48: #{tpu_custom_call.1} parent=5 // pred_fallthru
        _
    $region6: #{tpu_custom_call.1} parent=1 // loop_footer
      %s21 = sadd.s32 1, %s17
    $region7: #{tpu_custom_call.1} parent=1 // loop_footer_branch
      %16 = sbr.rel target = $region3
    $region8: #{tpu_custom_call.1} parent=1 // loop_exit
      _
    %6433 = vsyncpa [#allocation3], 1
    %s6434 = scalar_lea.sflag [#allocation3], 1
    %6435 = vsyncpa %s6434, 1
    %6436 = vsyncpa [#allocation6], 1
    %s6437 = scalar_lea.sflag [#allocation6], 1
    %6438 = vsyncpa %s6437, 1
    %6439 = vsyncpa [#allocation4], 1
    %s6440 = scalar_lea.sflag [#allocation4], 1
    %6441 = vsyncpa %s6440, 1

</llo_original>
